<compile_context>
chip_gen: v6e
topology: v6e:2x2x1
jax: 0.10.0
libtpu: 0.0.40
codegen_flags: <defaults>
</compile_context>

<pallas_src>
import functools

import jax
import jax.numpy as jnp
from jax.experimental import pallas as pl
from jax.experimental.pallas import tpu as pltpu

WV_DIM = 32          # wv_dim passed to Net.__init__
_LANE = 128          # TPU lane width; small layer dims are zero-padded to it
_HI = jax.lax.Precision.HIGHEST


# nn.Sequential(out_layers) with eval-mode Dropout removed (identity).
def _build_ops(dim):
    return [
        ("bn", dim), ("lin", dim, 256), ("bn", 256), ("relu",),
        ("lin", 256, 512), ("bn", 512), ("relu",),
        ("lin", 512, 1024), ("bn", 1024), ("relu",),          # Dropout -> id
        ("lin", 1024, 1024), ("relu",),
        ("lin", 1024, 1024), ("bn", 1024), ("relu",),         # Dropout -> id
        ("lin", 1024, 512), ("bn", 512), ("relu",),
        ("lin", 512, 256), ("relu",),
        ("lin", 256, 256), ("relu",),
        ("lin", 256, 256), ("bn", 256), ("relu",),
        ("lin", 256, 256), ("bn", 256), ("relu",),
        ("lin", 256, 64), ("bn", 64), ("relu",),
        ("lin", 64, 64), ("bn", 64), ("relu",),
        ("lin", 64, 16), ("bn", 16), ("relu",),
        ("lin", 16, 1), ("sigmoid",),
    ]


def _layer_dims(dim):
    return [(op[1], op[2]) for op in _build_ops(dim) if op[0] == "lin"]


def _plan(dim):
    """Static packing plan for the folded Linear chain.

    metas[i] (one per Linear, in order):
      g     -> which packed weight/bias buffer the layer lives in,
      off   -> first row of its (padded) weight block inside that buffer,
      p_in  -> padded input width  (== previous layer's padded output),
      p_out -> padded output width (== lane width of buffer g),
      brow  -> its row inside the packed bias buffer.
    Also returns per-group row counts, lane widths, and layer counts.
    """
    dims = _layer_dims(dim)
    pads = []
    prev_out = dim
    for (_, n_out) in dims:
        p_in, p_out = prev_out, max(n_out, _LANE)
        pads.append((p_in, p_out))
        prev_out = p_out
    widths = sorted({p for _, p in pads}, reverse=True)      # [1024,512,256,128]
    g_of = {w: i for i, w in enumerate(widths)}
    row_off = [0] * len(widths)
    layer_cnt = [0] * len(widths)
    metas = []
    for p_in, p_out in pads:
        g = g_of[p_out]
        metas.append(dict(g=g, off=row_off[g], p_in=p_in, p_out=p_out,
                          brow=layer_cnt[g]))
        row_off[g] += p_in
        layer_cnt[g] += 1
    return metas, row_off, widths, layer_cnt


# ----------------------------------------------------------------------------
# Parameter construction (deterministic), BN folding, and packing (wrapper).
# ----------------------------------------------------------------------------
def make_raw_params(key, dim):
    """Deterministic init of every Linear / BatchNorm(eval) parameter.

    Returns a list aligned with _build_ops(dim):
      ("bn", scale, shift)   with scale = gamma/sqrt(var+eps),
                                  shift = beta - mean*scale   (eval-mode BN)
      ("lin", W, b)
      None                   for activations.
    """
    eps = 1e-5
    raw = []
    for op in _build_ops(dim):
        if op[0] == "bn":
            n = op[1]
            key, k1, k2, k3, k4 = jax.random.split(key, 5)
            gamma = 1.0 + 0.1 * jax.random.normal(k1, (n,), jnp.float32)
            beta = 0.1 * jax.random.normal(k2, (n,), jnp.float32)
            mean = 0.1 * jax.random.normal(k3, (n,), jnp.float32)
            var = jax.random.uniform(k4, (n,), jnp.float32, 0.5, 1.5)
            scale = gamma / jnp.sqrt(var + eps)
            shift = beta - mean * scale
            raw.append(("bn", scale, shift))
        elif op[0] == "lin":
            n_in, n_out = op[1], op[2]
            key, k1, k2 = jax.random.split(key, 3)
            w = jax.random.normal(k1, (n_in, n_out), jnp.float32) / jnp.sqrt(
                jnp.float32(n_in))
            b = 0.01 * jax.random.normal(k2, (n_out,), jnp.float32)
            raw.append(("lin", w, b))
        else:
            raw.append(None)
    return raw


def fold_bn_into_linear(dim, raw):
    """Fold every eval-mode BatchNorm into its adjacent Linear (exact):

      BN before Linear:  W' = diag(s) @ W ,  b' = b + t @ W
      Linear before BN:  W' = W * s       ,  b' = b * s + t

    Returns 14 (W, b) float32 pairs: the net becomes (Linear->ReLU)x13 ->
    Linear -> Sigmoid.
    """
    ops = _build_ops(dim)
    layers = []
    pending = None            # BN seen before its Linear (only the first one)
    prev_kind = None
    for op, params in zip(ops, raw):
        if op[0] == "lin":
            _, w, b = params
            if pending is not None:
                s, t = pending
                b = b + t @ w
                w = s[:, None] * w
                pending = None
            layers.append((w, b))
        elif op[0] == "bn":
            _, s, t = params
            if prev_kind == "lin":                 # BN right after a Linear
                w, b = layers[-1]
                layers[-1] = (w * s[None, :], b * s + t)
            else:                                  # BN before the first Linear
                pending = (s, t)
        prev_kind = op[0]
    assert pending is None
    return layers


def pack_params(dim, folded):
    """Pack folded (W, b) into 4 bf16 weight buffers + 4 f32 bias buffers,
    grouped by padded output width; sub-128 dims are zero-padded (exact)."""
    metas, group_rows, widths, layer_cnt = _plan(dim)
    w_bufs = [jnp.zeros((group_rows[g], widths[g]), jnp.float32)
              for g in range(len(widths))]
    b_bufs = [jnp.zeros((layer_cnt[g], widths[g]), jnp.float32)
              for g in range(len(widths))]
    for m, (w, b) in zip(metas, folded):
        n_in, n_out = w.shape
        g, off = m["g"], m["off"]
        w_bufs[g] = w_bufs[g].at[off:off + n_in, 0:n_out].set(w)
        b_bufs[g] = b_bufs[g].at[m["brow"], 0:n_out].set(b)
    w_bufs = [w.astype(jnp.bfloat16) for w in w_bufs]
    return w_bufs, b_bufs


# ----------------------------------------------------------------------------
# Pallas kernel: whole forward pass in one invocation (grid = ()).
# ----------------------------------------------------------------------------
def _net_kernel(metas, n_groups, x_ref, *refs):
    w_refs = refs[:n_groups]                   # packed bf16 weight buffers
    b_refs = refs[n_groups:2 * n_groups]       # packed f32 bias buffers
    o_ref = refs[2 * n_groups]

    # Tiny bias buffers: load them whole, once.
    biases = [b[...] for b in b_refs]

    # torch.sum(x, 1) followed by reshape((B, D)) -> (B, D) float32
    h = jnp.sum(x_ref[...], axis=1)

    last = len(metas) - 1
    for i, m in enumerate(metas):
        g, off, p_in = m["g"], m["off"], m["p_in"]
        w = w_refs[g][off:off + p_in, :]                    # (p_in, p_out) bf16
        b = biases[g][m["brow"]:m["brow"] + 1, :]           # (1, p_out)   f32
        # bf16 x bf16 MXU matmul with f32 accumulation; bias/ReLU stay f32.
        h = jnp.dot(h.astype(jnp.bfloat16), w,
                    preferred_element_type=jnp.float32) + b
        if i < last:
            h = jnp.maximum(h, 0.0)                         # ReLU
    # Final Sigmoid; only column 0 is the real (unpadded) output unit.
    logit = h[:, 0:1]
    o_ref[...] = 1.0 / (1.0 + jnp.exp(-logit))


def net_forward(x, w_bufs, b_bufs):
    dim = x.shape[-1]
    metas, _, widths, _ = _plan(dim)
    n_groups = len(widths)
    args = [x] + list(w_bufs) + list(b_bufs)
    kernel = functools.partial(_net_kernel, metas, n_groups)
    return pl.pallas_call(
        kernel,
        out_shape=jax.ShapeDtypeStruct((x.shape[0], 1), jnp.float32),
        in_specs=[pl.BlockSpec(memory_space=pltpu.MemorySpace.VMEM)
                  for _ in args],
        out_specs=pl.BlockSpec(memory_space=pltpu.MemorySpace.VMEM),
        compiler_params=pltpu.CompilerParams(
            vmem_limit_bytes=48 * 1024 * 1024),   # <= v7x's 64 MiB physical
    )(*args)


# ----------------------------------------------------------------------------
# Pure-JAX references for correctness checking.
# ----------------------------------------------------------------------------
def net_forward_ref(x, folded):
    """Folded network with the SAME bf16 weight quantization / bf16 matmul
    inputs / f32 accumulation as the kernel."""
    h = jnp.sum(x, axis=1)
    last = len(folded) - 1
    for i, (w, b) in enumerate(folded):
        h = jnp.dot(h.astype(jnp.bfloat16), w.astype(jnp.bfloat16),
                    preferred_element_type=jnp.float32) + b
        if i < last:
            h = jnp.maximum(h, 0.0)
    return 1.0 / (1.0 + jnp.exp(-h))


def net_forward_folded_f32_ref(x, folded):
    """Folded network, full f32 (checks folding algebra, not quantization)."""
    h = jnp.sum(x, axis=1)
    last = len(folded) - 1
    for i, (w, b) in enumerate(folded):
        h = jnp.dot(h, w, precision=_HI) + b
        if i < last:
            h = jnp.maximum(h, 0.0)
    return 1.0 / (1.0 + jnp.exp(-h))


def net_forward_unfolded_ref(x, dim, raw):
    """Original op sequence (BN as eval-mode affine, Dropout identity), f32."""
    h = jnp.sum(x, axis=1)
    for op, params in zip(_build_ops(dim), raw):
        if op[0] == "bn":
            _, s, t = params
            h = h * s + t
        elif op[0] == "lin":
            _, w, b = params
            h = jnp.dot(h, w, precision=_HI) + b
        elif op[0] == "relu":
            h = jnp.maximum(h, 0.0)
        else:  # sigmoid
            h = 1.0 / (1.0 + jnp.exp(-h))
    return h


if __name__ == "__main__":
    B, S, D = 8, 8, WV_DIM
    key = jax.random.PRNGKey(0)
    kx, kp = jax.random.split(key)
    x = jax.random.normal(kx, (B, S, D), jnp.float32)

    raw = make_raw_params(kp, D)
    folded = fold_bn_into_linear(D, raw)
    w_bufs, b_bufs = pack_params(D, folded)

    out = net_forward(x, w_bufs, b_bufs)
    out = jax.block_until_ready(out)
    assert out.shape == (B, 1), out.shape

    # 1) BN-folding algebra is exact (pure-JAX f32 vs original op sequence).
    f_ref = net_forward_folded_f32_ref(x, folded)
    u_ref = net_forward_unfolded_ref(x, D, raw)
    assert jnp.allclose(f_ref, u_ref, atol=1e-4, rtol=1e-4), (
        f"folding mismatch: max abs err {jnp.max(jnp.abs(f_ref - u_ref))}")

    # 2) Kernel matches the bf16-quantized folded reference.
    ref = net_forward_ref(x, folded)
    assert jnp.allclose(out, ref, atol=2e-3, rtol=1e-3), (
        f"kernel mismatch: max abs err {jnp.max(jnp.abs(out - ref))}")

    print("KERNEL_OK")
</pallas_src>

<mosaic_0001>
module attributes {stable_mosaic.version = 11 : i64} {
  func.func @_net_kernel(%arg0: memref<8x8x32xf32, #tpu.memory_space<vmem>>, %arg1: memref<2560x1024xbf16, #tpu.memory_space<vmem>>, %arg2: memref<1280x512xbf16, #tpu.memory_space<vmem>>, %arg3: memref<1312x256xbf16, #tpu.memory_space<vmem>>, %arg4: memref<640x128xbf16, #tpu.memory_space<vmem>>, %arg5: memref<3x1024xf32, #tpu.memory_space<vmem>>, %arg6: memref<2x512xf32, #tpu.memory_space<vmem>>, %arg7: memref<5x256xf32, #tpu.memory_space<vmem>>, %arg8: memref<4x128xf32, #tpu.memory_space<vmem>>, %arg9: memref<8x1xf32, #tpu.memory_space<vmem>>) attributes {dimension_semantics = [], scalar_prefetch = 0 : i64, scratch_operands = 0 : i64, tpu.core_type = #tpu.core_type<tc>} {
    %c0 = arith.constant 0 : index
    %c0_0 = arith.constant 0 : index
    %0 = vector.load %arg5[%c0, %c0_0] : memref<3x1024xf32, #tpu.memory_space<vmem>>, vector<3x1024xf32>
    %c0_1 = arith.constant 0 : index
    %c0_2 = arith.constant 0 : index
    %1 = vector.load %arg6[%c0_1, %c0_2] : memref<2x512xf32, #tpu.memory_space<vmem>>, vector<2x512xf32>
    %c0_3 = arith.constant 0 : index
    %c0_4 = arith.constant 0 : index
    %2 = vector.load %arg7[%c0_3, %c0_4] : memref<5x256xf32, #tpu.memory_space<vmem>>, vector<5x256xf32>
    %c0_5 = arith.constant 0 : index
    %c0_6 = arith.constant 0 : index
    %3 = vector.load %arg8[%c0_5, %c0_6] : memref<4x128xf32, #tpu.memory_space<vmem>>, vector<4x128xf32>
    %c0_7 = arith.constant 0 : index
    %c0_8 = arith.constant 0 : index
    %c0_9 = arith.constant 0 : index
    %4 = vector.load %arg0[%c0_7, %c0_8, %c0_9] : memref<8x8x32xf32, #tpu.memory_space<vmem>>, vector<8x8x32xf32>
    %cst = arith.constant dense<0.000000e+00> : vector<8x32xf32>
    %5 = vector.multi_reduction <add>, %4, %cst [1] : vector<8x8x32xf32> to vector<8x32xf32>
    %c0_10 = arith.constant 0 : index
    %c0_11 = arith.constant 0 : index
    %6 = vector.load %arg3[%c0_10, %c0_11] : memref<1312x256xbf16, #tpu.memory_space<vmem>>, vector<32x256xbf16>
    %7 = vector.extract_strided_slice %2 {offsets = [0, 0], sizes = [1, 256], strides = [1, 1]} : vector<5x256xf32> to vector<1x256xf32>
    %8 = arith.truncf %5 : vector<8x32xf32> to vector<8x32xbf16>
    %cst_12 = arith.constant dense<0.000000e+00> : vector<8x256xf32>
    %9 = tpu.matmul %8, %6, %cst_12 {dimension_numbers = #tpu.dot_dimension_numbers<[1], [0], [0], [1], [0, 0, 1, 1], [], []>} : vector<8x32xbf16>, vector<32x256xbf16>, vector<8x256xf32> -> vector<8x256xf32>
    %10 = vector.broadcast %7 : vector<1x256xf32> to vector<8x256xf32>
    %11 = arith.addf %9, %10 : vector<8x256xf32>
    %cst_13 = arith.constant 0.000000e+00 : f32
    %12 = vector.broadcast %cst_13 : f32 to vector<8x256xf32>
    %13 = arith.maximumf %11, %12 : vector<8x256xf32>
    %c0_14 = arith.constant 0 : index
    %c0_15 = arith.constant 0 : index
    %14 = vector.load %arg2[%c0_14, %c0_15] : memref<1280x512xbf16, #tpu.memory_space<vmem>>, vector<256x512xbf16>
    %15 = vector.extract_strided_slice %1 {offsets = [0, 0], sizes = [1, 512], strides = [1, 1]} : vector<2x512xf32> to vector<1x512xf32>
    %16 = arith.truncf %13 : vector<8x256xf32> to vector<8x256xbf16>
    %cst_16 = arith.constant dense<0.000000e+00> : vector<8x512xf32>
    %17 = tpu.matmul %16, %14, %cst_16 {dimension_numbers = #tpu.dot_dimension_numbers<[1], [0], [0], [1], [0, 0, 1, 1], [], []>} : vector<8x256xbf16>, vector<256x512xbf16>, vector<8x512xf32> -> vector<8x512xf32>
    %18 = vector.broadcast %15 : vector<1x512xf32> to vector<8x512xf32>
    %19 = arith.addf %17, %18 : vector<8x512xf32>
    %cst_17 = arith.constant 0.000000e+00 : f32
    %20 = vector.broadcast %cst_17 : f32 to vector<8x512xf32>
    %21 = arith.maximumf %19, %20 : vector<8x512xf32>
    %c0_18 = arith.constant 0 : index
    %c0_19 = arith.constant 0 : index
    %22 = vector.load %arg1[%c0_18, %c0_19] : memref<2560x1024xbf16, #tpu.memory_space<vmem>>, vector<512x1024xbf16>
    %23 = vector.extract_strided_slice %0 {offsets = [0, 0], sizes = [1, 1024], strides = [1, 1]} : vector<3x1024xf32> to vector<1x1024xf32>
    %24 = arith.truncf %21 : vector<8x512xf32> to vector<8x512xbf16>
    %cst_20 = arith.constant dense<0.000000e+00> : vector<8x1024xf32>
    %25 = tpu.matmul %24, %22, %cst_20 {dimension_numbers = #tpu.dot_dimension_numbers<[1], [0], [0], [1], [0, 0, 1, 1], [], []>} : vector<8x512xbf16>, vector<512x1024xbf16>, vector<8x1024xf32> -> vector<8x1024xf32>
    %26 = vector.broadcast %23 : vector<1x1024xf32> to vector<8x1024xf32>
    %27 = arith.addf %25, %26 : vector<8x1024xf32>
    %cst_21 = arith.constant 0.000000e+00 : f32
    %28 = vector.broadcast %cst_21 : f32 to vector<8x1024xf32>
    %29 = arith.maximumf %27, %28 : vector<8x1024xf32>
    %c512 = arith.constant 512 : index
    %c0_22 = arith.constant 0 : index
    %30 = vector.load %arg1[%c512, %c0_22] : memref<2560x1024xbf16, #tpu.memory_space<vmem>>, vector<1024x1024xbf16>
    %31 = vector.extract_strided_slice %0 {offsets = [1, 0], sizes = [1, 1024], strides = [1, 1]} : vector<3x1024xf32> to vector<1x1024xf32>
    %32 = arith.truncf %29 : vector<8x1024xf32> to vector<8x1024xbf16>
    %cst_23 = arith.constant dense<0.000000e+00> : vector<8x1024xf32>
    %33 = tpu.matmul %32, %30, %cst_23 {dimension_numbers = #tpu.dot_dimension_numbers<[1], [0], [0], [1], [0, 0, 1, 1], [], []>} : vector<8x1024xbf16>, vector<1024x1024xbf16>, vector<8x1024xf32> -> vector<8x1024xf32>
    %34 = vector.broadcast %31 : vector<1x1024xf32> to vector<8x1024xf32>
    %35 = arith.addf %33, %34 : vector<8x1024xf32>
    %cst_24 = arith.constant 0.000000e+00 : f32
    %36 = vector.broadcast %cst_24 : f32 to vector<8x1024xf32>
    %37 = arith.maximumf %35, %36 : vector<8x1024xf32>
    %c1536 = arith.constant 1536 : index
    %c0_25 = arith.constant 0 : index
    %38 = vector.load %arg1[%c1536, %c0_25] : memref<2560x1024xbf16, #tpu.memory_space<vmem>>, vector<1024x1024xbf16>
    %39 = vector.extract_strided_slice %0 {offsets = [2, 0], sizes = [1, 1024], strides = [1, 1]} : vector<3x1024xf32> to vector<1x1024xf32>
    %40 = arith.truncf %37 : vector<8x1024xf32> to vector<8x1024xbf16>
    %cst_26 = arith.constant dense<0.000000e+00> : vector<8x1024xf32>
    %41 = tpu.matmul %40, %38, %cst_26 {dimension_numbers = #tpu.dot_dimension_numbers<[1], [0], [0], [1], [0, 0, 1, 1], [], []>} : vector<8x1024xbf16>, vector<1024x1024xbf16>, vector<8x1024xf32> -> vector<8x1024xf32>
    %42 = vector.broadcast %39 : vector<1x1024xf32> to vector<8x1024xf32>
    %43 = arith.addf %41, %42 : vector<8x1024xf32>
    %cst_27 = arith.constant 0.000000e+00 : f32
    %44 = vector.broadcast %cst_27 : f32 to vector<8x1024xf32>
    %45 = arith.maximumf %43, %44 : vector<8x1024xf32>
    %c256 = arith.constant 256 : index
    %c0_28 = arith.constant 0 : index
    %46 = vector.load %arg2[%c256, %c0_28] : memref<1280x512xbf16, #tpu.memory_space<vmem>>, vector<1024x512xbf16>
    %47 = vector.extract_strided_slice %1 {offsets = [1, 0], sizes = [1, 512], strides = [1, 1]} : vector<2x512xf32> to vector<1x512xf32>
    %48 = arith.truncf %45 : vector<8x1024xf32> to vector<8x1024xbf16>
    %cst_29 = arith.constant dense<0.000000e+00> : vector<8x512xf32>
    %49 = tpu.matmul %48, %46, %cst_29 {dimension_numbers = #tpu.dot_dimension_numbers<[1], [0], [0], [1], [0, 0, 1, 1], [], []>} : vector<8x1024xbf16>, vector<1024x512xbf16>, vector<8x512xf32> -> vector<8x512xf32>
    %50 = vector.broadcast %47 : vector<1x512xf32> to vector<8x512xf32>
    %51 = arith.addf %49, %50 : vector<8x512xf32>
    %cst_30 = arith.constant 0.000000e+00 : f32
    %52 = vector.broadcast %cst_30 : f32 to vector<8x512xf32>
    %53 = arith.maximumf %51, %52 : vector<8x512xf32>
    %c32 = arith.constant 32 : index
    %c0_31 = arith.constant 0 : index
    %54 = vector.load %arg3[%c32, %c0_31] : memref<1312x256xbf16, #tpu.memory_space<vmem>>, vector<512x256xbf16>
    %55 = vector.extract_strided_slice %2 {offsets = [1, 0], sizes = [1, 256], strides = [1, 1]} : vector<5x256xf32> to vector<1x256xf32>
    %56 = arith.truncf %53 : vector<8x512xf32> to vector<8x512xbf16>
    %cst_32 = arith.constant dense<0.000000e+00> : vector<8x256xf32>
    %57 = tpu.matmul %56, %54, %cst_32 {dimension_numbers = #tpu.dot_dimension_numbers<[1], [0], [0], [1], [0, 0, 1, 1], [], []>} : vector<8x512xbf16>, vector<512x256xbf16>, vector<8x256xf32> -> vector<8x256xf32>
    %58 = vector.broadcast %55 : vector<1x256xf32> to vector<8x256xf32>
    %59 = arith.addf %57, %58 : vector<8x256xf32>
    %cst_33 = arith.constant 0.000000e+00 : f32
    %60 = vector.broadcast %cst_33 : f32 to vector<8x256xf32>
    %61 = arith.maximumf %59, %60 : vector<8x256xf32>
    %c544 = arith.constant 544 : index
    %c0_34 = arith.constant 0 : index
    %62 = vector.load %arg3[%c544, %c0_34] : memref<1312x256xbf16, #tpu.memory_space<vmem>>, vector<256x256xbf16>
    %63 = vector.extract_strided_slice %2 {offsets = [2, 0], sizes = [1, 256], strides = [1, 1]} : vector<5x256xf32> to vector<1x256xf32>
    %64 = arith.truncf %61 : vector<8x256xf32> to vector<8x256xbf16>
    %cst_35 = arith.constant dense<0.000000e+00> : vector<8x256xf32>
    %65 = tpu.matmul %64, %62, %cst_35 {dimension_numbers = #tpu.dot_dimension_numbers<[1], [0], [0], [1], [0, 0, 1, 1], [], []>} : vector<8x256xbf16>, vector<256x256xbf16>, vector<8x256xf32> -> vector<8x256xf32>
    %66 = vector.broadcast %63 : vector<1x256xf32> to vector<8x256xf32>
    %67 = arith.addf %65, %66 : vector<8x256xf32>
    %cst_36 = arith.constant 0.000000e+00 : f32
    %68 = vector.broadcast %cst_36 : f32 to vector<8x256xf32>
    %69 = arith.maximumf %67, %68 : vector<8x256xf32>
    %c800 = arith.constant 800 : index
    %c0_37 = arith.constant 0 : index
    %70 = vector.load %arg3[%c800, %c0_37] : memref<1312x256xbf16, #tpu.memory_space<vmem>>, vector<256x256xbf16>
    %71 = vector.extract_strided_slice %2 {offsets = [3, 0], sizes = [1, 256], strides = [1, 1]} : vector<5x256xf32> to vector<1x256xf32>
    %72 = arith.truncf %69 : vector<8x256xf32> to vector<8x256xbf16>
    %cst_38 = arith.constant dense<0.000000e+00> : vector<8x256xf32>
    %73 = tpu.matmul %72, %70, %cst_38 {dimension_numbers = #tpu.dot_dimension_numbers<[1], [0], [0], [1], [0, 0, 1, 1], [], []>} : vector<8x256xbf16>, vector<256x256xbf16>, vector<8x256xf32> -> vector<8x256xf32>
    %74 = vector.broadcast %71 : vector<1x256xf32> to vector<8x256xf32>
    %75 = arith.addf %73, %74 : vector<8x256xf32>
    %cst_39 = arith.constant 0.000000e+00 : f32
    %76 = vector.broadcast %cst_39 : f32 to vector<8x256xf32>
    %77 = arith.maximumf %75, %76 : vector<8x256xf32>
    %c1056 = arith.constant 1056 : index
    %c0_40 = arith.constant 0 : index
    %78 = vector.load %arg3[%c1056, %c0_40] : memref<1312x256xbf16, #tpu.memory_space<vmem>>, vector<256x256xbf16>
    %79 = vector.extract_strided_slice %2 {offsets = [4, 0], sizes = [1, 256], strides = [1, 1]} : vector<5x256xf32> to vector<1x256xf32>
    %80 = arith.truncf %77 : vector<8x256xf32> to vector<8x256xbf16>
    %cst_41 = arith.constant dense<0.000000e+00> : vector<8x256xf32>
    %81 = tpu.matmul %80, %78, %cst_41 {dimension_numbers = #tpu.dot_dimension_numbers<[1], [0], [0], [1], [0, 0, 1, 1], [], []>} : vector<8x256xbf16>, vector<256x256xbf16>, vector<8x256xf32> -> vector<8x256xf32>
    %82 = vector.broadcast %79 : vector<1x256xf32> to vector<8x256xf32>
    %83 = arith.addf %81, %82 : vector<8x256xf32>
    %cst_42 = arith.constant 0.000000e+00 : f32
    %84 = vector.broadcast %cst_42 : f32 to vector<8x256xf32>
    %85 = arith.maximumf %83, %84 : vector<8x256xf32>
    %c0_43 = arith.constant 0 : index
    %c0_44 = arith.constant 0 : index
    %86 = vector.load %arg4[%c0_43, %c0_44] : memref<640x128xbf16, #tpu.memory_space<vmem>>, vector<256x128xbf16>
    %87 = vector.extract_strided_slice %3 {offsets = [0, 0], sizes = [1, 128], strides = [1, 1]} : vector<4x128xf32> to vector<1x128xf32>
    %88 = arith.truncf %85 : vector<8x256xf32> to vector<8x256xbf16>
    %cst_45 = arith.constant dense<0.000000e+00> : vector<8x128xf32>
    %89 = tpu.matmul %88, %86, %cst_45 {dimension_numbers = #tpu.dot_dimension_numbers<[1], [0], [0], [1], [0, 0, 1, 1], [], []>} : vector<8x256xbf16>, vector<256x128xbf16>, vector<8x128xf32> -> vector<8x128xf32>
    %90 = vector.broadcast %87 : vector<1x128xf32> to vector<8x128xf32>
    %91 = arith.addf %89, %90 : vector<8x128xf32>
    %cst_46 = arith.constant 0.000000e+00 : f32
    %92 = vector.broadcast %cst_46 : f32 to vector<8x128xf32>
    %93 = arith.maximumf %91, %92 : vector<8x128xf32>
    %c256_47 = arith.constant 256 : index
    %c0_48 = arith.constant 0 : index
    %94 = vector.load %arg4[%c256_47, %c0_48] : memref<640x128xbf16, #tpu.memory_space<vmem>>, vector<128x128xbf16>
    %95 = vector.extract_strided_slice %3 {offsets = [1, 0], sizes = [1, 128], strides = [1, 1]} : vector<4x128xf32> to vector<1x128xf32>
    %96 = arith.truncf %93 : vector<8x128xf32> to vector<8x128xbf16>
    %cst_49 = arith.constant dense<0.000000e+00> : vector<8x128xf32>
    %97 = tpu.matmul %96, %94, %cst_49 {dimension_numbers = #tpu.dot_dimension_numbers<[1], [0], [0], [1], [0, 0, 1, 1], [], []>} : vector<8x128xbf16>, vector<128x128xbf16>, vector<8x128xf32> -> vector<8x128xf32>
    %98 = vector.broadcast %95 : vector<1x128xf32> to vector<8x128xf32>
    %99 = arith.addf %97, %98 : vector<8x128xf32>
    %cst_50 = arith.constant 0.000000e+00 : f32
    %100 = vector.broadcast %cst_50 : f32 to vector<8x128xf32>
    %101 = arith.maximumf %99, %100 : vector<8x128xf32>
    %c384 = arith.constant 384 : index
    %c0_51 = arith.constant 0 : index
    %102 = vector.load %arg4[%c384, %c0_51] : memref<640x128xbf16, #tpu.memory_space<vmem>>, vector<128x128xbf16>
    %103 = vector.extract_strided_slice %3 {offsets = [2, 0], sizes = [1, 128], strides = [1, 1]} : vector<4x128xf32> to vector<1x128xf32>
    %104 = arith.truncf %101 : vector<8x128xf32> to vector<8x128xbf16>
    %cst_52 = arith.constant dense<0.000000e+00> : vector<8x128xf32>
    %105 = tpu.matmul %104, %102, %cst_52 {dimension_numbers = #tpu.dot_dimension_numbers<[1], [0], [0], [1], [0, 0, 1, 1], [], []>} : vector<8x128xbf16>, vector<128x128xbf16>, vector<8x128xf32> -> vector<8x128xf32>
    %106 = vector.broadcast %103 : vector<1x128xf32> to vector<8x128xf32>
    %107 = arith.addf %105, %106 : vector<8x128xf32>
    %cst_53 = arith.constant 0.000000e+00 : f32
    %108 = vector.broadcast %cst_53 : f32 to vector<8x128xf32>
    %109 = arith.maximumf %107, %108 : vector<8x128xf32>
    %c512_54 = arith.constant 512 : index
    %c0_55 = arith.constant 0 : index
    %110 = vector.load %arg4[%c512_54, %c0_55] : memref<640x128xbf16, #tpu.memory_space<vmem>>, vector<128x128xbf16>
    %111 = vector.extract_strided_slice %3 {offsets = [3, 0], sizes = [1, 128], strides = [1, 1]} : vector<4x128xf32> to vector<1x128xf32>
    %112 = arith.truncf %109 : vector<8x128xf32> to vector<8x128xbf16>
    %cst_56 = arith.constant dense<0.000000e+00> : vector<8x128xf32>
    %113 = tpu.matmul %112, %110, %cst_56 {dimension_numbers = #tpu.dot_dimension_numbers<[1], [0], [0], [1], [0, 0, 1, 1], [], []>} : vector<8x128xbf16>, vector<128x128xbf16>, vector<8x128xf32> -> vector<8x128xf32>
    %114 = vector.broadcast %111 : vector<1x128xf32> to vector<8x128xf32>
    %115 = arith.addf %113, %114 : vector<8x128xf32>
    %116 = vector.extract_strided_slice %115 {offsets = [0, 0], sizes = [8, 1], strides = [1, 1]} : vector<8x128xf32> to vector<8x1xf32>
    %cst_57 = arith.constant 0.000000e+00 : f32
    %117 = vector.broadcast %cst_57 : f32 to vector<8x1xf32>
    %118 = arith.subf %117, %116 : vector<8x1xf32>
    %119 = math.exp %118 : vector<8x1xf32>
    %cst_58 = arith.constant 1.000000e+00 : f32
    %120 = vector.broadcast %cst_58 : f32 to vector<8x1xf32>
    %121 = arith.addf %120, %119 : vector<8x1xf32>
    %cst_59 = arith.constant 1.000000e+00 : f32
    %122 = vector.broadcast %cst_59 : f32 to vector<8x1xf32>
    %123 = arith.divf %122, %121 : vector<8x1xf32>
    %c0_60 = arith.constant 0 : index
    %c0_61 = arith.constant 0 : index
    %124 = vector.load %arg9[%c0_60, %c0_61] : memref<8x1xf32, #tpu.memory_space<vmem>>, vector<8x1xf32>
    tpu.vector_store %arg9[%c0_60, %c0_61], %123 {strides = array<i32>} : memref<8x1xf32, #tpu.memory_space<vmem>>, vector<8x1xf32>,
    return
  }
}

</mosaic_0001>

<llo_original>
// kernel: tpu_custom_call.1
$region0: #{tpu_custom_call.1}
  #allocation0 [shape = 'u32[]', space=smem, size = 0x4, offset = 0x4, fixed_abs, tag = 'smem constant byte address 0x4 - core index']
  #allocation1 [shape = 'u32[144,128]{1,0:T(1,128)}', space=vmem, size = 0x12000, scoped, tag = 'internal scratch']
  %s0 = inlined_call_operand.hbm [shape: f32[8,8,32], index: 0, kind: input, shape index: {}]
  %s1 = inlined_call_operand.hbm [shape: bf16[2560,1024], index: 1, kind: input, shape index: {}]
  %s2 = inlined_call_operand.hbm [shape: bf16[1280,512], index: 2, kind: input, shape index: {}]
  %s3 = inlined_call_operand.hbm [shape: bf16[1312,256], index: 3, kind: input, shape index: {}]
  %s4 = inlined_call_operand.hbm [shape: bf16[640,128], index: 4, kind: input, shape index: {}]
  %s5 = inlined_call_operand.hbm [shape: f32[3,1024], index: 5, kind: input, shape index: {}]
  %s6 = inlined_call_operand.hbm [shape: f32[2,512], index: 6, kind: input, shape index: {}]
  %s7 = inlined_call_operand.hbm [shape: f32[5,256], index: 7, kind: input, shape index: {}]
  %s8 = inlined_call_operand.hbm [shape: f32[4,128], index: 8, kind: input, shape index: {}]
  %s9 = inlined_call_operand.vmem [shape: f32[8,1], index: 9, kind: output, shape index: {}]
  %s10 = sld [smem:[#allocation0]]
  $region82: #{tpu_custom_call.1} parent=0
    _
  %s12 = ssub.s32 1, %s10
  %s13 = scalar_select 0, %s12, %s10
  $region1: #{tpu_custom_call.1} parent=0
    #allocation2 [shape = 'u8[32768]{0}', space=vmem, size = 0x8000, scoped, tag = 'input window, operand 0, single buffered']
    #allocation3 [shape = 's32[1]{0}', space=sflag, size = 0x4, scoped, tag = 'scoped memory for tpu_custom_call.1']
    #allocation4 [shape = 'u8[5242880]{0}', space=vmem, size = 0x500000, scoped, tag = 'input window, operand 1, single buffered']
    #allocation5 [shape = 's32[1]{0}', space=sflag, size = 0x4, scoped, tag = 'scoped memory for tpu_custom_call.1']
    #allocation6 [shape = 'u8[1310720]{0}', space=vmem, size = 0x140000, scoped, tag = 'input window, operand 2, single buffered']
    #allocation7 [shape = 'u8[671744]{0}', space=vmem, size = 0xa4000, scoped, tag = 'input window, operand 3, single buffered']
    #allocation8 [shape = 's32[1]{0}', space=sflag, size = 0x4, scoped, tag = 'scoped memory for tpu_custom_call.1']
    #allocation9 [shape = 'u8[163840]{0}', space=vmem, size = 0x28000, scoped, tag = 'input window, operand 4, single buffered']
    #allocation10 [shape = 'u8[16384]{0}', space=vmem, size = 0x4000, scoped, tag = 'input window, operand 5, single buffered']
    #allocation11 [shape = 's32[1]{0}', space=sflag, size = 0x4, scoped, tag = 'scoped memory for tpu_custom_call.1']
    #allocation12 [shape = 'u8[4096]{0}', space=vmem, size = 0x1000, scoped, tag = 'input window, operand 6, single buffered']
    #allocation13 [shape = 'u8[8192]{0}', space=vmem, size = 0x2000, scoped, tag = 'input window, operand 7, single buffered']
    #allocation14 [shape = 's32[1]{0}', space=sflag, size = 0x4, scoped, tag = 'scoped memory for tpu_custom_call.1']
    #allocation15 [shape = 'u8[2048]{0}', space=vmem, size = 0x800, scoped, tag = 'input window, operand 8, single buffered']
    %14 = vsyncpa [#allocation3], 0
    %15 = vsyncpa [#allocation5], 0
    %16 = vsyncpa [#allocation8], 0
    %17 = vsyncpa [#allocation11], 0
    %18 = vsyncpa [#allocation14], 0
    // Predicated region
    $region2: #{tpu_custom_call.1} parent=1 // pred_check
      _
    $region3: #{tpu_custom_call.1} parent=1 // pred_check_branch
      %20 = sbr.rel (0) target = $region5
    $region4: #{tpu_custom_call.1} parent=1 // pred_region
      %s22 = ssub.s32 1024, 1024
      %23 = vsyncadd [#allocation3], %s22
      %s24 = sshll.u32 [#allocation2], 4
      %s25 = int_to_ptr.vmem [resolvable:$true] %s24
      %30 = dma.hbm_to_vmem [thread:$0]  %s0, 1024, %s25, [#allocation3], 128, 128, 8
    $region5: #{tpu_custom_call.1} parent=1 // pred_fallthru
      _
    // Predicated region
    $region6: #{tpu_custom_call.1} parent=1 // pred_check
      _
    $region7: #{tpu_custom_call.1} parent=1 // pred_check_branch
      %32 = sbr.rel (0) target = $region9
    $region8: #{tpu_custom_call.1} parent=1 // pred_region
      %s34 = ssub.s32 163840, 163840
      %35 = vsyncadd [#allocation5], %s34
      %s36 = sshll.u32 [#allocation4], 4
      %s37 = int_to_ptr.vmem [resolvable:$true] %s36
      %42 = dma.hbm_to_vmem [thread:$0]  %s1, 163840, %s37, [#allocation5], 512, 512, 32
    $region9: #{tpu_custom_call.1} parent=1 // pred_fallthru
      _
    // Predicated region
    $region10: #{tpu_custom_call.1} parent=1 // pred_check
      _
    $region11: #{tpu_custom_call.1} parent=1 // pred_check_branch
      %44 = sbr.rel (0) target = $region13
    $region12: #{tpu_custom_call.1} parent=1 // pred_region
      %s46 = ssub.s32 40960, 40960
      %47 = vsyncadd [#allocation5], %s46
      %s48 = sshll.u32 [#allocation6], 4
      %s49 = int_to_ptr.vmem [resolvable:$true] %s48
      %54 = dma.hbm_to_vmem [thread:$0]  %s2, 40960, %s49, [#allocation5], 256, 256, 16
    $region13: #{tpu_custom_call.1} parent=1 // pred_fallthru
      _
    // Predicated region
    $region14: #{tpu_custom_call.1} parent=1 // pred_check
      _
    $region15: #{tpu_custom_call.1} parent=1 // pred_check_branch
      %56 = sbr.rel (0) target = $region17
    $region16: #{tpu_custom_call.1} parent=1 // pred_region
      %s58 = ssub.s32 20992, 20992
      %59 = vsyncadd [#allocation8], %s58
      %s60 = sshll.u32 [#allocation7], 4
      %s61 = int_to_ptr.vmem [resolvable:$true] %s60
      %66 = dma.hbm_to_vmem [thread:$0]  %s3, 20992, %s61, [#allocation8], 128, 128, 8
    $region17: #{tpu_custom_call.1} parent=1 // pred_fallthru
      _
    // Predicated region
    $region18: #{tpu_custom_call.1} parent=1 // pred_check
      _
    $region19: #{tpu_custom_call.1} parent=1 // pred_check_branch
      %68 = sbr.rel (0) target = $region21
    $region20: #{tpu_custom_call.1} parent=1 // pred_region
      %s70 = ssub.s32 5120, 5120
      %71 = vsyncadd [#allocation8], %s70
      %s72 = sshll.u32 [#allocation9], 4
      %s73 = int_to_ptr.vmem [resolvable:$true] %s72
      %78 = dma.hbm_to_vmem [thread:$0]  %s4, 5120, %s73, [#allocation8], 64, 64, 4
    $region21: #{tpu_custom_call.1} parent=1 // pred_fallthru
      _
    // Predicated region
    $region22: #{tpu_custom_call.1} parent=1 // pred_check
      _
    $region23: #{tpu_custom_call.1} parent=1 // pred_check_branch
      %80 = sbr.rel (0) target = $region25
    $region24: #{tpu_custom_call.1} parent=1 // pred_region
      %s82 = ssub.s32 512, 512
      %83 = vsyncadd [#allocation11], %s82
      %s85 = sshll.u32 [#allocation10], 4
      %s86 = int_to_ptr.vmem [resolvable:$true] %s85
      %88 = dma.hbm_to_vmem [thread:$0]  %s5, 512, %s86, [#allocation11]
    $region25: #{tpu_custom_call.1} parent=1 // pred_fallthru
      _
    // Predicated region
    $region26: #{tpu_custom_call.1} parent=1 // pred_check
      _
    $region27: #{tpu_custom_call.1} parent=1 // pred_check_branch
      %90 = sbr.rel (0) target = $region29
    $region28: #{tpu_custom_call.1} parent=1 // pred_region
      %s92 = ssub.s32 128, 128
      %93 = vsyncadd [#allocation11], %s92
      %s95 = sshll.u32 [#allocation12], 4
      %s96 = int_to_ptr.vmem [resolvable:$true] %s95
      %98 = dma.hbm_to_vmem [thread:$0]  %s6, 128, %s96, [#allocation11]
    $region29: #{tpu_custom_call.1} parent=1 // pred_fallthru
      _
    // Predicated region
    $region30: #{tpu_custom_call.1} parent=1 // pred_check
      _
    $region31: #{tpu_custom_call.1} parent=1 // pred_check_branch
      %100 = sbr.rel (0) target = $region33
    $region32: #{tpu_custom_call.1} parent=1 // pred_region
      %s102 = ssub.s32 256, 256
      %103 = vsyncadd [#allocation14], %s102
      %s105 = sshll.u32 [#allocation13], 4
      %s106 = int_to_ptr.vmem [resolvable:$true] %s105
      %108 = dma.hbm_to_vmem [thread:$0]  %s7, 256, %s106, [#allocation14]
    $region33: #{tpu_custom_call.1} parent=1 // pred_fallthru
      _
    // Predicated region
    $region34: #{tpu_custom_call.1} parent=1 // pred_check
      _
    $region35: #{tpu_custom_call.1} parent=1 // pred_check_branch
      %110 = sbr.rel (0) target = $region37
    $region36: #{tpu_custom_call.1} parent=1 // pred_region
      %s112 = ssub.s32 64, 64
      %113 = vsyncadd [#allocation14], %s112
      %s115 = sshll.u32 [#allocation15], 4
      %s116 = int_to_ptr.vmem [resolvable:$true] %s115
      %118 = dma.hbm_to_vmem [thread:$0]  %s8, 64, %s116, [#allocation14]
    $region37: #{tpu_custom_call.1} parent=1 // pred_fallthru
      _
    // Predicated region
    $region38: #{tpu_custom_call.1} parent=1 // pred_check
      _
    $region39: #{tpu_custom_call.1} parent=1 // pred_check_branch
      %120 = sbr.rel (0) target = $region41
    $region40: #{tpu_custom_call.1} parent=1 // pred_region
      %121 = dma.done [#allocation3], 1024
    $region41: #{tpu_custom_call.1} parent=1 // pred_fallthru
      _
    // Predicated region
    $region42: #{tpu_custom_call.1} parent=1 // pred_check
      _
    $region43: #{tpu_custom_call.1} parent=1 // pred_check_branch
      %123 = sbr.rel (0) target = $region45
    $region44: #{tpu_custom_call.1} parent=1 // pred_region
      %124 = dma.done [#allocation5], 163840
    $region45: #{tpu_custom_call.1} parent=1 // pred_fallthru
      _
    // Predicated region
    $region46: #{tpu_custom_call.1} parent=1 // pred_check
      _
    $region47: #{tpu_custom_call.1} parent=1 // pred_check_branch
      %126 = sbr.rel (0) target = $region49
    $region48: #{tpu_custom_call.1} parent=1 // pred_region
      %127 = dma.done [#allocation5], 40960
    $region49: #{tpu_custom_call.1} parent=1 // pred_fallthru
      _
    // Predicated region
    $region50: #{tpu_custom_call.1} parent=1 // pred_check
      _
    $region51: #{tpu_custom_call.1} parent=1 // pred_check_branch
      %129 = sbr.rel (0) target = $region53
    $region52: #{tpu_custom_call.1} parent=1 // pred_region
      %130 = dma.done [#allocation8], 20992
    $region53: #{tpu_custom_call.1} parent=1 // pred_fallthru
      _
    // Predicated region
    $region54: #{tpu_custom_call.1} parent=1 // pred_check
      _
    $region55: #{tpu_custom_call.1} parent=1 // pred_check_branch
      %132 = sbr.rel (0) target = $region57
    $region56: #{tpu_custom_call.1} parent=1 // pred_region
      %133 = dma.done [#allocation8], 5120
    $region57: #{tpu_custom_call.1} parent=1 // pred_fallthru
      _
    // Predicated region
    $region58: #{tpu_custom_call.1} parent=1 // pred_check
      _
    $region59: #{tpu_custom_call.1} parent=1 // pred_check_branch
      %135 = sbr.rel (0) target = $region61
    $region60: #{tpu_custom_call.1} parent=1 // pred_region
      %136 = dma.done [#allocation11], 512
    $region61: #{tpu_custom_call.1} parent=1 // pred_fallthru
      _
    // Predicated region
    $region62: #{tpu_custom_call.1} parent=1 // pred_check
      _
    $region63: #{tpu_custom_call.1} parent=1 // pred_check_branch
      %138 = sbr.rel (0) target = $region65
    $region64: #{tpu_custom_call.1} parent=1 // pred_region
      %139 = dma.done [#allocation11], 128
    $region65: #{tpu_custom_call.1} parent=1 // pred_fallthru
      _
    // Predicated region
    $region66: #{tpu_custom_call.1} parent=1 // pred_check
      _
    $region67: #{tpu_custom_call.1} parent=1 // pred_check_branch
      %141 = sbr.rel (0) target = $region69
    $region68: #{tpu_custom_call.1} parent=1 // pred_region
      %142 = dma.done [#allocation14], 256
    $region69: #{tpu_custom_call.1} parent=1 // pred_fallthru
      _
    // Predicated region
    $region70: #{tpu_custom_call.1} parent=1 // pred_check
      _
    $region71: #{tpu_custom_call.1} parent=1 // pred_check_branch
      %144 = sbr.rel (0) target = $region73
    $region72: #{tpu_custom_call.1} parent=1 // pred_region
      %145 = dma.done [#allocation14], 64
    $region73: #{tpu_custom_call.1} parent=1 // pred_fallthru
      _
    %v147 = vld [vmem:[#allocation10] sm:$0x77]
    %v148 = vld [vmem:[#allocation10 + $0x8] sm:$0x77]
    %v149 = vld [vmem:[#allocation10 + $0x10] sm:$0x77]
    %v150 = vld [vmem:[#allocation10 + $0x18] sm:$0x77]
    %v151 = vld [vmem:[#allocation12] sm:$0xff]
    %v152 = vld [vmem:[#allocation13] sm:$0x1f]
    %v153 = vld [vmem:[#allocation13 + $0x8] sm:$0x1f]
    %v154 = vld [vmem:[#allocation15] sm:$0xf]
    %v155 = vld [vmem:[#allocation2] sm:$0xff]
    %v156 = vld [vmem:[#allocation2 + $0x8] sm:$0xff]
    %v157 = vld [vmem:[#allocation2 + $0x10] sm:$0xff]
    %v158 = vld [vmem:[#allocation2 + $0x18] sm:$0xff]
    %v159 = vld [vmem:[#allocation2 + $0x20] sm:$0xff]
    %v160 = vld [vmem:[#allocation2 + $0x28] sm:$0xff]
    %v161 = vld [vmem:[#allocation2 + $0x30] sm:$0xff]
    %v162 = vld [vmem:[#allocation2 + $0x38] sm:$0xff]
    %vm163 = vcmask 261120
    %v164 = vsel %vm163, %v155, 0.0
    %v165 = vrot.slane %v164, 4
    %v166 = vadd.f32 %v164, %v165
    %v167 = vrot.slane %v166, 2
    %v168 = vadd.f32 %v166, %v167
    %v169 = vrot.slane %v168, 1
    %v170 = vadd.f32 %v168, %v169
    %v171 = vsel %vm163, %v156, 0.0
    %v172 = vrot.slane %v171, 4
    %v173 = vadd.f32 %v171, %v172
    %v174 = vrot.slane %v173, 2
    %v175 = vadd.f32 %v173, %v174
    %v176 = vrot.slane %v175, 1
    %v177 = vadd.f32 %v175, %v176
    %v178 = vsel %vm163, %v157, 0.0
    %v179 = vrot.slane %v178, 4
    %v180 = vadd.f32 %v178, %v179
    %v181 = vrot.slane %v180, 2
    %v182 = vadd.f32 %v180, %v181
    %v183 = vrot.slane %v182, 1
    %v184 = vadd.f32 %v182, %v183
    %v185 = vsel %vm163, %v158, 0.0
    %v186 = vrot.slane %v185, 4
    %v187 = vadd.f32 %v185, %v186
    %v188 = vrot.slane %v187, 2
    %v189 = vadd.f32 %v187, %v188
    %v190 = vrot.slane %v189, 1
    %v191 = vadd.f32 %v189, %v190
    %v192 = vsel %vm163, %v159, 0.0
    %v193 = vrot.slane %v192, 4
    %v194 = vadd.f32 %v192, %v193
    %v195 = vrot.slane %v194, 2
    %v196 = vadd.f32 %v194, %v195
    %v197 = vrot.slane %v196, 1
    %v198 = vadd.f32 %v196, %v197
    %v199 = vsel %vm163, %v160, 0.0
    %v200 = vrot.slane %v199, 4
    %v201 = vadd.f32 %v199, %v200
    %v202 = vrot.slane %v201, 2
    %v203 = vadd.f32 %v201, %v202
    %v204 = vrot.slane %v203, 1
    %v205 = vadd.f32 %v203, %v204
    %v206 = vsel %vm163, %v161, 0.0
    %v207 = vrot.slane %v206, 4
    %v208 = vadd.f32 %v206, %v207
    %v209 = vrot.slane %v208, 2
    %v210 = vadd.f32 %v208, %v209
    %v211 = vrot.slane %v210, 1
    %v212 = vadd.f32 %v210, %v211
    %v213 = vsel %vm163, %v162, 0.0
    %v214 = vrot.slane %v213, 4
    %v215 = vadd.f32 %v213, %v214
    %v216 = vrot.slane %v215, 2
    %v217 = vadd.f32 %v215, %v216
    %v218 = vrot.slane %v217, 1
    %v219 = vadd.f32 %v217, %v218
    %v220 = vld [vmem:[#allocation7] sm:$0xff]
    %v221 = vld [vmem:[#allocation7 + $0x8] sm:$0xff]
    %v222 = vld [vmem:[#allocation7 + $0x10] sm:$0xff]
    %v223 = vld [vmem:[#allocation7 + $0x18] sm:$0xff]
    %v224 = vpack.c.bf16 %v170, %v170
    %v225 = vpack.c.bf16 %v177, %v177
    %v226 = vpack.c.bf16 %v184, %v184
    %v227 = vpack.c.bf16 %v191, %v191
    %v228 = vpack.c.bf16 %v198, %v198
    %v229 = vpack.c.bf16 %v205, %v205
    %v230 = vpack.c.bf16 %v212, %v212
    %v231 = vpack.c.bf16 %v219, %v219
    %v232 = vlaneseq
    %v233 = vshrl.u32 %v232, 7
    %v234 = vsub.s32 0, %v233
    %v235 = vrot.slane %v152, %v234
    %v236 = vlaneseq
    %v237 = vshrl.u32 %v236, 7
    %v238 = vsub.s32 0, %v237
    %v239 = vrot.slane %v153, %v238
    %v248 = vunpack.c.l.b16 %v224
    %v249 = vunpack.c.l.b16 %v225
    %v250 = vunpack.c.l.b16 %v226
    %v251 = vunpack.c.l.b16 %v227
    %v252 = vunpack.c.l.b16 %v228
    %v253 = vunpack.c.l.b16 %v229
    %v254 = vunpack.c.l.b16 %v230
    %v255 = vunpack.c.l.b16 %v231
    %vm256 = vcmask 1041409
    %v257 = vsel %vm256, %v249, %v248
    %vm258 = vcmask 1042434
    %v259 = vsel %vm258, %v250, %v257
    %vm260 = vcmask 1043459
    %v261 = vsel %vm260, %v251, %v259
    %vm262 = vcmask 1044484
    %v263 = vsel %vm262, %v252, %v261
    %vm264 = vcmask 1045509
    %v265 = vsel %vm264, %v253, %v263
    %vm266 = vcmask 1046534
    %v267 = vsel %vm266, %v254, %v265
    %vm268 = vcmask 1047559
    %v269 = vsel %vm268, %v255, %v267
    %v270 = vpack.c.b16 %v269, %v269
    %v275 = vunpack.c.l.b16 %v220
    %v276 = vunpack.c.h.b16 %v220
    %v277 = vunpack.c.l.b16 %v221
    %v278 = vunpack.c.h.b16 %v221
    %v279 = vunpack.c.l.b16 %v222
    %v280 = vunpack.c.h.b16 %v222
    %v281 = vunpack.c.l.b16 %v223
    %v282 = vunpack.c.h.b16 %v223
    %v283 = vpack.c.b16 %v277, %v275
    %v284 = vpack.c.b16 %v278, %v276
    %v285 = vpack.c.b16 %v281, %v279
    %v286 = vpack.c.b16 %v282, %v280
    %v292 = vsel %vm163, %v270, 0
    %294 = vmatprep.subr.bf16.mxu0 0
    %295 = vmatpush1.bf16.msra.mxu0 0
    %296 = vmatprep.subr.bf16.mxu0 0
    %297 = vmatpush1.bf16.msra.mxu0 0
    %298 = vmatprep.subr.bf16.mxu0 0
    %299 = vmatpush1.bf16.msra.mxu0 0
    %300 = vmatprep.subr.bf16.mxu0 0
    %301 = vmatpush1.bf16.msra.mxu0 0
    %302 = vmatprep.subr.bf16.mxu0 0
    %303 = vmatpush1.bf16.msra.mxu0 0
    %304 = vmatprep.subr.bf16.mxu0 0
    %305 = vmatpush1.bf16.msra.mxu0 0
    %306 = vmatprep.subr.bf16.mxu0 %v286
    %307 = vmatpush1.bf16.msra.mxu0 %v285
    %308 = vmatprep.subr.bf16.mxu0 %v284
    %309 = vmatpush1.bf16.msra.mxu0 %v283
    %310 = vmatprep.subr.bf16.mxu0 0
    %311 = vmatpush2.bf16.msra.mxu0 0
    %312 = vmatprep.subr.bf16.mxu0 0
    %313 = vmatpush2.bf16.msra.mxu0 0
    %314 = vmatprep.subr.bf16.mxu0 0
    %315 = vmatpush2.bf16.msra.mxu0 0
    %316 = vmatprep.subr.bf16.mxu0 0
    %317 = vmatpush2.bf16.msra.mxu0 0
    %318 = vmatprep.subr.bf16.mxu0 0
    %319 = vmatpush2.bf16.msra.mxu0 0
    %320 = vmatprep.subr.bf16.mxu0 0
    %321 = vmatpush2.bf16.msra.mxu0 0
    %322 = vmatprep.subr.bf16.mxu0 0
    %323 = vmatpush2.bf16.msra.mxu0 0
    %324 = vmatprep.subr.bf16.mxu0 0
    %325 = vmatpush2.bf16.msra.mxu0 0
    %326 = vmatprep.mubr.bf16.mxu0 0
    %327 = vmatmul.mubr.bf16.gmra.mxu0 %v292
    %v328 = vpop.f32.mrf.mxu0
    %v329 = vadd.f32 %v235, %v328
    %v330 = vpop.f32.mrf.mxu0
    %v331 = vadd.f32 %v239, %v330
    %v332 = vpop.f32.mrf.mxu0
    %v333 = vpop.f32.mrf.mxu0
    %334 = vdwg.mxu0
    %v335 = vmax.f32 %v329, 0.0
    %v336 = vmax.f32 %v331, 0.0
    %v337 = vld [vmem:[#allocation6] sm:$0xff]
    %v338 = vld [vmem:[#allocation6 + $0x8] sm:$0xff]
    %v339 = vld [vmem:[#allocation6 + $0x10] sm:$0xff]
    %v340 = vld [vmem:[#allocation6 + $0x18] sm:$0xff]
    %v341 = vld [vmem:[#allocation6 + $0x20] sm:$0xff]
    %v342 = vld [vmem:[#allocation6 + $0x28] sm:$0xff]
    %v343 = vld [vmem:[#allocation6 + $0x30] sm:$0xff]
    %v344 = vld [vmem:[#allocation6 + $0x38] sm:$0xff]
    %v345 = vld [vmem:[#allocation6 + $0x40] sm:$0xff]
    %v346 = vld [vmem:[#allocation6 + $0x48] sm:$0xff]
    %v347 = vld [vmem:[#allocation6 + $0x50] sm:$0xff]
    %v348 = vld [vmem:[#allocation6 + $0x58] sm:$0xff]
    %v349 = vld [vmem:[#allocation6 + $0x60] sm:$0xff]
    %v350 = vld [vmem:[#allocation6 + $0x68] sm:$0xff]
    %v351 = vld [vmem:[#allocation6 + $0x70] sm:$0xff]
    %v352 = vld [vmem:[#allocation6 + $0x78] sm:$0xff]
    %v353 = vld [vmem:[#allocation6 + $0x80] sm:$0xff]
    %v354 = vld [vmem:[#allocation6 + $0x88] sm:$0xff]
    %v355 = vld [vmem:[#allocation6 + $0x90] sm:$0xff]
    %v356 = vld [vmem:[#allocation6 + $0x98] sm:$0xff]
    %v357 = vld [vmem:[#allocation6 + $0xa0] sm:$0xff]
    %v358 = vld [vmem:[#allocation6 + $0xa8] sm:$0xff]
    %v359 = vld [vmem:[#allocation6 + $0xb0] sm:$0xff]
    %v360 = vld [vmem:[#allocation6 + $0xb8] sm:$0xff]
    %v361 = vld [vmem:[#allocation6 + $0xc0] sm:$0xff]
    %v362 = vld [vmem:[#allocation6 + $0xc8] sm:$0xff]
    %v363 = vld [vmem:[#allocation6 + $0xd0] sm:$0xff]
    %v364 = vld [vmem:[#allocation6 + $0xd8] sm:$0xff]
    %v365 = vld [vmem:[#allocation6 + $0xe0] sm:$0xff]
    %v366 = vld [vmem:[#allocation6 + $0xe8] sm:$0xff]
    %v367 = vld [vmem:[#allocation6 + $0xf0] sm:$0xff]
    %v368 = vld [vmem:[#allocation6 + $0xf8] sm:$0xff]
    %v369 = vld [vmem:[#allocation6 + $0x100] sm:$0xff]
    %v370 = vld [vmem:[#allocation6 + $0x108] sm:$0xff]
    %v371 = vld [vmem:[#allocation6 + $0x110] sm:$0xff]
    %v372 = vld [vmem:[#allocation6 + $0x118] sm:$0xff]
    %v373 = vld [vmem:[#allocation6 + $0x120] sm:$0xff]
    %v374 = vld [vmem:[#allocation6 + $0x128] sm:$0xff]
    %v375 = vld [vmem:[#allocation6 + $0x130] sm:$0xff]
    %v376 = vld [vmem:[#allocation6 + $0x138] sm:$0xff]
    %v377 = vld [vmem:[#allocation6 + $0x140] sm:$0xff]
    %v378 = vld [vmem:[#allocation6 + $0x148] sm:$0xff]
    %v379 = vld [vmem:[#allocation6 + $0x150] sm:$0xff]
    %v380 = vld [vmem:[#allocation6 + $0x158] sm:$0xff]
    %v381 = vld [vmem:[#allocation6 + $0x160] sm:$0xff]
    %v382 = vld [vmem:[#allocation6 + $0x168] sm:$0xff]
    %v383 = vld [vmem:[#allocation6 + $0x170] sm:$0xff]
    %v384 = vld [vmem:[#allocation6 + $0x178] sm:$0xff]
    %v385 = vld [vmem:[#allocation6 + $0x180] sm:$0xff]
    %v386 = vld [vmem:[#allocation6 + $0x188] sm:$0xff]
    %v387 = vld [vmem:[#allocation6 + $0x190] sm:$0xff]
    %v388 = vld [vmem:[#allocation6 + $0x198] sm:$0xff]
    %v389 = vld [vmem:[#allocation6 + $0x1a0] sm:$0xff]
    %v390 = vld [vmem:[#allocation6 + $0x1a8] sm:$0xff]
    %v391 = vld [vmem:[#allocation6 + $0x1b0] sm:$0xff]
    %v392 = vld [vmem:[#allocation6 + $0x1b8] sm:$0xff]
    %v393 = vld [vmem:[#allocation6 + $0x1c0] sm:$0xff]
    %v394 = vld [vmem:[#allocation6 + $0x1c8] sm:$0xff]
    %v395 = vld [vmem:[#allocation6 + $0x1d0] sm:$0xff]
    %v396 = vld [vmem:[#allocation6 + $0x1d8] sm:$0xff]
    %v397 = vld [vmem:[#allocation6 + $0x1e0] sm:$0xff]
    %v398 = vld [vmem:[#allocation6 + $0x1e8] sm:$0xff]
    %v399 = vld [vmem:[#allocation6 + $0x1f0] sm:$0xff]
    %v400 = vld [vmem:[#allocation6 + $0x1f8] sm:$0xff]
    %v401 = vpack.c.bf16 %v335, %v335
    %v402 = vpack.c.bf16 %v336, %v336
    %v404 = vlaneseq
    %v405 = vshrl.u32 %v404, 7
    %v406 = vsub.s32 0, %v405
    %v407 = vrot.slane %v151, %v406
    %v408 = vlaneseq
    %v409 = vshrl.u32 %v408, 7
    %v410 = vsub.s32 2, %v409
    %v411 = vrot.slane %v151, %v410
    %v412 = vlaneseq
    %v413 = vshrl.u32 %v412, 7
    %v414 = vsub.s32 4, %v413
    %v415 = vrot.slane %v151, %v414
    %v416 = vlaneseq
    %v417 = vshrl.u32 %v416, 7
    %v418 = vsub.s32 6, %v417
    %v419 = vrot.slane %v151, %v418
    %v424 = vlaneseq
    %v425 = vshrl.u32 %v424, 7
    %v426 = vsub.s32 0, %v425
    %v427 = vrot.slane %v407, %v426
    %v428 = vlaneseq
    %v429 = vshrl.u32 %v428, 7
    %v430 = vsub.s32 0, %v429
    %v431 = vrot.slane %v411, %v430
    %v432 = vlaneseq
    %v433 = vshrl.u32 %v432, 7
    %v434 = vsub.s32 0, %v433
    %v435 = vrot.slane %v415, %v434
    %v436 = vlaneseq
    %v437 = vshrl.u32 %v436, 7
    %v438 = vsub.s32 0, %v437
    %v439 = vrot.slane %v419, %v438
    %v504 = vunpack.c.l.b16 %v337
    %v505 = vunpack.c.h.b16 %v337
    %v506 = vunpack.c.l.b16 %v338
    %v507 = vunpack.c.h.b16 %v338
    %v508 = vunpack.c.l.b16 %v339
    %v509 = vunpack.c.h.b16 %v339
    %v510 = vunpack.c.l.b16 %v340
    %v511 = vunpack.c.h.b16 %v340
    %v512 = vunpack.c.l.b16 %v341
    %v513 = vunpack.c.h.b16 %v341
    %v514 = vunpack.c.l.b16 %v342
    %v515 = vunpack.c.h.b16 %v342
    %v516 = vunpack.c.l.b16 %v343
    %v517 = vunpack.c.h.b16 %v343
    %v518 = vunpack.c.l.b16 %v344
    %v519 = vunpack.c.h.b16 %v344
    %v520 = vunpack.c.l.b16 %v345
    %v521 = vunpack.c.h.b16 %v345
    %v522 = vunpack.c.l.b16 %v346
    %v523 = vunpack.c.h.b16 %v346
    %v524 = vunpack.c.l.b16 %v347
    %v525 = vunpack.c.h.b16 %v347
    %v526 = vunpack.c.l.b16 %v348
    %v527 = vunpack.c.h.b16 %v348
    %v528 = vunpack.c.l.b16 %v349
    %v529 = vunpack.c.h.b16 %v349
    %v530 = vunpack.c.l.b16 %v350
    %v531 = vunpack.c.h.b16 %v350
    %v532 = vunpack.c.l.b16 %v351
    %v533 = vunpack.c.h.b16 %v351
    %v534 = vunpack.c.l.b16 %v352
    %v535 = vunpack.c.h.b16 %v352
    %v536 = vunpack.c.l.b16 %v353
    %v537 = vunpack.c.h.b16 %v353
    %v538 = vunpack.c.l.b16 %v354
    %v539 = vunpack.c.h.b16 %v354
    %v540 = vunpack.c.l.b16 %v355
    %v541 = vunpack.c.h.b16 %v355
    %v542 = vunpack.c.l.b16 %v356
    %v543 = vunpack.c.h.b16 %v356
    %v544 = vunpack.c.l.b16 %v357
    %v545 = vunpack.c.h.b16 %v357
    %v546 = vunpack.c.l.b16 %v358
    %v547 = vunpack.c.h.b16 %v358
    %v548 = vunpack.c.l.b16 %v359
    %v549 = vunpack.c.h.b16 %v359
    %v550 = vunpack.c.l.b16 %v360
    %v551 = vunpack.c.h.b16 %v360
    %v552 = vunpack.c.l.b16 %v361
    %v553 = vunpack.c.h.b16 %v361
    %v554 = vunpack.c.l.b16 %v362
    %v555 = vunpack.c.h.b16 %v362
    %v556 = vunpack.c.l.b16 %v363
    %v557 = vunpack.c.h.b16 %v363
    %v558 = vunpack.c.l.b16 %v364
    %v559 = vunpack.c.h.b16 %v364
    %v560 = vunpack.c.l.b16 %v365
    %v561 = vunpack.c.h.b16 %v365
    %v562 = vunpack.c.l.b16 %v366
    %v563 = vunpack.c.h.b16 %v366
    %v564 = vunpack.c.l.b16 %v367
    %v565 = vunpack.c.h.b16 %v367
    %v566 = vunpack.c.l.b16 %v368
    %v567 = vunpack.c.h.b16 %v368
    %v568 = vunpack.c.l.b16 %v369
    %v569 = vunpack.c.h.b16 %v369
    %v570 = vunpack.c.l.b16 %v370
    %v571 = vunpack.c.h.b16 %v370
    %v572 = vunpack.c.l.b16 %v371
    %v573 = vunpack.c.h.b16 %v371
    %v574 = vunpack.c.l.b16 %v372
    %v575 = vunpack.c.h.b16 %v372
    %v576 = vunpack.c.l.b16 %v373
    %v577 = vunpack.c.h.b16 %v373
    %v578 = vunpack.c.l.b16 %v374
    %v579 = vunpack.c.h.b16 %v374
    %v580 = vunpack.c.l.b16 %v375
    %v581 = vunpack.c.h.b16 %v375
    %v582 = vunpack.c.l.b16 %v376
    %v583 = vunpack.c.h.b16 %v376
    %v584 = vunpack.c.l.b16 %v377
    %v585 = vunpack.c.h.b16 %v377
    %v586 = vunpack.c.l.b16 %v378
    %v587 = vunpack.c.h.b16 %v378
    %v588 = vunpack.c.l.b16 %v379
    %v589 = vunpack.c.h.b16 %v379
    %v590 = vunpack.c.l.b16 %v380
    %v591 = vunpack.c.h.b16 %v380
    %v592 = vunpack.c.l.b16 %v381
    %v593 = vunpack.c.h.b16 %v381
    %v594 = vunpack.c.l.b16 %v382
    %v595 = vunpack.c.h.b16 %v382
    %v596 = vunpack.c.l.b16 %v383
    %v597 = vunpack.c.h.b16 %v383
    %v598 = vunpack.c.l.b16 %v384
    %v599 = vunpack.c.h.b16 %v384
    %v600 = vunpack.c.l.b16 %v385
    %v601 = vunpack.c.h.b16 %v385
    %v602 = vunpack.c.l.b16 %v386
    %v603 = vunpack.c.h.b16 %v386
    %v604 = vunpack.c.l.b16 %v387
    %v605 = vunpack.c.h.b16 %v387
    %v606 = vunpack.c.l.b16 %v388
    %v607 = vunpack.c.h.b16 %v388
    %v608 = vunpack.c.l.b16 %v389
    %v609 = vunpack.c.h.b16 %v389
    %v610 = vunpack.c.l.b16 %v390
    %v611 = vunpack.c.h.b16 %v390
    %v612 = vunpack.c.l.b16 %v391
    %v613 = vunpack.c.h.b16 %v391
    %v614 = vunpack.c.l.b16 %v392
    %v615 = vunpack.c.h.b16 %v392
    %v616 = vunpack.c.l.b16 %v393
    %v617 = vunpack.c.h.b16 %v393
    %v618 = vunpack.c.l.b16 %v394
    %v619 = vunpack.c.h.b16 %v394
    %v620 = vunpack.c.l.b16 %v395
    %v621 = vunpack.c.h.b16 %v395
    %v622 = vunpack.c.l.b16 %v396
    %v623 = vunpack.c.h.b16 %v396
    %v624 = vunpack.c.l.b16 %v397
    %v625 = vunpack.c.h.b16 %v397
    %v626 = vunpack.c.l.b16 %v398
    %v627 = vunpack.c.h.b16 %v398
    %v628 = vunpack.c.l.b16 %v399
    %v629 = vunpack.c.h.b16 %v399
    %v630 = vunpack.c.l.b16 %v400
    %v631 = vunpack.c.h.b16 %v400
    %v632 = vpack.c.b16 %v508, %v504
    %v633 = vpack.c.b16 %v509, %v505
    %v634 = vpack.c.b16 %v510, %v506
    %v635 = vpack.c.b16 %v511, %v507
    %v636 = vpack.c.b16 %v516, %v512
    %v637 = vpack.c.b16 %v517, %v513
    %v638 = vpack.c.b16 %v518, %v514
    %v639 = vpack.c.b16 %v519, %v515
    %v640 = vpack.c.b16 %v524, %v520
    %v641 = vpack.c.b16 %v525, %v521
    %v642 = vpack.c.b16 %v526, %v522
    %v643 = vpack.c.b16 %v527, %v523
    %v644 = vpack.c.b16 %v532, %v528
    %v645 = vpack.c.b16 %v533, %v529
    %v646 = vpack.c.b16 %v534, %v530
    %v647 = vpack.c.b16 %v535, %v531
    %v648 = vpack.c.b16 %v540, %v536
    %v649 = vpack.c.b16 %v541, %v537
    %v650 = vpack.c.b16 %v542, %v538
    %v651 = vpack.c.b16 %v543, %v539
    %v652 = vpack.c.b16 %v548, %v544
    %v653 = vpack.c.b16 %v549, %v545
    %v654 = vpack.c.b16 %v550, %v546
    %v655 = vpack.c.b16 %v551, %v547
    %v656 = vpack.c.b16 %v556, %v552
    %v657 = vpack.c.b16 %v557, %v553
    %v658 = vpack.c.b16 %v558, %v554
    %v659 = vpack.c.b16 %v559, %v555
    %v660 = vpack.c.b16 %v564, %v560
    %v661 = vpack.c.b16 %v565, %v561
    %v662 = vpack.c.b16 %v566, %v562
    %v663 = vpack.c.b16 %v567, %v563
    %v664 = vpack.c.b16 %v572, %v568
    %v665 = vpack.c.b16 %v573, %v569
    %v666 = vpack.c.b16 %v574, %v570
    %v667 = vpack.c.b16 %v575, %v571
    %v668 = vpack.c.b16 %v580, %v576
    %v669 = vpack.c.b16 %v581, %v577
    %v670 = vpack.c.b16 %v582, %v578
    %v671 = vpack.c.b16 %v583, %v579
    %v672 = vpack.c.b16 %v588, %v584
    %v673 = vpack.c.b16 %v589, %v585
    %v674 = vpack.c.b16 %v590, %v586
    %v675 = vpack.c.b16 %v591, %v587
    %v676 = vpack.c.b16 %v596, %v592
    %v677 = vpack.c.b16 %v597, %v593
    %v678 = vpack.c.b16 %v598, %v594
    %v679 = vpack.c.b16 %v599, %v595
    %v680 = vpack.c.b16 %v604, %v600
    %v681 = vpack.c.b16 %v605, %v601
    %v682 = vpack.c.b16 %v606, %v602
    %v683 = vpack.c.b16 %v607, %v603
    %v684 = vpack.c.b16 %v612, %v608
    %v685 = vpack.c.b16 %v613, %v609
    %v686 = vpack.c.b16 %v614, %v610
    %v687 = vpack.c.b16 %v615, %v611
    %v688 = vpack.c.b16 %v620, %v616
    %v689 = vpack.c.b16 %v621, %v617
    %v690 = vpack.c.b16 %v622, %v618
    %v691 = vpack.c.b16 %v623, %v619
    %v692 = vpack.c.b16 %v628, %v624
    %v693 = vpack.c.b16 %v629, %v625
    %v694 = vpack.c.b16 %v630, %v626
    %v695 = vpack.c.b16 %v631, %v627
    %760 = vmatprep.subr.bf16.mxu0 %v661
    %761 = vmatpush1.bf16.msra.mxu0 %v660
    %762 = vmatprep.subr.bf16.mxu0 %v657
    %763 = vmatpush1.bf16.msra.mxu0 %v656
    %764 = vmatprep.subr.bf16.mxu0 %v653
    %765 = vmatpush1.bf16.msra.mxu0 %v652
    %766 = vmatprep.subr.bf16.mxu0 %v649
    %767 = vmatpush1.bf16.msra.mxu0 %v648
    %768 = vmatprep.subr.bf16.mxu0 %v645
    %769 = vmatpush1.bf16.msra.mxu0 %v644
    %770 = vmatprep.subr.bf16.mxu0 %v641
    %771 = vmatpush1.bf16.msra.mxu0 %v640
    %772 = vmatprep.subr.bf16.mxu0 %v637
    %773 = vmatpush1.bf16.msra.mxu0 %v636
    %774 = vmatprep.subr.bf16.mxu0 %v633
    %775 = vmatpush1.bf16.msra.mxu0 %v632
    %776 = vmatprep.subr.bf16.mxu0 %v693
    %777 = vmatpush2.bf16.msra.mxu0 %v692
    %778 = vmatprep.subr.bf16.mxu0 %v689
    %779 = vmatpush2.bf16.msra.mxu0 %v688
    %780 = vmatprep.subr.bf16.mxu0 %v685
    %781 = vmatpush2.bf16.msra.mxu0 %v684
    %782 = vmatprep.subr.bf16.mxu0 %v681
    %783 = vmatpush2.bf16.msra.mxu0 %v680
    %784 = vmatprep.subr.bf16.mxu0 %v677
    %785 = vmatpush2.bf16.msra.mxu0 %v676
    %786 = vmatprep.subr.bf16.mxu0 %v673
    %787 = vmatpush2.bf16.msra.mxu0 %v672
    %788 = vmatprep.subr.bf16.mxu0 %v669
    %789 = vmatpush2.bf16.msra.mxu0 %v668
    %790 = vmatprep.subr.bf16.mxu0 %v665
    %791 = vmatpush2.bf16.msra.mxu0 %v664
    %792 = vmatprep.mubr.bf16.mxu0 %v402
    %793 = vmatmul.mubr.bf16.gmra.mxu0 %v401
    %v794 = vpop.f32.mrf.mxu0
    %v795 = vadd.f32 %v427, %v794
    %v796 = vpop.f32.mrf.mxu0
    %v797 = vadd.f32 %v431, %v796
    %v798 = vpop.f32.mrf.mxu0
    %v799 = vpop.f32.mrf.mxu0
    %800 = vdwg.mxu0
    %801 = vmatprep.subr.bf16.mxu0 %v663
    %802 = vmatpush1.bf16.msra.mxu0 %v662
    %803 = vmatprep.subr.bf16.mxu0 %v659
    %804 = vmatpush1.bf16.msra.mxu0 %v658
    %805 = vmatprep.subr.bf16.mxu0 %v655
    %806 = vmatpush1.bf16.msra.mxu0 %v654
    %807 = vmatprep.subr.bf16.mxu0 %v651
    %808 = vmatpush1.bf16.msra.mxu0 %v650
    %809 = vmatprep.subr.bf16.mxu0 %v647
    %810 = vmatpush1.bf16.msra.mxu0 %v646
    %811 = vmatprep.subr.bf16.mxu0 %v643
    %812 = vmatpush1.bf16.msra.mxu0 %v642
    %813 = vmatprep.subr.bf16.mxu0 %v639
    %814 = vmatpush1.bf16.msra.mxu0 %v638
    %815 = vmatprep.subr.bf16.mxu0 %v635
    %816 = vmatpush1.bf16.msra.mxu0 %v634
    %817 = vmatprep.subr.bf16.mxu0 %v695
    %818 = vmatpush2.bf16.msra.mxu0 %v694
    %819 = vmatprep.subr.bf16.mxu0 %v691
    %820 = vmatpush2.bf16.msra.mxu0 %v690
    %821 = vmatprep.subr.bf16.mxu0 %v687
    %822 = vmatpush2.bf16.msra.mxu0 %v686
    %823 = vmatprep.subr.bf16.mxu0 %v683
    %824 = vmatpush2.bf16.msra.mxu0 %v682
    %825 = vmatprep.subr.bf16.mxu0 %v679
    %826 = vmatpush2.bf16.msra.mxu0 %v678
    %827 = vmatprep.subr.bf16.mxu0 %v675
    %828 = vmatpush2.bf16.msra.mxu0 %v674
    %829 = vmatprep.subr.bf16.mxu0 %v671
    %830 = vmatpush2.bf16.msra.mxu0 %v670
    %831 = vmatprep.subr.bf16.mxu0 %v667
    %832 = vmatpush2.bf16.msra.mxu0 %v666
    %833 = vmatprep.mubr.bf16.mxu0 %v402
    %834 = vmatmul.mubr.bf16.gmra.mxu0 %v401
    %v835 = vpop.f32.mrf.mxu0
    %v836 = vadd.f32 %v435, %v835
    %v837 = vpop.f32.mrf.mxu0
    %v838 = vadd.f32 %v439, %v837
    %v839 = vpop.f32.mrf.mxu0
    %v840 = vpop.f32.mrf.mxu0
    %841 = vdwg.mxu0
    %v842 = vmax.f32 %v795, 0.0
    %v843 = vmax.f32 %v797, 0.0
    %v844 = vmax.f32 %v836, 0.0
    %v845 = vmax.f32 %v838, 0.0
    %v846 = vld [vmem:[#allocation4] sm:$0xff]
    %v847 = vld [vmem:[#allocation4 + $0x8] sm:$0xff]
    %v848 = vld [vmem:[#allocation4 + $0x10] sm:$0xff]
    %v849 = vld [vmem:[#allocation4 + $0x18] sm:$0xff]
    %v850 = vld [vmem:[#allocation4 + $0x20] sm:$0xff]
    %v851 = vld [vmem:[#allocation4 + $0x28] sm:$0xff]
    %v852 = vld [vmem:[#allocation4 + $0x30] sm:$0xff]
    %v853 = vld [vmem:[#allocation4 + $0x38] sm:$0xff]
    %v854 = vld [vmem:[#allocation4 + $0x40] sm:$0xff]
    %v855 = vld [vmem:[#allocation4 + $0x48] sm:$0xff]
    %v856 = vld [vmem:[#allocation4 + $0x50] sm:$0xff]
    %v857 = vld [vmem:[#allocation4 + $0x58] sm:$0xff]
    %v858 = vld [vmem:[#allocation4 + $0x60] sm:$0xff]
    %v859 = vld [vmem:[#allocation4 + $0x68] sm:$0xff]
    %v860 = vld [vmem:[#allocation4 + $0x70] sm:$0xff]
    %v861 = vld [vmem:[#allocation4 + $0x78] sm:$0xff]
    %v862 = vld [vmem:[#allocation4 + $0x80] sm:$0xff]
    %v863 = vld [vmem:[#allocation4 + $0x88] sm:$0xff]
    %v864 = vld [vmem:[#allocation4 + $0x90] sm:$0xff]
    %v865 = vld [vmem:[#allocation4 + $0x98] sm:$0xff]
    %v866 = vld [vmem:[#allocation4 + $0xa0] sm:$0xff]
    %v867 = vld [vmem:[#allocation4 + $0xa8] sm:$0xff]
    %v868 = vld [vmem:[#allocation4 + $0xb0] sm:$0xff]
    %v869 = vld [vmem:[#allocation4 + $0xb8] sm:$0xff]
    %v870 = vld [vmem:[#allocation4 + $0xc0] sm:$0xff]
    %v871 = vld [vmem:[#allocation4 + $0xc8] sm:$0xff]
    %v872 = vld [vmem:[#allocation4 + $0xd0] sm:$0xff]
    %v873 = vld [vmem:[#allocation4 + $0xd8] sm:$0xff]
    %v874 = vld [vmem:[#allocation4 + $0xe0] sm:$0xff]
    %v875 = vld [vmem:[#allocation4 + $0xe8] sm:$0xff]
    %v876 = vld [vmem:[#allocation4 + $0xf0] sm:$0xff]
    %v877 = vld [vmem:[#allocation4 + $0xf8] sm:$0xff]
    %v878 = vld [vmem:[#allocation4 + $0x100] sm:$0xff]
    %v879 = vld [vmem:[#allocation4 + $0x108] sm:$0xff]
    %v880 = vld [vmem:[#allocation4 + $0x110] sm:$0xff]
    %v881 = vld [vmem:[#allocation4 + $0x118] sm:$0xff]
    %v882 = vld [vmem:[#allocation4 + $0x120] sm:$0xff]
    %v883 = vld [vmem:[#allocation4 + $0x128] sm:$0xff]
    %v884 = vld [vmem:[#allocation4 + $0x130] sm:$0xff]
    %v885 = vld [vmem:[#allocation4 + $0x138] sm:$0xff]
    %v886 = vld [vmem:[#allocation4 + $0x140] sm:$0xff]
    %v887 = vld [vmem:[#allocation4 + $0x148] sm:$0xff]
    %v888 = vld [vmem:[#allocation4 + $0x150] sm:$0xff]
    %v889 = vld [vmem:[#allocation4 + $0x158] sm:$0xff]
    %v890 = vld [vmem:[#allocation4 + $0x160] sm:$0xff]
    %v891 = vld [vmem:[#allocation4 + $0x168] sm:$0xff]
    %v892 = vld [vmem:[#allocation4 + $0x170] sm:$0xff]
    %v893 = vld [vmem:[#allocation4 + $0x178] sm:$0xff]
    %v894 = vld [vmem:[#allocation4 + $0x180] sm:$0xff]
    %v895 = vld [vmem:[#allocation4 + $0x188] sm:$0xff]
    %v896 = vld [vmem:[#allocation4 + $0x190] sm:$0xff]
    %v897 = vld [vmem:[#allocation4 + $0x198] sm:$0xff]
    %v898 = vld [vmem:[#allocation4 + $0x1a0] sm:$0xff]
    %v899 = vld [vmem:[#allocation4 + $0x1a8] sm:$0xff]
    %v900 = vld [vmem:[#allocation4 + $0x1b0] sm:$0xff]
    %v901 = vld [vmem:[#allocation4 + $0x1b8] sm:$0xff]
    %v902 = vld [vmem:[#allocation4 + $0x1c0] sm:$0xff]
    %v903 = vld [vmem:[#allocation4 + $0x1c8] sm:$0xff]
    %v904 = vld [vmem:[#allocation4 + $0x1d0] sm:$0xff]
    %v905 = vld [vmem:[#allocation4 + $0x1d8] sm:$0xff]
    %v906 = vld [vmem:[#allocation4 + $0x1e0] sm:$0xff]
    %v907 = vld [vmem:[#allocation4 + $0x1e8] sm:$0xff]
    %v908 = vld [vmem:[#allocation4 + $0x1f0] sm:$0xff]
    %v909 = vld [vmem:[#allocation4 + $0x1f8] sm:$0xff]
    %v910 = vld [vmem:[#allocation4 + $0x200] sm:$0xff]
    %v911 = vld [vmem:[#allocation4 + $0x208] sm:$0xff]
    %v912 = vld [vmem:[#allocation4 + $0x210] sm:$0xff]
    %v913 = vld [vmem:[#allocation4 + $0x218] sm:$0xff]
    %v914 = vld [vmem:[#allocation4 + $0x220] sm:$0xff]
    %v915 = vld [vmem:[#allocation4 + $0x228] sm:$0xff]
    %v916 = vld [vmem:[#allocation4 + $0x230] sm:$0xff]
    %v917 = vld [vmem:[#allocation4 + $0x238] sm:$0xff]
    %v918 = vld [vmem:[#allocation4 + $0x240] sm:$0xff]
    %v919 = vld [vmem:[#allocation4 + $0x248] sm:$0xff]
    %v920 = vld [vmem:[#allocation4 + $0x250] sm:$0xff]
    %v921 = vld [vmem:[#allocation4 + $0x258] sm:$0xff]
    %v922 = vld [vmem:[#allocation4 + $0x260] sm:$0xff]
    %v923 = vld [vmem:[#allocation4 + $0x268] sm:$0xff]
    %v924 = vld [vmem:[#allocation4 + $0x270] sm:$0xff]
    %v925 = vld [vmem:[#allocation4 + $0x278] sm:$0xff]
    %v926 = vld [vmem:[#allocation4 + $0x280] sm:$0xff]
    %v927 = vld [vmem:[#allocation4 + $0x288] sm:$0xff]
    %v928 = vld [vmem:[#allocation4 + $0x290] sm:$0xff]
    %v929 = vld [vmem:[#allocation4 + $0x298] sm:$0xff]
    %v930 = vld [vmem:[#allocation4 + $0x2a0] sm:$0xff]
    %v931 = vld [vmem:[#allocation4 + $0x2a8] sm:$0xff]
    %v932 = vld [vmem:[#allocation4 + $0x2b0] sm:$0xff]
    %v933 = vld [vmem:[#allocation4 + $0x2b8] sm:$0xff]
    %v934 = vld [vmem:[#allocation4 + $0x2c0] sm:$0xff]
    %v935 = vld [vmem:[#allocation4 + $0x2c8] sm:$0xff]
    %v936 = vld [vmem:[#allocation4 + $0x2d0] sm:$0xff]
    %v937 = vld [vmem:[#allocation4 + $0x2d8] sm:$0xff]
    %v938 = vld [vmem:[#allocation4 + $0x2e0] sm:$0xff]
    %v939 = vld [vmem:[#allocation4 + $0x2e8] sm:$0xff]
    %v940 = vld [vmem:[#allocation4 + $0x2f0] sm:$0xff]
    %v941 = vld [vmem:[#allocation4 + $0x2f8] sm:$0xff]
    %v942 = vld [vmem:[#allocation4 + $0x300] sm:$0xff]
    %v943 = vld [vmem:[#allocation4 + $0x308] sm:$0xff]
    %v944 = vld [vmem:[#allocation4 + $0x310] sm:$0xff]
    %v945 = vld [vmem:[#allocation4 + $0x318] sm:$0xff]
    %v946 = vld [vmem:[#allocation4 + $0x320] sm:$0xff]
    %v947 = vld [vmem:[#allocation4 + $0x328] sm:$0xff]
    %v948 = vld [vmem:[#allocation4 + $0x330] sm:$0xff]
    %v949 = vld [vmem:[#allocation4 + $0x338] sm:$0xff]
    %v950 = vld [vmem:[#allocation4 + $0x340] sm:$0xff]
    %v951 = vld [vmem:[#allocation4 + $0x348] sm:$0xff]
    %v952 = vld [vmem:[#allocation4 + $0x350] sm:$0xff]
    %v953 = vld [vmem:[#allocation4 + $0x358] sm:$0xff]
    %v954 = vld [vmem:[#allocation4 + $0x360] sm:$0xff]
    %v955 = vld [vmem:[#allocation4 + $0x368] sm:$0xff]
    %v956 = vld [vmem:[#allocation4 + $0x370] sm:$0xff]
    %v957 = vld [vmem:[#allocation4 + $0x378] sm:$0xff]
    %v958 = vld [vmem:[#allocation4 + $0x380] sm:$0xff]
    %v959 = vld [vmem:[#allocation4 + $0x388] sm:$0xff]
    %v960 = vld [vmem:[#allocation4 + $0x390] sm:$0xff]
    %v961 = vld [vmem:[#allocation4 + $0x398] sm:$0xff]
    %v962 = vld [vmem:[#allocation4 + $0x3a0] sm:$0xff]
    %v963 = vld [vmem:[#allocation4 + $0x3a8] sm:$0xff]
    %v964 = vld [vmem:[#allocation4 + $0x3b0] sm:$0xff]
    %v965 = vld [vmem:[#allocation4 + $0x3b8] sm:$0xff]
    %v966 = vld [vmem:[#allocation4 + $0x3c0] sm:$0xff]
    %v967 = vld [vmem:[#allocation4 + $0x3c8] sm:$0xff]
    %v968 = vld [vmem:[#allocation4 + $0x3d0] sm:$0xff]
    %v969 = vld [vmem:[#allocation4 + $0x3d8] sm:$0xff]
    %v970 = vld [vmem:[#allocation4 + $0x3e0] sm:$0xff]
    %v971 = vld [vmem:[#allocation4 + $0x3e8] sm:$0xff]
    %v972 = vld [vmem:[#allocation4 + $0x3f0] sm:$0xff]
    %v973 = vld [vmem:[#allocation4 + $0x3f8] sm:$0xff]
    %v974 = vld [vmem:[#allocation4 + $0x400] sm:$0xff]
    %v975 = vld [vmem:[#allocation4 + $0x408] sm:$0xff]
    %v976 = vld [vmem:[#allocation4 + $0x410] sm:$0xff]
    %v977 = vld [vmem:[#allocation4 + $0x418] sm:$0xff]
    %v978 = vld [vmem:[#allocation4 + $0x420] sm:$0xff]
    %v979 = vld [vmem:[#allocation4 + $0x428] sm:$0xff]
    %v980 = vld [vmem:[#allocation4 + $0x430] sm:$0xff]
    %v981 = vld [vmem:[#allocation4 + $0x438] sm:$0xff]
    %v982 = vld [vmem:[#allocation4 + $0x440] sm:$0xff]
    %v983 = vld [vmem:[#allocation4 + $0x448] sm:$0xff]
    %v984 = vld [vmem:[#allocation4 + $0x450] sm:$0xff]
    %v985 = vld [vmem:[#allocation4 + $0x458] sm:$0xff]
    %v986 = vld [vmem:[#allocation4 + $0x460] sm:$0xff]
    %v987 = vld [vmem:[#allocation4 + $0x468] sm:$0xff]
    %v988 = vld [vmem:[#allocation4 + $0x470] sm:$0xff]
    %v989 = vld [vmem:[#allocation4 + $0x478] sm:$0xff]
    %v990 = vld [vmem:[#allocation4 + $0x480] sm:$0xff]
    %v991 = vld [vmem:[#allocation4 + $0x488] sm:$0xff]
    %v992 = vld [vmem:[#allocation4 + $0x490] sm:$0xff]
    %v993 = vld [vmem:[#allocation4 + $0x498] sm:$0xff]
    %v994 = vld [vmem:[#allocation4 + $0x4a0] sm:$0xff]
    %v995 = vld [vmem:[#allocation4 + $0x4a8] sm:$0xff]
    %v996 = vld [vmem:[#allocation4 + $0x4b0] sm:$0xff]
    %v997 = vld [vmem:[#allocation4 + $0x4b8] sm:$0xff]
    %v998 = vld [vmem:[#allocation4 + $0x4c0] sm:$0xff]
    %v999 = vld [vmem:[#allocation4 + $0x4c8] sm:$0xff]
    %v1000 = vld [vmem:[#allocation4 + $0x4d0] sm:$0xff]
    %v1001 = vld [vmem:[#allocation4 + $0x4d8] sm:$0xff]
    %v1002 = vld [vmem:[#allocation4 + $0x4e0] sm:$0xff]
    %v1003 = vld [vmem:[#allocation4 + $0x4e8] sm:$0xff]
    %v1004 = vld [vmem:[#allocation4 + $0x4f0] sm:$0xff]
    %v1005 = vld [vmem:[#allocation4 + $0x4f8] sm:$0xff]
    %v1006 = vld [vmem:[#allocation4 + $0x500] sm:$0xff]
    %v1007 = vld [vmem:[#allocation4 + $0x508] sm:$0xff]
    %v1008 = vld [vmem:[#allocation4 + $0x510] sm:$0xff]
    %v1009 = vld [vmem:[#allocation4 + $0x518] sm:$0xff]
    %v1010 = vld [vmem:[#allocation4 + $0x520] sm:$0xff]
    %v1011 = vld [vmem:[#allocation4 + $0x528] sm:$0xff]
    %v1012 = vld [vmem:[#allocation4 + $0x530] sm:$0xff]
    %v1013 = vld [vmem:[#allocation4 + $0x538] sm:$0xff]
    %v1014 = vld [vmem:[#allocation4 + $0x540] sm:$0xff]
    %v1015 = vld [vmem:[#allocation4 + $0x548] sm:$0xff]
    %v1016 = vld [vmem:[#allocation4 + $0x550] sm:$0xff]
    %v1017 = vld [vmem:[#allocation4 + $0x558] sm:$0xff]
    %v1018 = vld [vmem:[#allocation4 + $0x560] sm:$0xff]
    %v1019 = vld [vmem:[#allocation4 + $0x568] sm:$0xff]
    %v1020 = vld [vmem:[#allocation4 + $0x570] sm:$0xff]
    %v1021 = vld [vmem:[#allocation4 + $0x578] sm:$0xff]
    %v1022 = vld [vmem:[#allocation4 + $0x580] sm:$0xff]
    %v1023 = vld [vmem:[#allocation4 + $0x588] sm:$0xff]
    %v1024 = vld [vmem:[#allocation4 + $0x590] sm:$0xff]
    %v1025 = vld [vmem:[#allocation4 + $0x598] sm:$0xff]
    %v1026 = vld [vmem:[#allocation4 + $0x5a0] sm:$0xff]
    %v1027 = vld [vmem:[#allocation4 + $0x5a8] sm:$0xff]
    %v1028 = vld [vmem:[#allocation4 + $0x5b0] sm:$0xff]
    %v1029 = vld [vmem:[#allocation4 + $0x5b8] sm:$0xff]
    %v1030 = vld [vmem:[#allocation4 + $0x5c0] sm:$0xff]
    %v1031 = vld [vmem:[#allocation4 + $0x5c8] sm:$0xff]
    %v1032 = vld [vmem:[#allocation4 + $0x5d0] sm:$0xff]
    %v1033 = vld [vmem:[#allocation4 + $0x5d8] sm:$0xff]
    %v1034 = vld [vmem:[#allocation4 + $0x5e0] sm:$0xff]
    %v1035 = vld [vmem:[#allocation4 + $0x5e8] sm:$0xff]
    %v1036 = vld [vmem:[#allocation4 + $0x5f0] sm:$0xff]
    %v1037 = vld [vmem:[#allocation4 + $0x5f8] sm:$0xff]
    %v1038 = vld [vmem:[#allocation4 + $0x600] sm:$0xff]
    %v1039 = vld [vmem:[#allocation4 + $0x608] sm:$0xff]
    %v1040 = vld [vmem:[#allocation4 + $0x610] sm:$0xff]
    %v1041 = vld [vmem:[#allocation4 + $0x618] sm:$0xff]
    %v1042 = vld [vmem:[#allocation4 + $0x620] sm:$0xff]
    %v1043 = vld [vmem:[#allocation4 + $0x628] sm:$0xff]
    %v1044 = vld [vmem:[#allocation4 + $0x630] sm:$0xff]
    %v1045 = vld [vmem:[#allocation4 + $0x638] sm:$0xff]
    %v1046 = vld [vmem:[#allocation4 + $0x640] sm:$0xff]
    %v1047 = vld [vmem:[#allocation4 + $0x648] sm:$0xff]
    %v1048 = vld [vmem:[#allocation4 + $0x650] sm:$0xff]
    %v1049 = vld [vmem:[#allocation4 + $0x658] sm:$0xff]
    %v1050 = vld [vmem:[#allocation4 + $0x660] sm:$0xff]
    %v1051 = vld [vmem:[#allocation4 + $0x668] sm:$0xff]
    %v1052 = vld [vmem:[#allocation4 + $0x670] sm:$0xff]
    %v1053 = vld [vmem:[#allocation4 + $0x678] sm:$0xff]
    %v1054 = vld [vmem:[#allocation4 + $0x680] sm:$0xff]
    %v1055 = vld [vmem:[#allocation4 + $0x688] sm:$0xff]
    %v1056 = vld [vmem:[#allocation4 + $0x690] sm:$0xff]
    %v1057 = vld [vmem:[#allocation4 + $0x698] sm:$0xff]
    %v1058 = vld [vmem:[#allocation4 + $0x6a0] sm:$0xff]
    %v1059 = vld [vmem:[#allocation4 + $0x6a8] sm:$0xff]
    %v1060 = vld [vmem:[#allocation4 + $0x6b0] sm:$0xff]
    %v1061 = vld [vmem:[#allocation4 + $0x6b8] sm:$0xff]
    %v1062 = vld [vmem:[#allocation4 + $0x6c0] sm:$0xff]
    %v1063 = vld [vmem:[#allocation4 + $0x6c8] sm:$0xff]
    %v1064 = vld [vmem:[#allocation4 + $0x6d0] sm:$0xff]
    %v1065 = vld [vmem:[#allocation4 + $0x6d8] sm:$0xff]
    %v1066 = vld [vmem:[#allocation4 + $0x6e0] sm:$0xff]
    %v1067 = vld [vmem:[#allocation4 + $0x6e8] sm:$0xff]
    %v1068 = vld [vmem:[#allocation4 + $0x6f0] sm:$0xff]
    %v1069 = vld [vmem:[#allocation4 + $0x6f8] sm:$0xff]
    %v1070 = vld [vmem:[#allocation4 + $0x700] sm:$0xff]
    %v1071 = vld [vmem:[#allocation4 + $0x708] sm:$0xff]
    %v1072 = vld [vmem:[#allocation4 + $0x710] sm:$0xff]
    %v1073 = vld [vmem:[#allocation4 + $0x718] sm:$0xff]
    %v1074 = vld [vmem:[#allocation4 + $0x720] sm:$0xff]
    %v1075 = vld [vmem:[#allocation4 + $0x728] sm:$0xff]
    %v1076 = vld [vmem:[#allocation4 + $0x730] sm:$0xff]
    %v1077 = vld [vmem:[#allocation4 + $0x738] sm:$0xff]
    %v1078 = vld [vmem:[#allocation4 + $0x740] sm:$0xff]
    %v1079 = vld [vmem:[#allocation4 + $0x748] sm:$0xff]
    %v1080 = vld [vmem:[#allocation4 + $0x750] sm:$0xff]
    %v1081 = vld [vmem:[#allocation4 + $0x758] sm:$0xff]
    %v1082 = vld [vmem:[#allocation4 + $0x760] sm:$0xff]
    %v1083 = vld [vmem:[#allocation4 + $0x768] sm:$0xff]
    %v1084 = vld [vmem:[#allocation4 + $0x770] sm:$0xff]
    %v1085 = vld [vmem:[#allocation4 + $0x778] sm:$0xff]
    %v1086 = vld [vmem:[#allocation4 + $0x780] sm:$0xff]
    %v1087 = vld [vmem:[#allocation4 + $0x788] sm:$0xff]
    %v1088 = vld [vmem:[#allocation4 + $0x790] sm:$0xff]
    %v1089 = vld [vmem:[#allocation4 + $0x798] sm:$0xff]
    %v1090 = vld [vmem:[#allocation4 + $0x7a0] sm:$0xff]
    %v1091 = vld [vmem:[#allocation4 + $0x7a8] sm:$0xff]
    %v1092 = vld [vmem:[#allocation4 + $0x7b0] sm:$0xff]
    %v1093 = vld [vmem:[#allocation4 + $0x7b8] sm:$0xff]
    %v1094 = vld [vmem:[#allocation4 + $0x7c0] sm:$0xff]
    %v1095 = vld [vmem:[#allocation4 + $0x7c8] sm:$0xff]
    %v1096 = vld [vmem:[#allocation4 + $0x7d0] sm:$0xff]
    %v1097 = vld [vmem:[#allocation4 + $0x7d8] sm:$0xff]
    %v1098 = vld [vmem:[#allocation4 + $0x7e0] sm:$0xff]
    %v1099 = vld [vmem:[#allocation4 + $0x7e8] sm:$0xff]
    %v1100 = vld [vmem:[#allocation4 + $0x7f0] sm:$0xff]
    %v1101 = vld [vmem:[#allocation4 + $0x7f8] sm:$0xff]
    %v1102 = vpack.c.bf16 %v842, %v842
    %v1103 = vpack.c.bf16 %v843, %v843
    %v1104 = vpack.c.bf16 %v844, %v844
    %v1105 = vpack.c.bf16 %v845, %v845
    %v1110 = vlaneseq
    %v1111 = vshrl.u32 %v1110, 7
    %v1112 = vsub.s32 0, %v1111
    %v1113 = vrot.slane %v147, %v1112
    %v1114 = vlaneseq
    %v1115 = vshrl.u32 %v1114, 7
    %v1116 = vsub.s32 4, %v1115
    %v1117 = vrot.slane %v147, %v1116
    %v1118 = vlaneseq
    %v1119 = vshrl.u32 %v1118, 7
    %v1120 = vsub.s32 0, %v1119
    %v1121 = vrot.slane %v148, %v1120
    %v1122 = vlaneseq
    %v1123 = vshrl.u32 %v1122, 7
    %v1124 = vsub.s32 4, %v1123
    %v1125 = vrot.slane %v148, %v1124
    %v1126 = vlaneseq
    %v1127 = vshrl.u32 %v1126, 7
    %v1128 = vsub.s32 0, %v1127
    %v1129 = vrot.slane %v149, %v1128
    %v1130 = vlaneseq
    %v1131 = vshrl.u32 %v1130, 7
    %v1132 = vsub.s32 4, %v1131
    %v1133 = vrot.slane %v149, %v1132
    %v1134 = vlaneseq
    %v1135 = vshrl.u32 %v1134, 7
    %v1136 = vsub.s32 0, %v1135
    %v1137 = vrot.slane %v150, %v1136
    %v1138 = vlaneseq
    %v1139 = vshrl.u32 %v1138, 7
    %v1140 = vsub.s32 4, %v1139
    %v1141 = vrot.slane %v150, %v1140
    %v1150 = vlaneseq
    %v1151 = vshrl.u32 %v1150, 7
    %v1152 = vsub.s32 0, %v1151
    %v1153 = vrot.slane %v1113, %v1152
    %v1154 = vlaneseq
    %v1155 = vshrl.u32 %v1154, 7
    %v1156 = vsub.s32 0, %v1155
    %v1157 = vrot.slane %v1117, %v1156
    %v1158 = vlaneseq
    %v1159 = vshrl.u32 %v1158, 7
    %v1160 = vsub.s32 0, %v1159
    %v1161 = vrot.slane %v1121, %v1160
    %v1162 = vlaneseq
    %v1163 = vshrl.u32 %v1162, 7
    %v1164 = vsub.s32 0, %v1163
    %v1165 = vrot.slane %v1125, %v1164
    %v1166 = vlaneseq
    %v1167 = vshrl.u32 %v1166, 7
    %v1168 = vsub.s32 0, %v1167
    %v1169 = vrot.slane %v1129, %v1168
    %v1170 = vlaneseq
    %v1171 = vshrl.u32 %v1170, 7
    %v1172 = vsub.s32 0, %v1171
    %v1173 = vrot.slane %v1133, %v1172
    %v1174 = vlaneseq
    %v1175 = vshrl.u32 %v1174, 7
    %v1176 = vsub.s32 0, %v1175
    %v1177 = vrot.slane %v1137, %v1176
    %v1178 = vlaneseq
    %v1179 = vshrl.u32 %v1178, 7
    %v1180 = vsub.s32 0, %v1179
    %v1181 = vrot.slane %v1141, %v1180
    %v1438 = vunpack.c.l.b16 %v846
    %v1439 = vunpack.c.h.b16 %v846
    %v1440 = vunpack.c.l.b16 %v847
    %v1441 = vunpack.c.h.b16 %v847
    %v1442 = vunpack.c.l.b16 %v848
    %v1443 = vunpack.c.h.b16 %v848
    %v1444 = vunpack.c.l.b16 %v849
    %v1445 = vunpack.c.h.b16 %v849
    %v1446 = vunpack.c.l.b16 %v850
    %v1447 = vunpack.c.h.b16 %v850
    %v1448 = vunpack.c.l.b16 %v851
    %v1449 = vunpack.c.h.b16 %v851
    %v1450 = vunpack.c.l.b16 %v852
    %v1451 = vunpack.c.h.b16 %v852
    %v1452 = vunpack.c.l.b16 %v853
    %v1453 = vunpack.c.h.b16 %v853
    %v1454 = vunpack.c.l.b16 %v854
    %v1455 = vunpack.c.h.b16 %v854
    %v1456 = vunpack.c.l.b16 %v855
    %v1457 = vunpack.c.h.b16 %v855
    %v1458 = vunpack.c.l.b16 %v856
    %v1459 = vunpack.c.h.b16 %v856
    %v1460 = vunpack.c.l.b16 %v857
    %v1461 = vunpack.c.h.b16 %v857
    %v1462 = vunpack.c.l.b16 %v858
    %v1463 = vunpack.c.h.b16 %v858
    %v1464 = vunpack.c.l.b16 %v859
    %v1465 = vunpack.c.h.b16 %v859
    %v1466 = vunpack.c.l.b16 %v860
    %v1467 = vunpack.c.h.b16 %v860
    %v1468 = vunpack.c.l.b16 %v861
    %v1469 = vunpack.c.h.b16 %v861
    %v1470 = vunpack.c.l.b16 %v862
    %v1471 = vunpack.c.h.b16 %v862
    %v1472 = vunpack.c.l.b16 %v863
    %v1473 = vunpack.c.h.b16 %v863
    %v1474 = vunpack.c.l.b16 %v864
    %v1475 = vunpack.c.h.b16 %v864
    %v1476 = vunpack.c.l.b16 %v865
    %v1477 = vunpack.c.h.b16 %v865
    %v1478 = vunpack.c.l.b16 %v866
    %v1479 = vunpack.c.h.b16 %v866
    %v1480 = vunpack.c.l.b16 %v867
    %v1481 = vunpack.c.h.b16 %v867
    %v1482 = vunpack.c.l.b16 %v868
    %v1483 = vunpack.c.h.b16 %v868
    %v1484 = vunpack.c.l.b16 %v869
    %v1485 = vunpack.c.h.b16 %v869
    %v1486 = vunpack.c.l.b16 %v870
    %v1487 = vunpack.c.h.b16 %v870
    %v1488 = vunpack.c.l.b16 %v871
    %v1489 = vunpack.c.h.b16 %v871
    %v1490 = vunpack.c.l.b16 %v872
    %v1491 = vunpack.c.h.b16 %v872
    %v1492 = vunpack.c.l.b16 %v873
    %v1493 = vunpack.c.h.b16 %v873
    %v1494 = vunpack.c.l.b16 %v874
    %v1495 = vunpack.c.h.b16 %v874
    %v1496 = vunpack.c.l.b16 %v875
    %v1497 = vunpack.c.h.b16 %v875
    %v1498 = vunpack.c.l.b16 %v876
    %v1499 = vunpack.c.h.b16 %v876
    %v1500 = vunpack.c.l.b16 %v877
    %v1501 = vunpack.c.h.b16 %v877
    %v1502 = vunpack.c.l.b16 %v878
    %v1503 = vunpack.c.h.b16 %v878
    %v1504 = vunpack.c.l.b16 %v879
    %v1505 = vunpack.c.h.b16 %v879
    %v1506 = vunpack.c.l.b16 %v880
    %v1507 = vunpack.c.h.b16 %v880
    %v1508 = vunpack.c.l.b16 %v881
    %v1509 = vunpack.c.h.b16 %v881
    %v1510 = vunpack.c.l.b16 %v882
    %v1511 = vunpack.c.h.b16 %v882
    %v1512 = vunpack.c.l.b16 %v883
    %v1513 = vunpack.c.h.b16 %v883
    %v1514 = vunpack.c.l.b16 %v884
    %v1515 = vunpack.c.h.b16 %v884
    %v1516 = vunpack.c.l.b16 %v885
    %v1517 = vunpack.c.h.b16 %v885
    %v1518 = vunpack.c.l.b16 %v886
    %v1519 = vunpack.c.h.b16 %v886
    %v1520 = vunpack.c.l.b16 %v887
    %v1521 = vunpack.c.h.b16 %v887
    %v1522 = vunpack.c.l.b16 %v888
    %v1523 = vunpack.c.h.b16 %v888
    %v1524 = vunpack.c.l.b16 %v889
    %v1525 = vunpack.c.h.b16 %v889
    %v1526 = vunpack.c.l.b16 %v890
    %v1527 = vunpack.c.h.b16 %v890
    %v1528 = vunpack.c.l.b16 %v891
    %v1529 = vunpack.c.h.b16 %v891
    %v1530 = vunpack.c.l.b16 %v892
    %v1531 = vunpack.c.h.b16 %v892
    %v1532 = vunpack.c.l.b16 %v893
    %v1533 = vunpack.c.h.b16 %v893
    %v1534 = vunpack.c.l.b16 %v894
    %v1535 = vunpack.c.h.b16 %v894
    %v1536 = vunpack.c.l.b16 %v895
    %v1537 = vunpack.c.h.b16 %v895
    %v1538 = vunpack.c.l.b16 %v896
    %v1539 = vunpack.c.h.b16 %v896
    %v1540 = vunpack.c.l.b16 %v897
    %v1541 = vunpack.c.h.b16 %v897
    %v1542 = vunpack.c.l.b16 %v898
    %v1543 = vunpack.c.h.b16 %v898
    %v1544 = vunpack.c.l.b16 %v899
    %v1545 = vunpack.c.h.b16 %v899
    %v1546 = vunpack.c.l.b16 %v900
    %v1547 = vunpack.c.h.b16 %v900
    %v1548 = vunpack.c.l.b16 %v901
    %v1549 = vunpack.c.h.b16 %v901
    %v1550 = vunpack.c.l.b16 %v902
    %v1551 = vunpack.c.h.b16 %v902
    %v1552 = vunpack.c.l.b16 %v903
    %v1553 = vunpack.c.h.b16 %v903
    %v1554 = vunpack.c.l.b16 %v904
    %v1555 = vunpack.c.h.b16 %v904
    %v1556 = vunpack.c.l.b16 %v905
    %v1557 = vunpack.c.h.b16 %v905
    %v1558 = vunpack.c.l.b16 %v906
    %v1559 = vunpack.c.h.b16 %v906
    %v1560 = vunpack.c.l.b16 %v907
    %v1561 = vunpack.c.h.b16 %v907
    %v1562 = vunpack.c.l.b16 %v908
    %v1563 = vunpack.c.h.b16 %v908
    %v1564 = vunpack.c.l.b16 %v909
    %v1565 = vunpack.c.h.b16 %v909
    %v1566 = vunpack.c.l.b16 %v910
    %v1567 = vunpack.c.h.b16 %v910
    %v1568 = vunpack.c.l.b16 %v911
    %v1569 = vunpack.c.h.b16 %v911
    %v1570 = vunpack.c.l.b16 %v912
    %v1571 = vunpack.c.h.b16 %v912
    %v1572 = vunpack.c.l.b16 %v913
    %v1573 = vunpack.c.h.b16 %v913
    %v1574 = vunpack.c.l.b16 %v914
    %v1575 = vunpack.c.h.b16 %v914
    %v1576 = vunpack.c.l.b16 %v915
    %v1577 = vunpack.c.h.b16 %v915
    %v1578 = vunpack.c.l.b16 %v916
    %v1579 = vunpack.c.h.b16 %v916
    %v1580 = vunpack.c.l.b16 %v917
    %v1581 = vunpack.c.h.b16 %v917
    %v1582 = vunpack.c.l.b16 %v918
    %v1583 = vunpack.c.h.b16 %v918
    %v1584 = vunpack.c.l.b16 %v919
    %v1585 = vunpack.c.h.b16 %v919
    %v1586 = vunpack.c.l.b16 %v920
    %v1587 = vunpack.c.h.b16 %v920
    %v1588 = vunpack.c.l.b16 %v921
    %v1589 = vunpack.c.h.b16 %v921
    %v1590 = vunpack.c.l.b16 %v922
    %v1591 = vunpack.c.h.b16 %v922
    %v1592 = vunpack.c.l.b16 %v923
    %v1593 = vunpack.c.h.b16 %v923
    %v1594 = vunpack.c.l.b16 %v924
    %v1595 = vunpack.c.h.b16 %v924
    %v1596 = vunpack.c.l.b16 %v925
    %v1597 = vunpack.c.h.b16 %v925
    %v1598 = vunpack.c.l.b16 %v926
    %v1599 = vunpack.c.h.b16 %v926
    %v1600 = vunpack.c.l.b16 %v927
    %v1601 = vunpack.c.h.b16 %v927
    %v1602 = vunpack.c.l.b16 %v928
    %v1603 = vunpack.c.h.b16 %v928
    %v1604 = vunpack.c.l.b16 %v929
    %v1605 = vunpack.c.h.b16 %v929
    %v1606 = vunpack.c.l.b16 %v930
    %v1607 = vunpack.c.h.b16 %v930
    %v1608 = vunpack.c.l.b16 %v931
    %v1609 = vunpack.c.h.b16 %v931
    %v1610 = vunpack.c.l.b16 %v932
    %v1611 = vunpack.c.h.b16 %v932
    %v1612 = vunpack.c.l.b16 %v933
    %v1613 = vunpack.c.h.b16 %v933
    %v1614 = vunpack.c.l.b16 %v934
    %v1615 = vunpack.c.h.b16 %v934
    %v1616 = vunpack.c.l.b16 %v935
    %v1617 = vunpack.c.h.b16 %v935
    %v1618 = vunpack.c.l.b16 %v936
    %v1619 = vunpack.c.h.b16 %v936
    %v1620 = vunpack.c.l.b16 %v937
    %v1621 = vunpack.c.h.b16 %v937
    %v1622 = vunpack.c.l.b16 %v938
    %v1623 = vunpack.c.h.b16 %v938
    %v1624 = vunpack.c.l.b16 %v939
    %v1625 = vunpack.c.h.b16 %v939
    %v1626 = vunpack.c.l.b16 %v940
    %v1627 = vunpack.c.h.b16 %v940
    %v1628 = vunpack.c.l.b16 %v941
    %v1629 = vunpack.c.h.b16 %v941
    %v1630 = vunpack.c.l.b16 %v942
    %v1631 = vunpack.c.h.b16 %v942
    %v1632 = vunpack.c.l.b16 %v943
    %v1633 = vunpack.c.h.b16 %v943
    %v1634 = vunpack.c.l.b16 %v944
    %v1635 = vunpack.c.h.b16 %v944
    %v1636 = vunpack.c.l.b16 %v945
    %v1637 = vunpack.c.h.b16 %v945
    %v1638 = vunpack.c.l.b16 %v946
    %v1639 = vunpack.c.h.b16 %v946
    %v1640 = vunpack.c.l.b16 %v947
    %v1641 = vunpack.c.h.b16 %v947
    %v1642 = vunpack.c.l.b16 %v948
    %v1643 = vunpack.c.h.b16 %v948
    %v1644 = vunpack.c.l.b16 %v949
    %v1645 = vunpack.c.h.b16 %v949
    %v1646 = vunpack.c.l.b16 %v950
    %v1647 = vunpack.c.h.b16 %v950
    %v1648 = vunpack.c.l.b16 %v951
    %v1649 = vunpack.c.h.b16 %v951
    %v1650 = vunpack.c.l.b16 %v952
    %v1651 = vunpack.c.h.b16 %v952
    %v1652 = vunpack.c.l.b16 %v953
    %v1653 = vunpack.c.h.b16 %v953
    %v1654 = vunpack.c.l.b16 %v954
    %v1655 = vunpack.c.h.b16 %v954
    %v1656 = vunpack.c.l.b16 %v955
    %v1657 = vunpack.c.h.b16 %v955
    %v1658 = vunpack.c.l.b16 %v956
    %v1659 = vunpack.c.h.b16 %v956
    %v1660 = vunpack.c.l.b16 %v957
    %v1661 = vunpack.c.h.b16 %v957
    %v1662 = vunpack.c.l.b16 %v958
    %v1663 = vunpack.c.h.b16 %v958
    %v1664 = vunpack.c.l.b16 %v959
    %v1665 = vunpack.c.h.b16 %v959
    %v1666 = vunpack.c.l.b16 %v960
    %v1667 = vunpack.c.h.b16 %v960
    %v1668 = vunpack.c.l.b16 %v961
    %v1669 = vunpack.c.h.b16 %v961
    %v1670 = vunpack.c.l.b16 %v962
    %v1671 = vunpack.c.h.b16 %v962
    %v1672 = vunpack.c.l.b16 %v963
    %v1673 = vunpack.c.h.b16 %v963
    %v1674 = vunpack.c.l.b16 %v964
    %v1675 = vunpack.c.h.b16 %v964
    %v1676 = vunpack.c.l.b16 %v965
    %v1677 = vunpack.c.h.b16 %v965
    %v1678 = vunpack.c.l.b16 %v966
    %v1679 = vunpack.c.h.b16 %v966
    %v1680 = vunpack.c.l.b16 %v967
    %v1681 = vunpack.c.h.b16 %v967
    %v1682 = vunpack.c.l.b16 %v968
    %v1683 = vunpack.c.h.b16 %v968
    %v1684 = vunpack.c.l.b16 %v969
    %v1685 = vunpack.c.h.b16 %v969
    %v1686 = vunpack.c.l.b16 %v970
    %v1687 = vunpack.c.h.b16 %v970
    %v1688 = vunpack.c.l.b16 %v971
    %v1689 = vunpack.c.h.b16 %v971
    %v1690 = vunpack.c.l.b16 %v972
    %v1691 = vunpack.c.h.b16 %v972
    %v1692 = vunpack.c.l.b16 %v973
    %v1693 = vunpack.c.h.b16 %v973
    %v1694 = vunpack.c.l.b16 %v974
    %v1695 = vunpack.c.h.b16 %v974
    %v1696 = vunpack.c.l.b16 %v975
    %v1697 = vunpack.c.h.b16 %v975
    %v1698 = vunpack.c.l.b16 %v976
    %v1699 = vunpack.c.h.b16 %v976
    %v1700 = vunpack.c.l.b16 %v977
    %v1701 = vunpack.c.h.b16 %v977
    %v1702 = vunpack.c.l.b16 %v978
    %v1703 = vunpack.c.h.b16 %v978
    %v1704 = vunpack.c.l.b16 %v979
    %v1705 = vunpack.c.h.b16 %v979
    %v1706 = vunpack.c.l.b16 %v980
    %v1707 = vunpack.c.h.b16 %v980
    %v1708 = vunpack.c.l.b16 %v981
    %v1709 = vunpack.c.h.b16 %v981
    %v1710 = vunpack.c.l.b16 %v982
    %v1711 = vunpack.c.h.b16 %v982
    %v1712 = vunpack.c.l.b16 %v983
    %v1713 = vunpack.c.h.b16 %v983
    %v1714 = vunpack.c.l.b16 %v984
    %v1715 = vunpack.c.h.b16 %v984
    %v1716 = vunpack.c.l.b16 %v985
    %v1717 = vunpack.c.h.b16 %v985
    %v1718 = vunpack.c.l.b16 %v986
    %v1719 = vunpack.c.h.b16 %v986
    %v1720 = vunpack.c.l.b16 %v987
    %v1721 = vunpack.c.h.b16 %v987
    %v1722 = vunpack.c.l.b16 %v988
    %v1723 = vunpack.c.h.b16 %v988
    %v1724 = vunpack.c.l.b16 %v989
    %v1725 = vunpack.c.h.b16 %v989
    %v1726 = vunpack.c.l.b16 %v990
    %v1727 = vunpack.c.h.b16 %v990
    %v1728 = vunpack.c.l.b16 %v991
    %v1729 = vunpack.c.h.b16 %v991
    %v1730 = vunpack.c.l.b16 %v992
    %v1731 = vunpack.c.h.b16 %v992
    %v1732 = vunpack.c.l.b16 %v993
    %v1733 = vunpack.c.h.b16 %v993
    %v1734 = vunpack.c.l.b16 %v994
    %v1735 = vunpack.c.h.b16 %v994
    %v1736 = vunpack.c.l.b16 %v995
    %v1737 = vunpack.c.h.b16 %v995
    %v1738 = vunpack.c.l.b16 %v996
    %v1739 = vunpack.c.h.b16 %v996
    %v1740 = vunpack.c.l.b16 %v997
    %v1741 = vunpack.c.h.b16 %v997
    %v1742 = vunpack.c.l.b16 %v998
    %v1743 = vunpack.c.h.b16 %v998
    %v1744 = vunpack.c.l.b16 %v999
    %v1745 = vunpack.c.h.b16 %v999
    %v1746 = vunpack.c.l.b16 %v1000
    %v1747 = vunpack.c.h.b16 %v1000
    %v1748 = vunpack.c.l.b16 %v1001
    %v1749 = vunpack.c.h.b16 %v1001
    %v1750 = vunpack.c.l.b16 %v1002
    %v1751 = vunpack.c.h.b16 %v1002
    %v1752 = vunpack.c.l.b16 %v1003
    %v1753 = vunpack.c.h.b16 %v1003
    %v1754 = vunpack.c.l.b16 %v1004
    %v1755 = vunpack.c.h.b16 %v1004
    %v1756 = vunpack.c.l.b16 %v1005
    %v1757 = vunpack.c.h.b16 %v1005
    %v1758 = vunpack.c.l.b16 %v1006
    %v1759 = vunpack.c.h.b16 %v1006
    %v1760 = vunpack.c.l.b16 %v1007
    %v1761 = vunpack.c.h.b16 %v1007
    %v1762 = vunpack.c.l.b16 %v1008
    %v1763 = vunpack.c.h.b16 %v1008
    %v1764 = vunpack.c.l.b16 %v1009
    %v1765 = vunpack.c.h.b16 %v1009
    %v1766 = vunpack.c.l.b16 %v1010
    %v1767 = vunpack.c.h.b16 %v1010
    %v1768 = vunpack.c.l.b16 %v1011
    %v1769 = vunpack.c.h.b16 %v1011
    %v1770 = vunpack.c.l.b16 %v1012
    %v1771 = vunpack.c.h.b16 %v1012
    %v1772 = vunpack.c.l.b16 %v1013
    %v1773 = vunpack.c.h.b16 %v1013
    %v1774 = vunpack.c.l.b16 %v1014
    %v1775 = vunpack.c.h.b16 %v1014
    %v1776 = vunpack.c.l.b16 %v1015
    %v1777 = vunpack.c.h.b16 %v1015
    %v1778 = vunpack.c.l.b16 %v1016
    %v1779 = vunpack.c.h.b16 %v1016
    %v1780 = vunpack.c.l.b16 %v1017
    %v1781 = vunpack.c.h.b16 %v1017
    %v1782 = vunpack.c.l.b16 %v1018
    %v1783 = vunpack.c.h.b16 %v1018
    %v1784 = vunpack.c.l.b16 %v1019
    %v1785 = vunpack.c.h.b16 %v1019
    %v1786 = vunpack.c.l.b16 %v1020
    %v1787 = vunpack.c.h.b16 %v1020
    %v1788 = vunpack.c.l.b16 %v1021
    %v1789 = vunpack.c.h.b16 %v1021
    %v1790 = vunpack.c.l.b16 %v1022
    %v1791 = vunpack.c.h.b16 %v1022
    %v1792 = vunpack.c.l.b16 %v1023
    %v1793 = vunpack.c.h.b16 %v1023
    %v1794 = vunpack.c.l.b16 %v1024
    %v1795 = vunpack.c.h.b16 %v1024
    %v1796 = vunpack.c.l.b16 %v1025
    %v1797 = vunpack.c.h.b16 %v1025
    %v1798 = vunpack.c.l.b16 %v1026
    %v1799 = vunpack.c.h.b16 %v1026
    %v1800 = vunpack.c.l.b16 %v1027
    %v1801 = vunpack.c.h.b16 %v1027
    %v1802 = vunpack.c.l.b16 %v1028
    %v1803 = vunpack.c.h.b16 %v1028
    %v1804 = vunpack.c.l.b16 %v1029
    %v1805 = vunpack.c.h.b16 %v1029
    %v1806 = vunpack.c.l.b16 %v1030
    %v1807 = vunpack.c.h.b16 %v1030
    %v1808 = vunpack.c.l.b16 %v1031
    %v1809 = vunpack.c.h.b16 %v1031
    %v1810 = vunpack.c.l.b16 %v1032
    %v1811 = vunpack.c.h.b16 %v1032
    %v1812 = vunpack.c.l.b16 %v1033
    %v1813 = vunpack.c.h.b16 %v1033
    %v1814 = vunpack.c.l.b16 %v1034
    %v1815 = vunpack.c.h.b16 %v1034
    %v1816 = vunpack.c.l.b16 %v1035
    %v1817 = vunpack.c.h.b16 %v1035
    %v1818 = vunpack.c.l.b16 %v1036
    %v1819 = vunpack.c.h.b16 %v1036
    %v1820 = vunpack.c.l.b16 %v1037
    %v1821 = vunpack.c.h.b16 %v1037
    %v1822 = vunpack.c.l.b16 %v1038
    %v1823 = vunpack.c.h.b16 %v1038
    %v1824 = vunpack.c.l.b16 %v1039
    %v1825 = vunpack.c.h.b16 %v1039
    %v1826 = vunpack.c.l.b16 %v1040
    %v1827 = vunpack.c.h.b16 %v1040
    %v1828 = vunpack.c.l.b16 %v1041
    %v1829 = vunpack.c.h.b16 %v1041
    %v1830 = vunpack.c.l.b16 %v1042
    %v1831 = vunpack.c.h.b16 %v1042
    %v1832 = vunpack.c.l.b16 %v1043
    %v1833 = vunpack.c.h.b16 %v1043
    %v1834 = vunpack.c.l.b16 %v1044
    %v1835 = vunpack.c.h.b16 %v1044
    %v1836 = vunpack.c.l.b16 %v1045
    %v1837 = vunpack.c.h.b16 %v1045
    %v1838 = vunpack.c.l.b16 %v1046
    %v1839 = vunpack.c.h.b16 %v1046
    %v1840 = vunpack.c.l.b16 %v1047
    %v1841 = vunpack.c.h.b16 %v1047
    %v1842 = vunpack.c.l.b16 %v1048
    %v1843 = vunpack.c.h.b16 %v1048
    %v1844 = vunpack.c.l.b16 %v1049
    %v1845 = vunpack.c.h.b16 %v1049
    %v1846 = vunpack.c.l.b16 %v1050
    %v1847 = vunpack.c.h.b16 %v1050
    %v1848 = vunpack.c.l.b16 %v1051
    %v1849 = vunpack.c.h.b16 %v1051
    %v1850 = vunpack.c.l.b16 %v1052
    %v1851 = vunpack.c.h.b16 %v1052
    %v1852 = vunpack.c.l.b16 %v1053
    %v1853 = vunpack.c.h.b16 %v1053
    %v1854 = vunpack.c.l.b16 %v1054
    %v1855 = vunpack.c.h.b16 %v1054
    %v1856 = vunpack.c.l.b16 %v1055
    %v1857 = vunpack.c.h.b16 %v1055
    %v1858 = vunpack.c.l.b16 %v1056
    %v1859 = vunpack.c.h.b16 %v1056
    %v1860 = vunpack.c.l.b16 %v1057
    %v1861 = vunpack.c.h.b16 %v1057
    %v1862 = vunpack.c.l.b16 %v1058
    %v1863 = vunpack.c.h.b16 %v1058
    %v1864 = vunpack.c.l.b16 %v1059
    %v1865 = vunpack.c.h.b16 %v1059
    %v1866 = vunpack.c.l.b16 %v1060
    %v1867 = vunpack.c.h.b16 %v1060
    %v1868 = vunpack.c.l.b16 %v1061
    %v1869 = vunpack.c.h.b16 %v1061
    %v1870 = vunpack.c.l.b16 %v1062
    %v1871 = vunpack.c.h.b16 %v1062
    %v1872 = vunpack.c.l.b16 %v1063
    %v1873 = vunpack.c.h.b16 %v1063
    %v1874 = vunpack.c.l.b16 %v1064
    %v1875 = vunpack.c.h.b16 %v1064
    %v1876 = vunpack.c.l.b16 %v1065
    %v1877 = vunpack.c.h.b16 %v1065
    %v1878 = vunpack.c.l.b16 %v1066
    %v1879 = vunpack.c.h.b16 %v1066
    %v1880 = vunpack.c.l.b16 %v1067
    %v1881 = vunpack.c.h.b16 %v1067
    %v1882 = vunpack.c.l.b16 %v1068
    %v1883 = vunpack.c.h.b16 %v1068
    %v1884 = vunpack.c.l.b16 %v1069
    %v1885 = vunpack.c.h.b16 %v1069
    %v1886 = vunpack.c.l.b16 %v1070
    %v1887 = vunpack.c.h.b16 %v1070
    %v1888 = vunpack.c.l.b16 %v1071
    %v1889 = vunpack.c.h.b16 %v1071
    %v1890 = vunpack.c.l.b16 %v1072
    %v1891 = vunpack.c.h.b16 %v1072
    %v1892 = vunpack.c.l.b16 %v1073
    %v1893 = vunpack.c.h.b16 %v1073
    %v1894 = vunpack.c.l.b16 %v1074
    %v1895 = vunpack.c.h.b16 %v1074
    %v1896 = vunpack.c.l.b16 %v1075
    %v1897 = vunpack.c.h.b16 %v1075
    %v1898 = vunpack.c.l.b16 %v1076
    %v1899 = vunpack.c.h.b16 %v1076
    %v1900 = vunpack.c.l.b16 %v1077
    %v1901 = vunpack.c.h.b16 %v1077
    %v1902 = vunpack.c.l.b16 %v1078
    %v1903 = vunpack.c.h.b16 %v1078
    %v1904 = vunpack.c.l.b16 %v1079
    %v1905 = vunpack.c.h.b16 %v1079
    %v1906 = vunpack.c.l.b16 %v1080
    %v1907 = vunpack.c.h.b16 %v1080
    %v1908 = vunpack.c.l.b16 %v1081
    %v1909 = vunpack.c.h.b16 %v1081
    %v1910 = vunpack.c.l.b16 %v1082
    %v1911 = vunpack.c.h.b16 %v1082
    %v1912 = vunpack.c.l.b16 %v1083
    %v1913 = vunpack.c.h.b16 %v1083
    %v1914 = vunpack.c.l.b16 %v1084
    %v1915 = vunpack.c.h.b16 %v1084
    %v1916 = vunpack.c.l.b16 %v1085
    %v1917 = vunpack.c.h.b16 %v1085
    %v1918 = vunpack.c.l.b16 %v1086
    %v1919 = vunpack.c.h.b16 %v1086
    %v1920 = vunpack.c.l.b16 %v1087
    %v1921 = vunpack.c.h.b16 %v1087
    %v1922 = vunpack.c.l.b16 %v1088
    %v1923 = vunpack.c.h.b16 %v1088
    %v1924 = vunpack.c.l.b16 %v1089
    %v1925 = vunpack.c.h.b16 %v1089
    %v1926 = vunpack.c.l.b16 %v1090
    %v1927 = vunpack.c.h.b16 %v1090
    %v1928 = vunpack.c.l.b16 %v1091
    %v1929 = vunpack.c.h.b16 %v1091
    %v1930 = vunpack.c.l.b16 %v1092
    %v1931 = vunpack.c.h.b16 %v1092
    %v1932 = vunpack.c.l.b16 %v1093
    %v1933 = vunpack.c.h.b16 %v1093
    %v1934 = vunpack.c.l.b16 %v1094
    %v1935 = vunpack.c.h.b16 %v1094
    %v1936 = vunpack.c.l.b16 %v1095
    %v1937 = vunpack.c.h.b16 %v1095
    %v1938 = vunpack.c.l.b16 %v1096
    %v1939 = vunpack.c.h.b16 %v1096
    %v1940 = vunpack.c.l.b16 %v1097
    %v1941 = vunpack.c.h.b16 %v1097
    %v1942 = vunpack.c.l.b16 %v1098
    %v1943 = vunpack.c.h.b16 %v1098
    %v1944 = vunpack.c.l.b16 %v1099
    %v1945 = vunpack.c.h.b16 %v1099
    %v1946 = vunpack.c.l.b16 %v1100
    %v1947 = vunpack.c.h.b16 %v1100
    %v1948 = vunpack.c.l.b16 %v1101
    %v1949 = vunpack.c.h.b16 %v1101
    %v1950 = vpack.c.b16 %v1446, %v1438
    %v1951 = vpack.c.b16 %v1447, %v1439
    %v1952 = vpack.c.b16 %v1448, %v1440
    %v1953 = vpack.c.b16 %v1449, %v1441
    %v1954 = vpack.c.b16 %v1450, %v1442
    %v1955 = vpack.c.b16 %v1451, %v1443
    %v1956 = vpack.c.b16 %v1452, %v1444
    %v1957 = vpack.c.b16 %v1453, %v1445
    %v1958 = vpack.c.b16 %v1462, %v1454
    %v1959 = vpack.c.b16 %v1463, %v1455
    %v1960 = vpack.c.b16 %v1464, %v1456
    %v1961 = vpack.c.b16 %v1465, %v1457
    %v1962 = vpack.c.b16 %v1466, %v1458
    %v1963 = vpack.c.b16 %v1467, %v1459
    %v1964 = vpack.c.b16 %v1468, %v1460
    %v1965 = vpack.c.b16 %v1469, %v1461
    %v1966 = vpack.c.b16 %v1478, %v1470
    %v1967 = vpack.c.b16 %v1479, %v1471
    %v1968 = vpack.c.b16 %v1480, %v1472
    %v1969 = vpack.c.b16 %v1481, %v1473
    %v1970 = vpack.c.b16 %v1482, %v1474
    %v1971 = vpack.c.b16 %v1483, %v1475
    %v1972 = vpack.c.b16 %v1484, %v1476
    %v1973 = vpack.c.b16 %v1485, %v1477
    %v1974 = vpack.c.b16 %v1494, %v1486
    %v1975 = vpack.c.b16 %v1495, %v1487
    %v1976 = vpack.c.b16 %v1496, %v1488
    %v1977 = vpack.c.b16 %v1497, %v1489
    %v1978 = vpack.c.b16 %v1498, %v1490
    %v1979 = vpack.c.b16 %v1499, %v1491
    %v1980 = vpack.c.b16 %v1500, %v1492
    %v1981 = vpack.c.b16 %v1501, %v1493
    %v1982 = vpack.c.b16 %v1510, %v1502
    %v1983 = vpack.c.b16 %v1511, %v1503
    %v1984 = vpack.c.b16 %v1512, %v1504
    %v1985 = vpack.c.b16 %v1513, %v1505
    %v1986 = vpack.c.b16 %v1514, %v1506
    %v1987 = vpack.c.b16 %v1515, %v1507
    %v1988 = vpack.c.b16 %v1516, %v1508
    %v1989 = vpack.c.b16 %v1517, %v1509
    %v1990 = vpack.c.b16 %v1526, %v1518
    %v1991 = vpack.c.b16 %v1527, %v1519
    %v1992 = vpack.c.b16 %v1528, %v1520
    %v1993 = vpack.c.b16 %v1529, %v1521
    %v1994 = vpack.c.b16 %v1530, %v1522
    %v1995 = vpack.c.b16 %v1531, %v1523
    %v1996 = vpack.c.b16 %v1532, %v1524
    %v1997 = vpack.c.b16 %v1533, %v1525
    %v1998 = vpack.c.b16 %v1542, %v1534
    %v1999 = vpack.c.b16 %v1543, %v1535
    %v2000 = vpack.c.b16 %v1544, %v1536
    %v2001 = vpack.c.b16 %v1545, %v1537
    %v2002 = vpack.c.b16 %v1546, %v1538
    %v2003 = vpack.c.b16 %v1547, %v1539
    %v2004 = vpack.c.b16 %v1548, %v1540
    %v2005 = vpack.c.b16 %v1549, %v1541
    %v2006 = vpack.c.b16 %v1558, %v1550
    %v2007 = vpack.c.b16 %v1559, %v1551
    %v2008 = vpack.c.b16 %v1560, %v1552
    %v2009 = vpack.c.b16 %v1561, %v1553
    %v2010 = vpack.c.b16 %v1562, %v1554
    %v2011 = vpack.c.b16 %v1563, %v1555
    %v2012 = vpack.c.b16 %v1564, %v1556
    %v2013 = vpack.c.b16 %v1565, %v1557
    %v2014 = vpack.c.b16 %v1574, %v1566
    %v2015 = vpack.c.b16 %v1575, %v1567
    %v2016 = vpack.c.b16 %v1576, %v1568
    %v2017 = vpack.c.b16 %v1577, %v1569
    %v2018 = vpack.c.b16 %v1578, %v1570
    %v2019 = vpack.c.b16 %v1579, %v1571
    %v2020 = vpack.c.b16 %v1580, %v1572
    %v2021 = vpack.c.b16 %v1581, %v1573
    %v2022 = vpack.c.b16 %v1590, %v1582
    %v2023 = vpack.c.b16 %v1591, %v1583
    %v2024 = vpack.c.b16 %v1592, %v1584
    %v2025 = vpack.c.b16 %v1593, %v1585
    %v2026 = vpack.c.b16 %v1594, %v1586
    %v2027 = vpack.c.b16 %v1595, %v1587
    %v2028 = vpack.c.b16 %v1596, %v1588
    %v2029 = vpack.c.b16 %v1597, %v1589
    %v2030 = vpack.c.b16 %v1606, %v1598
    %v2031 = vpack.c.b16 %v1607, %v1599
    %v2032 = vpack.c.b16 %v1608, %v1600
    %v2033 = vpack.c.b16 %v1609, %v1601
    %v2034 = vpack.c.b16 %v1610, %v1602
    %v2035 = vpack.c.b16 %v1611, %v1603
    %v2036 = vpack.c.b16 %v1612, %v1604
    %v2037 = vpack.c.b16 %v1613, %v1605
    %v2038 = vpack.c.b16 %v1622, %v1614
    %v2039 = vpack.c.b16 %v1623, %v1615
    %v2040 = vpack.c.b16 %v1624, %v1616
    %v2041 = vpack.c.b16 %v1625, %v1617
    %v2042 = vpack.c.b16 %v1626, %v1618
    %v2043 = vpack.c.b16 %v1627, %v1619
    %v2044 = vpack.c.b16 %v1628, %v1620
    %v2045 = vpack.c.b16 %v1629, %v1621
    %v2046 = vpack.c.b16 %v1638, %v1630
    %v2047 = vpack.c.b16 %v1639, %v1631
    %v2048 = vpack.c.b16 %v1640, %v1632
    %v2049 = vpack.c.b16 %v1641, %v1633
    %v2050 = vpack.c.b16 %v1642, %v1634
    %v2051 = vpack.c.b16 %v1643, %v1635
    %v2052 = vpack.c.b16 %v1644, %v1636
    %v2053 = vpack.c.b16 %v1645, %v1637
    %v2054 = vpack.c.b16 %v1654, %v1646
    %v2055 = vpack.c.b16 %v1655, %v1647
    %v2056 = vpack.c.b16 %v1656, %v1648
    %v2057 = vpack.c.b16 %v1657, %v1649
    %v2058 = vpack.c.b16 %v1658, %v1650
    %v2059 = vpack.c.b16 %v1659, %v1651
    %v2060 = vpack.c.b16 %v1660, %v1652
    %v2061 = vpack.c.b16 %v1661, %v1653
    %v2062 = vpack.c.b16 %v1670, %v1662
    %v2063 = vpack.c.b16 %v1671, %v1663
    %v2064 = vpack.c.b16 %v1672, %v1664
    %v2065 = vpack.c.b16 %v1673, %v1665
    %v2066 = vpack.c.b16 %v1674, %v1666
    %v2067 = vpack.c.b16 %v1675, %v1667
    %v2068 = vpack.c.b16 %v1676, %v1668
    %v2069 = vpack.c.b16 %v1677, %v1669
    %v2070 = vpack.c.b16 %v1686, %v1678
    %v2071 = vpack.c.b16 %v1687, %v1679
    %v2072 = vpack.c.b16 %v1688, %v1680
    %v2073 = vpack.c.b16 %v1689, %v1681
    %v2074 = vpack.c.b16 %v1690, %v1682
    %v2075 = vpack.c.b16 %v1691, %v1683
    %v2076 = vpack.c.b16 %v1692, %v1684
    %v2077 = vpack.c.b16 %v1693, %v1685
    %v2078 = vpack.c.b16 %v1702, %v1694
    %v2079 = vpack.c.b16 %v1703, %v1695
    %v2080 = vpack.c.b16 %v1704, %v1696
    %v2081 = vpack.c.b16 %v1705, %v1697
    %v2082 = vpack.c.b16 %v1706, %v1698
    %v2083 = vpack.c.b16 %v1707, %v1699
    %v2084 = vpack.c.b16 %v1708, %v1700
    %v2085 = vpack.c.b16 %v1709, %v1701
    %v2086 = vpack.c.b16 %v1718, %v1710
    %v2087 = vpack.c.b16 %v1719, %v1711
    %v2088 = vpack.c.b16 %v1720, %v1712
    %v2089 = vpack.c.b16 %v1721, %v1713
    %v2090 = vpack.c.b16 %v1722, %v1714
    %v2091 = vpack.c.b16 %v1723, %v1715
    %v2092 = vpack.c.b16 %v1724, %v1716
    %v2093 = vpack.c.b16 %v1725, %v1717
    %v2094 = vpack.c.b16 %v1734, %v1726
    %v2095 = vpack.c.b16 %v1735, %v1727
    %v2096 = vpack.c.b16 %v1736, %v1728
    %v2097 = vpack.c.b16 %v1737, %v1729
    %v2098 = vpack.c.b16 %v1738, %v1730
    %v2099 = vpack.c.b16 %v1739, %v1731
    %v2100 = vpack.c.b16 %v1740, %v1732
    %v2101 = vpack.c.b16 %v1741, %v1733
    %v2102 = vpack.c.b16 %v1750, %v1742
    %v2103 = vpack.c.b16 %v1751, %v1743
    %v2104 = vpack.c.b16 %v1752, %v1744
    %v2105 = vpack.c.b16 %v1753, %v1745
    %v2106 = vpack.c.b16 %v1754, %v1746
    %v2107 = vpack.c.b16 %v1755, %v1747
    %v2108 = vpack.c.b16 %v1756, %v1748
    %v2109 = vpack.c.b16 %v1757, %v1749
    %v2110 = vpack.c.b16 %v1766, %v1758
    %v2111 = vpack.c.b16 %v1767, %v1759
    %v2112 = vpack.c.b16 %v1768, %v1760
    %v2113 = vpack.c.b16 %v1769, %v1761
    %v2114 = vpack.c.b16 %v1770, %v1762
    %v2115 = vpack.c.b16 %v1771, %v1763
    %v2116 = vpack.c.b16 %v1772, %v1764
    %v2117 = vpack.c.b16 %v1773, %v1765
    %v2118 = vpack.c.b16 %v1782, %v1774
    %v2119 = vpack.c.b16 %v1783, %v1775
    %v2120 = vpack.c.b16 %v1784, %v1776
    %v2121 = vpack.c.b16 %v1785, %v1777
    %v2122 = vpack.c.b16 %v1786, %v1778
    %v2123 = vpack.c.b16 %v1787, %v1779
    %v2124 = vpack.c.b16 %v1788, %v1780
    %v2125 = vpack.c.b16 %v1789, %v1781
    %v2126 = vpack.c.b16 %v1798, %v1790
    %v2127 = vpack.c.b16 %v1799, %v1791
    %v2128 = vpack.c.b16 %v1800, %v1792
    %v2129 = vpack.c.b16 %v1801, %v1793
    %v2130 = vpack.c.b16 %v1802, %v1794
    %v2131 = vpack.c.b16 %v1803, %v1795
    %v2132 = vpack.c.b16 %v1804, %v1796
    %v2133 = vpack.c.b16 %v1805, %v1797
    %v2134 = vpack.c.b16 %v1814, %v1806
    %v2135 = vpack.c.b16 %v1815, %v1807
    %v2136 = vpack.c.b16 %v1816, %v1808
    %v2137 = vpack.c.b16 %v1817, %v1809
    %v2138 = vpack.c.b16 %v1818, %v1810
    %v2139 = vpack.c.b16 %v1819, %v1811
    %v2140 = vpack.c.b16 %v1820, %v1812
    %v2141 = vpack.c.b16 %v1821, %v1813
    %v2142 = vpack.c.b16 %v1830, %v1822
    %v2143 = vpack.c.b16 %v1831, %v1823
    %v2144 = vpack.c.b16 %v1832, %v1824
    %v2145 = vpack.c.b16 %v1833, %v1825
    %v2146 = vpack.c.b16 %v1834, %v1826
    %v2147 = vpack.c.b16 %v1835, %v1827
    %v2148 = vpack.c.b16 %v1836, %v1828
    %v2149 = vpack.c.b16 %v1837, %v1829
    %v2150 = vpack.c.b16 %v1846, %v1838
    %v2151 = vpack.c.b16 %v1847, %v1839
    %v2152 = vpack.c.b16 %v1848, %v1840
    %v2153 = vpack.c.b16 %v1849, %v1841
    %v2154 = vpack.c.b16 %v1850, %v1842
    %v2155 = vpack.c.b16 %v1851, %v1843
    %v2156 = vpack.c.b16 %v1852, %v1844
    %v2157 = vpack.c.b16 %v1853, %v1845
    %v2158 = vpack.c.b16 %v1862, %v1854
    %v2159 = vpack.c.b16 %v1863, %v1855
    %v2160 = vpack.c.b16 %v1864, %v1856
    %v2161 = vpack.c.b16 %v1865, %v1857
    %v2162 = vpack.c.b16 %v1866, %v1858
    %v2163 = vpack.c.b16 %v1867, %v1859
    %v2164 = vpack.c.b16 %v1868, %v1860
    %v2165 = vpack.c.b16 %v1869, %v1861
    %v2166 = vpack.c.b16 %v1878, %v1870
    %v2167 = vpack.c.b16 %v1879, %v1871
    %v2168 = vpack.c.b16 %v1880, %v1872
    %v2169 = vpack.c.b16 %v1881, %v1873
    %v2170 = vpack.c.b16 %v1882, %v1874
    %v2171 = vpack.c.b16 %v1883, %v1875
    %v2172 = vpack.c.b16 %v1884, %v1876
    %v2173 = vpack.c.b16 %v1885, %v1877
    %v2174 = vpack.c.b16 %v1894, %v1886
    %v2175 = vpack.c.b16 %v1895, %v1887
    %v2176 = vpack.c.b16 %v1896, %v1888
    %v2177 = vpack.c.b16 %v1897, %v1889
    %v2178 = vpack.c.b16 %v1898, %v1890
    %v2179 = vpack.c.b16 %v1899, %v1891
    %v2180 = vpack.c.b16 %v1900, %v1892
    %v2181 = vpack.c.b16 %v1901, %v1893
    %v2182 = vpack.c.b16 %v1910, %v1902
    %v2183 = vpack.c.b16 %v1911, %v1903
    %v2184 = vpack.c.b16 %v1912, %v1904
    %v2185 = vpack.c.b16 %v1913, %v1905
    %v2186 = vpack.c.b16 %v1914, %v1906
    %v2187 = vpack.c.b16 %v1915, %v1907
    %v2188 = vpack.c.b16 %v1916, %v1908
    %v2189 = vpack.c.b16 %v1917, %v1909
    %v2190 = vpack.c.b16 %v1926, %v1918
    %v2191 = vpack.c.b16 %v1927, %v1919
    %v2192 = vpack.c.b16 %v1928, %v1920
    %v2193 = vpack.c.b16 %v1929, %v1921
    %v2194 = vpack.c.b16 %v1930, %v1922
    %v2195 = vpack.c.b16 %v1931, %v1923
    %v2196 = vpack.c.b16 %v1932, %v1924
    %v2197 = vpack.c.b16 %v1933, %v1925
    %v2198 = vpack.c.b16 %v1942, %v1934
    %v2199 = vpack.c.b16 %v1943, %v1935
    %v2200 = vpack.c.b16 %v1944, %v1936
    %v2201 = vpack.c.b16 %v1945, %v1937
    %v2202 = vpack.c.b16 %v1946, %v1938
    %v2203 = vpack.c.b16 %v1947, %v1939
    %v2204 = vpack.c.b16 %v1948, %v1940
    %v2205 = vpack.c.b16 %v1949, %v1941
    %2462 = vmatprep.subr.bf16.mxu0 %v2007
    %2463 = vmatpush1.bf16.msra.mxu0 %v2006
    %2464 = vmatprep.subr.bf16.mxu0 %v1999
    %2465 = vmatpush1.bf16.msra.mxu0 %v1998
    %2466 = vmatprep.subr.bf16.mxu0 %v1991
    %2467 = vmatpush1.bf16.msra.mxu0 %v1990
    %2468 = vmatprep.subr.bf16.mxu0 %v1983
    %2469 = vmatpush1.bf16.msra.mxu0 %v1982
    %2470 = vmatprep.subr.bf16.mxu0 %v1975
    %2471 = vmatpush1.bf16.msra.mxu0 %v1974
    %2472 = vmatprep.subr.bf16.mxu0 %v1967
    %2473 = vmatpush1.bf16.msra.mxu0 %v1966
    %2474 = vmatprep.subr.bf16.mxu0 %v1959
    %2475 = vmatpush1.bf16.msra.mxu0 %v1958
    %2476 = vmatprep.subr.bf16.mxu0 %v1951
    %2477 = vmatpush1.bf16.msra.mxu0 %v1950
    %2478 = vmatprep.subr.bf16.mxu0 %v2071
    %2479 = vmatpush2.bf16.msra.mxu0 %v2070
    %2480 = vmatprep.subr.bf16.mxu0 %v2063
    %2481 = vmatpush2.bf16.msra.mxu0 %v2062
    %2482 = vmatprep.subr.bf16.mxu0 %v2055
    %2483 = vmatpush2.bf16.msra.mxu0 %v2054
    %2484 = vmatprep.subr.bf16.mxu0 %v2047
    %2485 = vmatpush2.bf16.msra.mxu0 %v2046
    %2486 = vmatprep.subr.bf16.mxu0 %v2039
    %2487 = vmatpush2.bf16.msra.mxu0 %v2038
    %2488 = vmatprep.subr.bf16.mxu0 %v2031
    %2489 = vmatpush2.bf16.msra.mxu0 %v2030
    %2490 = vmatprep.subr.bf16.mxu0 %v2023
    %2491 = vmatpush2.bf16.msra.mxu0 %v2022
    %2492 = vmatprep.subr.bf16.mxu0 %v2015
    %2493 = vmatpush2.bf16.msra.mxu0 %v2014
    %2494 = vmatprep.mubr.bf16.mxu0 %v1103
    %2495 = vmatmul.mubr.bf16.gmra.mxu0 %v1102
    %v2496 = vpop.f32.mrf.mxu0
    %v2497 = vadd.f32 %v1153, %v2496
    %v2498 = vpop.f32.mrf.mxu0
    %v2499 = vadd.f32 %v1157, %v2498
    %v2500 = vpop.f32.mrf.mxu0
    %v2501 = vpop.f32.mrf.mxu0
    %2502 = vdwg.mxu0
    %2503 = vmatprep.subr.bf16.mxu0 %v2135
    %2504 = vmatpush1.bf16.msra.mxu0 %v2134
    %2505 = vmatprep.subr.bf16.mxu0 %v2127
    %2506 = vmatpush1.bf16.msra.mxu0 %v2126
    %2507 = vmatprep.subr.bf16.mxu0 %v2119
    %2508 = vmatpush1.bf16.msra.mxu0 %v2118
    %2509 = vmatprep.subr.bf16.mxu0 %v2111
    %2510 = vmatpush1.bf16.msra.mxu0 %v2110
    %2511 = vmatprep.subr.bf16.mxu0 %v2103
    %2512 = vmatpush1.bf16.msra.mxu0 %v2102
    %2513 = vmatprep.subr.bf16.mxu0 %v2095
    %2514 = vmatpush1.bf16.msra.mxu0 %v2094
    %2515 = vmatprep.subr.bf16.mxu0 %v2087
    %2516 = vmatpush1.bf16.msra.mxu0 %v2086
    %2517 = vmatprep.subr.bf16.mxu0 %v2079
    %2518 = vmatpush1.bf16.msra.mxu0 %v2078
    %2519 = vmatprep.subr.bf16.mxu0 %v2199
    %2520 = vmatpush2.bf16.msra.mxu0 %v2198
    %2521 = vmatprep.subr.bf16.mxu0 %v2191
    %2522 = vmatpush2.bf16.msra.mxu0 %v2190
    %2523 = vmatprep.subr.bf16.mxu0 %v2183
    %2524 = vmatpush2.bf16.msra.mxu0 %v2182
    %2525 = vmatprep.subr.bf16.mxu0 %v2175
    %2526 = vmatpush2.bf16.msra.mxu0 %v2174
    %2527 = vmatprep.subr.bf16.mxu0 %v2167
    %2528 = vmatpush2.bf16.msra.mxu0 %v2166
    %2529 = vmatprep.subr.bf16.mxu0 %v2159
    %2530 = vmatpush2.bf16.msra.mxu0 %v2158
    %2531 = vmatprep.subr.bf16.mxu0 %v2151
    %2532 = vmatpush2.bf16.msra.mxu0 %v2150
    %2533 = vmatprep.subr.bf16.mxu0 %v2143
    %2534 = vmatpush2.bf16.msra.mxu0 %v2142
    %2535 = vmatprep.mubr.bf16.mxu0 %v1105
    %2536 = vmatmul.mubr.bf16.gmra.mxu0 %v1104
    %v2537 = vpop.f32.mrf.mxu0
    %v2538 = vadd.f32 %v2497, %v2537
    %v2539 = vpop.f32.mrf.mxu0
    %v2540 = vadd.f32 %v2499, %v2539
    %v2541 = vpop.f32.mrf.mxu0
    %v2542 = vpop.f32.mrf.mxu0
    %2543 = vdwg.mxu0
    %2544 = vmatprep.subr.bf16.mxu0 %v2009
    %2545 = vmatpush1.bf16.msra.mxu0 %v2008
    %2546 = vmatprep.subr.bf16.mxu0 %v2001
    %2547 = vmatpush1.bf16.msra.mxu0 %v2000
    %2548 = vmatprep.subr.bf16.mxu0 %v1993
    %2549 = vmatpush1.bf16.msra.mxu0 %v1992
    %2550 = vmatprep.subr.bf16.mxu0 %v1985
    %2551 = vmatpush1.bf16.msra.mxu0 %v1984
    %2552 = vmatprep.subr.bf16.mxu0 %v1977
    %2553 = vmatpush1.bf16.msra.mxu0 %v1976
    %2554 = vmatprep.subr.bf16.mxu0 %v1969
    %2555 = vmatpush1.bf16.msra.mxu0 %v1968
    %2556 = vmatprep.subr.bf16.mxu0 %v1961
    %2557 = vmatpush1.bf16.msra.mxu0 %v1960
    %2558 = vmatprep.subr.bf16.mxu0 %v1953
    %2559 = vmatpush1.bf16.msra.mxu0 %v1952
    %2560 = vmatprep.subr.bf16.mxu0 %v2073
    %2561 = vmatpush2.bf16.msra.mxu0 %v2072
    %2562 = vmatprep.subr.bf16.mxu0 %v2065
    %2563 = vmatpush2.bf16.msra.mxu0 %v2064
    %2564 = vmatprep.subr.bf16.mxu0 %v2057
    %2565 = vmatpush2.bf16.msra.mxu0 %v2056
    %2566 = vmatprep.subr.bf16.mxu0 %v2049
    %2567 = vmatpush2.bf16.msra.mxu0 %v2048
    %2568 = vmatprep.subr.bf16.mxu0 %v2041
    %2569 = vmatpush2.bf16.msra.mxu0 %v2040
    %2570 = vmatprep.subr.bf16.mxu0 %v2033
    %2571 = vmatpush2.bf16.msra.mxu0 %v2032
    %2572 = vmatprep.subr.bf16.mxu0 %v2025
    %2573 = vmatpush2.bf16.msra.mxu0 %v2024
    %2574 = vmatprep.subr.bf16.mxu0 %v2017
    %2575 = vmatpush2.bf16.msra.mxu0 %v2016
    %2576 = vmatprep.mubr.bf16.mxu0 %v1103
    %2577 = vmatmul.mubr.bf16.gmra.mxu0 %v1102
    %v2578 = vpop.f32.mrf.mxu0
    %v2579 = vadd.f32 %v1161, %v2578
    %v2580 = vpop.f32.mrf.mxu0
    %v2581 = vadd.f32 %v1165, %v2580
    %v2582 = vpop.f32.mrf.mxu0
    %v2583 = vpop.f32.mrf.mxu0
    %2584 = vdwg.mxu0
    %2585 = vmatprep.subr.bf16.mxu0 %v2137
    %2586 = vmatpush1.bf16.msra.mxu0 %v2136
    %2587 = vmatprep.subr.bf16.mxu0 %v2129
    %2588 = vmatpush1.bf16.msra.mxu0 %v2128
    %2589 = vmatprep.subr.bf16.mxu0 %v2121
    %2590 = vmatpush1.bf16.msra.mxu0 %v2120
    %2591 = vmatprep.subr.bf16.mxu0 %v2113
    %2592 = vmatpush1.bf16.msra.mxu0 %v2112
    %2593 = vmatprep.subr.bf16.mxu0 %v2105
    %2594 = vmatpush1.bf16.msra.mxu0 %v2104
    %2595 = vmatprep.subr.bf16.mxu0 %v2097
    %2596 = vmatpush1.bf16.msra.mxu0 %v2096
    %2597 = vmatprep.subr.bf16.mxu0 %v2089
    %2598 = vmatpush1.bf16.msra.mxu0 %v2088
    %2599 = vmatprep.subr.bf16.mxu0 %v2081
    %2600 = vmatpush1.bf16.msra.mxu0 %v2080
    %2601 = vmatprep.subr.bf16.mxu0 %v2201
    %2602 = vmatpush2.bf16.msra.mxu0 %v2200
    %2603 = vmatprep.subr.bf16.mxu0 %v2193
    %2604 = vmatpush2.bf16.msra.mxu0 %v2192
    %2605 = vmatprep.subr.bf16.mxu0 %v2185
    %2606 = vmatpush2.bf16.msra.mxu0 %v2184
    %2607 = vmatprep.subr.bf16.mxu0 %v2177
    %2608 = vmatpush2.bf16.msra.mxu0 %v2176
    %2609 = vmatprep.subr.bf16.mxu0 %v2169
    %2610 = vmatpush2.bf16.msra.mxu0 %v2168
    %2611 = vmatprep.subr.bf16.mxu0 %v2161
    %2612 = vmatpush2.bf16.msra.mxu0 %v2160
    %2613 = vmatprep.subr.bf16.mxu0 %v2153
    %2614 = vmatpush2.bf16.msra.mxu0 %v2152
    %2615 = vmatprep.subr.bf16.mxu0 %v2145
    %2616 = vmatpush2.bf16.msra.mxu0 %v2144
    %2617 = vmatprep.mubr.bf16.mxu0 %v1105
    %2618 = vmatmul.mubr.bf16.gmra.mxu0 %v1104
    %v2619 = vpop.f32.mrf.mxu0
    %v2620 = vadd.f32 %v2579, %v2619
    %v2621 = vpop.f32.mrf.mxu0
    %v2622 = vadd.f32 %v2581, %v2621
    %v2623 = vpop.f32.mrf.mxu0
    %v2624 = vpop.f32.mrf.mxu0
    %2625 = vdwg.mxu0
    %2626 = vmatprep.subr.bf16.mxu0 %v2011
    %2627 = vmatpush1.bf16.msra.mxu0 %v2010
    %2628 = vmatprep.subr.bf16.mxu0 %v2003
    %2629 = vmatpush1.bf16.msra.mxu0 %v2002
    %2630 = vmatprep.subr.bf16.mxu0 %v1995
    %2631 = vmatpush1.bf16.msra.mxu0 %v1994
    %2632 = vmatprep.subr.bf16.mxu0 %v1987
    %2633 = vmatpush1.bf16.msra.mxu0 %v1986
    %2634 = vmatprep.subr.bf16.mxu0 %v1979
    %2635 = vmatpush1.bf16.msra.mxu0 %v1978
    %2636 = vmatprep.subr.bf16.mxu0 %v1971
    %2637 = vmatpush1.bf16.msra.mxu0 %v1970
    %2638 = vmatprep.subr.bf16.mxu0 %v1963
    %2639 = vmatpush1.bf16.msra.mxu0 %v1962
    %2640 = vmatprep.subr.bf16.mxu0 %v1955
    %2641 = vmatpush1.bf16.msra.mxu0 %v1954
    %2642 = vmatprep.subr.bf16.mxu0 %v2075
    %2643 = vmatpush2.bf16.msra.mxu0 %v2074
    %2644 = vmatprep.subr.bf16.mxu0 %v2067
    %2645 = vmatpush2.bf16.msra.mxu0 %v2066
    %2646 = vmatprep.subr.bf16.mxu0 %v2059
    %2647 = vmatpush2.bf16.msra.mxu0 %v2058
    %2648 = vmatprep.subr.bf16.mxu0 %v2051
    %2649 = vmatpush2.bf16.msra.mxu0 %v2050
    %2650 = vmatprep.subr.bf16.mxu0 %v2043
    %2651 = vmatpush2.bf16.msra.mxu0 %v2042
    %2652 = vmatprep.subr.bf16.mxu0 %v2035
    %2653 = vmatpush2.bf16.msra.mxu0 %v2034
    %2654 = vmatprep.subr.bf16.mxu0 %v2027
    %2655 = vmatpush2.bf16.msra.mxu0 %v2026
    %2656 = vmatprep.subr.bf16.mxu0 %v2019
    %2657 = vmatpush2.bf16.msra.mxu0 %v2018
    %2658 = vmatprep.mubr.bf16.mxu0 %v1103
    %2659 = vmatmul.mubr.bf16.gmra.mxu0 %v1102
    %v2660 = vpop.f32.mrf.mxu0
    %v2661 = vadd.f32 %v1169, %v2660
    %v2662 = vpop.f32.mrf.mxu0
    %v2663 = vadd.f32 %v1173, %v2662
    %v2664 = vpop.f32.mrf.mxu0
    %v2665 = vpop.f32.mrf.mxu0
    %2666 = vdwg.mxu0
    %2667 = vmatprep.subr.bf16.mxu0 %v2139
    %2668 = vmatpush1.bf16.msra.mxu0 %v2138
    %2669 = vmatprep.subr.bf16.mxu0 %v2131
    %2670 = vmatpush1.bf16.msra.mxu0 %v2130
    %2671 = vmatprep.subr.bf16.mxu0 %v2123
    %2672 = vmatpush1.bf16.msra.mxu0 %v2122
    %2673 = vmatprep.subr.bf16.mxu0 %v2115
    %2674 = vmatpush1.bf16.msra.mxu0 %v2114
    %2675 = vmatprep.subr.bf16.mxu0 %v2107
    %2676 = vmatpush1.bf16.msra.mxu0 %v2106
    %2677 = vmatprep.subr.bf16.mxu0 %v2099
    %2678 = vmatpush1.bf16.msra.mxu0 %v2098
    %2679 = vmatprep.subr.bf16.mxu0 %v2091
    %2680 = vmatpush1.bf16.msra.mxu0 %v2090
    %2681 = vmatprep.subr.bf16.mxu0 %v2083
    %2682 = vmatpush1.bf16.msra.mxu0 %v2082
    %2683 = vmatprep.subr.bf16.mxu0 %v2203
    %2684 = vmatpush2.bf16.msra.mxu0 %v2202
    %2685 = vmatprep.subr.bf16.mxu0 %v2195
    %2686 = vmatpush2.bf16.msra.mxu0 %v2194
    %2687 = vmatprep.subr.bf16.mxu0 %v2187
    %2688 = vmatpush2.bf16.msra.mxu0 %v2186
    %2689 = vmatprep.subr.bf16.mxu0 %v2179
    %2690 = vmatpush2.bf16.msra.mxu0 %v2178
    %2691 = vmatprep.subr.bf16.mxu0 %v2171
    %2692 = vmatpush2.bf16.msra.mxu0 %v2170
    %2693 = vmatprep.subr.bf16.mxu0 %v2163
    %2694 = vmatpush2.bf16.msra.mxu0 %v2162
    %2695 = vmatprep.subr.bf16.mxu0 %v2155
    %2696 = vmatpush2.bf16.msra.mxu0 %v2154
    %2697 = vmatprep.subr.bf16.mxu0 %v2147
    %2698 = vmatpush2.bf16.msra.mxu0 %v2146
    %2699 = vmatprep.mubr.bf16.mxu0 %v1105
    %2700 = vmatmul.mubr.bf16.gmra.mxu0 %v1104
    %v2701 = vpop.f32.mrf.mxu0
    %v2702 = vadd.f32 %v2661, %v2701
    %v2703 = vpop.f32.mrf.mxu0
    %v2704 = vadd.f32 %v2663, %v2703
    %v2705 = vpop.f32.mrf.mxu0
    %v2706 = vpop.f32.mrf.mxu0
    %2707 = vdwg.mxu0
    %2708 = vmatprep.subr.bf16.mxu0 %v2013
    %2709 = vmatpush1.bf16.msra.mxu0 %v2012
    %2710 = vmatprep.subr.bf16.mxu0 %v2005
    %2711 = vmatpush1.bf16.msra.mxu0 %v2004
    %2712 = vmatprep.subr.bf16.mxu0 %v1997
    %2713 = vmatpush1.bf16.msra.mxu0 %v1996
    %2714 = vmatprep.subr.bf16.mxu0 %v1989
    %2715 = vmatpush1.bf16.msra.mxu0 %v1988
    %2716 = vmatprep.subr.bf16.mxu0 %v1981
    %2717 = vmatpush1.bf16.msra.mxu0 %v1980
    %2718 = vmatprep.subr.bf16.mxu0 %v1973
    %2719 = vmatpush1.bf16.msra.mxu0 %v1972
    %2720 = vmatprep.subr.bf16.mxu0 %v1965
    %2721 = vmatpush1.bf16.msra.mxu0 %v1964
    %2722 = vmatprep.subr.bf16.mxu0 %v1957
    %2723 = vmatpush1.bf16.msra.mxu0 %v1956
    %2724 = vmatprep.subr.bf16.mxu0 %v2077
    %2725 = vmatpush2.bf16.msra.mxu0 %v2076
    %2726 = vmatprep.subr.bf16.mxu0 %v2069
    %2727 = vmatpush2.bf16.msra.mxu0 %v2068
    %2728 = vmatprep.subr.bf16.mxu0 %v2061
    %2729 = vmatpush2.bf16.msra.mxu0 %v2060
    %2730 = vmatprep.subr.bf16.mxu0 %v2053
    %2731 = vmatpush2.bf16.msra.mxu0 %v2052
    %2732 = vmatprep.subr.bf16.mxu0 %v2045
    %2733 = vmatpush2.bf16.msra.mxu0 %v2044
    %2734 = vmatprep.subr.bf16.mxu0 %v2037
    %2735 = vmatpush2.bf16.msra.mxu0 %v2036
    %2736 = vmatprep.subr.bf16.mxu0 %v2029
    %2737 = vmatpush2.bf16.msra.mxu0 %v2028
    %2738 = vmatprep.subr.bf16.mxu0 %v2021
    %2739 = vmatpush2.bf16.msra.mxu0 %v2020
    %2740 = vmatprep.mubr.bf16.mxu0 %v1103
    %2741 = vmatmul.mubr.bf16.gmra.mxu0 %v1102
    %v2742 = vpop.f32.mrf.mxu0
    %v2743 = vadd.f32 %v1177, %v2742
    %v2744 = vpop.f32.mrf.mxu0
    %v2745 = vadd.f32 %v1181, %v2744
    %v2746 = vpop.f32.mrf.mxu0
    %v2747 = vpop.f32.mrf.mxu0
    %2748 = vdwg.mxu0
    %2749 = vmatprep.subr.bf16.mxu0 %v2141
    %2750 = vmatpush1.bf16.msra.mxu0 %v2140
    %2751 = vmatprep.subr.bf16.mxu0 %v2133
    %2752 = vmatpush1.bf16.msra.mxu0 %v2132
    %2753 = vmatprep.subr.bf16.mxu0 %v2125
    %2754 = vmatpush1.bf16.msra.mxu0 %v2124
    %2755 = vmatprep.subr.bf16.mxu0 %v2117
    %2756 = vmatpush1.bf16.msra.mxu0 %v2116
    %2757 = vmatprep.subr.bf16.mxu0 %v2109
    %2758 = vmatpush1.bf16.msra.mxu0 %v2108
    %2759 = vmatprep.subr.bf16.mxu0 %v2101
    %2760 = vmatpush1.bf16.msra.mxu0 %v2100
    %2761 = vmatprep.subr.bf16.mxu0 %v2093
    %2762 = vmatpush1.bf16.msra.mxu0 %v2092
    %2763 = vmatprep.subr.bf16.mxu0 %v2085
    %2764 = vmatpush1.bf16.msra.mxu0 %v2084
    %2765 = vmatprep.subr.bf16.mxu0 %v2205
    %2766 = vmatpush2.bf16.msra.mxu0 %v2204
    %2767 = vmatprep.subr.bf16.mxu0 %v2197
    %2768 = vmatpush2.bf16.msra.mxu0 %v2196
    %2769 = vmatprep.subr.bf16.mxu0 %v2189
    %2770 = vmatpush2.bf16.msra.mxu0 %v2188
    %2771 = vmatprep.subr.bf16.mxu0 %v2181
    %2772 = vmatpush2.bf16.msra.mxu0 %v2180
    %2773 = vmatprep.subr.bf16.mxu0 %v2173
    %2774 = vmatpush2.bf16.msra.mxu0 %v2172
    %2775 = vmatprep.subr.bf16.mxu0 %v2165
    %2776 = vmatpush2.bf16.msra.mxu0 %v2164
    %2777 = vmatprep.subr.bf16.mxu0 %v2157
    %2778 = vmatpush2.bf16.msra.mxu0 %v2156
    %2779 = vmatprep.subr.bf16.mxu0 %v2149
    %2780 = vmatpush2.bf16.msra.mxu0 %v2148
    %2781 = vmatprep.mubr.bf16.mxu0 %v1105
    %2782 = vmatmul.mubr.bf16.gmra.mxu0 %v1104
    %v2783 = vpop.f32.mrf.mxu0
    %v2784 = vadd.f32 %v2743, %v2783
    %v2785 = vpop.f32.mrf.mxu0
    %v2786 = vadd.f32 %v2745, %v2785
    %v2787 = vpop.f32.mrf.mxu0
    %v2788 = vpop.f32.mrf.mxu0
    %2789 = vdwg.mxu0
    %v2790 = vmax.f32 %v2538, 0.0
    %v2791 = vmax.f32 %v2540, 0.0
    %v2792 = vmax.f32 %v2620, 0.0
    %v2793 = vmax.f32 %v2622, 0.0
    %v2794 = vmax.f32 %v2702, 0.0
    %v2795 = vmax.f32 %v2704, 0.0
    %v2796 = vmax.f32 %v2784, 0.0
    %v2797 = vmax.f32 %v2786, 0.0
    %v2798 = vld [vmem:[#allocation4 + $0x800] sm:$0xff]
    %v2799 = vld [vmem:[#allocation4 + $0x808] sm:$0xff]
    %v2800 = vld [vmem:[#allocation4 + $0x810] sm:$0xff]
    %v2801 = vld [vmem:[#allocation4 + $0x818] sm:$0xff]
    %v2802 = vld [vmem:[#allocation4 + $0x820] sm:$0xff]
    %v2803 = vld [vmem:[#allocation4 + $0x828] sm:$0xff]
    %v2804 = vld [vmem:[#allocation4 + $0x830] sm:$0xff]
    %v2805 = vld [vmem:[#allocation4 + $0x838] sm:$0xff]
    %v2806 = vld [vmem:[#allocation4 + $0x840] sm:$0xff]
    %v2807 = vld [vmem:[#allocation4 + $0x848] sm:$0xff]
    %v2808 = vld [vmem:[#allocation4 + $0x850] sm:$0xff]
    %v2809 = vld [vmem:[#allocation4 + $0x858] sm:$0xff]
    %v2810 = vld [vmem:[#allocation4 + $0x860] sm:$0xff]
    %v2811 = vld [vmem:[#allocation4 + $0x868] sm:$0xff]
    %v2812 = vld [vmem:[#allocation4 + $0x870] sm:$0xff]
    %v2813 = vld [vmem:[#allocation4 + $0x878] sm:$0xff]
    %v2814 = vld [vmem:[#allocation4 + $0x880] sm:$0xff]
    %v2815 = vld [vmem:[#allocation4 + $0x888] sm:$0xff]
    %v2816 = vld [vmem:[#allocation4 + $0x890] sm:$0xff]
    %v2817 = vld [vmem:[#allocation4 + $0x898] sm:$0xff]
    %v2818 = vld [vmem:[#allocation4 + $0x8a0] sm:$0xff]
    %v2819 = vld [vmem:[#allocation4 + $0x8a8] sm:$0xff]
    %v2820 = vld [vmem:[#allocation4 + $0x8b0] sm:$0xff]
    %v2821 = vld [vmem:[#allocation4 + $0x8b8] sm:$0xff]
    %v2822 = vld [vmem:[#allocation4 + $0x8c0] sm:$0xff]
    %v2823 = vld [vmem:[#allocation4 + $0x8c8] sm:$0xff]
    %v2824 = vld [vmem:[#allocation4 + $0x8d0] sm:$0xff]
    %v2825 = vld [vmem:[#allocation4 + $0x8d8] sm:$0xff]
    %v2826 = vld [vmem:[#allocation4 + $0x8e0] sm:$0xff]
    %v2827 = vld [vmem:[#allocation4 + $0x8e8] sm:$0xff]
    %v2828 = vld [vmem:[#allocation4 + $0x8f0] sm:$0xff]
    %v2829 = vld [vmem:[#allocation4 + $0x8f8] sm:$0xff]
    %v2830 = vld [vmem:[#allocation4 + $0x900] sm:$0xff]
    %v2831 = vld [vmem:[#allocation4 + $0x908] sm:$0xff]
    %v2832 = vld [vmem:[#allocation4 + $0x910] sm:$0xff]
    %v2833 = vld [vmem:[#allocation4 + $0x918] sm:$0xff]
    %v2834 = vld [vmem:[#allocation4 + $0x920] sm:$0xff]
    %v2835 = vld [vmem:[#allocation4 + $0x928] sm:$0xff]
    %v2836 = vld [vmem:[#allocation4 + $0x930] sm:$0xff]
    %v2837 = vld [vmem:[#allocation4 + $0x938] sm:$0xff]
    %v2838 = vld [vmem:[#allocation4 + $0x940] sm:$0xff]
    %v2839 = vld [vmem:[#allocation4 + $0x948] sm:$0xff]
    %v2840 = vld [vmem:[#allocation4 + $0x950] sm:$0xff]
    %v2841 = vld [vmem:[#allocation4 + $0x958] sm:$0xff]
    %v2842 = vld [vmem:[#allocation4 + $0x960] sm:$0xff]
    %v2843 = vld [vmem:[#allocation4 + $0x968] sm:$0xff]
    %v2844 = vld [vmem:[#allocation4 + $0x970] sm:$0xff]
    %v2845 = vld [vmem:[#allocation4 + $0x978] sm:$0xff]
    %v2846 = vld [vmem:[#allocation4 + $0x980] sm:$0xff]
    %v2847 = vld [vmem:[#allocation4 + $0x988] sm:$0xff]
    %v2848 = vld [vmem:[#allocation4 + $0x990] sm:$0xff]
    %v2849 = vld [vmem:[#allocation4 + $0x998] sm:$0xff]
    %v2850 = vld [vmem:[#allocation4 + $0x9a0] sm:$0xff]
    %v2851 = vld [vmem:[#allocation4 + $0x9a8] sm:$0xff]
    %v2852 = vld [vmem:[#allocation4 + $0x9b0] sm:$0xff]
    %v2853 = vld [vmem:[#allocation4 + $0x9b8] sm:$0xff]
    %v2854 = vld [vmem:[#allocation4 + $0x9c0] sm:$0xff]
    %v2855 = vld [vmem:[#allocation4 + $0x9c8] sm:$0xff]
    %v2856 = vld [vmem:[#allocation4 + $0x9d0] sm:$0xff]
    %v2857 = vld [vmem:[#allocation4 + $0x9d8] sm:$0xff]
    %v2858 = vld [vmem:[#allocation4 + $0x9e0] sm:$0xff]
    %v2859 = vld [vmem:[#allocation4 + $0x9e8] sm:$0xff]
    %v2860 = vld [vmem:[#allocation4 + $0x9f0] sm:$0xff]
    %v2861 = vld [vmem:[#allocation4 + $0x9f8] sm:$0xff]
    %v2862 = vld [vmem:[#allocation4 + $0xa00] sm:$0xff]
    %v2863 = vld [vmem:[#allocation4 + $0xa08] sm:$0xff]
    %v2864 = vld [vmem:[#allocation4 + $0xa10] sm:$0xff]
    %v2865 = vld [vmem:[#allocation4 + $0xa18] sm:$0xff]
    %v2866 = vld [vmem:[#allocation4 + $0xa20] sm:$0xff]
    %v2867 = vld [vmem:[#allocation4 + $0xa28] sm:$0xff]
    %v2868 = vld [vmem:[#allocation4 + $0xa30] sm:$0xff]
    %v2869 = vld [vmem:[#allocation4 + $0xa38] sm:$0xff]
    %v2870 = vld [vmem:[#allocation4 + $0xa40] sm:$0xff]
    %v2871 = vld [vmem:[#allocation4 + $0xa48] sm:$0xff]
    %v2872 = vld [vmem:[#allocation4 + $0xa50] sm:$0xff]
    %v2873 = vld [vmem:[#allocation4 + $0xa58] sm:$0xff]
    %v2874 = vld [vmem:[#allocation4 + $0xa60] sm:$0xff]
    %v2875 = vld [vmem:[#allocation4 + $0xa68] sm:$0xff]
    %v2876 = vld [vmem:[#allocation4 + $0xa70] sm:$0xff]
    %v2877 = vld [vmem:[#allocation4 + $0xa78] sm:$0xff]
    %v2878 = vld [vmem:[#allocation4 + $0xa80] sm:$0xff]
    %v2879 = vld [vmem:[#allocation4 + $0xa88] sm:$0xff]
    %v2880 = vld [vmem:[#allocation4 + $0xa90] sm:$0xff]
    %v2881 = vld [vmem:[#allocation4 + $0xa98] sm:$0xff]
    %v2882 = vld [vmem:[#allocation4 + $0xaa0] sm:$0xff]
    %v2883 = vld [vmem:[#allocation4 + $0xaa8] sm:$0xff]
    %v2884 = vld [vmem:[#allocation4 + $0xab0] sm:$0xff]
    %v2885 = vld [vmem:[#allocation4 + $0xab8] sm:$0xff]
    %v2886 = vld [vmem:[#allocation4 + $0xac0] sm:$0xff]
    %v2887 = vld [vmem:[#allocation4 + $0xac8] sm:$0xff]
    %v2888 = vld [vmem:[#allocation4 + $0xad0] sm:$0xff]
    %v2889 = vld [vmem:[#allocation4 + $0xad8] sm:$0xff]
    %v2890 = vld [vmem:[#allocation4 + $0xae0] sm:$0xff]
    %v2891 = vld [vmem:[#allocation4 + $0xae8] sm:$0xff]
    %v2892 = vld [vmem:[#allocation4 + $0xaf0] sm:$0xff]
    %v2893 = vld [vmem:[#allocation4 + $0xaf8] sm:$0xff]
    %v2894 = vld [vmem:[#allocation4 + $0xb00] sm:$0xff]
    %v2895 = vld [vmem:[#allocation4 + $0xb08] sm:$0xff]
    %v2896 = vld [vmem:[#allocation4 + $0xb10] sm:$0xff]
    %v2897 = vld [vmem:[#allocation4 + $0xb18] sm:$0xff]
    %v2898 = vld [vmem:[#allocation4 + $0xb20] sm:$0xff]
    %v2899 = vld [vmem:[#allocation4 + $0xb28] sm:$0xff]
    %v2900 = vld [vmem:[#allocation4 + $0xb30] sm:$0xff]
    %v2901 = vld [vmem:[#allocation4 + $0xb38] sm:$0xff]
    %v2902 = vld [vmem:[#allocation4 + $0xb40] sm:$0xff]
    %v2903 = vld [vmem:[#allocation4 + $0xb48] sm:$0xff]
    %v2904 = vld [vmem:[#allocation4 + $0xb50] sm:$0xff]
    %v2905 = vld [vmem:[#allocation4 + $0xb58] sm:$0xff]
    %v2906 = vld [vmem:[#allocation4 + $0xb60] sm:$0xff]
    %v2907 = vld [vmem:[#allocation4 + $0xb68] sm:$0xff]
    %v2908 = vld [vmem:[#allocation4 + $0xb70] sm:$0xff]
    %v2909 = vld [vmem:[#allocation4 + $0xb78] sm:$0xff]
    %v2910 = vld [vmem:[#allocation4 + $0xb80] sm:$0xff]
    %v2911 = vld [vmem:[#allocation4 + $0xb88] sm:$0xff]
    %v2912 = vld [vmem:[#allocation4 + $0xb90] sm:$0xff]
    %v2913 = vld [vmem:[#allocation4 + $0xb98] sm:$0xff]
    %v2914 = vld [vmem:[#allocation4 + $0xba0] sm:$0xff]
    %v2915 = vld [vmem:[#allocation4 + $0xba8] sm:$0xff]
    %v2916 = vld [vmem:[#allocation4 + $0xbb0] sm:$0xff]
    %v2917 = vld [vmem:[#allocation4 + $0xbb8] sm:$0xff]
    %v2918 = vld [vmem:[#allocation4 + $0xbc0] sm:$0xff]
    %v2919 = vld [vmem:[#allocation4 + $0xbc8] sm:$0xff]
    %v2920 = vld [vmem:[#allocation4 + $0xbd0] sm:$0xff]
    %v2921 = vld [vmem:[#allocation4 + $0xbd8] sm:$0xff]
    %v2922 = vld [vmem:[#allocation4 + $0xbe0] sm:$0xff]
    %v2923 = vld [vmem:[#allocation4 + $0xbe8] sm:$0xff]
    %v2924 = vld [vmem:[#allocation4 + $0xbf0] sm:$0xff]
    %v2925 = vld [vmem:[#allocation4 + $0xbf8] sm:$0xff]
    %v2926 = vld [vmem:[#allocation4 + $0xc00] sm:$0xff]
    %v2927 = vld [vmem:[#allocation4 + $0xc08] sm:$0xff]
    %v2928 = vld [vmem:[#allocation4 + $0xc10] sm:$0xff]
    %v2929 = vld [vmem:[#allocation4 + $0xc18] sm:$0xff]
    %v2930 = vld [vmem:[#allocation4 + $0xc20] sm:$0xff]
    %v2931 = vld [vmem:[#allocation4 + $0xc28] sm:$0xff]
    %v2932 = vld [vmem:[#allocation4 + $0xc30] sm:$0xff]
    %v2933 = vld [vmem:[#allocation4 + $0xc38] sm:$0xff]
    %v2934 = vld [vmem:[#allocation4 + $0xc40] sm:$0xff]
    %v2935 = vld [vmem:[#allocation4 + $0xc48] sm:$0xff]
    %v2936 = vld [vmem:[#allocation4 + $0xc50] sm:$0xff]
    %v2937 = vld [vmem:[#allocation4 + $0xc58] sm:$0xff]
    %v2938 = vld [vmem:[#allocation4 + $0xc60] sm:$0xff]
    %v2939 = vld [vmem:[#allocation4 + $0xc68] sm:$0xff]
    %v2940 = vld [vmem:[#allocation4 + $0xc70] sm:$0xff]
    %v2941 = vld [vmem:[#allocation4 + $0xc78] sm:$0xff]
    %v2942 = vld [vmem:[#allocation4 + $0xc80] sm:$0xff]
    %v2943 = vld [vmem:[#allocation4 + $0xc88] sm:$0xff]
    %v2944 = vld [vmem:[#allocation4 + $0xc90] sm:$0xff]
    %v2945 = vld [vmem:[#allocation4 + $0xc98] sm:$0xff]
    %v2946 = vld [vmem:[#allocation4 + $0xca0] sm:$0xff]
    %v2947 = vld [vmem:[#allocation4 + $0xca8] sm:$0xff]
    %v2948 = vld [vmem:[#allocation4 + $0xcb0] sm:$0xff]
    %v2949 = vld [vmem:[#allocation4 + $0xcb8] sm:$0xff]
    %v2950 = vld [vmem:[#allocation4 + $0xcc0] sm:$0xff]
    %v2951 = vld [vmem:[#allocation4 + $0xcc8] sm:$0xff]
    %v2952 = vld [vmem:[#allocation4 + $0xcd0] sm:$0xff]
    %v2953 = vld [vmem:[#allocation4 + $0xcd8] sm:$0xff]
    %v2954 = vld [vmem:[#allocation4 + $0xce0] sm:$0xff]
    %v2955 = vld [vmem:[#allocation4 + $0xce8] sm:$0xff]
    %v2956 = vld [vmem:[#allocation4 + $0xcf0] sm:$0xff]
    %v2957 = vld [vmem:[#allocation4 + $0xcf8] sm:$0xff]
    %v2958 = vld [vmem:[#allocation4 + $0xd00] sm:$0xff]
    %v2959 = vld [vmem:[#allocation4 + $0xd08] sm:$0xff]
    %v2960 = vld [vmem:[#allocation4 + $0xd10] sm:$0xff]
    %v2961 = vld [vmem:[#allocation4 + $0xd18] sm:$0xff]
    %v2962 = vld [vmem:[#allocation4 + $0xd20] sm:$0xff]
    %v2963 = vld [vmem:[#allocation4 + $0xd28] sm:$0xff]
    %v2964 = vld [vmem:[#allocation4 + $0xd30] sm:$0xff]
    %v2965 = vld [vmem:[#allocation4 + $0xd38] sm:$0xff]
    %v2966 = vld [vmem:[#allocation4 + $0xd40] sm:$0xff]
    %v2967 = vld [vmem:[#allocation4 + $0xd48] sm:$0xff]
    %v2968 = vld [vmem:[#allocation4 + $0xd50] sm:$0xff]
    %v2969 = vld [vmem:[#allocation4 + $0xd58] sm:$0xff]
    %v2970 = vld [vmem:[#allocation4 + $0xd60] sm:$0xff]
    %v2971 = vld [vmem:[#allocation4 + $0xd68] sm:$0xff]
    %v2972 = vld [vmem:[#allocation4 + $0xd70] sm:$0xff]
    %v2973 = vld [vmem:[#allocation4 + $0xd78] sm:$0xff]
    %v2974 = vld [vmem:[#allocation4 + $0xd80] sm:$0xff]
    %v2975 = vld [vmem:[#allocation4 + $0xd88] sm:$0xff]
    %v2976 = vld [vmem:[#allocation4 + $0xd90] sm:$0xff]
    %v2977 = vld [vmem:[#allocation4 + $0xd98] sm:$0xff]
    %v2978 = vld [vmem:[#allocation4 + $0xda0] sm:$0xff]
    %v2979 = vld [vmem:[#allocation4 + $0xda8] sm:$0xff]
    %v2980 = vld [vmem:[#allocation4 + $0xdb0] sm:$0xff]
    %v2981 = vld [vmem:[#allocation4 + $0xdb8] sm:$0xff]
    %v2982 = vld [vmem:[#allocation4 + $0xdc0] sm:$0xff]
    %v2983 = vld [vmem:[#allocation4 + $0xdc8] sm:$0xff]
    %v2984 = vld [vmem:[#allocation4 + $0xdd0] sm:$0xff]
    %v2985 = vld [vmem:[#allocation4 + $0xdd8] sm:$0xff]
    %v2986 = vld [vmem:[#allocation4 + $0xde0] sm:$0xff]
    %v2987 = vld [vmem:[#allocation4 + $0xde8] sm:$0xff]
    %v2988 = vld [vmem:[#allocation4 + $0xdf0] sm:$0xff]
    %v2989 = vld [vmem:[#allocation4 + $0xdf8] sm:$0xff]
    %v2990 = vld [vmem:[#allocation4 + $0xe00] sm:$0xff]
    %v2991 = vld [vmem:[#allocation4 + $0xe08] sm:$0xff]
    %v2992 = vld [vmem:[#allocation4 + $0xe10] sm:$0xff]
    %v2993 = vld [vmem:[#allocation4 + $0xe18] sm:$0xff]
    %v2994 = vld [vmem:[#allocation4 + $0xe20] sm:$0xff]
    %v2995 = vld [vmem:[#allocation4 + $0xe28] sm:$0xff]
    %v2996 = vld [vmem:[#allocation4 + $0xe30] sm:$0xff]
    %v2997 = vld [vmem:[#allocation4 + $0xe38] sm:$0xff]
    %v2998 = vld [vmem:[#allocation4 + $0xe40] sm:$0xff]
    %v2999 = vld [vmem:[#allocation4 + $0xe48] sm:$0xff]
    %v3000 = vld [vmem:[#allocation4 + $0xe50] sm:$0xff]
    %v3001 = vld [vmem:[#allocation4 + $0xe58] sm:$0xff]
    %v3002 = vld [vmem:[#allocation4 + $0xe60] sm:$0xff]
    %v3003 = vld [vmem:[#allocation4 + $0xe68] sm:$0xff]
    %v3004 = vld [vmem:[#allocation4 + $0xe70] sm:$0xff]
    %v3005 = vld [vmem:[#allocation4 + $0xe78] sm:$0xff]
    %v3006 = vld [vmem:[#allocation4 + $0xe80] sm:$0xff]
    %v3007 = vld [vmem:[#allocation4 + $0xe88] sm:$0xff]
    %v3008 = vld [vmem:[#allocation4 + $0xe90] sm:$0xff]
    %v3009 = vld [vmem:[#allocation4 + $0xe98] sm:$0xff]
    %v3010 = vld [vmem:[#allocation4 + $0xea0] sm:$0xff]
    %v3011 = vld [vmem:[#allocation4 + $0xea8] sm:$0xff]
    %v3012 = vld [vmem:[#allocation4 + $0xeb0] sm:$0xff]
    %v3013 = vld [vmem:[#allocation4 + $0xeb8] sm:$0xff]
    %v3014 = vld [vmem:[#allocation4 + $0xec0] sm:$0xff]
    %v3015 = vld [vmem:[#allocation4 + $0xec8] sm:$0xff]
    %v3016 = vld [vmem:[#allocation4 + $0xed0] sm:$0xff]
    %v3017 = vld [vmem:[#allocation4 + $0xed8] sm:$0xff]
    %v3018 = vld [vmem:[#allocation4 + $0xee0] sm:$0xff]
    %v3019 = vld [vmem:[#allocation4 + $0xee8] sm:$0xff]
    %v3020 = vld [vmem:[#allocation4 + $0xef0] sm:$0xff]
    %v3021 = vld [vmem:[#allocation4 + $0xef8] sm:$0xff]
    %v3022 = vld [vmem:[#allocation4 + $0xf00] sm:$0xff]
    %v3023 = vld [vmem:[#allocation4 + $0xf08] sm:$0xff]
    %v3024 = vld [vmem:[#allocation4 + $0xf10] sm:$0xff]
    %v3025 = vld [vmem:[#allocation4 + $0xf18] sm:$0xff]
    %v3026 = vld [vmem:[#allocation4 + $0xf20] sm:$0xff]
    %v3027 = vld [vmem:[#allocation4 + $0xf28] sm:$0xff]
    %v3028 = vld [vmem:[#allocation4 + $0xf30] sm:$0xff]
    %v3029 = vld [vmem:[#allocation4 + $0xf38] sm:$0xff]
    %v3030 = vld [vmem:[#allocation4 + $0xf40] sm:$0xff]
    %v3031 = vld [vmem:[#allocation4 + $0xf48] sm:$0xff]
    %v3032 = vld [vmem:[#allocation4 + $0xf50] sm:$0xff]
    %v3033 = vld [vmem:[#allocation4 + $0xf58] sm:$0xff]
    %v3034 = vld [vmem:[#allocation4 + $0xf60] sm:$0xff]
    %v3035 = vld [vmem:[#allocation4 + $0xf68] sm:$0xff]
    %v3036 = vld [vmem:[#allocation4 + $0xf70] sm:$0xff]
    %v3037 = vld [vmem:[#allocation4 + $0xf78] sm:$0xff]
    %v3038 = vld [vmem:[#allocation4 + $0xf80] sm:$0xff]
    %v3039 = vld [vmem:[#allocation4 + $0xf88] sm:$0xff]
    %v3040 = vld [vmem:[#allocation4 + $0xf90] sm:$0xff]
    %v3041 = vld [vmem:[#allocation4 + $0xf98] sm:$0xff]
    %v3042 = vld [vmem:[#allocation4 + $0xfa0] sm:$0xff]
    %v3043 = vld [vmem:[#allocation4 + $0xfa8] sm:$0xff]
    %v3044 = vld [vmem:[#allocation4 + $0xfb0] sm:$0xff]
    %v3045 = vld [vmem:[#allocation4 + $0xfb8] sm:$0xff]
    %v3046 = vld [vmem:[#allocation4 + $0xfc0] sm:$0xff]
    %v3047 = vld [vmem:[#allocation4 + $0xfc8] sm:$0xff]
    %v3048 = vld [vmem:[#allocation4 + $0xfd0] sm:$0xff]
    %v3049 = vld [vmem:[#allocation4 + $0xfd8] sm:$0xff]
    %v3050 = vld [vmem:[#allocation4 + $0xfe0] sm:$0xff]
    %v3051 = vld [vmem:[#allocation4 + $0xfe8] sm:$0xff]
    %v3052 = vld [vmem:[#allocation4 + $0xff0] sm:$0xff]
    %v3053 = vld [vmem:[#allocation4 + $0xff8] sm:$0xff]
    %v3054 = vld [vmem:[#allocation4 + $0x1000] sm:$0xff]
    %v3055 = vld [vmem:[#allocation4 + $0x1008] sm:$0xff]
    %v3056 = vld [vmem:[#allocation4 + $0x1010] sm:$0xff]
    %v3057 = vld [vmem:[#allocation4 + $0x1018] sm:$0xff]
    %v3058 = vld [vmem:[#allocation4 + $0x1020] sm:$0xff]
    %v3059 = vld [vmem:[#allocation4 + $0x1028] sm:$0xff]
    %v3060 = vld [vmem:[#allocation4 + $0x1030] sm:$0xff]
    %v3061 = vld [vmem:[#allocation4 + $0x1038] sm:$0xff]
    %v3062 = vld [vmem:[#allocation4 + $0x1040] sm:$0xff]
    %v3063 = vld [vmem:[#allocation4 + $0x1048] sm:$0xff]
    %v3064 = vld [vmem:[#allocation4 + $0x1050] sm:$0xff]
    %v3065 = vld [vmem:[#allocation4 + $0x1058] sm:$0xff]
    %v3066 = vld [vmem:[#allocation4 + $0x1060] sm:$0xff]
    %v3067 = vld [vmem:[#allocation4 + $0x1068] sm:$0xff]
    %v3068 = vld [vmem:[#allocation4 + $0x1070] sm:$0xff]
    %v3069 = vld [vmem:[#allocation4 + $0x1078] sm:$0xff]
    %v3070 = vld [vmem:[#allocation4 + $0x1080] sm:$0xff]
    %v3071 = vld [vmem:[#allocation4 + $0x1088] sm:$0xff]
    %v3072 = vld [vmem:[#allocation4 + $0x1090] sm:$0xff]
    %v3073 = vld [vmem:[#allocation4 + $0x1098] sm:$0xff]
    %v3074 = vld [vmem:[#allocation4 + $0x10a0] sm:$0xff]
    %v3075 = vld [vmem:[#allocation4 + $0x10a8] sm:$0xff]
    %v3076 = vld [vmem:[#allocation4 + $0x10b0] sm:$0xff]
    %v3077 = vld [vmem:[#allocation4 + $0x10b8] sm:$0xff]
    %v3078 = vld [vmem:[#allocation4 + $0x10c0] sm:$0xff]
    %v3079 = vld [vmem:[#allocation4 + $0x10c8] sm:$0xff]
    %v3080 = vld [vmem:[#allocation4 + $0x10d0] sm:$0xff]
    %v3081 = vld [vmem:[#allocation4 + $0x10d8] sm:$0xff]
    %v3082 = vld [vmem:[#allocation4 + $0x10e0] sm:$0xff]
    %v3083 = vld [vmem:[#allocation4 + $0x10e8] sm:$0xff]
    %v3084 = vld [vmem:[#allocation4 + $0x10f0] sm:$0xff]
    %v3085 = vld [vmem:[#allocation4 + $0x10f8] sm:$0xff]
    %v3086 = vld [vmem:[#allocation4 + $0x1100] sm:$0xff]
    %v3087 = vld [vmem:[#allocation4 + $0x1108] sm:$0xff]
    %v3088 = vld [vmem:[#allocation4 + $0x1110] sm:$0xff]
    %v3089 = vld [vmem:[#allocation4 + $0x1118] sm:$0xff]
    %v3090 = vld [vmem:[#allocation4 + $0x1120] sm:$0xff]
    %v3091 = vld [vmem:[#allocation4 + $0x1128] sm:$0xff]
    %v3092 = vld [vmem:[#allocation4 + $0x1130] sm:$0xff]
    %v3093 = vld [vmem:[#allocation4 + $0x1138] sm:$0xff]
    %v3094 = vld [vmem:[#allocation4 + $0x1140] sm:$0xff]
    %v3095 = vld [vmem:[#allocation4 + $0x1148] sm:$0xff]
    %v3096 = vld [vmem:[#allocation4 + $0x1150] sm:$0xff]
    %v3097 = vld [vmem:[#allocation4 + $0x1158] sm:$0xff]
    %v3098 = vld [vmem:[#allocation4 + $0x1160] sm:$0xff]
    %v3099 = vld [vmem:[#allocation4 + $0x1168] sm:$0xff]
    %v3100 = vld [vmem:[#allocation4 + $0x1170] sm:$0xff]
    %v3101 = vld [vmem:[#allocation4 + $0x1178] sm:$0xff]
    %v3102 = vld [vmem:[#allocation4 + $0x1180] sm:$0xff]
    %v3103 = vld [vmem:[#allocation4 + $0x1188] sm:$0xff]
    %v3104 = vld [vmem:[#allocation4 + $0x1190] sm:$0xff]
    %v3105 = vld [vmem:[#allocation4 + $0x1198] sm:$0xff]
    %v3106 = vld [vmem:[#allocation4 + $0x11a0] sm:$0xff]
    %v3107 = vld [vmem:[#allocation4 + $0x11a8] sm:$0xff]
    %v3108 = vld [vmem:[#allocation4 + $0x11b0] sm:$0xff]
    %v3109 = vld [vmem:[#allocation4 + $0x11b8] sm:$0xff]
    %v3110 = vld [vmem:[#allocation4 + $0x11c0] sm:$0xff]
    %v3111 = vld [vmem:[#allocation4 + $0x11c8] sm:$0xff]
    %v3112 = vld [vmem:[#allocation4 + $0x11d0] sm:$0xff]
    %v3113 = vld [vmem:[#allocation4 + $0x11d8] sm:$0xff]
    %v3114 = vld [vmem:[#allocation4 + $0x11e0] sm:$0xff]
    %v3115 = vld [vmem:[#allocation4 + $0x11e8] sm:$0xff]
    %v3116 = vld [vmem:[#allocation4 + $0x11f0] sm:$0xff]
    %v3117 = vld [vmem:[#allocation4 + $0x11f8] sm:$0xff]
    %v3118 = vld [vmem:[#allocation4 + $0x1200] sm:$0xff]
    %v3119 = vld [vmem:[#allocation4 + $0x1208] sm:$0xff]
    %v3120 = vld [vmem:[#allocation4 + $0x1210] sm:$0xff]
    %v3121 = vld [vmem:[#allocation4 + $0x1218] sm:$0xff]
    %v3122 = vld [vmem:[#allocation4 + $0x1220] sm:$0xff]
    %v3123 = vld [vmem:[#allocation4 + $0x1228] sm:$0xff]
    %v3124 = vld [vmem:[#allocation4 + $0x1230] sm:$0xff]
    %v3125 = vld [vmem:[#allocation4 + $0x1238] sm:$0xff]
    %v3126 = vld [vmem:[#allocation4 + $0x1240] sm:$0xff]
    %v3127 = vld [vmem:[#allocation4 + $0x1248] sm:$0xff]
    %v3128 = vld [vmem:[#allocation4 + $0x1250] sm:$0xff]
    %v3129 = vld [vmem:[#allocation4 + $0x1258] sm:$0xff]
    %v3130 = vld [vmem:[#allocation4 + $0x1260] sm:$0xff]
    %v3131 = vld [vmem:[#allocation4 + $0x1268] sm:$0xff]
    %v3132 = vld [vmem:[#allocation4 + $0x1270] sm:$0xff]
    %v3133 = vld [vmem:[#allocation4 + $0x1278] sm:$0xff]
    %v3134 = vld [vmem:[#allocation4 + $0x1280] sm:$0xff]
    %v3135 = vld [vmem:[#allocation4 + $0x1288] sm:$0xff]
    %v3136 = vld [vmem:[#allocation4 + $0x1290] sm:$0xff]
    %v3137 = vld [vmem:[#allocation4 + $0x1298] sm:$0xff]
    %v3138 = vld [vmem:[#allocation4 + $0x12a0] sm:$0xff]
    %v3139 = vld [vmem:[#allocation4 + $0x12a8] sm:$0xff]
    %v3140 = vld [vmem:[#allocation4 + $0x12b0] sm:$0xff]
    %v3141 = vld [vmem:[#allocation4 + $0x12b8] sm:$0xff]
    %v3142 = vld [vmem:[#allocation4 + $0x12c0] sm:$0xff]
    %v3143 = vld [vmem:[#allocation4 + $0x12c8] sm:$0xff]
    %v3144 = vld [vmem:[#allocation4 + $0x12d0] sm:$0xff]
    %v3145 = vld [vmem:[#allocation4 + $0x12d8] sm:$0xff]
    %v3146 = vld [vmem:[#allocation4 + $0x12e0] sm:$0xff]
    %v3147 = vld [vmem:[#allocation4 + $0x12e8] sm:$0xff]
    %v3148 = vld [vmem:[#allocation4 + $0x12f0] sm:$0xff]
    %v3149 = vld [vmem:[#allocation4 + $0x12f8] sm:$0xff]
    %v3150 = vld [vmem:[#allocation4 + $0x1300] sm:$0xff]
    %v3151 = vld [vmem:[#allocation4 + $0x1308] sm:$0xff]
    %v3152 = vld [vmem:[#allocation4 + $0x1310] sm:$0xff]
    %v3153 = vld [vmem:[#allocation4 + $0x1318] sm:$0xff]
    %v3154 = vld [vmem:[#allocation4 + $0x1320] sm:$0xff]
    %v3155 = vld [vmem:[#allocation4 + $0x1328] sm:$0xff]
    %v3156 = vld [vmem:[#allocation4 + $0x1330] sm:$0xff]
    %v3157 = vld [vmem:[#allocation4 + $0x1338] sm:$0xff]
    %v3158 = vld [vmem:[#allocation4 + $0x1340] sm:$0xff]
    %v3159 = vld [vmem:[#allocation4 + $0x1348] sm:$0xff]
    %v3160 = vld [vmem:[#allocation4 + $0x1350] sm:$0xff]
    %v3161 = vld [vmem:[#allocation4 + $0x1358] sm:$0xff]
    %v3162 = vld [vmem:[#allocation4 + $0x1360] sm:$0xff]
    %v3163 = vld [vmem:[#allocation4 + $0x1368] sm:$0xff]
    %v3164 = vld [vmem:[#allocation4 + $0x1370] sm:$0xff]
    %v3165 = vld [vmem:[#allocation4 + $0x1378] sm:$0xff]
    %v3166 = vld [vmem:[#allocation4 + $0x1380] sm:$0xff]
    %v3167 = vld [vmem:[#allocation4 + $0x1388] sm:$0xff]
    %v3168 = vld [vmem:[#allocation4 + $0x1390] sm:$0xff]
    %v3169 = vld [vmem:[#allocation4 + $0x1398] sm:$0xff]
    %v3170 = vld [vmem:[#allocation4 + $0x13a0] sm:$0xff]
    %v3171 = vld [vmem:[#allocation4 + $0x13a8] sm:$0xff]
    %v3172 = vld [vmem:[#allocation4 + $0x13b0] sm:$0xff]
    %v3173 = vld [vmem:[#allocation4 + $0x13b8] sm:$0xff]
    %v3174 = vld [vmem:[#allocation4 + $0x13c0] sm:$0xff]
    %v3175 = vld [vmem:[#allocation4 + $0x13c8] sm:$0xff]
    %v3176 = vld [vmem:[#allocation4 + $0x13d0] sm:$0xff]
    %v3177 = vld [vmem:[#allocation4 + $0x13d8] sm:$0xff]
    %v3178 = vld [vmem:[#allocation4 + $0x13e0] sm:$0xff]
    %v3179 = vld [vmem:[#allocation4 + $0x13e8] sm:$0xff]
    %v3180 = vld [vmem:[#allocation4 + $0x13f0] sm:$0xff]
    %v3181 = vld [vmem:[#allocation4 + $0x13f8] sm:$0xff]
    %v3182 = vld [vmem:[#allocation4 + $0x1400] sm:$0xff]
    %v3183 = vld [vmem:[#allocation4 + $0x1408] sm:$0xff]
    %v3184 = vld [vmem:[#allocation4 + $0x1410] sm:$0xff]
    %v3185 = vld [vmem:[#allocation4 + $0x1418] sm:$0xff]
    %v3186 = vld [vmem:[#allocation4 + $0x1420] sm:$0xff]
    %v3187 = vld [vmem:[#allocation4 + $0x1428] sm:$0xff]
    %v3188 = vld [vmem:[#allocation4 + $0x1430] sm:$0xff]
    %v3189 = vld [vmem:[#allocation4 + $0x1438] sm:$0xff]
    %v3190 = vld [vmem:[#allocation4 + $0x1440] sm:$0xff]
    %v3191 = vld [vmem:[#allocation4 + $0x1448] sm:$0xff]
    %v3192 = vld [vmem:[#allocation4 + $0x1450] sm:$0xff]
    %v3193 = vld [vmem:[#allocation4 + $0x1458] sm:$0xff]
    %v3194 = vld [vmem:[#allocation4 + $0x1460] sm:$0xff]
    %v3195 = vld [vmem:[#allocation4 + $0x1468] sm:$0xff]
    %v3196 = vld [vmem:[#allocation4 + $0x1470] sm:$0xff]
    %v3197 = vld [vmem:[#allocation4 + $0x1478] sm:$0xff]
    %v3198 = vld [vmem:[#allocation4 + $0x1480] sm:$0xff]
    %v3199 = vld [vmem:[#allocation4 + $0x1488] sm:$0xff]
    %v3200 = vld [vmem:[#allocation4 + $0x1490] sm:$0xff]
    %v3201 = vld [vmem:[#allocation4 + $0x1498] sm:$0xff]
    %v3202 = vld [vmem:[#allocation4 + $0x14a0] sm:$0xff]
    %v3203 = vld [vmem:[#allocation4 + $0x14a8] sm:$0xff]
    %v3204 = vld [vmem:[#allocation4 + $0x14b0] sm:$0xff]
    %v3205 = vld [vmem:[#allocation4 + $0x14b8] sm:$0xff]
    %v3206 = vld [vmem:[#allocation4 + $0x14c0] sm:$0xff]
    %v3207 = vld [vmem:[#allocation4 + $0x14c8] sm:$0xff]
    %v3208 = vld [vmem:[#allocation4 + $0x14d0] sm:$0xff]
    %v3209 = vld [vmem:[#allocation4 + $0x14d8] sm:$0xff]
    %v3210 = vld [vmem:[#allocation4 + $0x14e0] sm:$0xff]
    %v3211 = vld [vmem:[#allocation4 + $0x14e8] sm:$0xff]
    %v3212 = vld [vmem:[#allocation4 + $0x14f0] sm:$0xff]
    %v3213 = vld [vmem:[#allocation4 + $0x14f8] sm:$0xff]
    %v3214 = vld [vmem:[#allocation4 + $0x1500] sm:$0xff]
    %v3215 = vld [vmem:[#allocation4 + $0x1508] sm:$0xff]
    %v3216 = vld [vmem:[#allocation4 + $0x1510] sm:$0xff]
    %v3217 = vld [vmem:[#allocation4 + $0x1518] sm:$0xff]
    %v3218 = vld [vmem:[#allocation4 + $0x1520] sm:$0xff]
    %v3219 = vld [vmem:[#allocation4 + $0x1528] sm:$0xff]
    %v3220 = vld [vmem:[#allocation4 + $0x1530] sm:$0xff]
    %v3221 = vld [vmem:[#allocation4 + $0x1538] sm:$0xff]
    %v3222 = vld [vmem:[#allocation4 + $0x1540] sm:$0xff]
    %v3223 = vld [vmem:[#allocation4 + $0x1548] sm:$0xff]
    %v3224 = vld [vmem:[#allocation4 + $0x1550] sm:$0xff]
    %v3225 = vld [vmem:[#allocation4 + $0x1558] sm:$0xff]
    %v3226 = vld [vmem:[#allocation4 + $0x1560] sm:$0xff]
    %v3227 = vld [vmem:[#allocation4 + $0x1568] sm:$0xff]
    %v3228 = vld [vmem:[#allocation4 + $0x1570] sm:$0xff]
    %v3229 = vld [vmem:[#allocation4 + $0x1578] sm:$0xff]
    %v3230 = vld [vmem:[#allocation4 + $0x1580] sm:$0xff]
    %v3231 = vld [vmem:[#allocation4 + $0x1588] sm:$0xff]
    %v3232 = vld [vmem:[#allocation4 + $0x1590] sm:$0xff]
    %v3233 = vld [vmem:[#allocation4 + $0x1598] sm:$0xff]
    %v3234 = vld [vmem:[#allocation4 + $0x15a0] sm:$0xff]
    %v3235 = vld [vmem:[#allocation4 + $0x15a8] sm:$0xff]
    %v3236 = vld [vmem:[#allocation4 + $0x15b0] sm:$0xff]
    %v3237 = vld [vmem:[#allocation4 + $0x15b8] sm:$0xff]
    %v3238 = vld [vmem:[#allocation4 + $0x15c0] sm:$0xff]
    %v3239 = vld [vmem:[#allocation4 + $0x15c8] sm:$0xff]
    %v3240 = vld [vmem:[#allocation4 + $0x15d0] sm:$0xff]
    %v3241 = vld [vmem:[#allocation4 + $0x15d8] sm:$0xff]
    %v3242 = vld [vmem:[#allocation4 + $0x15e0] sm:$0xff]
    %v3243 = vld [vmem:[#allocation4 + $0x15e8] sm:$0xff]
    %v3244 = vld [vmem:[#allocation4 + $0x15f0] sm:$0xff]
    %v3245 = vld [vmem:[#allocation4 + $0x15f8] sm:$0xff]
    %v3246 = vld [vmem:[#allocation4 + $0x1600] sm:$0xff]
    %v3247 = vld [vmem:[#allocation4 + $0x1608] sm:$0xff]
    %v3248 = vld [vmem:[#allocation4 + $0x1610] sm:$0xff]
    %v3249 = vld [vmem:[#allocation4 + $0x1618] sm:$0xff]
    %v3250 = vld [vmem:[#allocation4 + $0x1620] sm:$0xff]
    %v3251 = vld [vmem:[#allocation4 + $0x1628] sm:$0xff]
    %v3252 = vld [vmem:[#allocation4 + $0x1630] sm:$0xff]
    %v3253 = vld [vmem:[#allocation4 + $0x1638] sm:$0xff]
    %v3254 = vld [vmem:[#allocation4 + $0x1640] sm:$0xff]
    %v3255 = vld [vmem:[#allocation4 + $0x1648] sm:$0xff]
    %v3256 = vld [vmem:[#allocation4 + $0x1650] sm:$0xff]
    %v3257 = vld [vmem:[#allocation4 + $0x1658] sm:$0xff]
    %v3258 = vld [vmem:[#allocation4 + $0x1660] sm:$0xff]
    %v3259 = vld [vmem:[#allocation4 + $0x1668] sm:$0xff]
    %v3260 = vld [vmem:[#allocation4 + $0x1670] sm:$0xff]
    %v3261 = vld [vmem:[#allocation4 + $0x1678] sm:$0xff]
    %v3262 = vld [vmem:[#allocation4 + $0x1680] sm:$0xff]
    %v3263 = vld [vmem:[#allocation4 + $0x1688] sm:$0xff]
    %v3264 = vld [vmem:[#allocation4 + $0x1690] sm:$0xff]
    %v3265 = vld [vmem:[#allocation4 + $0x1698] sm:$0xff]
    %v3266 = vld [vmem:[#allocation4 + $0x16a0] sm:$0xff]
    %v3267 = vld [vmem:[#allocation4 + $0x16a8] sm:$0xff]
    %v3268 = vld [vmem:[#allocation4 + $0x16b0] sm:$0xff]
    %v3269 = vld [vmem:[#allocation4 + $0x16b8] sm:$0xff]
    %v3270 = vld [vmem:[#allocation4 + $0x16c0] sm:$0xff]
    %v3271 = vld [vmem:[#allocation4 + $0x16c8] sm:$0xff]
    %v3272 = vld [vmem:[#allocation4 + $0x16d0] sm:$0xff]
    %v3273 = vld [vmem:[#allocation4 + $0x16d8] sm:$0xff]
    %v3274 = vld [vmem:[#allocation4 + $0x16e0] sm:$0xff]
    %v3275 = vld [vmem:[#allocation4 + $0x16e8] sm:$0xff]
    %v3276 = vld [vmem:[#allocation4 + $0x16f0] sm:$0xff]
    %v3277 = vld [vmem:[#allocation4 + $0x16f8] sm:$0xff]
    %v3278 = vld [vmem:[#allocation4 + $0x1700] sm:$0xff]
    %v3279 = vld [vmem:[#allocation4 + $0x1708] sm:$0xff]
    %v3280 = vld [vmem:[#allocation4 + $0x1710] sm:$0xff]
    %v3281 = vld [vmem:[#allocation4 + $0x1718] sm:$0xff]
    %v3282 = vld [vmem:[#allocation4 + $0x1720] sm:$0xff]
    %v3283 = vld [vmem:[#allocation4 + $0x1728] sm:$0xff]
    %v3284 = vld [vmem:[#allocation4 + $0x1730] sm:$0xff]
    %v3285 = vld [vmem:[#allocation4 + $0x1738] sm:$0xff]
    %v3286 = vld [vmem:[#allocation4 + $0x1740] sm:$0xff]
    %v3287 = vld [vmem:[#allocation4 + $0x1748] sm:$0xff]
    %v3288 = vld [vmem:[#allocation4 + $0x1750] sm:$0xff]
    %v3289 = vld [vmem:[#allocation4 + $0x1758] sm:$0xff]
    %v3290 = vld [vmem:[#allocation4 + $0x1760] sm:$0xff]
    %v3291 = vld [vmem:[#allocation4 + $0x1768] sm:$0xff]
    %v3292 = vld [vmem:[#allocation4 + $0x1770] sm:$0xff]
    %v3293 = vld [vmem:[#allocation4 + $0x1778] sm:$0xff]
    %v3294 = vld [vmem:[#allocation4 + $0x1780] sm:$0xff]
    %v3295 = vld [vmem:[#allocation4 + $0x1788] sm:$0xff]
    %v3296 = vld [vmem:[#allocation4 + $0x1790] sm:$0xff]
    %v3297 = vld [vmem:[#allocation4 + $0x1798] sm:$0xff]
    %v3298 = vld [vmem:[#allocation4 + $0x17a0] sm:$0xff]
    %v3299 = vld [vmem:[#allocation4 + $0x17a8] sm:$0xff]
    %v3300 = vld [vmem:[#allocation4 + $0x17b0] sm:$0xff]
    %v3301 = vld [vmem:[#allocation4 + $0x17b8] sm:$0xff]
    %v3302 = vld [vmem:[#allocation4 + $0x17c0] sm:$0xff]
    %v3303 = vld [vmem:[#allocation4 + $0x17c8] sm:$0xff]
    %v3304 = vld [vmem:[#allocation4 + $0x17d0] sm:$0xff]
    %v3305 = vld [vmem:[#allocation4 + $0x17d8] sm:$0xff]
    %v3306 = vld [vmem:[#allocation4 + $0x17e0] sm:$0xff]
    %v3307 = vld [vmem:[#allocation4 + $0x17e8] sm:$0xff]
    %v3308 = vld [vmem:[#allocation4 + $0x17f0] sm:$0xff]
    %v3309 = vld [vmem:[#allocation4 + $0x17f8] sm:$0xff]
    %v3310 = vpack.c.bf16 %v2790, %v2790
    %v3311 = vpack.c.bf16 %v2791, %v2791
    %v3312 = vpack.c.bf16 %v2792, %v2792
    %v3313 = vpack.c.bf16 %v2793, %v2793
    %v3314 = vpack.c.bf16 %v2794, %v2794
    %v3315 = vpack.c.bf16 %v2795, %v2795
    %v3316 = vpack.c.bf16 %v2796, %v2796
    %v3317 = vpack.c.bf16 %v2797, %v2797
    %v3318 = vlaneseq
    %v3319 = vshrl.u32 %v3318, 7
    %v3320 = vsub.s32 1, %v3319
    %v3321 = vrot.slane %v147, %v3320
    %v3322 = vlaneseq
    %v3323 = vshrl.u32 %v3322, 7
    %v3324 = vsub.s32 5, %v3323
    %v3325 = vrot.slane %v147, %v3324
    %v3326 = vlaneseq
    %v3327 = vshrl.u32 %v3326, 7
    %v3328 = vsub.s32 1, %v3327
    %v3329 = vrot.slane %v148, %v3328
    %v3330 = vlaneseq
    %v3331 = vshrl.u32 %v3330, 7
    %v3332 = vsub.s32 5, %v3331
    %v3333 = vrot.slane %v148, %v3332
    %v3334 = vlaneseq
    %v3335 = vshrl.u32 %v3334, 7
    %v3336 = vsub.s32 1, %v3335
    %v3337 = vrot.slane %v149, %v3336
    %v3338 = vlaneseq
    %v3339 = vshrl.u32 %v3338, 7
    %v3340 = vsub.s32 5, %v3339
    %v3341 = vrot.slane %v149, %v3340
    %v3342 = vlaneseq
    %v3343 = vshrl.u32 %v3342, 7
    %v3344 = vsub.s32 1, %v3343
    %v3345 = vrot.slane %v150, %v3344
    %v3346 = vlaneseq
    %v3347 = vshrl.u32 %v3346, 7
    %v3348 = vsub.s32 5, %v3347
    %v3349 = vrot.slane %v150, %v3348
    %v3358 = vlaneseq
    %v3359 = vshrl.u32 %v3358, 7
    %v3360 = vsub.s32 1, %v3359
    %v3361 = vrot.slane %v3321, %v3360
    %v3362 = vlaneseq
    %v3363 = vshrl.u32 %v3362, 7
    %v3364 = vsub.s32 1, %v3363
    %v3365 = vrot.slane %v3325, %v3364
    %v3366 = vlaneseq
    %v3367 = vshrl.u32 %v3366, 7
    %v3368 = vsub.s32 1, %v3367
    %v3369 = vrot.slane %v3329, %v3368
    %v3370 = vlaneseq
    %v3371 = vshrl.u32 %v3370, 7
    %v3372 = vsub.s32 1, %v3371
    %v3373 = vrot.slane %v3333, %v3372
    %v3374 = vlaneseq
    %v3375 = vshrl.u32 %v3374, 7
    %v3376 = vsub.s32 1, %v3375
    %v3377 = vrot.slane %v3337, %v3376
    %v3378 = vlaneseq
    %v3379 = vshrl.u32 %v3378, 7
    %v3380 = vsub.s32 1, %v3379
    %v3381 = vrot.slane %v3341, %v3380
    %v3382 = vlaneseq
    %v3383 = vshrl.u32 %v3382, 7
    %v3384 = vsub.s32 1, %v3383
    %v3385 = vrot.slane %v3345, %v3384
    %v3386 = vlaneseq
    %v3387 = vshrl.u32 %v3386, 7
    %v3388 = vsub.s32 1, %v3387
    %v3389 = vrot.slane %v3349, %v3388
    %v3902 = vunpack.c.l.b16 %v2798
    %v3903 = vunpack.c.h.b16 %v2798
    %v3904 = vunpack.c.l.b16 %v2799
    %v3905 = vunpack.c.h.b16 %v2799
    %v3906 = vunpack.c.l.b16 %v2800
    %v3907 = vunpack.c.h.b16 %v2800
    %v3908 = vunpack.c.l.b16 %v2801
    %v3909 = vunpack.c.h.b16 %v2801
    %v3910 = vunpack.c.l.b16 %v2802
    %v3911 = vunpack.c.h.b16 %v2802
    %v3912 = vunpack.c.l.b16 %v2803
    %v3913 = vunpack.c.h.b16 %v2803
    %v3914 = vunpack.c.l.b16 %v2804
    %v3915 = vunpack.c.h.b16 %v2804
    %v3916 = vunpack.c.l.b16 %v2805
    %v3917 = vunpack.c.h.b16 %v2805
    %v3918 = vunpack.c.l.b16 %v2806
    %v3919 = vunpack.c.h.b16 %v2806
    %v3920 = vunpack.c.l.b16 %v2807
    %v3921 = vunpack.c.h.b16 %v2807
    %v3922 = vunpack.c.l.b16 %v2808
    %v3923 = vunpack.c.h.b16 %v2808
    %v3924 = vunpack.c.l.b16 %v2809
    %v3925 = vunpack.c.h.b16 %v2809
    %v3926 = vunpack.c.l.b16 %v2810
    %v3927 = vunpack.c.h.b16 %v2810
    %v3928 = vunpack.c.l.b16 %v2811
    %v3929 = vunpack.c.h.b16 %v2811
    %v3930 = vunpack.c.l.b16 %v2812
    %v3931 = vunpack.c.h.b16 %v2812
    %v3932 = vunpack.c.l.b16 %v2813
    %v3933 = vunpack.c.h.b16 %v2813
    %v3934 = vunpack.c.l.b16 %v2814
    %v3935 = vunpack.c.h.b16 %v2814
    %v3936 = vunpack.c.l.b16 %v2815
    %v3937 = vunpack.c.h.b16 %v2815
    %v3938 = vunpack.c.l.b16 %v2816
    %v3939 = vunpack.c.h.b16 %v2816
    %v3940 = vunpack.c.l.b16 %v2817
    %v3941 = vunpack.c.h.b16 %v2817
    %v3942 = vunpack.c.l.b16 %v2818
    %v3943 = vunpack.c.h.b16 %v2818
    %v3944 = vunpack.c.l.b16 %v2819
    %v3945 = vunpack.c.h.b16 %v2819
    %v3946 = vunpack.c.l.b16 %v2820
    %v3947 = vunpack.c.h.b16 %v2820
    %v3948 = vunpack.c.l.b16 %v2821
    %v3949 = vunpack.c.h.b16 %v2821
    %v3950 = vunpack.c.l.b16 %v2822
    %v3951 = vunpack.c.h.b16 %v2822
    %v3952 = vunpack.c.l.b16 %v2823
    %v3953 = vunpack.c.h.b16 %v2823
    %v3954 = vunpack.c.l.b16 %v2824
    %v3955 = vunpack.c.h.b16 %v2824
    %v3956 = vunpack.c.l.b16 %v2825
    %v3957 = vunpack.c.h.b16 %v2825
    %v3958 = vunpack.c.l.b16 %v2826
    %v3959 = vunpack.c.h.b16 %v2826
    %v3960 = vunpack.c.l.b16 %v2827
    %v3961 = vunpack.c.h.b16 %v2827
    %v3962 = vunpack.c.l.b16 %v2828
    %v3963 = vunpack.c.h.b16 %v2828
    %v3964 = vunpack.c.l.b16 %v2829
    %v3965 = vunpack.c.h.b16 %v2829
    %v3966 = vunpack.c.l.b16 %v2830
    %v3967 = vunpack.c.h.b16 %v2830
    %v3968 = vunpack.c.l.b16 %v2831
    %v3969 = vunpack.c.h.b16 %v2831
    %v3970 = vunpack.c.l.b16 %v2832
    %v3971 = vunpack.c.h.b16 %v2832
    %v3972 = vunpack.c.l.b16 %v2833
    %v3973 = vunpack.c.h.b16 %v2833
    %v3974 = vunpack.c.l.b16 %v2834
    %v3975 = vunpack.c.h.b16 %v2834
    %v3976 = vunpack.c.l.b16 %v2835
    %v3977 = vunpack.c.h.b16 %v2835
    %v3978 = vunpack.c.l.b16 %v2836
    %v3979 = vunpack.c.h.b16 %v2836
    %v3980 = vunpack.c.l.b16 %v2837
    %v3981 = vunpack.c.h.b16 %v2837
    %v3982 = vunpack.c.l.b16 %v2838
    %v3983 = vunpack.c.h.b16 %v2838
    %v3984 = vunpack.c.l.b16 %v2839
    %v3985 = vunpack.c.h.b16 %v2839
    %v3986 = vunpack.c.l.b16 %v2840
    %v3987 = vunpack.c.h.b16 %v2840
    %v3988 = vunpack.c.l.b16 %v2841
    %v3989 = vunpack.c.h.b16 %v2841
    %v3990 = vunpack.c.l.b16 %v2842
    %v3991 = vunpack.c.h.b16 %v2842
    %v3992 = vunpack.c.l.b16 %v2843
    %v3993 = vunpack.c.h.b16 %v2843
    %v3994 = vunpack.c.l.b16 %v2844
    %v3995 = vunpack.c.h.b16 %v2844
    %v3996 = vunpack.c.l.b16 %v2845
    %v3997 = vunpack.c.h.b16 %v2845
    %v3998 = vunpack.c.l.b16 %v2846
    %v3999 = vunpack.c.h.b16 %v2846
    %v4000 = vunpack.c.l.b16 %v2847
    %v4001 = vunpack.c.h.b16 %v2847
    %v4002 = vunpack.c.l.b16 %v2848
    %v4003 = vunpack.c.h.b16 %v2848
    %v4004 = vunpack.c.l.b16 %v2849
    %v4005 = vunpack.c.h.b16 %v2849
    %v4006 = vunpack.c.l.b16 %v2850
    %v4007 = vunpack.c.h.b16 %v2850
    %v4008 = vunpack.c.l.b16 %v2851
    %v4009 = vunpack.c.h.b16 %v2851
    %v4010 = vunpack.c.l.b16 %v2852
    %v4011 = vunpack.c.h.b16 %v2852
    %v4012 = vunpack.c.l.b16 %v2853
    %v4013 = vunpack.c.h.b16 %v2853
    %v4014 = vunpack.c.l.b16 %v2854
    %v4015 = vunpack.c.h.b16 %v2854
    %v4016 = vunpack.c.l.b16 %v2855
    %v4017 = vunpack.c.h.b16 %v2855
    %v4018 = vunpack.c.l.b16 %v2856
    %v4019 = vunpack.c.h.b16 %v2856
    %v4020 = vunpack.c.l.b16 %v2857
    %v4021 = vunpack.c.h.b16 %v2857
    %v4022 = vunpack.c.l.b16 %v2858
    %v4023 = vunpack.c.h.b16 %v2858
    %v4024 = vunpack.c.l.b16 %v2859
    %v4025 = vunpack.c.h.b16 %v2859
    %v4026 = vunpack.c.l.b16 %v2860
    %v4027 = vunpack.c.h.b16 %v2860
    %v4028 = vunpack.c.l.b16 %v2861
    %v4029 = vunpack.c.h.b16 %v2861
    %v4030 = vunpack.c.l.b16 %v2862
    %v4031 = vunpack.c.h.b16 %v2862
    %v4032 = vunpack.c.l.b16 %v2863
    %v4033 = vunpack.c.h.b16 %v2863
    %v4034 = vunpack.c.l.b16 %v2864
    %v4035 = vunpack.c.h.b16 %v2864
    %v4036 = vunpack.c.l.b16 %v2865
    %v4037 = vunpack.c.h.b16 %v2865
    %v4038 = vunpack.c.l.b16 %v2866
    %v4039 = vunpack.c.h.b16 %v2866
    %v4040 = vunpack.c.l.b16 %v2867
    %v4041 = vunpack.c.h.b16 %v2867
    %v4042 = vunpack.c.l.b16 %v2868
    %v4043 = vunpack.c.h.b16 %v2868
    %v4044 = vunpack.c.l.b16 %v2869
    %v4045 = vunpack.c.h.b16 %v2869
    %v4046 = vunpack.c.l.b16 %v2870
    %v4047 = vunpack.c.h.b16 %v2870
    %v4048 = vunpack.c.l.b16 %v2871
    %v4049 = vunpack.c.h.b16 %v2871
    %v4050 = vunpack.c.l.b16 %v2872
    %v4051 = vunpack.c.h.b16 %v2872
    %v4052 = vunpack.c.l.b16 %v2873
    %v4053 = vunpack.c.h.b16 %v2873
    %v4054 = vunpack.c.l.b16 %v2874
    %v4055 = vunpack.c.h.b16 %v2874
    %v4056 = vunpack.c.l.b16 %v2875
    %v4057 = vunpack.c.h.b16 %v2875
    %v4058 = vunpack.c.l.b16 %v2876
    %v4059 = vunpack.c.h.b16 %v2876
    %v4060 = vunpack.c.l.b16 %v2877
    %v4061 = vunpack.c.h.b16 %v2877
    %v4062 = vunpack.c.l.b16 %v2878
    %v4063 = vunpack.c.h.b16 %v2878
    %v4064 = vunpack.c.l.b16 %v2879
    %v4065 = vunpack.c.h.b16 %v2879
    %v4066 = vunpack.c.l.b16 %v2880
    %v4067 = vunpack.c.h.b16 %v2880
    %v4068 = vunpack.c.l.b16 %v2881
    %v4069 = vunpack.c.h.b16 %v2881
    %v4070 = vunpack.c.l.b16 %v2882
    %v4071 = vunpack.c.h.b16 %v2882
    %v4072 = vunpack.c.l.b16 %v2883
    %v4073 = vunpack.c.h.b16 %v2883
    %v4074 = vunpack.c.l.b16 %v2884
    %v4075 = vunpack.c.h.b16 %v2884
    %v4076 = vunpack.c.l.b16 %v2885
    %v4077 = vunpack.c.h.b16 %v2885
    %v4078 = vunpack.c.l.b16 %v2886
    %v4079 = vunpack.c.h.b16 %v2886
    %v4080 = vunpack.c.l.b16 %v2887
    %v4081 = vunpack.c.h.b16 %v2887
    %v4082 = vunpack.c.l.b16 %v2888
    %v4083 = vunpack.c.h.b16 %v2888
    %v4084 = vunpack.c.l.b16 %v2889
    %v4085 = vunpack.c.h.b16 %v2889
    %v4086 = vunpack.c.l.b16 %v2890
    %v4087 = vunpack.c.h.b16 %v2890
    %v4088 = vunpack.c.l.b16 %v2891
    %v4089 = vunpack.c.h.b16 %v2891
    %v4090 = vunpack.c.l.b16 %v2892
    %v4091 = vunpack.c.h.b16 %v2892
    %v4092 = vunpack.c.l.b16 %v2893
    %v4093 = vunpack.c.h.b16 %v2893
    %v4094 = vunpack.c.l.b16 %v2894
    %v4095 = vunpack.c.h.b16 %v2894
    %v4096 = vunpack.c.l.b16 %v2895
    %v4097 = vunpack.c.h.b16 %v2895
    %v4098 = vunpack.c.l.b16 %v2896
    %v4099 = vunpack.c.h.b16 %v2896
    %v4100 = vunpack.c.l.b16 %v2897
    %v4101 = vunpack.c.h.b16 %v2897
    %v4102 = vunpack.c.l.b16 %v2898
    %v4103 = vunpack.c.h.b16 %v2898
    %v4104 = vunpack.c.l.b16 %v2899
    %v4105 = vunpack.c.h.b16 %v2899
    %v4106 = vunpack.c.l.b16 %v2900
    %v4107 = vunpack.c.h.b16 %v2900
    %v4108 = vunpack.c.l.b16 %v2901
    %v4109 = vunpack.c.h.b16 %v2901
    %v4110 = vunpack.c.l.b16 %v2902
    %v4111 = vunpack.c.h.b16 %v2902
    %v4112 = vunpack.c.l.b16 %v2903
    %v4113 = vunpack.c.h.b16 %v2903
    %v4114 = vunpack.c.l.b16 %v2904
    %v4115 = vunpack.c.h.b16 %v2904
    %v4116 = vunpack.c.l.b16 %v2905
    %v4117 = vunpack.c.h.b16 %v2905
    %v4118 = vunpack.c.l.b16 %v2906
    %v4119 = vunpack.c.h.b16 %v2906
    %v4120 = vunpack.c.l.b16 %v2907
    %v4121 = vunpack.c.h.b16 %v2907
    %v4122 = vunpack.c.l.b16 %v2908
    %v4123 = vunpack.c.h.b16 %v2908
    %v4124 = vunpack.c.l.b16 %v2909
    %v4125 = vunpack.c.h.b16 %v2909
    %v4126 = vunpack.c.l.b16 %v2910
    %v4127 = vunpack.c.h.b16 %v2910
    %v4128 = vunpack.c.l.b16 %v2911
    %v4129 = vunpack.c.h.b16 %v2911
    %v4130 = vunpack.c.l.b16 %v2912
    %v4131 = vunpack.c.h.b16 %v2912
    %v4132 = vunpack.c.l.b16 %v2913
    %v4133 = vunpack.c.h.b16 %v2913
    %v4134 = vunpack.c.l.b16 %v2914
    %v4135 = vunpack.c.h.b16 %v2914
    %v4136 = vunpack.c.l.b16 %v2915
    %v4137 = vunpack.c.h.b16 %v2915
    %v4138 = vunpack.c.l.b16 %v2916
    %v4139 = vunpack.c.h.b16 %v2916
    %v4140 = vunpack.c.l.b16 %v2917
    %v4141 = vunpack.c.h.b16 %v2917
    %v4142 = vunpack.c.l.b16 %v2918
    %v4143 = vunpack.c.h.b16 %v2918
    %v4144 = vunpack.c.l.b16 %v2919
    %v4145 = vunpack.c.h.b16 %v2919
    %v4146 = vunpack.c.l.b16 %v2920
    %v4147 = vunpack.c.h.b16 %v2920
    %v4148 = vunpack.c.l.b16 %v2921
    %v4149 = vunpack.c.h.b16 %v2921
    %v4150 = vunpack.c.l.b16 %v2922
    %v4151 = vunpack.c.h.b16 %v2922
    %v4152 = vunpack.c.l.b16 %v2923
    %v4153 = vunpack.c.h.b16 %v2923
    %v4154 = vunpack.c.l.b16 %v2924
    %v4155 = vunpack.c.h.b16 %v2924
    %v4156 = vunpack.c.l.b16 %v2925
    %v4157 = vunpack.c.h.b16 %v2925
    %v4158 = vunpack.c.l.b16 %v2926
    %v4159 = vunpack.c.h.b16 %v2926
    %v4160 = vunpack.c.l.b16 %v2927
    %v4161 = vunpack.c.h.b16 %v2927
    %v4162 = vunpack.c.l.b16 %v2928
    %v4163 = vunpack.c.h.b16 %v2928
    %v4164 = vunpack.c.l.b16 %v2929
    %v4165 = vunpack.c.h.b16 %v2929
    %v4166 = vunpack.c.l.b16 %v2930
    %v4167 = vunpack.c.h.b16 %v2930
    %v4168 = vunpack.c.l.b16 %v2931
    %v4169 = vunpack.c.h.b16 %v2931
    %v4170 = vunpack.c.l.b16 %v2932
    %v4171 = vunpack.c.h.b16 %v2932
    %v4172 = vunpack.c.l.b16 %v2933
    %v4173 = vunpack.c.h.b16 %v2933
    %v4174 = vunpack.c.l.b16 %v2934
    %v4175 = vunpack.c.h.b16 %v2934
    %v4176 = vunpack.c.l.b16 %v2935
    %v4177 = vunpack.c.h.b16 %v2935
    %v4178 = vunpack.c.l.b16 %v2936
    %v4179 = vunpack.c.h.b16 %v2936
    %v4180 = vunpack.c.l.b16 %v2937
    %v4181 = vunpack.c.h.b16 %v2937
    %v4182 = vunpack.c.l.b16 %v2938
    %v4183 = vunpack.c.h.b16 %v2938
    %v4184 = vunpack.c.l.b16 %v2939
    %v4185 = vunpack.c.h.b16 %v2939
    %v4186 = vunpack.c.l.b16 %v2940
    %v4187 = vunpack.c.h.b16 %v2940
    %v4188 = vunpack.c.l.b16 %v2941
    %v4189 = vunpack.c.h.b16 %v2941
    %v4190 = vunpack.c.l.b16 %v2942
    %v4191 = vunpack.c.h.b16 %v2942
    %v4192 = vunpack.c.l.b16 %v2943
    %v4193 = vunpack.c.h.b16 %v2943
    %v4194 = vunpack.c.l.b16 %v2944
    %v4195 = vunpack.c.h.b16 %v2944
    %v4196 = vunpack.c.l.b16 %v2945
    %v4197 = vunpack.c.h.b16 %v2945
    %v4198 = vunpack.c.l.b16 %v2946
    %v4199 = vunpack.c.h.b16 %v2946
    %v4200 = vunpack.c.l.b16 %v2947
    %v4201 = vunpack.c.h.b16 %v2947
    %v4202 = vunpack.c.l.b16 %v2948
    %v4203 = vunpack.c.h.b16 %v2948
    %v4204 = vunpack.c.l.b16 %v2949
    %v4205 = vunpack.c.h.b16 %v2949
    %v4206 = vunpack.c.l.b16 %v2950
    %v4207 = vunpack.c.h.b16 %v2950
    %v4208 = vunpack.c.l.b16 %v2951
    %v4209 = vunpack.c.h.b16 %v2951
    %v4210 = vunpack.c.l.b16 %v2952
    %v4211 = vunpack.c.h.b16 %v2952
    %v4212 = vunpack.c.l.b16 %v2953
    %v4213 = vunpack.c.h.b16 %v2953
    %v4214 = vunpack.c.l.b16 %v2954
    %v4215 = vunpack.c.h.b16 %v2954
    %v4216 = vunpack.c.l.b16 %v2955
    %v4217 = vunpack.c.h.b16 %v2955
    %v4218 = vunpack.c.l.b16 %v2956
    %v4219 = vunpack.c.h.b16 %v2956
    %v4220 = vunpack.c.l.b16 %v2957
    %v4221 = vunpack.c.h.b16 %v2957
    %v4222 = vunpack.c.l.b16 %v2958
    %v4223 = vunpack.c.h.b16 %v2958
    %v4224 = vunpack.c.l.b16 %v2959
    %v4225 = vunpack.c.h.b16 %v2959
    %v4226 = vunpack.c.l.b16 %v2960
    %v4227 = vunpack.c.h.b16 %v2960
    %v4228 = vunpack.c.l.b16 %v2961
    %v4229 = vunpack.c.h.b16 %v2961
    %v4230 = vunpack.c.l.b16 %v2962
    %v4231 = vunpack.c.h.b16 %v2962
    %v4232 = vunpack.c.l.b16 %v2963
    %v4233 = vunpack.c.h.b16 %v2963
    %v4234 = vunpack.c.l.b16 %v2964
    %v4235 = vunpack.c.h.b16 %v2964
    %v4236 = vunpack.c.l.b16 %v2965
    %v4237 = vunpack.c.h.b16 %v2965
    %v4238 = vunpack.c.l.b16 %v2966
    %v4239 = vunpack.c.h.b16 %v2966
    %v4240 = vunpack.c.l.b16 %v2967
    %v4241 = vunpack.c.h.b16 %v2967
    %v4242 = vunpack.c.l.b16 %v2968
    %v4243 = vunpack.c.h.b16 %v2968
    %v4244 = vunpack.c.l.b16 %v2969
    %v4245 = vunpack.c.h.b16 %v2969
    %v4246 = vunpack.c.l.b16 %v2970
    %v4247 = vunpack.c.h.b16 %v2970
    %v4248 = vunpack.c.l.b16 %v2971
    %v4249 = vunpack.c.h.b16 %v2971
    %v4250 = vunpack.c.l.b16 %v2972
    %v4251 = vunpack.c.h.b16 %v2972
    %v4252 = vunpack.c.l.b16 %v2973
    %v4253 = vunpack.c.h.b16 %v2973
    %v4254 = vunpack.c.l.b16 %v2974
    %v4255 = vunpack.c.h.b16 %v2974
    %v4256 = vunpack.c.l.b16 %v2975
    %v4257 = vunpack.c.h.b16 %v2975
    %v4258 = vunpack.c.l.b16 %v2976
    %v4259 = vunpack.c.h.b16 %v2976
    %v4260 = vunpack.c.l.b16 %v2977
    %v4261 = vunpack.c.h.b16 %v2977
    %v4262 = vunpack.c.l.b16 %v2978
    %v4263 = vunpack.c.h.b16 %v2978
    %v4264 = vunpack.c.l.b16 %v2979
    %v4265 = vunpack.c.h.b16 %v2979
    %v4266 = vunpack.c.l.b16 %v2980
    %v4267 = vunpack.c.h.b16 %v2980
    %v4268 = vunpack.c.l.b16 %v2981
    %v4269 = vunpack.c.h.b16 %v2981
    %v4270 = vunpack.c.l.b16 %v2982
    %v4271 = vunpack.c.h.b16 %v2982
    %v4272 = vunpack.c.l.b16 %v2983
    %v4273 = vunpack.c.h.b16 %v2983
    %v4274 = vunpack.c.l.b16 %v2984
    %v4275 = vunpack.c.h.b16 %v2984
    %v4276 = vunpack.c.l.b16 %v2985
    %v4277 = vunpack.c.h.b16 %v2985
    %v4278 = vunpack.c.l.b16 %v2986
    %v4279 = vunpack.c.h.b16 %v2986
    %v4280 = vunpack.c.l.b16 %v2987
    %v4281 = vunpack.c.h.b16 %v2987
    %v4282 = vunpack.c.l.b16 %v2988
    %v4283 = vunpack.c.h.b16 %v2988
    %v4284 = vunpack.c.l.b16 %v2989
    %v4285 = vunpack.c.h.b16 %v2989
    %v4286 = vunpack.c.l.b16 %v2990
    %v4287 = vunpack.c.h.b16 %v2990
    %v4288 = vunpack.c.l.b16 %v2991
    %v4289 = vunpack.c.h.b16 %v2991
    %v4290 = vunpack.c.l.b16 %v2992
    %v4291 = vunpack.c.h.b16 %v2992
    %v4292 = vunpack.c.l.b16 %v2993
    %v4293 = vunpack.c.h.b16 %v2993
    %v4294 = vunpack.c.l.b16 %v2994
    %v4295 = vunpack.c.h.b16 %v2994
    %v4296 = vunpack.c.l.b16 %v2995
    %v4297 = vunpack.c.h.b16 %v2995
    %v4298 = vunpack.c.l.b16 %v2996
    %v4299 = vunpack.c.h.b16 %v2996
    %v4300 = vunpack.c.l.b16 %v2997
    %v4301 = vunpack.c.h.b16 %v2997
    %v4302 = vunpack.c.l.b16 %v2998
    %v4303 = vunpack.c.h.b16 %v2998
    %v4304 = vunpack.c.l.b16 %v2999
    %v4305 = vunpack.c.h.b16 %v2999
    %v4306 = vunpack.c.l.b16 %v3000
    %v4307 = vunpack.c.h.b16 %v3000
    %v4308 = vunpack.c.l.b16 %v3001
    %v4309 = vunpack.c.h.b16 %v3001
    %v4310 = vunpack.c.l.b16 %v3002
    %v4311 = vunpack.c.h.b16 %v3002
    %v4312 = vunpack.c.l.b16 %v3003
    %v4313 = vunpack.c.h.b16 %v3003
    %v4314 = vunpack.c.l.b16 %v3004
    %v4315 = vunpack.c.h.b16 %v3004
    %v4316 = vunpack.c.l.b16 %v3005
    %v4317 = vunpack.c.h.b16 %v3005
    %v4318 = vunpack.c.l.b16 %v3006
    %v4319 = vunpack.c.h.b16 %v3006
    %v4320 = vunpack.c.l.b16 %v3007
    %v4321 = vunpack.c.h.b16 %v3007
    %v4322 = vunpack.c.l.b16 %v3008
    %v4323 = vunpack.c.h.b16 %v3008
    %v4324 = vunpack.c.l.b16 %v3009
    %v4325 = vunpack.c.h.b16 %v3009
    %v4326 = vunpack.c.l.b16 %v3010
    %v4327 = vunpack.c.h.b16 %v3010
    %v4328 = vunpack.c.l.b16 %v3011
    %v4329 = vunpack.c.h.b16 %v3011
    %v4330 = vunpack.c.l.b16 %v3012
    %v4331 = vunpack.c.h.b16 %v3012
    %v4332 = vunpack.c.l.b16 %v3013
    %v4333 = vunpack.c.h.b16 %v3013
    %v4334 = vunpack.c.l.b16 %v3014
    %v4335 = vunpack.c.h.b16 %v3014
    %v4336 = vunpack.c.l.b16 %v3015
    %v4337 = vunpack.c.h.b16 %v3015
    %v4338 = vunpack.c.l.b16 %v3016
    %v4339 = vunpack.c.h.b16 %v3016
    %v4340 = vunpack.c.l.b16 %v3017
    %v4341 = vunpack.c.h.b16 %v3017
    %v4342 = vunpack.c.l.b16 %v3018
    %v4343 = vunpack.c.h.b16 %v3018
    %v4344 = vunpack.c.l.b16 %v3019
    %v4345 = vunpack.c.h.b16 %v3019
    %v4346 = vunpack.c.l.b16 %v3020
    %v4347 = vunpack.c.h.b16 %v3020
    %v4348 = vunpack.c.l.b16 %v3021
    %v4349 = vunpack.c.h.b16 %v3021
    %v4350 = vunpack.c.l.b16 %v3022
    %v4351 = vunpack.c.h.b16 %v3022
    %v4352 = vunpack.c.l.b16 %v3023
    %v4353 = vunpack.c.h.b16 %v3023
    %v4354 = vunpack.c.l.b16 %v3024
    %v4355 = vunpack.c.h.b16 %v3024
    %v4356 = vunpack.c.l.b16 %v3025
    %v4357 = vunpack.c.h.b16 %v3025
    %v4358 = vunpack.c.l.b16 %v3026
    %v4359 = vunpack.c.h.b16 %v3026
    %v4360 = vunpack.c.l.b16 %v3027
    %v4361 = vunpack.c.h.b16 %v3027
    %v4362 = vunpack.c.l.b16 %v3028
    %v4363 = vunpack.c.h.b16 %v3028
    %v4364 = vunpack.c.l.b16 %v3029
    %v4365 = vunpack.c.h.b16 %v3029
    %v4366 = vunpack.c.l.b16 %v3030
    %v4367 = vunpack.c.h.b16 %v3030
    %v4368 = vunpack.c.l.b16 %v3031
    %v4369 = vunpack.c.h.b16 %v3031
    %v4370 = vunpack.c.l.b16 %v3032
    %v4371 = vunpack.c.h.b16 %v3032
    %v4372 = vunpack.c.l.b16 %v3033
    %v4373 = vunpack.c.h.b16 %v3033
    %v4374 = vunpack.c.l.b16 %v3034
    %v4375 = vunpack.c.h.b16 %v3034
    %v4376 = vunpack.c.l.b16 %v3035
    %v4377 = vunpack.c.h.b16 %v3035
    %v4378 = vunpack.c.l.b16 %v3036
    %v4379 = vunpack.c.h.b16 %v3036
    %v4380 = vunpack.c.l.b16 %v3037
    %v4381 = vunpack.c.h.b16 %v3037
    %v4382 = vunpack.c.l.b16 %v3038
    %v4383 = vunpack.c.h.b16 %v3038
    %v4384 = vunpack.c.l.b16 %v3039
    %v4385 = vunpack.c.h.b16 %v3039
    %v4386 = vunpack.c.l.b16 %v3040
    %v4387 = vunpack.c.h.b16 %v3040
    %v4388 = vunpack.c.l.b16 %v3041
    %v4389 = vunpack.c.h.b16 %v3041
    %v4390 = vunpack.c.l.b16 %v3042
    %v4391 = vunpack.c.h.b16 %v3042
    %v4392 = vunpack.c.l.b16 %v3043
    %v4393 = vunpack.c.h.b16 %v3043
    %v4394 = vunpack.c.l.b16 %v3044
    %v4395 = vunpack.c.h.b16 %v3044
    %v4396 = vunpack.c.l.b16 %v3045
    %v4397 = vunpack.c.h.b16 %v3045
    %v4398 = vunpack.c.l.b16 %v3046
    %v4399 = vunpack.c.h.b16 %v3046
    %v4400 = vunpack.c.l.b16 %v3047
    %v4401 = vunpack.c.h.b16 %v3047
    %v4402 = vunpack.c.l.b16 %v3048
    %v4403 = vunpack.c.h.b16 %v3048
    %v4404 = vunpack.c.l.b16 %v3049
    %v4405 = vunpack.c.h.b16 %v3049
    %v4406 = vunpack.c.l.b16 %v3050
    %v4407 = vunpack.c.h.b16 %v3050
    %v4408 = vunpack.c.l.b16 %v3051
    %v4409 = vunpack.c.h.b16 %v3051
    %v4410 = vunpack.c.l.b16 %v3052
    %v4411 = vunpack.c.h.b16 %v3052
    %v4412 = vunpack.c.l.b16 %v3053
    %v4413 = vunpack.c.h.b16 %v3053
    %v4414 = vunpack.c.l.b16 %v3054
    %v4415 = vunpack.c.h.b16 %v3054
    %v4416 = vunpack.c.l.b16 %v3055
    %v4417 = vunpack.c.h.b16 %v3055
    %v4418 = vunpack.c.l.b16 %v3056
    %v4419 = vunpack.c.h.b16 %v3056
    %v4420 = vunpack.c.l.b16 %v3057
    %v4421 = vunpack.c.h.b16 %v3057
    %v4422 = vunpack.c.l.b16 %v3058
    %v4423 = vunpack.c.h.b16 %v3058
    %v4424 = vunpack.c.l.b16 %v3059
    %v4425 = vunpack.c.h.b16 %v3059
    %v4426 = vunpack.c.l.b16 %v3060
    %v4427 = vunpack.c.h.b16 %v3060
    %v4428 = vunpack.c.l.b16 %v3061
    %v4429 = vunpack.c.h.b16 %v3061
    %v4430 = vunpack.c.l.b16 %v3062
    %v4431 = vunpack.c.h.b16 %v3062
    %v4432 = vunpack.c.l.b16 %v3063
    %v4433 = vunpack.c.h.b16 %v3063
    %v4434 = vunpack.c.l.b16 %v3064
    %v4435 = vunpack.c.h.b16 %v3064
    %v4436 = vunpack.c.l.b16 %v3065
    %v4437 = vunpack.c.h.b16 %v3065
    %v4438 = vunpack.c.l.b16 %v3066
    %v4439 = vunpack.c.h.b16 %v3066
    %v4440 = vunpack.c.l.b16 %v3067
    %v4441 = vunpack.c.h.b16 %v3067
    %v4442 = vunpack.c.l.b16 %v3068
    %v4443 = vunpack.c.h.b16 %v3068
    %v4444 = vunpack.c.l.b16 %v3069
    %v4445 = vunpack.c.h.b16 %v3069
    %v4446 = vunpack.c.l.b16 %v3070
    %v4447 = vunpack.c.h.b16 %v3070
    %v4448 = vunpack.c.l.b16 %v3071
    %v4449 = vunpack.c.h.b16 %v3071
    %v4450 = vunpack.c.l.b16 %v3072
    %v4451 = vunpack.c.h.b16 %v3072
    %v4452 = vunpack.c.l.b16 %v3073
    %v4453 = vunpack.c.h.b16 %v3073
    %v4454 = vunpack.c.l.b16 %v3074
    %v4455 = vunpack.c.h.b16 %v3074
    %v4456 = vunpack.c.l.b16 %v3075
    %v4457 = vunpack.c.h.b16 %v3075
    %v4458 = vunpack.c.l.b16 %v3076
    %v4459 = vunpack.c.h.b16 %v3076
    %v4460 = vunpack.c.l.b16 %v3077
    %v4461 = vunpack.c.h.b16 %v3077
    %v4462 = vunpack.c.l.b16 %v3078
    %v4463 = vunpack.c.h.b16 %v3078
    %v4464 = vunpack.c.l.b16 %v3079
    %v4465 = vunpack.c.h.b16 %v3079
    %v4466 = vunpack.c.l.b16 %v3080
    %v4467 = vunpack.c.h.b16 %v3080
    %v4468 = vunpack.c.l.b16 %v3081
    %v4469 = vunpack.c.h.b16 %v3081
    %v4470 = vunpack.c.l.b16 %v3082
    %v4471 = vunpack.c.h.b16 %v3082
    %v4472 = vunpack.c.l.b16 %v3083
    %v4473 = vunpack.c.h.b16 %v3083
    %v4474 = vunpack.c.l.b16 %v3084
    %v4475 = vunpack.c.h.b16 %v3084
    %v4476 = vunpack.c.l.b16 %v3085
    %v4477 = vunpack.c.h.b16 %v3085
    %v4478 = vunpack.c.l.b16 %v3086
    %v4479 = vunpack.c.h.b16 %v3086
    %v4480 = vunpack.c.l.b16 %v3087
    %v4481 = vunpack.c.h.b16 %v3087
    %v4482 = vunpack.c.l.b16 %v3088
    %v4483 = vunpack.c.h.b16 %v3088
    %v4484 = vunpack.c.l.b16 %v3089
    %v4485 = vunpack.c.h.b16 %v3089
    %v4486 = vunpack.c.l.b16 %v3090
    %v4487 = vunpack.c.h.b16 %v3090
    %v4488 = vunpack.c.l.b16 %v3091
    %v4489 = vunpack.c.h.b16 %v3091
    %v4490 = vunpack.c.l.b16 %v3092
    %v4491 = vunpack.c.h.b16 %v3092
    %v4492 = vunpack.c.l.b16 %v3093
    %v4493 = vunpack.c.h.b16 %v3093
    %v4494 = vunpack.c.l.b16 %v3094
    %v4495 = vunpack.c.h.b16 %v3094
    %v4496 = vunpack.c.l.b16 %v3095
    %v4497 = vunpack.c.h.b16 %v3095
    %v4498 = vunpack.c.l.b16 %v3096
    %v4499 = vunpack.c.h.b16 %v3096
    %v4500 = vunpack.c.l.b16 %v3097
    %v4501 = vunpack.c.h.b16 %v3097
    %v4502 = vunpack.c.l.b16 %v3098
    %v4503 = vunpack.c.h.b16 %v3098
    %v4504 = vunpack.c.l.b16 %v3099
    %v4505 = vunpack.c.h.b16 %v3099
    %v4506 = vunpack.c.l.b16 %v3100
    %v4507 = vunpack.c.h.b16 %v3100
    %v4508 = vunpack.c.l.b16 %v3101
    %v4509 = vunpack.c.h.b16 %v3101
    %v4510 = vunpack.c.l.b16 %v3102
    %v4511 = vunpack.c.h.b16 %v3102
    %v4512 = vunpack.c.l.b16 %v3103
    %v4513 = vunpack.c.h.b16 %v3103
    %v4514 = vunpack.c.l.b16 %v3104
    %v4515 = vunpack.c.h.b16 %v3104
    %v4516 = vunpack.c.l.b16 %v3105
    %v4517 = vunpack.c.h.b16 %v3105
    %v4518 = vunpack.c.l.b16 %v3106
    %v4519 = vunpack.c.h.b16 %v3106
    %v4520 = vunpack.c.l.b16 %v3107
    %v4521 = vunpack.c.h.b16 %v3107
    %v4522 = vunpack.c.l.b16 %v3108
    %v4523 = vunpack.c.h.b16 %v3108
    %v4524 = vunpack.c.l.b16 %v3109
    %v4525 = vunpack.c.h.b16 %v3109
    %v4526 = vunpack.c.l.b16 %v3110
    %v4527 = vunpack.c.h.b16 %v3110
    %v4528 = vunpack.c.l.b16 %v3111
    %v4529 = vunpack.c.h.b16 %v3111
    %v4530 = vunpack.c.l.b16 %v3112
    %v4531 = vunpack.c.h.b16 %v3112
    %v4532 = vunpack.c.l.b16 %v3113
    %v4533 = vunpack.c.h.b16 %v3113
    %v4534 = vunpack.c.l.b16 %v3114
    %v4535 = vunpack.c.h.b16 %v3114
    %v4536 = vunpack.c.l.b16 %v3115
    %v4537 = vunpack.c.h.b16 %v3115
    %v4538 = vunpack.c.l.b16 %v3116
    %v4539 = vunpack.c.h.b16 %v3116
    %v4540 = vunpack.c.l.b16 %v3117
    %v4541 = vunpack.c.h.b16 %v3117
    %v4542 = vunpack.c.l.b16 %v3118
    %v4543 = vunpack.c.h.b16 %v3118
    %v4544 = vunpack.c.l.b16 %v3119
    %v4545 = vunpack.c.h.b16 %v3119
    %v4546 = vunpack.c.l.b16 %v3120
    %v4547 = vunpack.c.h.b16 %v3120
    %v4548 = vunpack.c.l.b16 %v3121
    %v4549 = vunpack.c.h.b16 %v3121
    %v4550 = vunpack.c.l.b16 %v3122
    %v4551 = vunpack.c.h.b16 %v3122
    %v4552 = vunpack.c.l.b16 %v3123
    %v4553 = vunpack.c.h.b16 %v3123
    %v4554 = vunpack.c.l.b16 %v3124
    %v4555 = vunpack.c.h.b16 %v3124
    %v4556 = vunpack.c.l.b16 %v3125
    %v4557 = vunpack.c.h.b16 %v3125
    %v4558 = vunpack.c.l.b16 %v3126
    %v4559 = vunpack.c.h.b16 %v3126
    %v4560 = vunpack.c.l.b16 %v3127
    %v4561 = vunpack.c.h.b16 %v3127
    %v4562 = vunpack.c.l.b16 %v3128
    %v4563 = vunpack.c.h.b16 %v3128
    %v4564 = vunpack.c.l.b16 %v3129
    %v4565 = vunpack.c.h.b16 %v3129
    %v4566 = vunpack.c.l.b16 %v3130
    %v4567 = vunpack.c.h.b16 %v3130
    %v4568 = vunpack.c.l.b16 %v3131
    %v4569 = vunpack.c.h.b16 %v3131
    %v4570 = vunpack.c.l.b16 %v3132
    %v4571 = vunpack.c.h.b16 %v3132
    %v4572 = vunpack.c.l.b16 %v3133
    %v4573 = vunpack.c.h.b16 %v3133
    %v4574 = vunpack.c.l.b16 %v3134
    %v4575 = vunpack.c.h.b16 %v3134
    %v4576 = vunpack.c.l.b16 %v3135
    %v4577 = vunpack.c.h.b16 %v3135
    %v4578 = vunpack.c.l.b16 %v3136
    %v4579 = vunpack.c.h.b16 %v3136
    %v4580 = vunpack.c.l.b16 %v3137
    %v4581 = vunpack.c.h.b16 %v3137
    %v4582 = vunpack.c.l.b16 %v3138
    %v4583 = vunpack.c.h.b16 %v3138
    %v4584 = vunpack.c.l.b16 %v3139
    %v4585 = vunpack.c.h.b16 %v3139
    %v4586 = vunpack.c.l.b16 %v3140
    %v4587 = vunpack.c.h.b16 %v3140
    %v4588 = vunpack.c.l.b16 %v3141
    %v4589 = vunpack.c.h.b16 %v3141
    %v4590 = vunpack.c.l.b16 %v3142
    %v4591 = vunpack.c.h.b16 %v3142
    %v4592 = vunpack.c.l.b16 %v3143
    %v4593 = vunpack.c.h.b16 %v3143
    %v4594 = vunpack.c.l.b16 %v3144
    %v4595 = vunpack.c.h.b16 %v3144
    %v4596 = vunpack.c.l.b16 %v3145
    %v4597 = vunpack.c.h.b16 %v3145
    %v4598 = vunpack.c.l.b16 %v3146
    %v4599 = vunpack.c.h.b16 %v3146
    %v4600 = vunpack.c.l.b16 %v3147
    %v4601 = vunpack.c.h.b16 %v3147
    %v4602 = vunpack.c.l.b16 %v3148
    %v4603 = vunpack.c.h.b16 %v3148
    %v4604 = vunpack.c.l.b16 %v3149
    %v4605 = vunpack.c.h.b16 %v3149
    %v4606 = vunpack.c.l.b16 %v3150
    %v4607 = vunpack.c.h.b16 %v3150
    %v4608 = vunpack.c.l.b16 %v3151
    %v4609 = vunpack.c.h.b16 %v3151
    %v4610 = vunpack.c.l.b16 %v3152
    %v4611 = vunpack.c.h.b16 %v3152
    %v4612 = vunpack.c.l.b16 %v3153
    %v4613 = vunpack.c.h.b16 %v3153
    %v4614 = vunpack.c.l.b16 %v3154
    %v4615 = vunpack.c.h.b16 %v3154
    %v4616 = vunpack.c.l.b16 %v3155
    %v4617 = vunpack.c.h.b16 %v3155
    %v4618 = vunpack.c.l.b16 %v3156
    %v4619 = vunpack.c.h.b16 %v3156
    %v4620 = vunpack.c.l.b16 %v3157
    %v4621 = vunpack.c.h.b16 %v3157
    %v4622 = vunpack.c.l.b16 %v3158
    %v4623 = vunpack.c.h.b16 %v3158
    %v4624 = vunpack.c.l.b16 %v3159
    %v4625 = vunpack.c.h.b16 %v3159
    %v4626 = vunpack.c.l.b16 %v3160
    %v4627 = vunpack.c.h.b16 %v3160
    %v4628 = vunpack.c.l.b16 %v3161
    %v4629 = vunpack.c.h.b16 %v3161
    %v4630 = vunpack.c.l.b16 %v3162
    %v4631 = vunpack.c.h.b16 %v3162
    %v4632 = vunpack.c.l.b16 %v3163
    %v4633 = vunpack.c.h.b16 %v3163
    %v4634 = vunpack.c.l.b16 %v3164
    %v4635 = vunpack.c.h.b16 %v3164
    %v4636 = vunpack.c.l.b16 %v3165
    %v4637 = vunpack.c.h.b16 %v3165
    %v4638 = vunpack.c.l.b16 %v3166
    %v4639 = vunpack.c.h.b16 %v3166
    %v4640 = vunpack.c.l.b16 %v3167
    %v4641 = vunpack.c.h.b16 %v3167
    %v4642 = vunpack.c.l.b16 %v3168
    %v4643 = vunpack.c.h.b16 %v3168
    %v4644 = vunpack.c.l.b16 %v3169
    %v4645 = vunpack.c.h.b16 %v3169
    %v4646 = vunpack.c.l.b16 %v3170
    %v4647 = vunpack.c.h.b16 %v3170
    %v4648 = vunpack.c.l.b16 %v3171
    %v4649 = vunpack.c.h.b16 %v3171
    %v4650 = vunpack.c.l.b16 %v3172
    %v4651 = vunpack.c.h.b16 %v3172
    %v4652 = vunpack.c.l.b16 %v3173
    %v4653 = vunpack.c.h.b16 %v3173
    %v4654 = vunpack.c.l.b16 %v3174
    %v4655 = vunpack.c.h.b16 %v3174
    %v4656 = vunpack.c.l.b16 %v3175
    %v4657 = vunpack.c.h.b16 %v3175
    %v4658 = vunpack.c.l.b16 %v3176
    %v4659 = vunpack.c.h.b16 %v3176
    %v4660 = vunpack.c.l.b16 %v3177
    %v4661 = vunpack.c.h.b16 %v3177
    %v4662 = vunpack.c.l.b16 %v3178
    %v4663 = vunpack.c.h.b16 %v3178
    %v4664 = vunpack.c.l.b16 %v3179
    %v4665 = vunpack.c.h.b16 %v3179
    %v4666 = vunpack.c.l.b16 %v3180
    %v4667 = vunpack.c.h.b16 %v3180
    %v4668 = vunpack.c.l.b16 %v3181
    %v4669 = vunpack.c.h.b16 %v3181
    %v4670 = vunpack.c.l.b16 %v3182
    %v4671 = vunpack.c.h.b16 %v3182
    %v4672 = vunpack.c.l.b16 %v3183
    %v4673 = vunpack.c.h.b16 %v3183
    %v4674 = vunpack.c.l.b16 %v3184
    %v4675 = vunpack.c.h.b16 %v3184
    %v4676 = vunpack.c.l.b16 %v3185
    %v4677 = vunpack.c.h.b16 %v3185
    %v4678 = vunpack.c.l.b16 %v3186
    %v4679 = vunpack.c.h.b16 %v3186
    %v4680 = vunpack.c.l.b16 %v3187
    %v4681 = vunpack.c.h.b16 %v3187
    %v4682 = vunpack.c.l.b16 %v3188
    %v4683 = vunpack.c.h.b16 %v3188
    %v4684 = vunpack.c.l.b16 %v3189
    %v4685 = vunpack.c.h.b16 %v3189
    %v4686 = vunpack.c.l.b16 %v3190
    %v4687 = vunpack.c.h.b16 %v3190
    %v4688 = vunpack.c.l.b16 %v3191
    %v4689 = vunpack.c.h.b16 %v3191
    %v4690 = vunpack.c.l.b16 %v3192
    %v4691 = vunpack.c.h.b16 %v3192
    %v4692 = vunpack.c.l.b16 %v3193
    %v4693 = vunpack.c.h.b16 %v3193
    %v4694 = vunpack.c.l.b16 %v3194
    %v4695 = vunpack.c.h.b16 %v3194
    %v4696 = vunpack.c.l.b16 %v3195
    %v4697 = vunpack.c.h.b16 %v3195
    %v4698 = vunpack.c.l.b16 %v3196
    %v4699 = vunpack.c.h.b16 %v3196
    %v4700 = vunpack.c.l.b16 %v3197
    %v4701 = vunpack.c.h.b16 %v3197
    %v4702 = vunpack.c.l.b16 %v3198
    %v4703 = vunpack.c.h.b16 %v3198
    %v4704 = vunpack.c.l.b16 %v3199
    %v4705 = vunpack.c.h.b16 %v3199
    %v4706 = vunpack.c.l.b16 %v3200
    %v4707 = vunpack.c.h.b16 %v3200
    %v4708 = vunpack.c.l.b16 %v3201
    %v4709 = vunpack.c.h.b16 %v3201
    %v4710 = vunpack.c.l.b16 %v3202
    %v4711 = vunpack.c.h.b16 %v3202
    %v4712 = vunpack.c.l.b16 %v3203
    %v4713 = vunpack.c.h.b16 %v3203
    %v4714 = vunpack.c.l.b16 %v3204
    %v4715 = vunpack.c.h.b16 %v3204
    %v4716 = vunpack.c.l.b16 %v3205
    %v4717 = vunpack.c.h.b16 %v3205
    %v4718 = vunpack.c.l.b16 %v3206
    %v4719 = vunpack.c.h.b16 %v3206
    %v4720 = vunpack.c.l.b16 %v3207
    %v4721 = vunpack.c.h.b16 %v3207
    %v4722 = vunpack.c.l.b16 %v3208
    %v4723 = vunpack.c.h.b16 %v3208
    %v4724 = vunpack.c.l.b16 %v3209
    %v4725 = vunpack.c.h.b16 %v3209
    %v4726 = vunpack.c.l.b16 %v3210
    %v4727 = vunpack.c.h.b16 %v3210
    %v4728 = vunpack.c.l.b16 %v3211
    %v4729 = vunpack.c.h.b16 %v3211
    %v4730 = vunpack.c.l.b16 %v3212
    %v4731 = vunpack.c.h.b16 %v3212
    %v4732 = vunpack.c.l.b16 %v3213
    %v4733 = vunpack.c.h.b16 %v3213
    %v4734 = vunpack.c.l.b16 %v3214
    %v4735 = vunpack.c.h.b16 %v3214
    %v4736 = vunpack.c.l.b16 %v3215
    %v4737 = vunpack.c.h.b16 %v3215
    %v4738 = vunpack.c.l.b16 %v3216
    %v4739 = vunpack.c.h.b16 %v3216
    %v4740 = vunpack.c.l.b16 %v3217
    %v4741 = vunpack.c.h.b16 %v3217
    %v4742 = vunpack.c.l.b16 %v3218
    %v4743 = vunpack.c.h.b16 %v3218
    %v4744 = vunpack.c.l.b16 %v3219
    %v4745 = vunpack.c.h.b16 %v3219
    %v4746 = vunpack.c.l.b16 %v3220
    %v4747 = vunpack.c.h.b16 %v3220
    %v4748 = vunpack.c.l.b16 %v3221
    %v4749 = vunpack.c.h.b16 %v3221
    %v4750 = vunpack.c.l.b16 %v3222
    %v4751 = vunpack.c.h.b16 %v3222
    %v4752 = vunpack.c.l.b16 %v3223
    %v4753 = vunpack.c.h.b16 %v3223
    %v4754 = vunpack.c.l.b16 %v3224
    %v4755 = vunpack.c.h.b16 %v3224
    %v4756 = vunpack.c.l.b16 %v3225
    %v4757 = vunpack.c.h.b16 %v3225
    %v4758 = vunpack.c.l.b16 %v3226
    %v4759 = vunpack.c.h.b16 %v3226
    %v4760 = vunpack.c.l.b16 %v3227
    %v4761 = vunpack.c.h.b16 %v3227
    %v4762 = vunpack.c.l.b16 %v3228
    %v4763 = vunpack.c.h.b16 %v3228
    %v4764 = vunpack.c.l.b16 %v3229
    %v4765 = vunpack.c.h.b16 %v3229
    %v4766 = vunpack.c.l.b16 %v3230
    %v4767 = vunpack.c.h.b16 %v3230
    %v4768 = vunpack.c.l.b16 %v3231
    %v4769 = vunpack.c.h.b16 %v3231
    %v4770 = vunpack.c.l.b16 %v3232
    %v4771 = vunpack.c.h.b16 %v3232
    %v4772 = vunpack.c.l.b16 %v3233
    %v4773 = vunpack.c.h.b16 %v3233
    %v4774 = vunpack.c.l.b16 %v3234
    %v4775 = vunpack.c.h.b16 %v3234
    %v4776 = vunpack.c.l.b16 %v3235
    %v4777 = vunpack.c.h.b16 %v3235
    %v4778 = vunpack.c.l.b16 %v3236
    %v4779 = vunpack.c.h.b16 %v3236
    %v4780 = vunpack.c.l.b16 %v3237
    %v4781 = vunpack.c.h.b16 %v3237
    %v4782 = vunpack.c.l.b16 %v3238
    %v4783 = vunpack.c.h.b16 %v3238
    %v4784 = vunpack.c.l.b16 %v3239
    %v4785 = vunpack.c.h.b16 %v3239
    %v4786 = vunpack.c.l.b16 %v3240
    %v4787 = vunpack.c.h.b16 %v3240
    %v4788 = vunpack.c.l.b16 %v3241
    %v4789 = vunpack.c.h.b16 %v3241
    %v4790 = vunpack.c.l.b16 %v3242
    %v4791 = vunpack.c.h.b16 %v3242
    %v4792 = vunpack.c.l.b16 %v3243
    %v4793 = vunpack.c.h.b16 %v3243
    %v4794 = vunpack.c.l.b16 %v3244
    %v4795 = vunpack.c.h.b16 %v3244
    %v4796 = vunpack.c.l.b16 %v3245
    %v4797 = vunpack.c.h.b16 %v3245
    %v4798 = vunpack.c.l.b16 %v3246
    %v4799 = vunpack.c.h.b16 %v3246
    %v4800 = vunpack.c.l.b16 %v3247
    %v4801 = vunpack.c.h.b16 %v3247
    %v4802 = vunpack.c.l.b16 %v3248
    %v4803 = vunpack.c.h.b16 %v3248
    %v4804 = vunpack.c.l.b16 %v3249
    %v4805 = vunpack.c.h.b16 %v3249
    %v4806 = vunpack.c.l.b16 %v3250
    %v4807 = vunpack.c.h.b16 %v3250
    %v4808 = vunpack.c.l.b16 %v3251
    %v4809 = vunpack.c.h.b16 %v3251
    %v4810 = vunpack.c.l.b16 %v3252
    %v4811 = vunpack.c.h.b16 %v3252
    %v4812 = vunpack.c.l.b16 %v3253
    %v4813 = vunpack.c.h.b16 %v3253
    %v4814 = vunpack.c.l.b16 %v3254
    %v4815 = vunpack.c.h.b16 %v3254
    %v4816 = vunpack.c.l.b16 %v3255
    %v4817 = vunpack.c.h.b16 %v3255
    %v4818 = vunpack.c.l.b16 %v3256
    %v4819 = vunpack.c.h.b16 %v3256
    %v4820 = vunpack.c.l.b16 %v3257
    %v4821 = vunpack.c.h.b16 %v3257
    %v4822 = vunpack.c.l.b16 %v3258
    %v4823 = vunpack.c.h.b16 %v3258
    %v4824 = vunpack.c.l.b16 %v3259
    %v4825 = vunpack.c.h.b16 %v3259
    %v4826 = vunpack.c.l.b16 %v3260
    %v4827 = vunpack.c.h.b16 %v3260
    %v4828 = vunpack.c.l.b16 %v3261
    %v4829 = vunpack.c.h.b16 %v3261
    %v4830 = vunpack.c.l.b16 %v3262
    %v4831 = vunpack.c.h.b16 %v3262
    %v4832 = vunpack.c.l.b16 %v3263
    %v4833 = vunpack.c.h.b16 %v3263
    %v4834 = vunpack.c.l.b16 %v3264
    %v4835 = vunpack.c.h.b16 %v3264
    %v4836 = vunpack.c.l.b16 %v3265
    %v4837 = vunpack.c.h.b16 %v3265
    %v4838 = vunpack.c.l.b16 %v3266
    %v4839 = vunpack.c.h.b16 %v3266
    %v4840 = vunpack.c.l.b16 %v3267
    %v4841 = vunpack.c.h.b16 %v3267
    %v4842 = vunpack.c.l.b16 %v3268
    %v4843 = vunpack.c.h.b16 %v3268
    %v4844 = vunpack.c.l.b16 %v3269
    %v4845 = vunpack.c.h.b16 %v3269
    %v4846 = vunpack.c.l.b16 %v3270
    %v4847 = vunpack.c.h.b16 %v3270
    %v4848 = vunpack.c.l.b16 %v3271
    %v4849 = vunpack.c.h.b16 %v3271
    %v4850 = vunpack.c.l.b16 %v3272
    %v4851 = vunpack.c.h.b16 %v3272
    %v4852 = vunpack.c.l.b16 %v3273
    %v4853 = vunpack.c.h.b16 %v3273
    %v4854 = vunpack.c.l.b16 %v3274
    %v4855 = vunpack.c.h.b16 %v3274
    %v4856 = vunpack.c.l.b16 %v3275
    %v4857 = vunpack.c.h.b16 %v3275
    %v4858 = vunpack.c.l.b16 %v3276
    %v4859 = vunpack.c.h.b16 %v3276
    %v4860 = vunpack.c.l.b16 %v3277
    %v4861 = vunpack.c.h.b16 %v3277
    %v4862 = vunpack.c.l.b16 %v3278
    %v4863 = vunpack.c.h.b16 %v3278
    %v4864 = vunpack.c.l.b16 %v3279
    %v4865 = vunpack.c.h.b16 %v3279
    %v4866 = vunpack.c.l.b16 %v3280
    %v4867 = vunpack.c.h.b16 %v3280
    %v4868 = vunpack.c.l.b16 %v3281
    %v4869 = vunpack.c.h.b16 %v3281
    %v4870 = vunpack.c.l.b16 %v3282
    %v4871 = vunpack.c.h.b16 %v3282
    %v4872 = vunpack.c.l.b16 %v3283
    %v4873 = vunpack.c.h.b16 %v3283
    %v4874 = vunpack.c.l.b16 %v3284
    %v4875 = vunpack.c.h.b16 %v3284
    %v4876 = vunpack.c.l.b16 %v3285
    %v4877 = vunpack.c.h.b16 %v3285
    %v4878 = vunpack.c.l.b16 %v3286
    %v4879 = vunpack.c.h.b16 %v3286
    %v4880 = vunpack.c.l.b16 %v3287
    %v4881 = vunpack.c.h.b16 %v3287
    %v4882 = vunpack.c.l.b16 %v3288
    %v4883 = vunpack.c.h.b16 %v3288
    %v4884 = vunpack.c.l.b16 %v3289
    %v4885 = vunpack.c.h.b16 %v3289
    %v4886 = vunpack.c.l.b16 %v3290
    %v4887 = vunpack.c.h.b16 %v3290
    %v4888 = vunpack.c.l.b16 %v3291
    %v4889 = vunpack.c.h.b16 %v3291
    %v4890 = vunpack.c.l.b16 %v3292
    %v4891 = vunpack.c.h.b16 %v3292
    %v4892 = vunpack.c.l.b16 %v3293
    %v4893 = vunpack.c.h.b16 %v3293
    %v4894 = vunpack.c.l.b16 %v3294
    %v4895 = vunpack.c.h.b16 %v3294
    %v4896 = vunpack.c.l.b16 %v3295
    %v4897 = vunpack.c.h.b16 %v3295
    %v4898 = vunpack.c.l.b16 %v3296
    %v4899 = vunpack.c.h.b16 %v3296
    %v4900 = vunpack.c.l.b16 %v3297
    %v4901 = vunpack.c.h.b16 %v3297
    %v4902 = vunpack.c.l.b16 %v3298
    %v4903 = vunpack.c.h.b16 %v3298
    %v4904 = vunpack.c.l.b16 %v3299
    %v4905 = vunpack.c.h.b16 %v3299
    %v4906 = vunpack.c.l.b16 %v3300
    %v4907 = vunpack.c.h.b16 %v3300
    %v4908 = vunpack.c.l.b16 %v3301
    %v4909 = vunpack.c.h.b16 %v3301
    %v4910 = vunpack.c.l.b16 %v3302
    %v4911 = vunpack.c.h.b16 %v3302
    %v4912 = vunpack.c.l.b16 %v3303
    %v4913 = vunpack.c.h.b16 %v3303
    %v4914 = vunpack.c.l.b16 %v3304
    %v4915 = vunpack.c.h.b16 %v3304
    %v4916 = vunpack.c.l.b16 %v3305
    %v4917 = vunpack.c.h.b16 %v3305
    %v4918 = vunpack.c.l.b16 %v3306
    %v4919 = vunpack.c.h.b16 %v3306
    %v4920 = vunpack.c.l.b16 %v3307
    %v4921 = vunpack.c.h.b16 %v3307
    %v4922 = vunpack.c.l.b16 %v3308
    %v4923 = vunpack.c.h.b16 %v3308
    %v4924 = vunpack.c.l.b16 %v3309
    %v4925 = vunpack.c.h.b16 %v3309
    %v4926 = vpack.c.b16 %v3910, %v3902
    %v4927 = vpack.c.b16 %v3911, %v3903
    %v4928 = vpack.c.b16 %v3912, %v3904
    %v4929 = vpack.c.b16 %v3913, %v3905
    %v4930 = vpack.c.b16 %v3914, %v3906
    %v4931 = vpack.c.b16 %v3915, %v3907
    %v4932 = vpack.c.b16 %v3916, %v3908
    %v4933 = vpack.c.b16 %v3917, %v3909
    %v4934 = vpack.c.b16 %v3926, %v3918
    %v4935 = vpack.c.b16 %v3927, %v3919
    %v4936 = vpack.c.b16 %v3928, %v3920
    %v4937 = vpack.c.b16 %v3929, %v3921
    %v4938 = vpack.c.b16 %v3930, %v3922
    %v4939 = vpack.c.b16 %v3931, %v3923
    %v4940 = vpack.c.b16 %v3932, %v3924
    %v4941 = vpack.c.b16 %v3933, %v3925
    %v4942 = vpack.c.b16 %v3942, %v3934
    %v4943 = vpack.c.b16 %v3943, %v3935
    %v4944 = vpack.c.b16 %v3944, %v3936
    %v4945 = vpack.c.b16 %v3945, %v3937
    %v4946 = vpack.c.b16 %v3946, %v3938
    %v4947 = vpack.c.b16 %v3947, %v3939
    %v4948 = vpack.c.b16 %v3948, %v3940
    %v4949 = vpack.c.b16 %v3949, %v3941
    %v4950 = vpack.c.b16 %v3958, %v3950
    %v4951 = vpack.c.b16 %v3959, %v3951
    %v4952 = vpack.c.b16 %v3960, %v3952
    %v4953 = vpack.c.b16 %v3961, %v3953
    %v4954 = vpack.c.b16 %v3962, %v3954
    %v4955 = vpack.c.b16 %v3963, %v3955
    %v4956 = vpack.c.b16 %v3964, %v3956
    %v4957 = vpack.c.b16 %v3965, %v3957
    %v4958 = vpack.c.b16 %v3974, %v3966
    %v4959 = vpack.c.b16 %v3975, %v3967
    %v4960 = vpack.c.b16 %v3976, %v3968
    %v4961 = vpack.c.b16 %v3977, %v3969
    %v4962 = vpack.c.b16 %v3978, %v3970
    %v4963 = vpack.c.b16 %v3979, %v3971
    %v4964 = vpack.c.b16 %v3980, %v3972
    %v4965 = vpack.c.b16 %v3981, %v3973
    %v4966 = vpack.c.b16 %v3990, %v3982
    %v4967 = vpack.c.b16 %v3991, %v3983
    %v4968 = vpack.c.b16 %v3992, %v3984
    %v4969 = vpack.c.b16 %v3993, %v3985
    %v4970 = vpack.c.b16 %v3994, %v3986
    %v4971 = vpack.c.b16 %v3995, %v3987
    %v4972 = vpack.c.b16 %v3996, %v3988
    %v4973 = vpack.c.b16 %v3997, %v3989
    %v4974 = vpack.c.b16 %v4006, %v3998
    %v4975 = vpack.c.b16 %v4007, %v3999
    %v4976 = vpack.c.b16 %v4008, %v4000
    %v4977 = vpack.c.b16 %v4009, %v4001
    %v4978 = vpack.c.b16 %v4010, %v4002
    %v4979 = vpack.c.b16 %v4011, %v4003
    %v4980 = vpack.c.b16 %v4012, %v4004
    %v4981 = vpack.c.b16 %v4013, %v4005
    %v4982 = vpack.c.b16 %v4022, %v4014
    %v4983 = vpack.c.b16 %v4023, %v4015
    %v4984 = vpack.c.b16 %v4024, %v4016
    %v4985 = vpack.c.b16 %v4025, %v4017
    %v4986 = vpack.c.b16 %v4026, %v4018
    %v4987 = vpack.c.b16 %v4027, %v4019
    %v4988 = vpack.c.b16 %v4028, %v4020
    %v4989 = vpack.c.b16 %v4029, %v4021
    %v4990 = vpack.c.b16 %v4038, %v4030
    %v4991 = vpack.c.b16 %v4039, %v4031
    %v4992 = vpack.c.b16 %v4040, %v4032
    %v4993 = vpack.c.b16 %v4041, %v4033
    %v4994 = vpack.c.b16 %v4042, %v4034
    %v4995 = vpack.c.b16 %v4043, %v4035
    %v4996 = vpack.c.b16 %v4044, %v4036
    %v4997 = vpack.c.b16 %v4045, %v4037
    %v4998 = vpack.c.b16 %v4054, %v4046
    %v4999 = vpack.c.b16 %v4055, %v4047
    %v5000 = vpack.c.b16 %v4056, %v4048
    %v5001 = vpack.c.b16 %v4057, %v4049
    %v5002 = vpack.c.b16 %v4058, %v4050
    %v5003 = vpack.c.b16 %v4059, %v4051
    %v5004 = vpack.c.b16 %v4060, %v4052
    %v5005 = vpack.c.b16 %v4061, %v4053
    %v5006 = vpack.c.b16 %v4070, %v4062
    %v5007 = vpack.c.b16 %v4071, %v4063
    %v5008 = vpack.c.b16 %v4072, %v4064
    %v5009 = vpack.c.b16 %v4073, %v4065
    %v5010 = vpack.c.b16 %v4074, %v4066
    %v5011 = vpack.c.b16 %v4075, %v4067
    %v5012 = vpack.c.b16 %v4076, %v4068
    %v5013 = vpack.c.b16 %v4077, %v4069
    %v5014 = vpack.c.b16 %v4086, %v4078
    %v5015 = vpack.c.b16 %v4087, %v4079
    %v5016 = vpack.c.b16 %v4088, %v4080
    %v5017 = vpack.c.b16 %v4089, %v4081
    %v5018 = vpack.c.b16 %v4090, %v4082
    %v5019 = vpack.c.b16 %v4091, %v4083
    %v5020 = vpack.c.b16 %v4092, %v4084
    %v5021 = vpack.c.b16 %v4093, %v4085
    %v5022 = vpack.c.b16 %v4102, %v4094
    %v5023 = vpack.c.b16 %v4103, %v4095
    %v5024 = vpack.c.b16 %v4104, %v4096
    %v5025 = vpack.c.b16 %v4105, %v4097
    %v5026 = vpack.c.b16 %v4106, %v4098
    %v5027 = vpack.c.b16 %v4107, %v4099
    %v5028 = vpack.c.b16 %v4108, %v4100
    %v5029 = vpack.c.b16 %v4109, %v4101
    %v5030 = vpack.c.b16 %v4118, %v4110
    %v5031 = vpack.c.b16 %v4119, %v4111
    %v5032 = vpack.c.b16 %v4120, %v4112
    %v5033 = vpack.c.b16 %v4121, %v4113
    %v5034 = vpack.c.b16 %v4122, %v4114
    %v5035 = vpack.c.b16 %v4123, %v4115
    %v5036 = vpack.c.b16 %v4124, %v4116
    %v5037 = vpack.c.b16 %v4125, %v4117
    %v5038 = vpack.c.b16 %v4134, %v4126
    %v5039 = vpack.c.b16 %v4135, %v4127
    %v5040 = vpack.c.b16 %v4136, %v4128
    %v5041 = vpack.c.b16 %v4137, %v4129
    %v5042 = vpack.c.b16 %v4138, %v4130
    %v5043 = vpack.c.b16 %v4139, %v4131
    %v5044 = vpack.c.b16 %v4140, %v4132
    %v5045 = vpack.c.b16 %v4141, %v4133
    %v5046 = vpack.c.b16 %v4150, %v4142
    %v5047 = vpack.c.b16 %v4151, %v4143
    %v5048 = vpack.c.b16 %v4152, %v4144
    %v5049 = vpack.c.b16 %v4153, %v4145
    %v5050 = vpack.c.b16 %v4154, %v4146
    %v5051 = vpack.c.b16 %v4155, %v4147
    %v5052 = vpack.c.b16 %v4156, %v4148
    %v5053 = vpack.c.b16 %v4157, %v4149
    %v5054 = vpack.c.b16 %v4166, %v4158
    %v5055 = vpack.c.b16 %v4167, %v4159
    %v5056 = vpack.c.b16 %v4168, %v4160
    %v5057 = vpack.c.b16 %v4169, %v4161
    %v5058 = vpack.c.b16 %v4170, %v4162
    %v5059 = vpack.c.b16 %v4171, %v4163
    %v5060 = vpack.c.b16 %v4172, %v4164
    %v5061 = vpack.c.b16 %v4173, %v4165
    %v5062 = vpack.c.b16 %v4182, %v4174
    %v5063 = vpack.c.b16 %v4183, %v4175
    %v5064 = vpack.c.b16 %v4184, %v4176
    %v5065 = vpack.c.b16 %v4185, %v4177
    %v5066 = vpack.c.b16 %v4186, %v4178
    %v5067 = vpack.c.b16 %v4187, %v4179
    %v5068 = vpack.c.b16 %v4188, %v4180
    %v5069 = vpack.c.b16 %v4189, %v4181
    %v5070 = vpack.c.b16 %v4198, %v4190
    %v5071 = vpack.c.b16 %v4199, %v4191
    %v5072 = vpack.c.b16 %v4200, %v4192
    %v5073 = vpack.c.b16 %v4201, %v4193
    %v5074 = vpack.c.b16 %v4202, %v4194
    %v5075 = vpack.c.b16 %v4203, %v4195
    %v5076 = vpack.c.b16 %v4204, %v4196
    %v5077 = vpack.c.b16 %v4205, %v4197
    %v5078 = vpack.c.b16 %v4214, %v4206
    %v5079 = vpack.c.b16 %v4215, %v4207
    %v5080 = vpack.c.b16 %v4216, %v4208
    %v5081 = vpack.c.b16 %v4217, %v4209
    %v5082 = vpack.c.b16 %v4218, %v4210
    %v5083 = vpack.c.b16 %v4219, %v4211
    %v5084 = vpack.c.b16 %v4220, %v4212
    %v5085 = vpack.c.b16 %v4221, %v4213
    %v5086 = vpack.c.b16 %v4230, %v4222
    %v5087 = vpack.c.b16 %v4231, %v4223
    %v5088 = vpack.c.b16 %v4232, %v4224
    %v5089 = vpack.c.b16 %v4233, %v4225
    %v5090 = vpack.c.b16 %v4234, %v4226
    %v5091 = vpack.c.b16 %v4235, %v4227
    %v5092 = vpack.c.b16 %v4236, %v4228
    %v5093 = vpack.c.b16 %v4237, %v4229
    %v5094 = vpack.c.b16 %v4246, %v4238
    %v5095 = vpack.c.b16 %v4247, %v4239
    %v5096 = vpack.c.b16 %v4248, %v4240
    %v5097 = vpack.c.b16 %v4249, %v4241
    %v5098 = vpack.c.b16 %v4250, %v4242
    %v5099 = vpack.c.b16 %v4251, %v4243
    %v5100 = vpack.c.b16 %v4252, %v4244
    %v5101 = vpack.c.b16 %v4253, %v4245
    %v5102 = vpack.c.b16 %v4262, %v4254
    %v5103 = vpack.c.b16 %v4263, %v4255
    %v5104 = vpack.c.b16 %v4264, %v4256
    %v5105 = vpack.c.b16 %v4265, %v4257
    %v5106 = vpack.c.b16 %v4266, %v4258
    %v5107 = vpack.c.b16 %v4267, %v4259
    %v5108 = vpack.c.b16 %v4268, %v4260
    %v5109 = vpack.c.b16 %v4269, %v4261
    %v5110 = vpack.c.b16 %v4278, %v4270
    %v5111 = vpack.c.b16 %v4279, %v4271
    %v5112 = vpack.c.b16 %v4280, %v4272
    %v5113 = vpack.c.b16 %v4281, %v4273
    %v5114 = vpack.c.b16 %v4282, %v4274
    %v5115 = vpack.c.b16 %v4283, %v4275
    %v5116 = vpack.c.b16 %v4284, %v4276
    %v5117 = vpack.c.b16 %v4285, %v4277
    %v5118 = vpack.c.b16 %v4294, %v4286
    %v5119 = vpack.c.b16 %v4295, %v4287
    %v5120 = vpack.c.b16 %v4296, %v4288
    %v5121 = vpack.c.b16 %v4297, %v4289
    %v5122 = vpack.c.b16 %v4298, %v4290
    %v5123 = vpack.c.b16 %v4299, %v4291
    %v5124 = vpack.c.b16 %v4300, %v4292
    %v5125 = vpack.c.b16 %v4301, %v4293
    %v5126 = vpack.c.b16 %v4310, %v4302
    %v5127 = vpack.c.b16 %v4311, %v4303
    %v5128 = vpack.c.b16 %v4312, %v4304
    %v5129 = vpack.c.b16 %v4313, %v4305
    %v5130 = vpack.c.b16 %v4314, %v4306
    %v5131 = vpack.c.b16 %v4315, %v4307
    %v5132 = vpack.c.b16 %v4316, %v4308
    %v5133 = vpack.c.b16 %v4317, %v4309
    %v5134 = vpack.c.b16 %v4326, %v4318
    %v5135 = vpack.c.b16 %v4327, %v4319
    %v5136 = vpack.c.b16 %v4328, %v4320
    %v5137 = vpack.c.b16 %v4329, %v4321
    %v5138 = vpack.c.b16 %v4330, %v4322
    %v5139 = vpack.c.b16 %v4331, %v4323
    %v5140 = vpack.c.b16 %v4332, %v4324
    %v5141 = vpack.c.b16 %v4333, %v4325
    %v5142 = vpack.c.b16 %v4342, %v4334
    %v5143 = vpack.c.b16 %v4343, %v4335
    %v5144 = vpack.c.b16 %v4344, %v4336
    %v5145 = vpack.c.b16 %v4345, %v4337
    %v5146 = vpack.c.b16 %v4346, %v4338
    %v5147 = vpack.c.b16 %v4347, %v4339
    %v5148 = vpack.c.b16 %v4348, %v4340
    %v5149 = vpack.c.b16 %v4349, %v4341
    %v5150 = vpack.c.b16 %v4358, %v4350
    %v5151 = vpack.c.b16 %v4359, %v4351
    %v5152 = vpack.c.b16 %v4360, %v4352
    %v5153 = vpack.c.b16 %v4361, %v4353
    %v5154 = vpack.c.b16 %v4362, %v4354
    %v5155 = vpack.c.b16 %v4363, %v4355
    %v5156 = vpack.c.b16 %v4364, %v4356
    %v5157 = vpack.c.b16 %v4365, %v4357
    %v5158 = vpack.c.b16 %v4374, %v4366
    %v5159 = vpack.c.b16 %v4375, %v4367
    %v5160 = vpack.c.b16 %v4376, %v4368
    %v5161 = vpack.c.b16 %v4377, %v4369
    %v5162 = vpack.c.b16 %v4378, %v4370
    %v5163 = vpack.c.b16 %v4379, %v4371
    %v5164 = vpack.c.b16 %v4380, %v4372
    %v5165 = vpack.c.b16 %v4381, %v4373
    %v5166 = vpack.c.b16 %v4390, %v4382
    %v5167 = vpack.c.b16 %v4391, %v4383
    %v5168 = vpack.c.b16 %v4392, %v4384
    %v5169 = vpack.c.b16 %v4393, %v4385
    %v5170 = vpack.c.b16 %v4394, %v4386
    %v5171 = vpack.c.b16 %v4395, %v4387
    %v5172 = vpack.c.b16 %v4396, %v4388
    %v5173 = vpack.c.b16 %v4397, %v4389
    %v5174 = vpack.c.b16 %v4406, %v4398
    %v5175 = vpack.c.b16 %v4407, %v4399
    %v5176 = vpack.c.b16 %v4408, %v4400
    %v5177 = vpack.c.b16 %v4409, %v4401
    %v5178 = vpack.c.b16 %v4410, %v4402
    %v5179 = vpack.c.b16 %v4411, %v4403
    %v5180 = vpack.c.b16 %v4412, %v4404
    %v5181 = vpack.c.b16 %v4413, %v4405
    %v5182 = vpack.c.b16 %v4422, %v4414
    %v5183 = vpack.c.b16 %v4423, %v4415
    %v5184 = vpack.c.b16 %v4424, %v4416
    %v5185 = vpack.c.b16 %v4425, %v4417
    %v5186 = vpack.c.b16 %v4426, %v4418
    %v5187 = vpack.c.b16 %v4427, %v4419
    %v5188 = vpack.c.b16 %v4428, %v4420
    %v5189 = vpack.c.b16 %v4429, %v4421
    %v5190 = vpack.c.b16 %v4438, %v4430
    %v5191 = vpack.c.b16 %v4439, %v4431
    %v5192 = vpack.c.b16 %v4440, %v4432
    %v5193 = vpack.c.b16 %v4441, %v4433
    %v5194 = vpack.c.b16 %v4442, %v4434
    %v5195 = vpack.c.b16 %v4443, %v4435
    %v5196 = vpack.c.b16 %v4444, %v4436
    %v5197 = vpack.c.b16 %v4445, %v4437
    %v5198 = vpack.c.b16 %v4454, %v4446
    %v5199 = vpack.c.b16 %v4455, %v4447
    %v5200 = vpack.c.b16 %v4456, %v4448
    %v5201 = vpack.c.b16 %v4457, %v4449
    %v5202 = vpack.c.b16 %v4458, %v4450
    %v5203 = vpack.c.b16 %v4459, %v4451
    %v5204 = vpack.c.b16 %v4460, %v4452
    %v5205 = vpack.c.b16 %v4461, %v4453
    %v5206 = vpack.c.b16 %v4470, %v4462
    %v5207 = vpack.c.b16 %v4471, %v4463
    %v5208 = vpack.c.b16 %v4472, %v4464
    %v5209 = vpack.c.b16 %v4473, %v4465
    %v5210 = vpack.c.b16 %v4474, %v4466
    %v5211 = vpack.c.b16 %v4475, %v4467
    %v5212 = vpack.c.b16 %v4476, %v4468
    %v5213 = vpack.c.b16 %v4477, %v4469
    %v5214 = vpack.c.b16 %v4486, %v4478
    %v5215 = vpack.c.b16 %v4487, %v4479
    %v5216 = vpack.c.b16 %v4488, %v4480
    %v5217 = vpack.c.b16 %v4489, %v4481
    %v5218 = vpack.c.b16 %v4490, %v4482
    %v5219 = vpack.c.b16 %v4491, %v4483
    %v5220 = vpack.c.b16 %v4492, %v4484
    %v5221 = vpack.c.b16 %v4493, %v4485
    %v5222 = vpack.c.b16 %v4502, %v4494
    %v5223 = vpack.c.b16 %v4503, %v4495
    %v5224 = vpack.c.b16 %v4504, %v4496
    %v5225 = vpack.c.b16 %v4505, %v4497
    %v5226 = vpack.c.b16 %v4506, %v4498
    %v5227 = vpack.c.b16 %v4507, %v4499
    %v5228 = vpack.c.b16 %v4508, %v4500
    %v5229 = vpack.c.b16 %v4509, %v4501
    %v5230 = vpack.c.b16 %v4518, %v4510
    %v5231 = vpack.c.b16 %v4519, %v4511
    %v5232 = vpack.c.b16 %v4520, %v4512
    %v5233 = vpack.c.b16 %v4521, %v4513
    %v5234 = vpack.c.b16 %v4522, %v4514
    %v5235 = vpack.c.b16 %v4523, %v4515
    %v5236 = vpack.c.b16 %v4524, %v4516
    %v5237 = vpack.c.b16 %v4525, %v4517
    %v5238 = vpack.c.b16 %v4534, %v4526
    %v5239 = vpack.c.b16 %v4535, %v4527
    %v5240 = vpack.c.b16 %v4536, %v4528
    %v5241 = vpack.c.b16 %v4537, %v4529
    %v5242 = vpack.c.b16 %v4538, %v4530
    %v5243 = vpack.c.b16 %v4539, %v4531
    %v5244 = vpack.c.b16 %v4540, %v4532
    %v5245 = vpack.c.b16 %v4541, %v4533
    %v5246 = vpack.c.b16 %v4550, %v4542
    %v5247 = vpack.c.b16 %v4551, %v4543
    %v5248 = vpack.c.b16 %v4552, %v4544
    %v5249 = vpack.c.b16 %v4553, %v4545
    %v5250 = vpack.c.b16 %v4554, %v4546
    %v5251 = vpack.c.b16 %v4555, %v4547
    %v5252 = vpack.c.b16 %v4556, %v4548
    %v5253 = vpack.c.b16 %v4557, %v4549
    %v5254 = vpack.c.b16 %v4566, %v4558
    %v5255 = vpack.c.b16 %v4567, %v4559
    %v5256 = vpack.c.b16 %v4568, %v4560
    %v5257 = vpack.c.b16 %v4569, %v4561
    %v5258 = vpack.c.b16 %v4570, %v4562
    %v5259 = vpack.c.b16 %v4571, %v4563
    %v5260 = vpack.c.b16 %v4572, %v4564
    %v5261 = vpack.c.b16 %v4573, %v4565
    %v5262 = vpack.c.b16 %v4582, %v4574
    %v5263 = vpack.c.b16 %v4583, %v4575
    %v5264 = vpack.c.b16 %v4584, %v4576
    %v5265 = vpack.c.b16 %v4585, %v4577
    %v5266 = vpack.c.b16 %v4586, %v4578
    %v5267 = vpack.c.b16 %v4587, %v4579
    %v5268 = vpack.c.b16 %v4588, %v4580
    %v5269 = vpack.c.b16 %v4589, %v4581
    %v5270 = vpack.c.b16 %v4598, %v4590
    %v5271 = vpack.c.b16 %v4599, %v4591
    %v5272 = vpack.c.b16 %v4600, %v4592
    %v5273 = vpack.c.b16 %v4601, %v4593
    %v5274 = vpack.c.b16 %v4602, %v4594
    %v5275 = vpack.c.b16 %v4603, %v4595
    %v5276 = vpack.c.b16 %v4604, %v4596
    %v5277 = vpack.c.b16 %v4605, %v4597
    %v5278 = vpack.c.b16 %v4614, %v4606
    %v5279 = vpack.c.b16 %v4615, %v4607
    %v5280 = vpack.c.b16 %v4616, %v4608
    %v5281 = vpack.c.b16 %v4617, %v4609
    %v5282 = vpack.c.b16 %v4618, %v4610
    %v5283 = vpack.c.b16 %v4619, %v4611
    %v5284 = vpack.c.b16 %v4620, %v4612
    %v5285 = vpack.c.b16 %v4621, %v4613
    %v5286 = vpack.c.b16 %v4630, %v4622
    %v5287 = vpack.c.b16 %v4631, %v4623
    %v5288 = vpack.c.b16 %v4632, %v4624
    %v5289 = vpack.c.b16 %v4633, %v4625
    %v5290 = vpack.c.b16 %v4634, %v4626
    %v5291 = vpack.c.b16 %v4635, %v4627
    %v5292 = vpack.c.b16 %v4636, %v4628
    %v5293 = vpack.c.b16 %v4637, %v4629
    %v5294 = vpack.c.b16 %v4646, %v4638
    %v5295 = vpack.c.b16 %v4647, %v4639
    %v5296 = vpack.c.b16 %v4648, %v4640
    %v5297 = vpack.c.b16 %v4649, %v4641
    %v5298 = vpack.c.b16 %v4650, %v4642
    %v5299 = vpack.c.b16 %v4651, %v4643
    %v5300 = vpack.c.b16 %v4652, %v4644
    %v5301 = vpack.c.b16 %v4653, %v4645
    %v5302 = vpack.c.b16 %v4662, %v4654
    %v5303 = vpack.c.b16 %v4663, %v4655
    %v5304 = vpack.c.b16 %v4664, %v4656
    %v5305 = vpack.c.b16 %v4665, %v4657
    %v5306 = vpack.c.b16 %v4666, %v4658
    %v5307 = vpack.c.b16 %v4667, %v4659
    %v5308 = vpack.c.b16 %v4668, %v4660
    %v5309 = vpack.c.b16 %v4669, %v4661
    %v5310 = vpack.c.b16 %v4678, %v4670
    %v5311 = vpack.c.b16 %v4679, %v4671
    %v5312 = vpack.c.b16 %v4680, %v4672
    %v5313 = vpack.c.b16 %v4681, %v4673
    %v5314 = vpack.c.b16 %v4682, %v4674
    %v5315 = vpack.c.b16 %v4683, %v4675
    %v5316 = vpack.c.b16 %v4684, %v4676
    %v5317 = vpack.c.b16 %v4685, %v4677
    %v5318 = vpack.c.b16 %v4694, %v4686
    %v5319 = vpack.c.b16 %v4695, %v4687
    %v5320 = vpack.c.b16 %v4696, %v4688
    %v5321 = vpack.c.b16 %v4697, %v4689
    %v5322 = vpack.c.b16 %v4698, %v4690
    %v5323 = vpack.c.b16 %v4699, %v4691
    %v5324 = vpack.c.b16 %v4700, %v4692
    %v5325 = vpack.c.b16 %v4701, %v4693
    %v5326 = vpack.c.b16 %v4710, %v4702
    %v5327 = vpack.c.b16 %v4711, %v4703
    %v5328 = vpack.c.b16 %v4712, %v4704
    %v5329 = vpack.c.b16 %v4713, %v4705
    %v5330 = vpack.c.b16 %v4714, %v4706
    %v5331 = vpack.c.b16 %v4715, %v4707
    %v5332 = vpack.c.b16 %v4716, %v4708
    %v5333 = vpack.c.b16 %v4717, %v4709
    %v5334 = vpack.c.b16 %v4726, %v4718
    %v5335 = vpack.c.b16 %v4727, %v4719
    %v5336 = vpack.c.b16 %v4728, %v4720
    %v5337 = vpack.c.b16 %v4729, %v4721
    %v5338 = vpack.c.b16 %v4730, %v4722
    %v5339 = vpack.c.b16 %v4731, %v4723
    %v5340 = vpack.c.b16 %v4732, %v4724
    %v5341 = vpack.c.b16 %v4733, %v4725
    %v5342 = vpack.c.b16 %v4742, %v4734
    %v5343 = vpack.c.b16 %v4743, %v4735
    %v5344 = vpack.c.b16 %v4744, %v4736
    %v5345 = vpack.c.b16 %v4745, %v4737
    %v5346 = vpack.c.b16 %v4746, %v4738
    %v5347 = vpack.c.b16 %v4747, %v4739
    %v5348 = vpack.c.b16 %v4748, %v4740
    %v5349 = vpack.c.b16 %v4749, %v4741
    %v5350 = vpack.c.b16 %v4758, %v4750
    %v5351 = vpack.c.b16 %v4759, %v4751
    %v5352 = vpack.c.b16 %v4760, %v4752
    %v5353 = vpack.c.b16 %v4761, %v4753
    %v5354 = vpack.c.b16 %v4762, %v4754
    %v5355 = vpack.c.b16 %v4763, %v4755
    %v5356 = vpack.c.b16 %v4764, %v4756
    %v5357 = vpack.c.b16 %v4765, %v4757
    %v5358 = vpack.c.b16 %v4774, %v4766
    %v5359 = vpack.c.b16 %v4775, %v4767
    %v5360 = vpack.c.b16 %v4776, %v4768
    %v5361 = vpack.c.b16 %v4777, %v4769
    %v5362 = vpack.c.b16 %v4778, %v4770
    %v5363 = vpack.c.b16 %v4779, %v4771
    %v5364 = vpack.c.b16 %v4780, %v4772
    %v5365 = vpack.c.b16 %v4781, %v4773
    %v5366 = vpack.c.b16 %v4790, %v4782
    %v5367 = vpack.c.b16 %v4791, %v4783
    %v5368 = vpack.c.b16 %v4792, %v4784
    %v5369 = vpack.c.b16 %v4793, %v4785
    %v5370 = vpack.c.b16 %v4794, %v4786
    %v5371 = vpack.c.b16 %v4795, %v4787
    %v5372 = vpack.c.b16 %v4796, %v4788
    %v5373 = vpack.c.b16 %v4797, %v4789
    %v5374 = vpack.c.b16 %v4806, %v4798
    %v5375 = vpack.c.b16 %v4807, %v4799
    %v5376 = vpack.c.b16 %v4808, %v4800
    %v5377 = vpack.c.b16 %v4809, %v4801
    %v5378 = vpack.c.b16 %v4810, %v4802
    %v5379 = vpack.c.b16 %v4811, %v4803
    %v5380 = vpack.c.b16 %v4812, %v4804
    %v5381 = vpack.c.b16 %v4813, %v4805
    %v5382 = vpack.c.b16 %v4822, %v4814
    %v5383 = vpack.c.b16 %v4823, %v4815
    %v5384 = vpack.c.b16 %v4824, %v4816
    %v5385 = vpack.c.b16 %v4825, %v4817
    %v5386 = vpack.c.b16 %v4826, %v4818
    %v5387 = vpack.c.b16 %v4827, %v4819
    %v5388 = vpack.c.b16 %v4828, %v4820
    %v5389 = vpack.c.b16 %v4829, %v4821
    %v5390 = vpack.c.b16 %v4838, %v4830
    %v5391 = vpack.c.b16 %v4839, %v4831
    %v5392 = vpack.c.b16 %v4840, %v4832
    %v5393 = vpack.c.b16 %v4841, %v4833
    %v5394 = vpack.c.b16 %v4842, %v4834
    %v5395 = vpack.c.b16 %v4843, %v4835
    %v5396 = vpack.c.b16 %v4844, %v4836
    %v5397 = vpack.c.b16 %v4845, %v4837
    %v5398 = vpack.c.b16 %v4854, %v4846
    %v5399 = vpack.c.b16 %v4855, %v4847
    %v5400 = vpack.c.b16 %v4856, %v4848
    %v5401 = vpack.c.b16 %v4857, %v4849
    %v5402 = vpack.c.b16 %v4858, %v4850
    %v5403 = vpack.c.b16 %v4859, %v4851
    %v5404 = vpack.c.b16 %v4860, %v4852
    %v5405 = vpack.c.b16 %v4861, %v4853
    %v5406 = vpack.c.b16 %v4870, %v4862
    %v5407 = vpack.c.b16 %v4871, %v4863
    %v5408 = vpack.c.b16 %v4872, %v4864
    %v5409 = vpack.c.b16 %v4873, %v4865
    %v5410 = vpack.c.b16 %v4874, %v4866
    %v5411 = vpack.c.b16 %v4875, %v4867
    %v5412 = vpack.c.b16 %v4876, %v4868
    %v5413 = vpack.c.b16 %v4877, %v4869
    %v5414 = vpack.c.b16 %v4886, %v4878
    %v5415 = vpack.c.b16 %v4887, %v4879
    %v5416 = vpack.c.b16 %v4888, %v4880
    %v5417 = vpack.c.b16 %v4889, %v4881
    %v5418 = vpack.c.b16 %v4890, %v4882
    %v5419 = vpack.c.b16 %v4891, %v4883
    %v5420 = vpack.c.b16 %v4892, %v4884
    %v5421 = vpack.c.b16 %v4893, %v4885
    %v5422 = vpack.c.b16 %v4902, %v4894
    %v5423 = vpack.c.b16 %v4903, %v4895
    %v5424 = vpack.c.b16 %v4904, %v4896
    %v5425 = vpack.c.b16 %v4905, %v4897
    %v5426 = vpack.c.b16 %v4906, %v4898
    %v5427 = vpack.c.b16 %v4907, %v4899
    %v5428 = vpack.c.b16 %v4908, %v4900
    %v5429 = vpack.c.b16 %v4909, %v4901
    %v5430 = vpack.c.b16 %v4918, %v4910
    %v5431 = vpack.c.b16 %v4919, %v4911
    %v5432 = vpack.c.b16 %v4920, %v4912
    %v5433 = vpack.c.b16 %v4921, %v4913
    %v5434 = vpack.c.b16 %v4922, %v4914
    %v5435 = vpack.c.b16 %v4923, %v4915
    %v5436 = vpack.c.b16 %v4924, %v4916
    %v5437 = vpack.c.b16 %v4925, %v4917
    %5950 = vmatprep.subr.bf16.mxu0 %v4983
    %5951 = vmatpush1.bf16.msra.mxu0 %v4982
    %5952 = vmatprep.subr.bf16.mxu0 %v4975
    %5953 = vmatpush1.bf16.msra.mxu0 %v4974
    %5954 = vmatprep.subr.bf16.mxu0 %v4967
    %5955 = vmatpush1.bf16.msra.mxu0 %v4966
    %5956 = vmatprep.subr.bf16.mxu0 %v4959
    %5957 = vmatpush1.bf16.msra.mxu0 %v4958
    %5958 = vmatprep.subr.bf16.mxu0 %v4951
    %5959 = vmatpush1.bf16.msra.mxu0 %v4950
    %5960 = vmatprep.subr.bf16.mxu0 %v4943
    %5961 = vmatpush1.bf16.msra.mxu0 %v4942
    %5962 = vmatprep.subr.bf16.mxu0 %v4935
    %5963 = vmatpush1.bf16.msra.mxu0 %v4934
    %5964 = vmatprep.subr.bf16.mxu0 %v4927
    %5965 = vmatpush1.bf16.msra.mxu0 %v4926
    %5966 = vmatprep.subr.bf16.mxu0 %v5047
    %5967 = vmatpush2.bf16.msra.mxu0 %v5046
    %5968 = vmatprep.subr.bf16.mxu0 %v5039
    %5969 = vmatpush2.bf16.msra.mxu0 %v5038
    %5970 = vmatprep.subr.bf16.mxu0 %v5031
    %5971 = vmatpush2.bf16.msra.mxu0 %v5030
    %5972 = vmatprep.subr.bf16.mxu0 %v5023
    %5973 = vmatpush2.bf16.msra.mxu0 %v5022
    %5974 = vmatprep.subr.bf16.mxu0 %v5015
    %5975 = vmatpush2.bf16.msra.mxu0 %v5014
    %5976 = vmatprep.subr.bf16.mxu0 %v5007
    %5977 = vmatpush2.bf16.msra.mxu0 %v5006
    %5978 = vmatprep.subr.bf16.mxu0 %v4999
    %5979 = vmatpush2.bf16.msra.mxu0 %v4998
    %5980 = vmatprep.subr.bf16.mxu0 %v4991
    %5981 = vmatpush2.bf16.msra.mxu0 %v4990
    %5982 = vmatprep.mubr.bf16.mxu0 %v3311
    %5983 = vmatmul.mubr.bf16.gmra.mxu0 %v3310
    %v5984 = vpop.f32.mrf.mxu0
    %v5985 = vadd.f32 %v3361, %v5984
    %v5986 = vpop.f32.mrf.mxu0
    %v5987 = vadd.f32 %v3365, %v5986
    %v5988 = vpop.f32.mrf.mxu0
    %v5989 = vpop.f32.mrf.mxu0
    %5990 = vdwg.mxu0
    %5991 = vmatprep.subr.bf16.mxu0 %v5111
    %5992 = vmatpush1.bf16.msra.mxu0 %v5110
    %5993 = vmatprep.subr.bf16.mxu0 %v5103
    %5994 = vmatpush1.bf16.msra.mxu0 %v5102
    %5995 = vmatprep.subr.bf16.mxu0 %v5095
    %5996 = vmatpush1.bf16.msra.mxu0 %v5094
    %5997 = vmatprep.subr.bf16.mxu0 %v5087
    %5998 = vmatpush1.bf16.msra.mxu0 %v5086
    %5999 = vmatprep.subr.bf16.mxu0 %v5079
    %6000 = vmatpush1.bf16.msra.mxu0 %v5078
    %6001 = vmatprep.subr.bf16.mxu0 %v5071
    %6002 = vmatpush1.bf16.msra.mxu0 %v5070
    %6003 = vmatprep.subr.bf16.mxu0 %v5063
    %6004 = vmatpush1.bf16.msra.mxu0 %v5062
    %6005 = vmatprep.subr.bf16.mxu0 %v5055
    %6006 = vmatpush1.bf16.msra.mxu0 %v5054
    %6007 = vmatprep.subr.bf16.mxu0 %v5175
    %6008 = vmatpush2.bf16.msra.mxu0 %v5174
    %6009 = vmatprep.subr.bf16.mxu0 %v5167
    %6010 = vmatpush2.bf16.msra.mxu0 %v5166
    %6011 = vmatprep.subr.bf16.mxu0 %v5159
    %6012 = vmatpush2.bf16.msra.mxu0 %v5158
    %6013 = vmatprep.subr.bf16.mxu0 %v5151
    %6014 = vmatpush2.bf16.msra.mxu0 %v5150
    %6015 = vmatprep.subr.bf16.mxu0 %v5143
    %6016 = vmatpush2.bf16.msra.mxu0 %v5142
    %6017 = vmatprep.subr.bf16.mxu0 %v5135
    %6018 = vmatpush2.bf16.msra.mxu0 %v5134
    %6019 = vmatprep.subr.bf16.mxu0 %v5127
    %6020 = vmatpush2.bf16.msra.mxu0 %v5126
    %6021 = vmatprep.subr.bf16.mxu0 %v5119
    %6022 = vmatpush2.bf16.msra.mxu0 %v5118
    %6023 = vmatprep.mubr.bf16.mxu0 %v3313
    %6024 = vmatmul.mubr.bf16.gmra.mxu0 %v3312
    %v6025 = vpop.f32.mrf.mxu0
    %v6026 = vadd.f32 %v5985, %v6025
    %v6027 = vpop.f32.mrf.mxu0
    %v6028 = vadd.f32 %v5987, %v6027
    %v6029 = vpop.f32.mrf.mxu0
    %v6030 = vpop.f32.mrf.mxu0
    %6031 = vdwg.mxu0
    %6032 = vmatprep.subr.bf16.mxu0 %v5239
    %6033 = vmatpush1.bf16.msra.mxu0 %v5238
    %6034 = vmatprep.subr.bf16.mxu0 %v5231
    %6035 = vmatpush1.bf16.msra.mxu0 %v5230
    %6036 = vmatprep.subr.bf16.mxu0 %v5223
    %6037 = vmatpush1.bf16.msra.mxu0 %v5222
    %6038 = vmatprep.subr.bf16.mxu0 %v5215
    %6039 = vmatpush1.bf16.msra.mxu0 %v5214
    %6040 = vmatprep.subr.bf16.mxu0 %v5207
    %6041 = vmatpush1.bf16.msra.mxu0 %v5206
    %6042 = vmatprep.subr.bf16.mxu0 %v5199
    %6043 = vmatpush1.bf16.msra.mxu0 %v5198
    %6044 = vmatprep.subr.bf16.mxu0 %v5191
    %6045 = vmatpush1.bf16.msra.mxu0 %v5190
    %6046 = vmatprep.subr.bf16.mxu0 %v5183
    %6047 = vmatpush1.bf16.msra.mxu0 %v5182
    %6048 = vmatprep.subr.bf16.mxu0 %v5303
    %6049 = vmatpush2.bf16.msra.mxu0 %v5302
    %6050 = vmatprep.subr.bf16.mxu0 %v5295
    %6051 = vmatpush2.bf16.msra.mxu0 %v5294
    %6052 = vmatprep.subr.bf16.mxu0 %v5287
    %6053 = vmatpush2.bf16.msra.mxu0 %v5286
    %6054 = vmatprep.subr.bf16.mxu0 %v5279
    %6055 = vmatpush2.bf16.msra.mxu0 %v5278
    %6056 = vmatprep.subr.bf16.mxu0 %v5271
    %6057 = vmatpush2.bf16.msra.mxu0 %v5270
    %6058 = vmatprep.subr.bf16.mxu0 %v5263
    %6059 = vmatpush2.bf16.msra.mxu0 %v5262
    %6060 = vmatprep.subr.bf16.mxu0 %v5255
    %6061 = vmatpush2.bf16.msra.mxu0 %v5254
    %6062 = vmatprep.subr.bf16.mxu0 %v5247
    %6063 = vmatpush2.bf16.msra.mxu0 %v5246
    %6064 = vmatprep.mubr.bf16.mxu0 %v3315
    %6065 = vmatmul.mubr.bf16.gmra.mxu0 %v3314
    %v6066 = vpop.f32.mrf.mxu0
    %v6067 = vadd.f32 %v6026, %v6066
    %v6068 = vpop.f32.mrf.mxu0
    %v6069 = vadd.f32 %v6028, %v6068
    %v6070 = vpop.f32.mrf.mxu0
    %v6071 = vpop.f32.mrf.mxu0
    %6072 = vdwg.mxu0
    %6073 = vmatprep.subr.bf16.mxu0 %v5367
    %6074 = vmatpush1.bf16.msra.mxu0 %v5366
    %6075 = vmatprep.subr.bf16.mxu0 %v5359
    %6076 = vmatpush1.bf16.msra.mxu0 %v5358
    %6077 = vmatprep.subr.bf16.mxu0 %v5351
    %6078 = vmatpush1.bf16.msra.mxu0 %v5350
    %6079 = vmatprep.subr.bf16.mxu0 %v5343
    %6080 = vmatpush1.bf16.msra.mxu0 %v5342
    %6081 = vmatprep.subr.bf16.mxu0 %v5335
    %6082 = vmatpush1.bf16.msra.mxu0 %v5334
    %6083 = vmatprep.subr.bf16.mxu0 %v5327
    %6084 = vmatpush1.bf16.msra.mxu0 %v5326
    %6085 = vmatprep.subr.bf16.mxu0 %v5319
    %6086 = vmatpush1.bf16.msra.mxu0 %v5318
    %6087 = vmatprep.subr.bf16.mxu0 %v5311
    %6088 = vmatpush1.bf16.msra.mxu0 %v5310
    %6089 = vmatprep.subr.bf16.mxu0 %v5431
    %6090 = vmatpush2.bf16.msra.mxu0 %v5430
    %6091 = vmatprep.subr.bf16.mxu0 %v5423
    %6092 = vmatpush2.bf16.msra.mxu0 %v5422
    %6093 = vmatprep.subr.bf16.mxu0 %v5415
    %6094 = vmatpush2.bf16.msra.mxu0 %v5414
    %6095 = vmatprep.subr.bf16.mxu0 %v5407
    %6096 = vmatpush2.bf16.msra.mxu0 %v5406
    %6097 = vmatprep.subr.bf16.mxu0 %v5399
    %6098 = vmatpush2.bf16.msra.mxu0 %v5398
    %6099 = vmatprep.subr.bf16.mxu0 %v5391
    %6100 = vmatpush2.bf16.msra.mxu0 %v5390
    %6101 = vmatprep.subr.bf16.mxu0 %v5383
    %6102 = vmatpush2.bf16.msra.mxu0 %v5382
    %6103 = vmatprep.subr.bf16.mxu0 %v5375
    %6104 = vmatpush2.bf16.msra.mxu0 %v5374
    %6105 = vmatprep.mubr.bf16.mxu0 %v3317
    %6106 = vmatmul.mubr.bf16.gmra.mxu0 %v3316
    %v6107 = vpop.f32.mrf.mxu0
    %v6108 = vadd.f32 %v6067, %v6107
    %v6109 = vpop.f32.mrf.mxu0
    %v6110 = vadd.f32 %v6069, %v6109
    %v6111 = vpop.f32.mrf.mxu0
    %v6112 = vpop.f32.mrf.mxu0
    %6113 = vdwg.mxu0
    %6114 = vmatprep.subr.bf16.mxu0 %v4985
    %6115 = vmatpush1.bf16.msra.mxu0 %v4984
    %6116 = vmatprep.subr.bf16.mxu0 %v4977
    %6117 = vmatpush1.bf16.msra.mxu0 %v4976
    %6118 = vmatprep.subr.bf16.mxu0 %v4969
    %6119 = vmatpush1.bf16.msra.mxu0 %v4968
    %6120 = vmatprep.subr.bf16.mxu0 %v4961
    %6121 = vmatpush1.bf16.msra.mxu0 %v4960
    %6122 = vmatprep.subr.bf16.mxu0 %v4953
    %6123 = vmatpush1.bf16.msra.mxu0 %v4952
    %6124 = vmatprep.subr.bf16.mxu0 %v4945
    %6125 = vmatpush1.bf16.msra.mxu0 %v4944
    %6126 = vmatprep.subr.bf16.mxu0 %v4937
    %6127 = vmatpush1.bf16.msra.mxu0 %v4936
    %6128 = vmatprep.subr.bf16.mxu0 %v4929
    %6129 = vmatpush1.bf16.msra.mxu0 %v4928
    %6130 = vmatprep.subr.bf16.mxu0 %v5049
    %6131 = vmatpush2.bf16.msra.mxu0 %v5048
    %6132 = vmatprep.subr.bf16.mxu0 %v5041
    %6133 = vmatpush2.bf16.msra.mxu0 %v5040
    %6134 = vmatprep.subr.bf16.mxu0 %v5033
    %6135 = vmatpush2.bf16.msra.mxu0 %v5032
    %6136 = vmatprep.subr.bf16.mxu0 %v5025
    %6137 = vmatpush2.bf16.msra.mxu0 %v5024
    %6138 = vmatprep.subr.bf16.mxu0 %v5017
    %6139 = vmatpush2.bf16.msra.mxu0 %v5016
    %6140 = vmatprep.subr.bf16.mxu0 %v5009
    %6141 = vmatpush2.bf16.msra.mxu0 %v5008
    %6142 = vmatprep.subr.bf16.mxu0 %v5001
    %6143 = vmatpush2.bf16.msra.mxu0 %v5000
    %6144 = vmatprep.subr.bf16.mxu0 %v4993
    %6145 = vmatpush2.bf16.msra.mxu0 %v4992
    %6146 = vmatprep.mubr.bf16.mxu0 %v3311
    %6147 = vmatmul.mubr.bf16.gmra.mxu0 %v3310
    %v6148 = vpop.f32.mrf.mxu0
    %v6149 = vadd.f32 %v3369, %v6148
    %v6150 = vpop.f32.mrf.mxu0
    %v6151 = vadd.f32 %v3373, %v6150
    %v6152 = vpop.f32.mrf.mxu0
    %v6153 = vpop.f32.mrf.mxu0
    %6154 = vdwg.mxu0
    %6155 = vmatprep.subr.bf16.mxu0 %v5113
    %6156 = vmatpush1.bf16.msra.mxu0 %v5112
    %6157 = vmatprep.subr.bf16.mxu0 %v5105
    %6158 = vmatpush1.bf16.msra.mxu0 %v5104
    %6159 = vmatprep.subr.bf16.mxu0 %v5097
    %6160 = vmatpush1.bf16.msra.mxu0 %v5096
    %6161 = vmatprep.subr.bf16.mxu0 %v5089
    %6162 = vmatpush1.bf16.msra.mxu0 %v5088
    %6163 = vmatprep.subr.bf16.mxu0 %v5081
    %6164 = vmatpush1.bf16.msra.mxu0 %v5080
    %6165 = vmatprep.subr.bf16.mxu0 %v5073
    %6166 = vmatpush1.bf16.msra.mxu0 %v5072
    %6167 = vmatprep.subr.bf16.mxu0 %v5065
    %6168 = vmatpush1.bf16.msra.mxu0 %v5064
    %6169 = vmatprep.subr.bf16.mxu0 %v5057
    %6170 = vmatpush1.bf16.msra.mxu0 %v5056
    %6171 = vmatprep.subr.bf16.mxu0 %v5177
    %6172 = vmatpush2.bf16.msra.mxu0 %v5176
    %6173 = vmatprep.subr.bf16.mxu0 %v5169
    %6174 = vmatpush2.bf16.msra.mxu0 %v5168
    %6175 = vmatprep.subr.bf16.mxu0 %v5161
    %6176 = vmatpush2.bf16.msra.mxu0 %v5160
    %6177 = vmatprep.subr.bf16.mxu0 %v5153
    %6178 = vmatpush2.bf16.msra.mxu0 %v5152
    %6179 = vmatprep.subr.bf16.mxu0 %v5145
    %6180 = vmatpush2.bf16.msra.mxu0 %v5144
    %6181 = vmatprep.subr.bf16.mxu0 %v5137
    %6182 = vmatpush2.bf16.msra.mxu0 %v5136
    %6183 = vmatprep.subr.bf16.mxu0 %v5129
    %6184 = vmatpush2.bf16.msra.mxu0 %v5128
    %6185 = vmatprep.subr.bf16.mxu0 %v5121
    %6186 = vmatpush2.bf16.msra.mxu0 %v5120
    %6187 = vmatprep.mubr.bf16.mxu0 %v3313
    %6188 = vmatmul.mubr.bf16.gmra.mxu0 %v3312
    %v6189 = vpop.f32.mrf.mxu0
    %v6190 = vadd.f32 %v6149, %v6189
    %v6191 = vpop.f32.mrf.mxu0
    %v6192 = vadd.f32 %v6151, %v6191
    %v6193 = vpop.f32.mrf.mxu0
    %v6194 = vpop.f32.mrf.mxu0
    %6195 = vdwg.mxu0
    %6196 = vmatprep.subr.bf16.mxu0 %v5241
    %6197 = vmatpush1.bf16.msra.mxu0 %v5240
    %6198 = vmatprep.subr.bf16.mxu0 %v5233
    %6199 = vmatpush1.bf16.msra.mxu0 %v5232
    %6200 = vmatprep.subr.bf16.mxu0 %v5225
    %6201 = vmatpush1.bf16.msra.mxu0 %v5224
    %6202 = vmatprep.subr.bf16.mxu0 %v5217
    %6203 = vmatpush1.bf16.msra.mxu0 %v5216
    %6204 = vmatprep.subr.bf16.mxu0 %v5209
    %6205 = vmatpush1.bf16.msra.mxu0 %v5208
    %6206 = vmatprep.subr.bf16.mxu0 %v5201
    %6207 = vmatpush1.bf16.msra.mxu0 %v5200
    %6208 = vmatprep.subr.bf16.mxu0 %v5193
    %6209 = vmatpush1.bf16.msra.mxu0 %v5192
    %6210 = vmatprep.subr.bf16.mxu0 %v5185
    %6211 = vmatpush1.bf16.msra.mxu0 %v5184
    %6212 = vmatprep.subr.bf16.mxu0 %v5305
    %6213 = vmatpush2.bf16.msra.mxu0 %v5304
    %6214 = vmatprep.subr.bf16.mxu0 %v5297
    %6215 = vmatpush2.bf16.msra.mxu0 %v5296
    %6216 = vmatprep.subr.bf16.mxu0 %v5289
    %6217 = vmatpush2.bf16.msra.mxu0 %v5288
    %6218 = vmatprep.subr.bf16.mxu0 %v5281
    %6219 = vmatpush2.bf16.msra.mxu0 %v5280
    %6220 = vmatprep.subr.bf16.mxu0 %v5273
    %6221 = vmatpush2.bf16.msra.mxu0 %v5272
    %6222 = vmatprep.subr.bf16.mxu0 %v5265
    %6223 = vmatpush2.bf16.msra.mxu0 %v5264
    %6224 = vmatprep.subr.bf16.mxu0 %v5257
    %6225 = vmatpush2.bf16.msra.mxu0 %v5256
    %6226 = vmatprep.subr.bf16.mxu0 %v5249
    %6227 = vmatpush2.bf16.msra.mxu0 %v5248
    %6228 = vmatprep.mubr.bf16.mxu0 %v3315
    %6229 = vmatmul.mubr.bf16.gmra.mxu0 %v3314
    %v6230 = vpop.f32.mrf.mxu0
    %v6231 = vadd.f32 %v6190, %v6230
    %v6232 = vpop.f32.mrf.mxu0
    %v6233 = vadd.f32 %v6192, %v6232
    %v6234 = vpop.f32.mrf.mxu0
    %v6235 = vpop.f32.mrf.mxu0
    %6236 = vdwg.mxu0
    %6237 = vmatprep.subr.bf16.mxu0 %v5369
    %6238 = vmatpush1.bf16.msra.mxu0 %v5368
    %6239 = vmatprep.subr.bf16.mxu0 %v5361
    %6240 = vmatpush1.bf16.msra.mxu0 %v5360
    %6241 = vmatprep.subr.bf16.mxu0 %v5353
    %6242 = vmatpush1.bf16.msra.mxu0 %v5352
    %6243 = vmatprep.subr.bf16.mxu0 %v5345
    %6244 = vmatpush1.bf16.msra.mxu0 %v5344
    %6245 = vmatprep.subr.bf16.mxu0 %v5337
    %6246 = vmatpush1.bf16.msra.mxu0 %v5336
    %6247 = vmatprep.subr.bf16.mxu0 %v5329
    %6248 = vmatpush1.bf16.msra.mxu0 %v5328
    %6249 = vmatprep.subr.bf16.mxu0 %v5321
    %6250 = vmatpush1.bf16.msra.mxu0 %v5320
    %6251 = vmatprep.subr.bf16.mxu0 %v5313
    %6252 = vmatpush1.bf16.msra.mxu0 %v5312
    %6253 = vmatprep.subr.bf16.mxu0 %v5433
    %6254 = vmatpush2.bf16.msra.mxu0 %v5432
    %6255 = vmatprep.subr.bf16.mxu0 %v5425
    %6256 = vmatpush2.bf16.msra.mxu0 %v5424
    %6257 = vmatprep.subr.bf16.mxu0 %v5417
    %6258 = vmatpush2.bf16.msra.mxu0 %v5416
    %6259 = vmatprep.subr.bf16.mxu0 %v5409
    %6260 = vmatpush2.bf16.msra.mxu0 %v5408
    %6261 = vmatprep.subr.bf16.mxu0 %v5401
    %6262 = vmatpush2.bf16.msra.mxu0 %v5400
    %6263 = vmatprep.subr.bf16.mxu0 %v5393
    %6264 = vmatpush2.bf16.msra.mxu0 %v5392
    %6265 = vmatprep.subr.bf16.mxu0 %v5385
    %6266 = vmatpush2.bf16.msra.mxu0 %v5384
    %6267 = vmatprep.subr.bf16.mxu0 %v5377
    %6268 = vmatpush2.bf16.msra.mxu0 %v5376
    %6269 = vmatprep.mubr.bf16.mxu0 %v3317
    %6270 = vmatmul.mubr.bf16.gmra.mxu0 %v3316
    %v6271 = vpop.f32.mrf.mxu0
    %v6272 = vadd.f32 %v6231, %v6271
    %v6273 = vpop.f32.mrf.mxu0
    %v6274 = vadd.f32 %v6233, %v6273
    %v6275 = vpop.f32.mrf.mxu0
    %v6276 = vpop.f32.mrf.mxu0
    %6277 = vdwg.mxu0
    %6278 = vmatprep.subr.bf16.mxu0 %v4987
    %6279 = vmatpush1.bf16.msra.mxu0 %v4986
    %6280 = vmatprep.subr.bf16.mxu0 %v4979
    %6281 = vmatpush1.bf16.msra.mxu0 %v4978
    %6282 = vmatprep.subr.bf16.mxu0 %v4971
    %6283 = vmatpush1.bf16.msra.mxu0 %v4970
    %6284 = vmatprep.subr.bf16.mxu0 %v4963
    %6285 = vmatpush1.bf16.msra.mxu0 %v4962
    %6286 = vmatprep.subr.bf16.mxu0 %v4955
    %6287 = vmatpush1.bf16.msra.mxu0 %v4954
    %6288 = vmatprep.subr.bf16.mxu0 %v4947
    %6289 = vmatpush1.bf16.msra.mxu0 %v4946
    %6290 = vmatprep.subr.bf16.mxu0 %v4939
    %6291 = vmatpush1.bf16.msra.mxu0 %v4938
    %6292 = vmatprep.subr.bf16.mxu0 %v4931
    %6293 = vmatpush1.bf16.msra.mxu0 %v4930
    %6294 = vmatprep.subr.bf16.mxu0 %v5051
    %6295 = vmatpush2.bf16.msra.mxu0 %v5050
    %6296 = vmatprep.subr.bf16.mxu0 %v5043
    %6297 = vmatpush2.bf16.msra.mxu0 %v5042
    %6298 = vmatprep.subr.bf16.mxu0 %v5035
    %6299 = vmatpush2.bf16.msra.mxu0 %v5034
    %6300 = vmatprep.subr.bf16.mxu0 %v5027
    %6301 = vmatpush2.bf16.msra.mxu0 %v5026
    %6302 = vmatprep.subr.bf16.mxu0 %v5019
    %6303 = vmatpush2.bf16.msra.mxu0 %v5018
    %6304 = vmatprep.subr.bf16.mxu0 %v5011
    %6305 = vmatpush2.bf16.msra.mxu0 %v5010
    %6306 = vmatprep.subr.bf16.mxu0 %v5003
    %6307 = vmatpush2.bf16.msra.mxu0 %v5002
    %6308 = vmatprep.subr.bf16.mxu0 %v4995
    %6309 = vmatpush2.bf16.msra.mxu0 %v4994
    %6310 = vmatprep.mubr.bf16.mxu0 %v3311
    %6311 = vmatmul.mubr.bf16.gmra.mxu0 %v3310
    %v6312 = vpop.f32.mrf.mxu0
    %v6313 = vadd.f32 %v3377, %v6312
    %v6314 = vpop.f32.mrf.mxu0
    %v6315 = vadd.f32 %v3381, %v6314
    %v6316 = vpop.f32.mrf.mxu0
    %v6317 = vpop.f32.mrf.mxu0
    %6318 = vdwg.mxu0
    %6319 = vmatprep.subr.bf16.mxu0 %v5115
    %6320 = vmatpush1.bf16.msra.mxu0 %v5114
    %6321 = vmatprep.subr.bf16.mxu0 %v5107
    %6322 = vmatpush1.bf16.msra.mxu0 %v5106
    %6323 = vmatprep.subr.bf16.mxu0 %v5099
    %6324 = vmatpush1.bf16.msra.mxu0 %v5098
    %6325 = vmatprep.subr.bf16.mxu0 %v5091
    %6326 = vmatpush1.bf16.msra.mxu0 %v5090
    %6327 = vmatprep.subr.bf16.mxu0 %v5083
    %6328 = vmatpush1.bf16.msra.mxu0 %v5082
    %6329 = vmatprep.subr.bf16.mxu0 %v5075
    %6330 = vmatpush1.bf16.msra.mxu0 %v5074
    %6331 = vmatprep.subr.bf16.mxu0 %v5067
    %6332 = vmatpush1.bf16.msra.mxu0 %v5066
    %6333 = vmatprep.subr.bf16.mxu0 %v5059
    %6334 = vmatpush1.bf16.msra.mxu0 %v5058
    %6335 = vmatprep.subr.bf16.mxu0 %v5179
    %6336 = vmatpush2.bf16.msra.mxu0 %v5178
    %6337 = vmatprep.subr.bf16.mxu0 %v5171
    %6338 = vmatpush2.bf16.msra.mxu0 %v5170
    %6339 = vmatprep.subr.bf16.mxu0 %v5163
    %6340 = vmatpush2.bf16.msra.mxu0 %v5162
    %6341 = vmatprep.subr.bf16.mxu0 %v5155
    %6342 = vmatpush2.bf16.msra.mxu0 %v5154
    %6343 = vmatprep.subr.bf16.mxu0 %v5147
    %6344 = vmatpush2.bf16.msra.mxu0 %v5146
    %6345 = vmatprep.subr.bf16.mxu0 %v5139
    %6346 = vmatpush2.bf16.msra.mxu0 %v5138
    %6347 = vmatprep.subr.bf16.mxu0 %v5131
    %6348 = vmatpush2.bf16.msra.mxu0 %v5130
    %6349 = vmatprep.subr.bf16.mxu0 %v5123
    %6350 = vmatpush2.bf16.msra.mxu0 %v5122
    %6351 = vmatprep.mubr.bf16.mxu0 %v3313
    %6352 = vmatmul.mubr.bf16.gmra.mxu0 %v3312
    %v6353 = vpop.f32.mrf.mxu0
    %v6354 = vadd.f32 %v6313, %v6353
    %v6355 = vpop.f32.mrf.mxu0
    %v6356 = vadd.f32 %v6315, %v6355
    %v6357 = vpop.f32.mrf.mxu0
    %v6358 = vpop.f32.mrf.mxu0
    %6359 = vdwg.mxu0
    %6360 = vmatprep.subr.bf16.mxu0 %v5243
    %6361 = vmatpush1.bf16.msra.mxu0 %v5242
    %6362 = vmatprep.subr.bf16.mxu0 %v5235
    %6363 = vmatpush1.bf16.msra.mxu0 %v5234
    %6364 = vmatprep.subr.bf16.mxu0 %v5227
    %6365 = vmatpush1.bf16.msra.mxu0 %v5226
    %6366 = vmatprep.subr.bf16.mxu0 %v5219
    %6367 = vmatpush1.bf16.msra.mxu0 %v5218
    %6368 = vmatprep.subr.bf16.mxu0 %v5211
    %6369 = vmatpush1.bf16.msra.mxu0 %v5210
    %6370 = vmatprep.subr.bf16.mxu0 %v5203
    %6371 = vmatpush1.bf16.msra.mxu0 %v5202
    %6372 = vmatprep.subr.bf16.mxu0 %v5195
    %6373 = vmatpush1.bf16.msra.mxu0 %v5194
    %6374 = vmatprep.subr.bf16.mxu0 %v5187
    %6375 = vmatpush1.bf16.msra.mxu0 %v5186
    %6376 = vmatprep.subr.bf16.mxu0 %v5307
    %6377 = vmatpush2.bf16.msra.mxu0 %v5306
    %6378 = vmatprep.subr.bf16.mxu0 %v5299
    %6379 = vmatpush2.bf16.msra.mxu0 %v5298
    %6380 = vmatprep.subr.bf16.mxu0 %v5291
    %6381 = vmatpush2.bf16.msra.mxu0 %v5290
    %6382 = vmatprep.subr.bf16.mxu0 %v5283
    %6383 = vmatpush2.bf16.msra.mxu0 %v5282
    %6384 = vmatprep.subr.bf16.mxu0 %v5275
    %6385 = vmatpush2.bf16.msra.mxu0 %v5274
    %6386 = vmatprep.subr.bf16.mxu0 %v5267
    %6387 = vmatpush2.bf16.msra.mxu0 %v5266
    %6388 = vmatprep.subr.bf16.mxu0 %v5259
    %6389 = vmatpush2.bf16.msra.mxu0 %v5258
    %6390 = vmatprep.subr.bf16.mxu0 %v5251
    %6391 = vmatpush2.bf16.msra.mxu0 %v5250
    %6392 = vmatprep.mubr.bf16.mxu0 %v3315
    %6393 = vmatmul.mubr.bf16.gmra.mxu0 %v3314
    %v6394 = vpop.f32.mrf.mxu0
    %v6395 = vadd.f32 %v6354, %v6394
    %v6396 = vpop.f32.mrf.mxu0
    %v6397 = vadd.f32 %v6356, %v6396
    %v6398 = vpop.f32.mrf.mxu0
    %v6399 = vpop.f32.mrf.mxu0
    %6400 = vdwg.mxu0
    %6401 = vmatprep.subr.bf16.mxu0 %v5371
    %6402 = vmatpush1.bf16.msra.mxu0 %v5370
    %6403 = vmatprep.subr.bf16.mxu0 %v5363
    %6404 = vmatpush1.bf16.msra.mxu0 %v5362
    %6405 = vmatprep.subr.bf16.mxu0 %v5355
    %6406 = vmatpush1.bf16.msra.mxu0 %v5354
    %6407 = vmatprep.subr.bf16.mxu0 %v5347
    %6408 = vmatpush1.bf16.msra.mxu0 %v5346
    %6409 = vmatprep.subr.bf16.mxu0 %v5339
    %6410 = vmatpush1.bf16.msra.mxu0 %v5338
    %6411 = vmatprep.subr.bf16.mxu0 %v5331
    %6412 = vmatpush1.bf16.msra.mxu0 %v5330
    %6413 = vmatprep.subr.bf16.mxu0 %v5323
    %6414 = vmatpush1.bf16.msra.mxu0 %v5322
    %6415 = vmatprep.subr.bf16.mxu0 %v5315
    %6416 = vmatpush1.bf16.msra.mxu0 %v5314
    %6417 = vmatprep.subr.bf16.mxu0 %v5435
    %6418 = vmatpush2.bf16.msra.mxu0 %v5434
    %6419 = vmatprep.subr.bf16.mxu0 %v5427
    %6420 = vmatpush2.bf16.msra.mxu0 %v5426
    %6421 = vmatprep.subr.bf16.mxu0 %v5419
    %6422 = vmatpush2.bf16.msra.mxu0 %v5418
    %6423 = vmatprep.subr.bf16.mxu0 %v5411
    %6424 = vmatpush2.bf16.msra.mxu0 %v5410
    %6425 = vmatprep.subr.bf16.mxu0 %v5403
    %6426 = vmatpush2.bf16.msra.mxu0 %v5402
    %6427 = vmatprep.subr.bf16.mxu0 %v5395
    %6428 = vmatpush2.bf16.msra.mxu0 %v5394
    %6429 = vmatprep.subr.bf16.mxu0 %v5387
    %6430 = vmatpush2.bf16.msra.mxu0 %v5386
    %6431 = vmatprep.subr.bf16.mxu0 %v5379
    %6432 = vmatpush2.bf16.msra.mxu0 %v5378
    %6433 = vmatprep.mubr.bf16.mxu0 %v3317
    %6434 = vmatmul.mubr.bf16.gmra.mxu0 %v3316
    %v6435 = vpop.f32.mrf.mxu0
    %v6436 = vadd.f32 %v6395, %v6435
    %v6437 = vpop.f32.mrf.mxu0
    %v6438 = vadd.f32 %v6397, %v6437
    %v6439 = vpop.f32.mrf.mxu0
    %v6440 = vpop.f32.mrf.mxu0
    %6441 = vdwg.mxu0
    %6442 = vmatprep.subr.bf16.mxu0 %v4989
    %6443 = vmatpush1.bf16.msra.mxu0 %v4988
    %6444 = vmatprep.subr.bf16.mxu0 %v4981
    %6445 = vmatpush1.bf16.msra.mxu0 %v4980
    %6446 = vmatprep.subr.bf16.mxu0 %v4973
    %6447 = vmatpush1.bf16.msra.mxu0 %v4972
    %6448 = vmatprep.subr.bf16.mxu0 %v4965
    %6449 = vmatpush1.bf16.msra.mxu0 %v4964
    %6450 = vmatprep.subr.bf16.mxu0 %v4957
    %6451 = vmatpush1.bf16.msra.mxu0 %v4956
    %6452 = vmatprep.subr.bf16.mxu0 %v4949
    %6453 = vmatpush1.bf16.msra.mxu0 %v4948
    %6454 = vmatprep.subr.bf16.mxu0 %v4941
    %6455 = vmatpush1.bf16.msra.mxu0 %v4940
    %6456 = vmatprep.subr.bf16.mxu0 %v4933
    %6457 = vmatpush1.bf16.msra.mxu0 %v4932
    %6458 = vmatprep.subr.bf16.mxu0 %v5053
    %6459 = vmatpush2.bf16.msra.mxu0 %v5052
    %6460 = vmatprep.subr.bf16.mxu0 %v5045
    %6461 = vmatpush2.bf16.msra.mxu0 %v5044
    %6462 = vmatprep.subr.bf16.mxu0 %v5037
    %6463 = vmatpush2.bf16.msra.mxu0 %v5036
    %6464 = vmatprep.subr.bf16.mxu0 %v5029
    %6465 = vmatpush2.bf16.msra.mxu0 %v5028
    %6466 = vmatprep.subr.bf16.mxu0 %v5021
    %6467 = vmatpush2.bf16.msra.mxu0 %v5020
    %6468 = vmatprep.subr.bf16.mxu0 %v5013
    %6469 = vmatpush2.bf16.msra.mxu0 %v5012
    %6470 = vmatprep.subr.bf16.mxu0 %v5005
    %6471 = vmatpush2.bf16.msra.mxu0 %v5004
    %6472 = vmatprep.subr.bf16.mxu0 %v4997
    %6473 = vmatpush2.bf16.msra.mxu0 %v4996
    %6474 = vmatprep.mubr.bf16.mxu0 %v3311
    %6475 = vmatmul.mubr.bf16.gmra.mxu0 %v3310
    %v6476 = vpop.f32.mrf.mxu0
    %v6477 = vadd.f32 %v3385, %v6476
    %v6478 = vpop.f32.mrf.mxu0
    %v6479 = vadd.f32 %v3389, %v6478
    %v6480 = vpop.f32.mrf.mxu0
    %v6481 = vpop.f32.mrf.mxu0
    %6482 = vdwg.mxu0
    %6483 = vmatprep.subr.bf16.mxu0 %v5117
    %6484 = vmatpush1.bf16.msra.mxu0 %v5116
    %6485 = vmatprep.subr.bf16.mxu0 %v5109
    %6486 = vmatpush1.bf16.msra.mxu0 %v5108
    %6487 = vmatprep.subr.bf16.mxu0 %v5101
    %6488 = vmatpush1.bf16.msra.mxu0 %v5100
    %6489 = vmatprep.subr.bf16.mxu0 %v5093
    %6490 = vmatpush1.bf16.msra.mxu0 %v5092
    %6491 = vmatprep.subr.bf16.mxu0 %v5085
    %6492 = vmatpush1.bf16.msra.mxu0 %v5084
    %6493 = vmatprep.subr.bf16.mxu0 %v5077
    %6494 = vmatpush1.bf16.msra.mxu0 %v5076
    %6495 = vmatprep.subr.bf16.mxu0 %v5069
    %6496 = vmatpush1.bf16.msra.mxu0 %v5068
    %6497 = vmatprep.subr.bf16.mxu0 %v5061
    %6498 = vmatpush1.bf16.msra.mxu0 %v5060
    %6499 = vmatprep.subr.bf16.mxu0 %v5181
    %6500 = vmatpush2.bf16.msra.mxu0 %v5180
    %6501 = vmatprep.subr.bf16.mxu0 %v5173
    %6502 = vmatpush2.bf16.msra.mxu0 %v5172
    %6503 = vmatprep.subr.bf16.mxu0 %v5165
    %6504 = vmatpush2.bf16.msra.mxu0 %v5164
    %6505 = vmatprep.subr.bf16.mxu0 %v5157
    %6506 = vmatpush2.bf16.msra.mxu0 %v5156
    %6507 = vmatprep.subr.bf16.mxu0 %v5149
    %6508 = vmatpush2.bf16.msra.mxu0 %v5148
    %6509 = vmatprep.subr.bf16.mxu0 %v5141
    %6510 = vmatpush2.bf16.msra.mxu0 %v5140
    %6511 = vmatprep.subr.bf16.mxu0 %v5133
    %6512 = vmatpush2.bf16.msra.mxu0 %v5132
    %6513 = vmatprep.subr.bf16.mxu0 %v5125
    %6514 = vmatpush2.bf16.msra.mxu0 %v5124
    %6515 = vmatprep.mubr.bf16.mxu0 %v3313
    %6516 = vmatmul.mubr.bf16.gmra.mxu0 %v3312
    %v6517 = vpop.f32.mrf.mxu0
    %v6518 = vadd.f32 %v6477, %v6517
    %v6519 = vpop.f32.mrf.mxu0
    %v6520 = vadd.f32 %v6479, %v6519
    %v6521 = vpop.f32.mrf.mxu0
    %v6522 = vpop.f32.mrf.mxu0
    %6523 = vdwg.mxu0
    %6524 = vmatprep.subr.bf16.mxu0 %v5245
    %6525 = vmatpush1.bf16.msra.mxu0 %v5244
    %6526 = vmatprep.subr.bf16.mxu0 %v5237
    %6527 = vmatpush1.bf16.msra.mxu0 %v5236
    %6528 = vmatprep.subr.bf16.mxu0 %v5229
    %6529 = vmatpush1.bf16.msra.mxu0 %v5228
    %6530 = vmatprep.subr.bf16.mxu0 %v5221
    %6531 = vmatpush1.bf16.msra.mxu0 %v5220
    %6532 = vmatprep.subr.bf16.mxu0 %v5213
    %6533 = vmatpush1.bf16.msra.mxu0 %v5212
    %6534 = vmatprep.subr.bf16.mxu0 %v5205
    %6535 = vmatpush1.bf16.msra.mxu0 %v5204
    %6536 = vmatprep.subr.bf16.mxu0 %v5197
    %6537 = vmatpush1.bf16.msra.mxu0 %v5196
    %6538 = vmatprep.subr.bf16.mxu0 %v5189
    %6539 = vmatpush1.bf16.msra.mxu0 %v5188
    %6540 = vmatprep.subr.bf16.mxu0 %v5309
    %6541 = vmatpush2.bf16.msra.mxu0 %v5308
    %6542 = vmatprep.subr.bf16.mxu0 %v5301
    %6543 = vmatpush2.bf16.msra.mxu0 %v5300
    %6544 = vmatprep.subr.bf16.mxu0 %v5293
    %6545 = vmatpush2.bf16.msra.mxu0 %v5292
    %6546 = vmatprep.subr.bf16.mxu0 %v5285
    %6547 = vmatpush2.bf16.msra.mxu0 %v5284
    %6548 = vmatprep.subr.bf16.mxu0 %v5277
    %6549 = vmatpush2.bf16.msra.mxu0 %v5276
    %6550 = vmatprep.subr.bf16.mxu0 %v5269
    %6551 = vmatpush2.bf16.msra.mxu0 %v5268
    %6552 = vmatprep.subr.bf16.mxu0 %v5261
    %6553 = vmatpush2.bf16.msra.mxu0 %v5260
    %6554 = vmatprep.subr.bf16.mxu0 %v5253
    %6555 = vmatpush2.bf16.msra.mxu0 %v5252
    %6556 = vmatprep.mubr.bf16.mxu0 %v3315
    %6557 = vmatmul.mubr.bf16.gmra.mxu0 %v3314
    %v6558 = vpop.f32.mrf.mxu0
    %v6559 = vadd.f32 %v6518, %v6558
    %v6560 = vpop.f32.mrf.mxu0
    %v6561 = vadd.f32 %v6520, %v6560
    %v6562 = vpop.f32.mrf.mxu0
    %v6563 = vpop.f32.mrf.mxu0
    %6564 = vdwg.mxu0
    %6565 = vmatprep.subr.bf16.mxu0 %v5373
    %6566 = vmatpush1.bf16.msra.mxu0 %v5372
    %6567 = vmatprep.subr.bf16.mxu0 %v5365
    %6568 = vmatpush1.bf16.msra.mxu0 %v5364
    %6569 = vmatprep.subr.bf16.mxu0 %v5357
    %6570 = vmatpush1.bf16.msra.mxu0 %v5356
    %6571 = vmatprep.subr.bf16.mxu0 %v5349
    %6572 = vmatpush1.bf16.msra.mxu0 %v5348
    %6573 = vmatprep.subr.bf16.mxu0 %v5341
    %6574 = vmatpush1.bf16.msra.mxu0 %v5340
    %6575 = vmatprep.subr.bf16.mxu0 %v5333
    %6576 = vmatpush1.bf16.msra.mxu0 %v5332
    %6577 = vmatprep.subr.bf16.mxu0 %v5325
    %6578 = vmatpush1.bf16.msra.mxu0 %v5324
    %6579 = vmatprep.subr.bf16.mxu0 %v5317
    %6580 = vmatpush1.bf16.msra.mxu0 %v5316
    %6581 = vmatprep.subr.bf16.mxu0 %v5437
    %6582 = vmatpush2.bf16.msra.mxu0 %v5436
    %6583 = vmatprep.subr.bf16.mxu0 %v5429
    %6584 = vmatpush2.bf16.msra.mxu0 %v5428
    %6585 = vmatprep.subr.bf16.mxu0 %v5421
    %6586 = vmatpush2.bf16.msra.mxu0 %v5420
    %6587 = vmatprep.subr.bf16.mxu0 %v5413
    %6588 = vmatpush2.bf16.msra.mxu0 %v5412
    %6589 = vmatprep.subr.bf16.mxu0 %v5405
    %6590 = vmatpush2.bf16.msra.mxu0 %v5404
    %6591 = vmatprep.subr.bf16.mxu0 %v5397
    %6592 = vmatpush2.bf16.msra.mxu0 %v5396
    %6593 = vmatprep.subr.bf16.mxu0 %v5389
    %6594 = vmatpush2.bf16.msra.mxu0 %v5388
    %6595 = vmatprep.subr.bf16.mxu0 %v5381
    %6596 = vmatpush2.bf16.msra.mxu0 %v5380
    %6597 = vmatprep.mubr.bf16.mxu0 %v3317
    %6598 = vmatmul.mubr.bf16.gmra.mxu0 %v3316
    %v6599 = vpop.f32.mrf.mxu0
    %v6600 = vadd.f32 %v6559, %v6599
    %v6601 = vpop.f32.mrf.mxu0
    %v6602 = vadd.f32 %v6561, %v6601
    %v6603 = vpop.f32.mrf.mxu0
    %v6604 = vpop.f32.mrf.mxu0
    %6605 = vdwg.mxu0
    %v6606 = vmax.f32 %v6108, 0.0
    %v6607 = vmax.f32 %v6110, 0.0
    %v6608 = vmax.f32 %v6272, 0.0
    %v6609 = vmax.f32 %v6274, 0.0
    %v6610 = vmax.f32 %v6436, 0.0
    %v6611 = vmax.f32 %v6438, 0.0
    %v6612 = vmax.f32 %v6600, 0.0
    %v6613 = vmax.f32 %v6602, 0.0
    %v6614 = vld [vmem:[#allocation4 + $0x1800] sm:$0xff]
    %v6615 = vld [vmem:[#allocation4 + $0x1808] sm:$0xff]
    %v6616 = vld [vmem:[#allocation4 + $0x1810] sm:$0xff]
    %v6617 = vld [vmem:[#allocation4 + $0x1818] sm:$0xff]
    %v6618 = vld [vmem:[#allocation4 + $0x1820] sm:$0xff]
    %v6619 = vld [vmem:[#allocation4 + $0x1828] sm:$0xff]
    %v6620 = vld [vmem:[#allocation4 + $0x1830] sm:$0xff]
    %v6621 = vld [vmem:[#allocation4 + $0x1838] sm:$0xff]
    %v6622 = vld [vmem:[#allocation4 + $0x1840] sm:$0xff]
    %v6623 = vld [vmem:[#allocation4 + $0x1848] sm:$0xff]
    %v6624 = vld [vmem:[#allocation4 + $0x1850] sm:$0xff]
    %v6625 = vld [vmem:[#allocation4 + $0x1858] sm:$0xff]
    %v6626 = vld [vmem:[#allocation4 + $0x1860] sm:$0xff]
    %v6627 = vld [vmem:[#allocation4 + $0x1868] sm:$0xff]
    %v6628 = vld [vmem:[#allocation4 + $0x1870] sm:$0xff]
    %v6629 = vld [vmem:[#allocation4 + $0x1878] sm:$0xff]
    %v6630 = vld [vmem:[#allocation4 + $0x1880] sm:$0xff]
    %v6631 = vld [vmem:[#allocation4 + $0x1888] sm:$0xff]
    %v6632 = vld [vmem:[#allocation4 + $0x1890] sm:$0xff]
    %v6633 = vld [vmem:[#allocation4 + $0x1898] sm:$0xff]
    %v6634 = vld [vmem:[#allocation4 + $0x18a0] sm:$0xff]
    %v6635 = vld [vmem:[#allocation4 + $0x18a8] sm:$0xff]
    %v6636 = vld [vmem:[#allocation4 + $0x18b0] sm:$0xff]
    %v6637 = vld [vmem:[#allocation4 + $0x18b8] sm:$0xff]
    %v6638 = vld [vmem:[#allocation4 + $0x18c0] sm:$0xff]
    %v6639 = vld [vmem:[#allocation4 + $0x18c8] sm:$0xff]
    %v6640 = vld [vmem:[#allocation4 + $0x18d0] sm:$0xff]
    %v6641 = vld [vmem:[#allocation4 + $0x18d8] sm:$0xff]
    %v6642 = vld [vmem:[#allocation4 + $0x18e0] sm:$0xff]
    %v6643 = vld [vmem:[#allocation4 + $0x18e8] sm:$0xff]
    %v6644 = vld [vmem:[#allocation4 + $0x18f0] sm:$0xff]
    %v6645 = vld [vmem:[#allocation4 + $0x18f8] sm:$0xff]
    %v6646 = vld [vmem:[#allocation4 + $0x1900] sm:$0xff]
    %v6647 = vld [vmem:[#allocation4 + $0x1908] sm:$0xff]
    %v6648 = vld [vmem:[#allocation4 + $0x1910] sm:$0xff]
    %v6649 = vld [vmem:[#allocation4 + $0x1918] sm:$0xff]
    %v6650 = vld [vmem:[#allocation4 + $0x1920] sm:$0xff]
    %v6651 = vld [vmem:[#allocation4 + $0x1928] sm:$0xff]
    %v6652 = vld [vmem:[#allocation4 + $0x1930] sm:$0xff]
    %v6653 = vld [vmem:[#allocation4 + $0x1938] sm:$0xff]
    %v6654 = vld [vmem:[#allocation4 + $0x1940] sm:$0xff]
    %v6655 = vld [vmem:[#allocation4 + $0x1948] sm:$0xff]
    %v6656 = vld [vmem:[#allocation4 + $0x1950] sm:$0xff]
    %v6657 = vld [vmem:[#allocation4 + $0x1958] sm:$0xff]
    %v6658 = vld [vmem:[#allocation4 + $0x1960] sm:$0xff]
    %v6659 = vld [vmem:[#allocation4 + $0x1968] sm:$0xff]
    %v6660 = vld [vmem:[#allocation4 + $0x1970] sm:$0xff]
    %v6661 = vld [vmem:[#allocation4 + $0x1978] sm:$0xff]
    %v6662 = vld [vmem:[#allocation4 + $0x1980] sm:$0xff]
    %v6663 = vld [vmem:[#allocation4 + $0x1988] sm:$0xff]
    %v6664 = vld [vmem:[#allocation4 + $0x1990] sm:$0xff]
    %v6665 = vld [vmem:[#allocation4 + $0x1998] sm:$0xff]
    %v6666 = vld [vmem:[#allocation4 + $0x19a0] sm:$0xff]
    %v6667 = vld [vmem:[#allocation4 + $0x19a8] sm:$0xff]
    %v6668 = vld [vmem:[#allocation4 + $0x19b0] sm:$0xff]
    %v6669 = vld [vmem:[#allocation4 + $0x19b8] sm:$0xff]
    %v6670 = vld [vmem:[#allocation4 + $0x19c0] sm:$0xff]
    %v6671 = vld [vmem:[#allocation4 + $0x19c8] sm:$0xff]
    %v6672 = vld [vmem:[#allocation4 + $0x19d0] sm:$0xff]
    %v6673 = vld [vmem:[#allocation4 + $0x19d8] sm:$0xff]
    %v6674 = vld [vmem:[#allocation4 + $0x19e0] sm:$0xff]
    %v6675 = vld [vmem:[#allocation4 + $0x19e8] sm:$0xff]
    %v6676 = vld [vmem:[#allocation4 + $0x19f0] sm:$0xff]
    %v6677 = vld [vmem:[#allocation4 + $0x19f8] sm:$0xff]
    %v6678 = vld [vmem:[#allocation4 + $0x1a00] sm:$0xff]
    %v6679 = vld [vmem:[#allocation4 + $0x1a08] sm:$0xff]
    %v6680 = vld [vmem:[#allocation4 + $0x1a10] sm:$0xff]
    %v6681 = vld [vmem:[#allocation4 + $0x1a18] sm:$0xff]
    %v6682 = vld [vmem:[#allocation4 + $0x1a20] sm:$0xff]
    %v6683 = vld [vmem:[#allocation4 + $0x1a28] sm:$0xff]
    %v6684 = vld [vmem:[#allocation4 + $0x1a30] sm:$0xff]
    %v6685 = vld [vmem:[#allocation4 + $0x1a38] sm:$0xff]
    %v6686 = vld [vmem:[#allocation4 + $0x1a40] sm:$0xff]
    %v6687 = vld [vmem:[#allocation4 + $0x1a48] sm:$0xff]
    %v6688 = vld [vmem:[#allocation4 + $0x1a50] sm:$0xff]
    %v6689 = vld [vmem:[#allocation4 + $0x1a58] sm:$0xff]
    %v6690 = vld [vmem:[#allocation4 + $0x1a60] sm:$0xff]
    %v6691 = vld [vmem:[#allocation4 + $0x1a68] sm:$0xff]
    %v6692 = vld [vmem:[#allocation4 + $0x1a70] sm:$0xff]
    %v6693 = vld [vmem:[#allocation4 + $0x1a78] sm:$0xff]
    %v6694 = vld [vmem:[#allocation4 + $0x1a80] sm:$0xff]
    %v6695 = vld [vmem:[#allocation4 + $0x1a88] sm:$0xff]
    %v6696 = vld [vmem:[#allocation4 + $0x1a90] sm:$0xff]
    %v6697 = vld [vmem:[#allocation4 + $0x1a98] sm:$0xff]
    %v6698 = vld [vmem:[#allocation4 + $0x1aa0] sm:$0xff]
    %v6699 = vld [vmem:[#allocation4 + $0x1aa8] sm:$0xff]
    %v6700 = vld [vmem:[#allocation4 + $0x1ab0] sm:$0xff]
    %v6701 = vld [vmem:[#allocation4 + $0x1ab8] sm:$0xff]
    %v6702 = vld [vmem:[#allocation4 + $0x1ac0] sm:$0xff]
    %v6703 = vld [vmem:[#allocation4 + $0x1ac8] sm:$0xff]
    %v6704 = vld [vmem:[#allocation4 + $0x1ad0] sm:$0xff]
    %v6705 = vld [vmem:[#allocation4 + $0x1ad8] sm:$0xff]
    %v6706 = vld [vmem:[#allocation4 + $0x1ae0] sm:$0xff]
    %v6707 = vld [vmem:[#allocation4 + $0x1ae8] sm:$0xff]
    %v6708 = vld [vmem:[#allocation4 + $0x1af0] sm:$0xff]
    %v6709 = vld [vmem:[#allocation4 + $0x1af8] sm:$0xff]
    %v6710 = vld [vmem:[#allocation4 + $0x1b00] sm:$0xff]
    %v6711 = vld [vmem:[#allocation4 + $0x1b08] sm:$0xff]
    %v6712 = vld [vmem:[#allocation4 + $0x1b10] sm:$0xff]
    %v6713 = vld [vmem:[#allocation4 + $0x1b18] sm:$0xff]
    %v6714 = vld [vmem:[#allocation4 + $0x1b20] sm:$0xff]
    %v6715 = vld [vmem:[#allocation4 + $0x1b28] sm:$0xff]
    %v6716 = vld [vmem:[#allocation4 + $0x1b30] sm:$0xff]
    %v6717 = vld [vmem:[#allocation4 + $0x1b38] sm:$0xff]
    %v6718 = vld [vmem:[#allocation4 + $0x1b40] sm:$0xff]
    %v6719 = vld [vmem:[#allocation4 + $0x1b48] sm:$0xff]
    %v6720 = vld [vmem:[#allocation4 + $0x1b50] sm:$0xff]
    %v6721 = vld [vmem:[#allocation4 + $0x1b58] sm:$0xff]
    %v6722 = vld [vmem:[#allocation4 + $0x1b60] sm:$0xff]
    %v6723 = vld [vmem:[#allocation4 + $0x1b68] sm:$0xff]
    %v6724 = vld [vmem:[#allocation4 + $0x1b70] sm:$0xff]
    %v6725 = vld [vmem:[#allocation4 + $0x1b78] sm:$0xff]
    %v6726 = vld [vmem:[#allocation4 + $0x1b80] sm:$0xff]
    %v6727 = vld [vmem:[#allocation4 + $0x1b88] sm:$0xff]
    %v6728 = vld [vmem:[#allocation4 + $0x1b90] sm:$0xff]
    %v6729 = vld [vmem:[#allocation4 + $0x1b98] sm:$0xff]
    %v6730 = vld [vmem:[#allocation4 + $0x1ba0] sm:$0xff]
    %v6731 = vld [vmem:[#allocation4 + $0x1ba8] sm:$0xff]
    %v6732 = vld [vmem:[#allocation4 + $0x1bb0] sm:$0xff]
    %v6733 = vld [vmem:[#allocation4 + $0x1bb8] sm:$0xff]
    %v6734 = vld [vmem:[#allocation4 + $0x1bc0] sm:$0xff]
    %v6735 = vld [vmem:[#allocation4 + $0x1bc8] sm:$0xff]
    %v6736 = vld [vmem:[#allocation4 + $0x1bd0] sm:$0xff]
    %v6737 = vld [vmem:[#allocation4 + $0x1bd8] sm:$0xff]
    %v6738 = vld [vmem:[#allocation4 + $0x1be0] sm:$0xff]
    %v6739 = vld [vmem:[#allocation4 + $0x1be8] sm:$0xff]
    %v6740 = vld [vmem:[#allocation4 + $0x1bf0] sm:$0xff]
    %v6741 = vld [vmem:[#allocation4 + $0x1bf8] sm:$0xff]
    %v6742 = vld [vmem:[#allocation4 + $0x1c00] sm:$0xff]
    %v6743 = vld [vmem:[#allocation4 + $0x1c08] sm:$0xff]
    %v6744 = vld [vmem:[#allocation4 + $0x1c10] sm:$0xff]
    %v6745 = vld [vmem:[#allocation4 + $0x1c18] sm:$0xff]
    %v6746 = vld [vmem:[#allocation4 + $0x1c20] sm:$0xff]
    %v6747 = vld [vmem:[#allocation4 + $0x1c28] sm:$0xff]
    %v6748 = vld [vmem:[#allocation4 + $0x1c30] sm:$0xff]
    %v6749 = vld [vmem:[#allocation4 + $0x1c38] sm:$0xff]
    %v6750 = vld [vmem:[#allocation4 + $0x1c40] sm:$0xff]
    %v6751 = vld [vmem:[#allocation4 + $0x1c48] sm:$0xff]
    %v6752 = vld [vmem:[#allocation4 + $0x1c50] sm:$0xff]
    %v6753 = vld [vmem:[#allocation4 + $0x1c58] sm:$0xff]
    %v6754 = vld [vmem:[#allocation4 + $0x1c60] sm:$0xff]
    %v6755 = vld [vmem:[#allocation4 + $0x1c68] sm:$0xff]
    %v6756 = vld [vmem:[#allocation4 + $0x1c70] sm:$0xff]
    %v6757 = vld [vmem:[#allocation4 + $0x1c78] sm:$0xff]
    %v6758 = vld [vmem:[#allocation4 + $0x1c80] sm:$0xff]
    %v6759 = vld [vmem:[#allocation4 + $0x1c88] sm:$0xff]
    %v6760 = vld [vmem:[#allocation4 + $0x1c90] sm:$0xff]
    %v6761 = vld [vmem:[#allocation4 + $0x1c98] sm:$0xff]
    %v6762 = vld [vmem:[#allocation4 + $0x1ca0] sm:$0xff]
    %v6763 = vld [vmem:[#allocation4 + $0x1ca8] sm:$0xff]
    %v6764 = vld [vmem:[#allocation4 + $0x1cb0] sm:$0xff]
    %v6765 = vld [vmem:[#allocation4 + $0x1cb8] sm:$0xff]
    %v6766 = vld [vmem:[#allocation4 + $0x1cc0] sm:$0xff]
    %v6767 = vld [vmem:[#allocation4 + $0x1cc8] sm:$0xff]
    %v6768 = vld [vmem:[#allocation4 + $0x1cd0] sm:$0xff]
    %v6769 = vld [vmem:[#allocation4 + $0x1cd8] sm:$0xff]
    %v6770 = vld [vmem:[#allocation4 + $0x1ce0] sm:$0xff]
    %v6771 = vld [vmem:[#allocation4 + $0x1ce8] sm:$0xff]
    %v6772 = vld [vmem:[#allocation4 + $0x1cf0] sm:$0xff]
    %v6773 = vld [vmem:[#allocation4 + $0x1cf8] sm:$0xff]
    %v6774 = vld [vmem:[#allocation4 + $0x1d00] sm:$0xff]
    %v6775 = vld [vmem:[#allocation4 + $0x1d08] sm:$0xff]
    %v6776 = vld [vmem:[#allocation4 + $0x1d10] sm:$0xff]
    %v6777 = vld [vmem:[#allocation4 + $0x1d18] sm:$0xff]
    %v6778 = vld [vmem:[#allocation4 + $0x1d20] sm:$0xff]
    %v6779 = vld [vmem:[#allocation4 + $0x1d28] sm:$0xff]
    %v6780 = vld [vmem:[#allocation4 + $0x1d30] sm:$0xff]
    %v6781 = vld [vmem:[#allocation4 + $0x1d38] sm:$0xff]
    %v6782 = vld [vmem:[#allocation4 + $0x1d40] sm:$0xff]
    %v6783 = vld [vmem:[#allocation4 + $0x1d48] sm:$0xff]
    %v6784 = vld [vmem:[#allocation4 + $0x1d50] sm:$0xff]
    %v6785 = vld [vmem:[#allocation4 + $0x1d58] sm:$0xff]
    %v6786 = vld [vmem:[#allocation4 + $0x1d60] sm:$0xff]
    %v6787 = vld [vmem:[#allocation4 + $0x1d68] sm:$0xff]
    %v6788 = vld [vmem:[#allocation4 + $0x1d70] sm:$0xff]
    %v6789 = vld [vmem:[#allocation4 + $0x1d78] sm:$0xff]
    %v6790 = vld [vmem:[#allocation4 + $0x1d80] sm:$0xff]
    %v6791 = vld [vmem:[#allocation4 + $0x1d88] sm:$0xff]
    %v6792 = vld [vmem:[#allocation4 + $0x1d90] sm:$0xff]
    %v6793 = vld [vmem:[#allocation4 + $0x1d98] sm:$0xff]
    %v6794 = vld [vmem:[#allocation4 + $0x1da0] sm:$0xff]
    %v6795 = vld [vmem:[#allocation4 + $0x1da8] sm:$0xff]
    %v6796 = vld [vmem:[#allocation4 + $0x1db0] sm:$0xff]
    %v6797 = vld [vmem:[#allocation4 + $0x1db8] sm:$0xff]
    %v6798 = vld [vmem:[#allocation4 + $0x1dc0] sm:$0xff]
    %v6799 = vld [vmem:[#allocation4 + $0x1dc8] sm:$0xff]
    %v6800 = vld [vmem:[#allocation4 + $0x1dd0] sm:$0xff]
    %v6801 = vld [vmem:[#allocation4 + $0x1dd8] sm:$0xff]
    %v6802 = vld [vmem:[#allocation4 + $0x1de0] sm:$0xff]
    %v6803 = vld [vmem:[#allocation4 + $0x1de8] sm:$0xff]
    %v6804 = vld [vmem:[#allocation4 + $0x1df0] sm:$0xff]
    %v6805 = vld [vmem:[#allocation4 + $0x1df8] sm:$0xff]
    %v6806 = vld [vmem:[#allocation4 + $0x1e00] sm:$0xff]
    %v6807 = vld [vmem:[#allocation4 + $0x1e08] sm:$0xff]
    %v6808 = vld [vmem:[#allocation4 + $0x1e10] sm:$0xff]
    %v6809 = vld [vmem:[#allocation4 + $0x1e18] sm:$0xff]
    %v6810 = vld [vmem:[#allocation4 + $0x1e20] sm:$0xff]
    %v6811 = vld [vmem:[#allocation4 + $0x1e28] sm:$0xff]
    %v6812 = vld [vmem:[#allocation4 + $0x1e30] sm:$0xff]
    %v6813 = vld [vmem:[#allocation4 + $0x1e38] sm:$0xff]
    %v6814 = vld [vmem:[#allocation4 + $0x1e40] sm:$0xff]
    %v6815 = vld [vmem:[#allocation4 + $0x1e48] sm:$0xff]
    %v6816 = vld [vmem:[#allocation4 + $0x1e50] sm:$0xff]
    %v6817 = vld [vmem:[#allocation4 + $0x1e58] sm:$0xff]
    %v6818 = vld [vmem:[#allocation4 + $0x1e60] sm:$0xff]
    %v6819 = vld [vmem:[#allocation4 + $0x1e68] sm:$0xff]
    %v6820 = vld [vmem:[#allocation4 + $0x1e70] sm:$0xff]
    %v6821 = vld [vmem:[#allocation4 + $0x1e78] sm:$0xff]
    %v6822 = vld [vmem:[#allocation4 + $0x1e80] sm:$0xff]
    %v6823 = vld [vmem:[#allocation4 + $0x1e88] sm:$0xff]
    %v6824 = vld [vmem:[#allocation4 + $0x1e90] sm:$0xff]
    %v6825 = vld [vmem:[#allocation4 + $0x1e98] sm:$0xff]
    %v6826 = vld [vmem:[#allocation4 + $0x1ea0] sm:$0xff]
    %v6827 = vld [vmem:[#allocation4 + $0x1ea8] sm:$0xff]
    %v6828 = vld [vmem:[#allocation4 + $0x1eb0] sm:$0xff]
    %v6829 = vld [vmem:[#allocation4 + $0x1eb8] sm:$0xff]
    %v6830 = vld [vmem:[#allocation4 + $0x1ec0] sm:$0xff]
    %v6831 = vld [vmem:[#allocation4 + $0x1ec8] sm:$0xff]
    %v6832 = vld [vmem:[#allocation4 + $0x1ed0] sm:$0xff]
    %v6833 = vld [vmem:[#allocation4 + $0x1ed8] sm:$0xff]
    %v6834 = vld [vmem:[#allocation4 + $0x1ee0] sm:$0xff]
    %v6835 = vld [vmem:[#allocation4 + $0x1ee8] sm:$0xff]
    %v6836 = vld [vmem:[#allocation4 + $0x1ef0] sm:$0xff]
    %v6837 = vld [vmem:[#allocation4 + $0x1ef8] sm:$0xff]
    %v6838 = vld [vmem:[#allocation4 + $0x1f00] sm:$0xff]
    %v6839 = vld [vmem:[#allocation4 + $0x1f08] sm:$0xff]
    %v6840 = vld [vmem:[#allocation4 + $0x1f10] sm:$0xff]
    %v6841 = vld [vmem:[#allocation4 + $0x1f18] sm:$0xff]
    %v6842 = vld [vmem:[#allocation4 + $0x1f20] sm:$0xff]
    %v6843 = vld [vmem:[#allocation4 + $0x1f28] sm:$0xff]
    %v6844 = vld [vmem:[#allocation4 + $0x1f30] sm:$0xff]
    %v6845 = vld [vmem:[#allocation4 + $0x1f38] sm:$0xff]
    %v6846 = vld [vmem:[#allocation4 + $0x1f40] sm:$0xff]
    %v6847 = vld [vmem:[#allocation4 + $0x1f48] sm:$0xff]
    %v6848 = vld [vmem:[#allocation4 + $0x1f50] sm:$0xff]
    %v6849 = vld [vmem:[#allocation4 + $0x1f58] sm:$0xff]
    %v6850 = vld [vmem:[#allocation4 + $0x1f60] sm:$0xff]
    %v6851 = vld [vmem:[#allocation4 + $0x1f68] sm:$0xff]
    %v6852 = vld [vmem:[#allocation4 + $0x1f70] sm:$0xff]
    %v6853 = vld [vmem:[#allocation4 + $0x1f78] sm:$0xff]
    %v6854 = vld [vmem:[#allocation4 + $0x1f80] sm:$0xff]
    %v6855 = vld [vmem:[#allocation4 + $0x1f88] sm:$0xff]
    %v6856 = vld [vmem:[#allocation4 + $0x1f90] sm:$0xff]
    %v6857 = vld [vmem:[#allocation4 + $0x1f98] sm:$0xff]
    %v6858 = vld [vmem:[#allocation4 + $0x1fa0] sm:$0xff]
    %v6859 = vld [vmem:[#allocation4 + $0x1fa8] sm:$0xff]
    %v6860 = vld [vmem:[#allocation4 + $0x1fb0] sm:$0xff]
    %v6861 = vld [vmem:[#allocation4 + $0x1fb8] sm:$0xff]
    %v6862 = vld [vmem:[#allocation4 + $0x1fc0] sm:$0xff]
    %v6863 = vld [vmem:[#allocation4 + $0x1fc8] sm:$0xff]
    %v6864 = vld [vmem:[#allocation4 + $0x1fd0] sm:$0xff]
    %v6865 = vld [vmem:[#allocation4 + $0x1fd8] sm:$0xff]
    %v6866 = vld [vmem:[#allocation4 + $0x1fe0] sm:$0xff]
    %v6867 = vld [vmem:[#allocation4 + $0x1fe8] sm:$0xff]
    %v6868 = vld [vmem:[#allocation4 + $0x1ff0] sm:$0xff]
    %v6869 = vld [vmem:[#allocation4 + $0x1ff8] sm:$0xff]
    %v6870 = vld [vmem:[#allocation4 + $0x2000] sm:$0xff]
    %v6871 = vld [vmem:[#allocation4 + $0x2008] sm:$0xff]
    %v6872 = vld [vmem:[#allocation4 + $0x2010] sm:$0xff]
    %v6873 = vld [vmem:[#allocation4 + $0x2018] sm:$0xff]
    %v6874 = vld [vmem:[#allocation4 + $0x2020] sm:$0xff]
    %v6875 = vld [vmem:[#allocation4 + $0x2028] sm:$0xff]
    %v6876 = vld [vmem:[#allocation4 + $0x2030] sm:$0xff]
    %v6877 = vld [vmem:[#allocation4 + $0x2038] sm:$0xff]
    %v6878 = vld [vmem:[#allocation4 + $0x2040] sm:$0xff]
    %v6879 = vld [vmem:[#allocation4 + $0x2048] sm:$0xff]
    %v6880 = vld [vmem:[#allocation4 + $0x2050] sm:$0xff]
    %v6881 = vld [vmem:[#allocation4 + $0x2058] sm:$0xff]
    %v6882 = vld [vmem:[#allocation4 + $0x2060] sm:$0xff]
    %v6883 = vld [vmem:[#allocation4 + $0x2068] sm:$0xff]
    %v6884 = vld [vmem:[#allocation4 + $0x2070] sm:$0xff]
    %v6885 = vld [vmem:[#allocation4 + $0x2078] sm:$0xff]
    %v6886 = vld [vmem:[#allocation4 + $0x2080] sm:$0xff]
    %v6887 = vld [vmem:[#allocation4 + $0x2088] sm:$0xff]
    %v6888 = vld [vmem:[#allocation4 + $0x2090] sm:$0xff]
    %v6889 = vld [vmem:[#allocation4 + $0x2098] sm:$0xff]
    %v6890 = vld [vmem:[#allocation4 + $0x20a0] sm:$0xff]
    %v6891 = vld [vmem:[#allocation4 + $0x20a8] sm:$0xff]
    %v6892 = vld [vmem:[#allocation4 + $0x20b0] sm:$0xff]
    %v6893 = vld [vmem:[#allocation4 + $0x20b8] sm:$0xff]
    %v6894 = vld [vmem:[#allocation4 + $0x20c0] sm:$0xff]
    %v6895 = vld [vmem:[#allocation4 + $0x20c8] sm:$0xff]
    %v6896 = vld [vmem:[#allocation4 + $0x20d0] sm:$0xff]
    %v6897 = vld [vmem:[#allocation4 + $0x20d8] sm:$0xff]
    %v6898 = vld [vmem:[#allocation4 + $0x20e0] sm:$0xff]
    %v6899 = vld [vmem:[#allocation4 + $0x20e8] sm:$0xff]
    %v6900 = vld [vmem:[#allocation4 + $0x20f0] sm:$0xff]
    %v6901 = vld [vmem:[#allocation4 + $0x20f8] sm:$0xff]
    %v6902 = vld [vmem:[#allocation4 + $0x2100] sm:$0xff]
    %v6903 = vld [vmem:[#allocation4 + $0x2108] sm:$0xff]
    %v6904 = vld [vmem:[#allocation4 + $0x2110] sm:$0xff]
    %v6905 = vld [vmem:[#allocation4 + $0x2118] sm:$0xff]
    %v6906 = vld [vmem:[#allocation4 + $0x2120] sm:$0xff]
    %v6907 = vld [vmem:[#allocation4 + $0x2128] sm:$0xff]
    %v6908 = vld [vmem:[#allocation4 + $0x2130] sm:$0xff]
    %v6909 = vld [vmem:[#allocation4 + $0x2138] sm:$0xff]
    %v6910 = vld [vmem:[#allocation4 + $0x2140] sm:$0xff]
    %v6911 = vld [vmem:[#allocation4 + $0x2148] sm:$0xff]
    %v6912 = vld [vmem:[#allocation4 + $0x2150] sm:$0xff]
    %v6913 = vld [vmem:[#allocation4 + $0x2158] sm:$0xff]
    %v6914 = vld [vmem:[#allocation4 + $0x2160] sm:$0xff]
    %v6915 = vld [vmem:[#allocation4 + $0x2168] sm:$0xff]
    %v6916 = vld [vmem:[#allocation4 + $0x2170] sm:$0xff]
    %v6917 = vld [vmem:[#allocation4 + $0x2178] sm:$0xff]
    %v6918 = vld [vmem:[#allocation4 + $0x2180] sm:$0xff]
    %v6919 = vld [vmem:[#allocation4 + $0x2188] sm:$0xff]
    %v6920 = vld [vmem:[#allocation4 + $0x2190] sm:$0xff]
    %v6921 = vld [vmem:[#allocation4 + $0x2198] sm:$0xff]
    %v6922 = vld [vmem:[#allocation4 + $0x21a0] sm:$0xff]
    %v6923 = vld [vmem:[#allocation4 + $0x21a8] sm:$0xff]
    %v6924 = vld [vmem:[#allocation4 + $0x21b0] sm:$0xff]
    %v6925 = vld [vmem:[#allocation4 + $0x21b8] sm:$0xff]
    %v6926 = vld [vmem:[#allocation4 + $0x21c0] sm:$0xff]
    %v6927 = vld [vmem:[#allocation4 + $0x21c8] sm:$0xff]
    %v6928 = vld [vmem:[#allocation4 + $0x21d0] sm:$0xff]
    %v6929 = vld [vmem:[#allocation4 + $0x21d8] sm:$0xff]
    %v6930 = vld [vmem:[#allocation4 + $0x21e0] sm:$0xff]
    %v6931 = vld [vmem:[#allocation4 + $0x21e8] sm:$0xff]
    %v6932 = vld [vmem:[#allocation4 + $0x21f0] sm:$0xff]
    %v6933 = vld [vmem:[#allocation4 + $0x21f8] sm:$0xff]
    %v6934 = vld [vmem:[#allocation4 + $0x2200] sm:$0xff]
    %v6935 = vld [vmem:[#allocation4 + $0x2208] sm:$0xff]
    %v6936 = vld [vmem:[#allocation4 + $0x2210] sm:$0xff]
    %v6937 = vld [vmem:[#allocation4 + $0x2218] sm:$0xff]
    %v6938 = vld [vmem:[#allocation4 + $0x2220] sm:$0xff]
    %v6939 = vld [vmem:[#allocation4 + $0x2228] sm:$0xff]
    %v6940 = vld [vmem:[#allocation4 + $0x2230] sm:$0xff]
    %v6941 = vld [vmem:[#allocation4 + $0x2238] sm:$0xff]
    %v6942 = vld [vmem:[#allocation4 + $0x2240] sm:$0xff]
    %v6943 = vld [vmem:[#allocation4 + $0x2248] sm:$0xff]
    %v6944 = vld [vmem:[#allocation4 + $0x2250] sm:$0xff]
    %v6945 = vld [vmem:[#allocation4 + $0x2258] sm:$0xff]
    %v6946 = vld [vmem:[#allocation4 + $0x2260] sm:$0xff]
    %v6947 = vld [vmem:[#allocation4 + $0x2268] sm:$0xff]
    %v6948 = vld [vmem:[#allocation4 + $0x2270] sm:$0xff]
    %v6949 = vld [vmem:[#allocation4 + $0x2278] sm:$0xff]
    %v6950 = vld [vmem:[#allocation4 + $0x2280] sm:$0xff]
    %v6951 = vld [vmem:[#allocation4 + $0x2288] sm:$0xff]
    %v6952 = vld [vmem:[#allocation4 + $0x2290] sm:$0xff]
    %v6953 = vld [vmem:[#allocation4 + $0x2298] sm:$0xff]
    %v6954 = vld [vmem:[#allocation4 + $0x22a0] sm:$0xff]
    %v6955 = vld [vmem:[#allocation4 + $0x22a8] sm:$0xff]
    %v6956 = vld [vmem:[#allocation4 + $0x22b0] sm:$0xff]
    %v6957 = vld [vmem:[#allocation4 + $0x22b8] sm:$0xff]
    %v6958 = vld [vmem:[#allocation4 + $0x22c0] sm:$0xff]
    %v6959 = vld [vmem:[#allocation4 + $0x22c8] sm:$0xff]
    %v6960 = vld [vmem:[#allocation4 + $0x22d0] sm:$0xff]
    %v6961 = vld [vmem:[#allocation4 + $0x22d8] sm:$0xff]
    %v6962 = vld [vmem:[#allocation4 + $0x22e0] sm:$0xff]
    %v6963 = vld [vmem:[#allocation4 + $0x22e8] sm:$0xff]
    %v6964 = vld [vmem:[#allocation4 + $0x22f0] sm:$0xff]
    %v6965 = vld [vmem:[#allocation4 + $0x22f8] sm:$0xff]
    %v6966 = vld [vmem:[#allocation4 + $0x2300] sm:$0xff]
    %v6967 = vld [vmem:[#allocation4 + $0x2308] sm:$0xff]
    %v6968 = vld [vmem:[#allocation4 + $0x2310] sm:$0xff]
    %v6969 = vld [vmem:[#allocation4 + $0x2318] sm:$0xff]
    %v6970 = vld [vmem:[#allocation4 + $0x2320] sm:$0xff]
    %v6971 = vld [vmem:[#allocation4 + $0x2328] sm:$0xff]
    %v6972 = vld [vmem:[#allocation4 + $0x2330] sm:$0xff]
    %v6973 = vld [vmem:[#allocation4 + $0x2338] sm:$0xff]
    %v6974 = vld [vmem:[#allocation4 + $0x2340] sm:$0xff]
    %v6975 = vld [vmem:[#allocation4 + $0x2348] sm:$0xff]
    %v6976 = vld [vmem:[#allocation4 + $0x2350] sm:$0xff]
    %v6977 = vld [vmem:[#allocation4 + $0x2358] sm:$0xff]
    %v6978 = vld [vmem:[#allocation4 + $0x2360] sm:$0xff]
    %v6979 = vld [vmem:[#allocation4 + $0x2368] sm:$0xff]
    %v6980 = vld [vmem:[#allocation4 + $0x2370] sm:$0xff]
    %v6981 = vld [vmem:[#allocation4 + $0x2378] sm:$0xff]
    %v6982 = vld [vmem:[#allocation4 + $0x2380] sm:$0xff]
    %v6983 = vld [vmem:[#allocation4 + $0x2388] sm:$0xff]
    %v6984 = vld [vmem:[#allocation4 + $0x2390] sm:$0xff]
    %v6985 = vld [vmem:[#allocation4 + $0x2398] sm:$0xff]
    %v6986 = vld [vmem:[#allocation4 + $0x23a0] sm:$0xff]
    %v6987 = vld [vmem:[#allocation4 + $0x23a8] sm:$0xff]
    %v6988 = vld [vmem:[#allocation4 + $0x23b0] sm:$0xff]
    %v6989 = vld [vmem:[#allocation4 + $0x23b8] sm:$0xff]
    %v6990 = vld [vmem:[#allocation4 + $0x23c0] sm:$0xff]
    %v6991 = vld [vmem:[#allocation4 + $0x23c8] sm:$0xff]
    %v6992 = vld [vmem:[#allocation4 + $0x23d0] sm:$0xff]
    %v6993 = vld [vmem:[#allocation4 + $0x23d8] sm:$0xff]
    %v6994 = vld [vmem:[#allocation4 + $0x23e0] sm:$0xff]
    %v6995 = vld [vmem:[#allocation4 + $0x23e8] sm:$0xff]
    %v6996 = vld [vmem:[#allocation4 + $0x23f0] sm:$0xff]
    %v6997 = vld [vmem:[#allocation4 + $0x23f8] sm:$0xff]
    %v6998 = vld [vmem:[#allocation4 + $0x2400] sm:$0xff]
    %v6999 = vld [vmem:[#allocation4 + $0x2408] sm:$0xff]
    %v7000 = vld [vmem:[#allocation4 + $0x2410] sm:$0xff]
    %v7001 = vld [vmem:[#allocation4 + $0x2418] sm:$0xff]
    %v7002 = vld [vmem:[#allocation4 + $0x2420] sm:$0xff]
    %v7003 = vld [vmem:[#allocation4 + $0x2428] sm:$0xff]
    %v7004 = vld [vmem:[#allocation4 + $0x2430] sm:$0xff]
    %v7005 = vld [vmem:[#allocation4 + $0x2438] sm:$0xff]
    %v7006 = vld [vmem:[#allocation4 + $0x2440] sm:$0xff]
    %v7007 = vld [vmem:[#allocation4 + $0x2448] sm:$0xff]
    %v7008 = vld [vmem:[#allocation4 + $0x2450] sm:$0xff]
    %v7009 = vld [vmem:[#allocation4 + $0x2458] sm:$0xff]
    %v7010 = vld [vmem:[#allocation4 + $0x2460] sm:$0xff]
    %v7011 = vld [vmem:[#allocation4 + $0x2468] sm:$0xff]
    %v7012 = vld [vmem:[#allocation4 + $0x2470] sm:$0xff]
    %v7013 = vld [vmem:[#allocation4 + $0x2478] sm:$0xff]
    %v7014 = vld [vmem:[#allocation4 + $0x2480] sm:$0xff]
    %v7015 = vld [vmem:[#allocation4 + $0x2488] sm:$0xff]
    %v7016 = vld [vmem:[#allocation4 + $0x2490] sm:$0xff]
    %v7017 = vld [vmem:[#allocation4 + $0x2498] sm:$0xff]
    %v7018 = vld [vmem:[#allocation4 + $0x24a0] sm:$0xff]
    %v7019 = vld [vmem:[#allocation4 + $0x24a8] sm:$0xff]
    %v7020 = vld [vmem:[#allocation4 + $0x24b0] sm:$0xff]
    %v7021 = vld [vmem:[#allocation4 + $0x24b8] sm:$0xff]
    %v7022 = vld [vmem:[#allocation4 + $0x24c0] sm:$0xff]
    %v7023 = vld [vmem:[#allocation4 + $0x24c8] sm:$0xff]
    %v7024 = vld [vmem:[#allocation4 + $0x24d0] sm:$0xff]
    %v7025 = vld [vmem:[#allocation4 + $0x24d8] sm:$0xff]
    %v7026 = vld [vmem:[#allocation4 + $0x24e0] sm:$0xff]
    %v7027 = vld [vmem:[#allocation4 + $0x24e8] sm:$0xff]
    %v7028 = vld [vmem:[#allocation4 + $0x24f0] sm:$0xff]
    %v7029 = vld [vmem:[#allocation4 + $0x24f8] sm:$0xff]
    %v7030 = vld [vmem:[#allocation4 + $0x2500] sm:$0xff]
    %v7031 = vld [vmem:[#allocation4 + $0x2508] sm:$0xff]
    %v7032 = vld [vmem:[#allocation4 + $0x2510] sm:$0xff]
    %v7033 = vld [vmem:[#allocation4 + $0x2518] sm:$0xff]
    %v7034 = vld [vmem:[#allocation4 + $0x2520] sm:$0xff]
    %v7035 = vld [vmem:[#allocation4 + $0x2528] sm:$0xff]
    %v7036 = vld [vmem:[#allocation4 + $0x2530] sm:$0xff]
    %v7037 = vld [vmem:[#allocation4 + $0x2538] sm:$0xff]
    %v7038 = vld [vmem:[#allocation4 + $0x2540] sm:$0xff]
    %v7039 = vld [vmem:[#allocation4 + $0x2548] sm:$0xff]
    %v7040 = vld [vmem:[#allocation4 + $0x2550] sm:$0xff]
    %v7041 = vld [vmem:[#allocation4 + $0x2558] sm:$0xff]
    %v7042 = vld [vmem:[#allocation4 + $0x2560] sm:$0xff]
    %v7043 = vld [vmem:[#allocation4 + $0x2568] sm:$0xff]
    %v7044 = vld [vmem:[#allocation4 + $0x2570] sm:$0xff]
    %v7045 = vld [vmem:[#allocation4 + $0x2578] sm:$0xff]
    %v7046 = vld [vmem:[#allocation4 + $0x2580] sm:$0xff]
    %v7047 = vld [vmem:[#allocation4 + $0x2588] sm:$0xff]
    %v7048 = vld [vmem:[#allocation4 + $0x2590] sm:$0xff]
    %v7049 = vld [vmem:[#allocation4 + $0x2598] sm:$0xff]
    %v7050 = vld [vmem:[#allocation4 + $0x25a0] sm:$0xff]
    %v7051 = vld [vmem:[#allocation4 + $0x25a8] sm:$0xff]
    %v7052 = vld [vmem:[#allocation4 + $0x25b0] sm:$0xff]
    %v7053 = vld [vmem:[#allocation4 + $0x25b8] sm:$0xff]
    %v7054 = vld [vmem:[#allocation4 + $0x25c0] sm:$0xff]
    %v7055 = vld [vmem:[#allocation4 + $0x25c8] sm:$0xff]
    %v7056 = vld [vmem:[#allocation4 + $0x25d0] sm:$0xff]
    %v7057 = vld [vmem:[#allocation4 + $0x25d8] sm:$0xff]
    %v7058 = vld [vmem:[#allocation4 + $0x25e0] sm:$0xff]
    %v7059 = vld [vmem:[#allocation4 + $0x25e8] sm:$0xff]
    %v7060 = vld [vmem:[#allocation4 + $0x25f0] sm:$0xff]
    %v7061 = vld [vmem:[#allocation4 + $0x25f8] sm:$0xff]
    %v7062 = vld [vmem:[#allocation4 + $0x2600] sm:$0xff]
    %v7063 = vld [vmem:[#allocation4 + $0x2608] sm:$0xff]
    %v7064 = vld [vmem:[#allocation4 + $0x2610] sm:$0xff]
    %v7065 = vld [vmem:[#allocation4 + $0x2618] sm:$0xff]
    %v7066 = vld [vmem:[#allocation4 + $0x2620] sm:$0xff]
    %v7067 = vld [vmem:[#allocation4 + $0x2628] sm:$0xff]
    %v7068 = vld [vmem:[#allocation4 + $0x2630] sm:$0xff]
    %v7069 = vld [vmem:[#allocation4 + $0x2638] sm:$0xff]
    %v7070 = vld [vmem:[#allocation4 + $0x2640] sm:$0xff]
    %v7071 = vld [vmem:[#allocation4 + $0x2648] sm:$0xff]
    %v7072 = vld [vmem:[#allocation4 + $0x2650] sm:$0xff]
    %v7073 = vld [vmem:[#allocation4 + $0x2658] sm:$0xff]
    %v7074 = vld [vmem:[#allocation4 + $0x2660] sm:$0xff]
    %v7075 = vld [vmem:[#allocation4 + $0x2668] sm:$0xff]
    %v7076 = vld [vmem:[#allocation4 + $0x2670] sm:$0xff]
    %v7077 = vld [vmem:[#allocation4 + $0x2678] sm:$0xff]
    %v7078 = vld [vmem:[#allocation4 + $0x2680] sm:$0xff]
    %v7079 = vld [vmem:[#allocation4 + $0x2688] sm:$0xff]
    %v7080 = vld [vmem:[#allocation4 + $0x2690] sm:$0xff]
    %v7081 = vld [vmem:[#allocation4 + $0x2698] sm:$0xff]
    %v7082 = vld [vmem:[#allocation4 + $0x26a0] sm:$0xff]
    %v7083 = vld [vmem:[#allocation4 + $0x26a8] sm:$0xff]
    %v7084 = vld [vmem:[#allocation4 + $0x26b0] sm:$0xff]
    %v7085 = vld [vmem:[#allocation4 + $0x26b8] sm:$0xff]
    %v7086 = vld [vmem:[#allocation4 + $0x26c0] sm:$0xff]
    %v7087 = vld [vmem:[#allocation4 + $0x26c8] sm:$0xff]
    %v7088 = vld [vmem:[#allocation4 + $0x26d0] sm:$0xff]
    %v7089 = vld [vmem:[#allocation4 + $0x26d8] sm:$0xff]
    %v7090 = vld [vmem:[#allocation4 + $0x26e0] sm:$0xff]
    %v7091 = vld [vmem:[#allocation4 + $0x26e8] sm:$0xff]
    %v7092 = vld [vmem:[#allocation4 + $0x26f0] sm:$0xff]
    %v7093 = vld [vmem:[#allocation4 + $0x26f8] sm:$0xff]
    %v7094 = vld [vmem:[#allocation4 + $0x2700] sm:$0xff]
    %v7095 = vld [vmem:[#allocation4 + $0x2708] sm:$0xff]
    %v7096 = vld [vmem:[#allocation4 + $0x2710] sm:$0xff]
    %v7097 = vld [vmem:[#allocation4 + $0x2718] sm:$0xff]
    %v7098 = vld [vmem:[#allocation4 + $0x2720] sm:$0xff]
    %v7099 = vld [vmem:[#allocation4 + $0x2728] sm:$0xff]
    %v7100 = vld [vmem:[#allocation4 + $0x2730] sm:$0xff]
    %v7101 = vld [vmem:[#allocation4 + $0x2738] sm:$0xff]
    %v7102 = vld [vmem:[#allocation4 + $0x2740] sm:$0xff]
    %v7103 = vld [vmem:[#allocation4 + $0x2748] sm:$0xff]
    %v7104 = vld [vmem:[#allocation4 + $0x2750] sm:$0xff]
    %v7105 = vld [vmem:[#allocation4 + $0x2758] sm:$0xff]
    %v7106 = vld [vmem:[#allocation4 + $0x2760] sm:$0xff]
    %v7107 = vld [vmem:[#allocation4 + $0x2768] sm:$0xff]
    %v7108 = vld [vmem:[#allocation4 + $0x2770] sm:$0xff]
    %v7109 = vld [vmem:[#allocation4 + $0x2778] sm:$0xff]
    %v7110 = vld [vmem:[#allocation4 + $0x2780] sm:$0xff]
    %v7111 = vld [vmem:[#allocation4 + $0x2788] sm:$0xff]
    %v7112 = vld [vmem:[#allocation4 + $0x2790] sm:$0xff]
    %v7113 = vld [vmem:[#allocation4 + $0x2798] sm:$0xff]
    %v7114 = vld [vmem:[#allocation4 + $0x27a0] sm:$0xff]
    %v7115 = vld [vmem:[#allocation4 + $0x27a8] sm:$0xff]
    %v7116 = vld [vmem:[#allocation4 + $0x27b0] sm:$0xff]
    %v7117 = vld [vmem:[#allocation4 + $0x27b8] sm:$0xff]
    %v7118 = vld [vmem:[#allocation4 + $0x27c0] sm:$0xff]
    %v7119 = vld [vmem:[#allocation4 + $0x27c8] sm:$0xff]
    %v7120 = vld [vmem:[#allocation4 + $0x27d0] sm:$0xff]
    %v7121 = vld [vmem:[#allocation4 + $0x27d8] sm:$0xff]
    %v7122 = vld [vmem:[#allocation4 + $0x27e0] sm:$0xff]
    %v7123 = vld [vmem:[#allocation4 + $0x27e8] sm:$0xff]
    %v7124 = vld [vmem:[#allocation4 + $0x27f0] sm:$0xff]
    %v7125 = vld [vmem:[#allocation4 + $0x27f8] sm:$0xff]
    %v7126 = vpack.c.bf16 %v6606, %v6606
    %v7127 = vpack.c.bf16 %v6607, %v6607
    %v7128 = vpack.c.bf16 %v6608, %v6608
    %v7129 = vpack.c.bf16 %v6609, %v6609
    %v7130 = vpack.c.bf16 %v6610, %v6610
    %v7131 = vpack.c.bf16 %v6611, %v6611
    %v7132 = vpack.c.bf16 %v6612, %v6612
    %v7133 = vpack.c.bf16 %v6613, %v6613
    %v7134 = vlaneseq
    %v7135 = vshrl.u32 %v7134, 7
    %v7136 = vsub.s32 2, %v7135
    %v7137 = vrot.slane %v147, %v7136
    %v7138 = vlaneseq
    %v7139 = vshrl.u32 %v7138, 7
    %v7140 = vsub.s32 6, %v7139
    %v7141 = vrot.slane %v147, %v7140
    %v7142 = vlaneseq
    %v7143 = vshrl.u32 %v7142, 7
    %v7144 = vsub.s32 2, %v7143
    %v7145 = vrot.slane %v148, %v7144
    %v7146 = vlaneseq
    %v7147 = vshrl.u32 %v7146, 7
    %v7148 = vsub.s32 6, %v7147
    %v7149 = vrot.slane %v148, %v7148
    %v7150 = vlaneseq
    %v7151 = vshrl.u32 %v7150, 7
    %v7152 = vsub.s32 2, %v7151
    %v7153 = vrot.slane %v149, %v7152
    %v7154 = vlaneseq
    %v7155 = vshrl.u32 %v7154, 7
    %v7156 = vsub.s32 6, %v7155
    %v7157 = vrot.slane %v149, %v7156
    %v7158 = vlaneseq
    %v7159 = vshrl.u32 %v7158, 7
    %v7160 = vsub.s32 2, %v7159
    %v7161 = vrot.slane %v150, %v7160
    %v7162 = vlaneseq
    %v7163 = vshrl.u32 %v7162, 7
    %v7164 = vsub.s32 6, %v7163
    %v7165 = vrot.slane %v150, %v7164
    %v7174 = vlaneseq
    %v7175 = vshrl.u32 %v7174, 7
    %v7176 = vsub.s32 2, %v7175
    %v7177 = vrot.slane %v7137, %v7176
    %v7178 = vlaneseq
    %v7179 = vshrl.u32 %v7178, 7
    %v7180 = vsub.s32 2, %v7179
    %v7181 = vrot.slane %v7141, %v7180
    %v7182 = vlaneseq
    %v7183 = vshrl.u32 %v7182, 7
    %v7184 = vsub.s32 2, %v7183
    %v7185 = vrot.slane %v7145, %v7184
    %v7186 = vlaneseq
    %v7187 = vshrl.u32 %v7186, 7
    %v7188 = vsub.s32 2, %v7187
    %v7189 = vrot.slane %v7149, %v7188
    %v7190 = vlaneseq
    %v7191 = vshrl.u32 %v7190, 7
    %v7192 = vsub.s32 2, %v7191
    %v7193 = vrot.slane %v7153, %v7192
    %v7194 = vlaneseq
    %v7195 = vshrl.u32 %v7194, 7
    %v7196 = vsub.s32 2, %v7195
    %v7197 = vrot.slane %v7157, %v7196
    %v7198 = vlaneseq
    %v7199 = vshrl.u32 %v7198, 7
    %v7200 = vsub.s32 2, %v7199
    %v7201 = vrot.slane %v7161, %v7200
    %v7202 = vlaneseq
    %v7203 = vshrl.u32 %v7202, 7
    %v7204 = vsub.s32 2, %v7203
    %v7205 = vrot.slane %v7165, %v7204
    %v7718 = vunpack.c.l.b16 %v6614
    %v7719 = vunpack.c.h.b16 %v6614
    %v7720 = vunpack.c.l.b16 %v6615
    %v7721 = vunpack.c.h.b16 %v6615
    %v7722 = vunpack.c.l.b16 %v6616
    %v7723 = vunpack.c.h.b16 %v6616
    %v7724 = vunpack.c.l.b16 %v6617
    %v7725 = vunpack.c.h.b16 %v6617
    %v7726 = vunpack.c.l.b16 %v6618
    %v7727 = vunpack.c.h.b16 %v6618
    %v7728 = vunpack.c.l.b16 %v6619
    %v7729 = vunpack.c.h.b16 %v6619
    %v7730 = vunpack.c.l.b16 %v6620
    %v7731 = vunpack.c.h.b16 %v6620
    %v7732 = vunpack.c.l.b16 %v6621
    %v7733 = vunpack.c.h.b16 %v6621
    %v7734 = vunpack.c.l.b16 %v6622
    %v7735 = vunpack.c.h.b16 %v6622
    %v7736 = vunpack.c.l.b16 %v6623
    %v7737 = vunpack.c.h.b16 %v6623
    %v7738 = vunpack.c.l.b16 %v6624
    %v7739 = vunpack.c.h.b16 %v6624
    %v7740 = vunpack.c.l.b16 %v6625
    %v7741 = vunpack.c.h.b16 %v6625
    %v7742 = vunpack.c.l.b16 %v6626
    %v7743 = vunpack.c.h.b16 %v6626
    %v7744 = vunpack.c.l.b16 %v6627
    %v7745 = vunpack.c.h.b16 %v6627
    %v7746 = vunpack.c.l.b16 %v6628
    %v7747 = vunpack.c.h.b16 %v6628
    %v7748 = vunpack.c.l.b16 %v6629
    %v7749 = vunpack.c.h.b16 %v6629
    %v7750 = vunpack.c.l.b16 %v6630
    %v7751 = vunpack.c.h.b16 %v6630
    %v7752 = vunpack.c.l.b16 %v6631
    %v7753 = vunpack.c.h.b16 %v6631
    %v7754 = vunpack.c.l.b16 %v6632
    %v7755 = vunpack.c.h.b16 %v6632
    %v7756 = vunpack.c.l.b16 %v6633
    %v7757 = vunpack.c.h.b16 %v6633
    %v7758 = vunpack.c.l.b16 %v6634
    %v7759 = vunpack.c.h.b16 %v6634
    %v7760 = vunpack.c.l.b16 %v6635
    %v7761 = vunpack.c.h.b16 %v6635
    %v7762 = vunpack.c.l.b16 %v6636
    %v7763 = vunpack.c.h.b16 %v6636
    %v7764 = vunpack.c.l.b16 %v6637
    %v7765 = vunpack.c.h.b16 %v6637
    %v7766 = vunpack.c.l.b16 %v6638
    %v7767 = vunpack.c.h.b16 %v6638
    %v7768 = vunpack.c.l.b16 %v6639
    %v7769 = vunpack.c.h.b16 %v6639
    %v7770 = vunpack.c.l.b16 %v6640
    %v7771 = vunpack.c.h.b16 %v6640
    %v7772 = vunpack.c.l.b16 %v6641
    %v7773 = vunpack.c.h.b16 %v6641
    %v7774 = vunpack.c.l.b16 %v6642
    %v7775 = vunpack.c.h.b16 %v6642
    %v7776 = vunpack.c.l.b16 %v6643
    %v7777 = vunpack.c.h.b16 %v6643
    %v7778 = vunpack.c.l.b16 %v6644
    %v7779 = vunpack.c.h.b16 %v6644
    %v7780 = vunpack.c.l.b16 %v6645
    %v7781 = vunpack.c.h.b16 %v6645
    %v7782 = vunpack.c.l.b16 %v6646
    %v7783 = vunpack.c.h.b16 %v6646
    %v7784 = vunpack.c.l.b16 %v6647
    %v7785 = vunpack.c.h.b16 %v6647
    %v7786 = vunpack.c.l.b16 %v6648
    %v7787 = vunpack.c.h.b16 %v6648
    %v7788 = vunpack.c.l.b16 %v6649
    %v7789 = vunpack.c.h.b16 %v6649
    %v7790 = vunpack.c.l.b16 %v6650
    %v7791 = vunpack.c.h.b16 %v6650
    %v7792 = vunpack.c.l.b16 %v6651
    %v7793 = vunpack.c.h.b16 %v6651
    %v7794 = vunpack.c.l.b16 %v6652
    %v7795 = vunpack.c.h.b16 %v6652
    %v7796 = vunpack.c.l.b16 %v6653
    %v7797 = vunpack.c.h.b16 %v6653
    %v7798 = vunpack.c.l.b16 %v6654
    %v7799 = vunpack.c.h.b16 %v6654
    %v7800 = vunpack.c.l.b16 %v6655
    %v7801 = vunpack.c.h.b16 %v6655
    %v7802 = vunpack.c.l.b16 %v6656
    %v7803 = vunpack.c.h.b16 %v6656
    %v7804 = vunpack.c.l.b16 %v6657
    %v7805 = vunpack.c.h.b16 %v6657
    %v7806 = vunpack.c.l.b16 %v6658
    %v7807 = vunpack.c.h.b16 %v6658
    %v7808 = vunpack.c.l.b16 %v6659
    %v7809 = vunpack.c.h.b16 %v6659
    %v7810 = vunpack.c.l.b16 %v6660
    %v7811 = vunpack.c.h.b16 %v6660
    %v7812 = vunpack.c.l.b16 %v6661
    %v7813 = vunpack.c.h.b16 %v6661
    %v7814 = vunpack.c.l.b16 %v6662
    %v7815 = vunpack.c.h.b16 %v6662
    %v7816 = vunpack.c.l.b16 %v6663
    %v7817 = vunpack.c.h.b16 %v6663
    %v7818 = vunpack.c.l.b16 %v6664
    %v7819 = vunpack.c.h.b16 %v6664
    %v7820 = vunpack.c.l.b16 %v6665
    %v7821 = vunpack.c.h.b16 %v6665
    %v7822 = vunpack.c.l.b16 %v6666
    %v7823 = vunpack.c.h.b16 %v6666
    %v7824 = vunpack.c.l.b16 %v6667
    %v7825 = vunpack.c.h.b16 %v6667
    %v7826 = vunpack.c.l.b16 %v6668
    %v7827 = vunpack.c.h.b16 %v6668
    %v7828 = vunpack.c.l.b16 %v6669
    %v7829 = vunpack.c.h.b16 %v6669
    %v7830 = vunpack.c.l.b16 %v6670
    %v7831 = vunpack.c.h.b16 %v6670
    %v7832 = vunpack.c.l.b16 %v6671
    %v7833 = vunpack.c.h.b16 %v6671
    %v7834 = vunpack.c.l.b16 %v6672
    %v7835 = vunpack.c.h.b16 %v6672
    %v7836 = vunpack.c.l.b16 %v6673
    %v7837 = vunpack.c.h.b16 %v6673
    %v7838 = vunpack.c.l.b16 %v6674
    %v7839 = vunpack.c.h.b16 %v6674
    %v7840 = vunpack.c.l.b16 %v6675
    %v7841 = vunpack.c.h.b16 %v6675
    %v7842 = vunpack.c.l.b16 %v6676
    %v7843 = vunpack.c.h.b16 %v6676
    %v7844 = vunpack.c.l.b16 %v6677
    %v7845 = vunpack.c.h.b16 %v6677
    %v7846 = vunpack.c.l.b16 %v6678
    %v7847 = vunpack.c.h.b16 %v6678
    %v7848 = vunpack.c.l.b16 %v6679
    %v7849 = vunpack.c.h.b16 %v6679
    %v7850 = vunpack.c.l.b16 %v6680
    %v7851 = vunpack.c.h.b16 %v6680
    %v7852 = vunpack.c.l.b16 %v6681
    %v7853 = vunpack.c.h.b16 %v6681
    %v7854 = vunpack.c.l.b16 %v6682
    %v7855 = vunpack.c.h.b16 %v6682
    %v7856 = vunpack.c.l.b16 %v6683
    %v7857 = vunpack.c.h.b16 %v6683
    %v7858 = vunpack.c.l.b16 %v6684
    %v7859 = vunpack.c.h.b16 %v6684
    %v7860 = vunpack.c.l.b16 %v6685
    %v7861 = vunpack.c.h.b16 %v6685
    %v7862 = vunpack.c.l.b16 %v6686
    %v7863 = vunpack.c.h.b16 %v6686
    %v7864 = vunpack.c.l.b16 %v6687
    %v7865 = vunpack.c.h.b16 %v6687
    %v7866 = vunpack.c.l.b16 %v6688
    %v7867 = vunpack.c.h.b16 %v6688
    %v7868 = vunpack.c.l.b16 %v6689
    %v7869 = vunpack.c.h.b16 %v6689
    %v7870 = vunpack.c.l.b16 %v6690
    %v7871 = vunpack.c.h.b16 %v6690
    %v7872 = vunpack.c.l.b16 %v6691
    %v7873 = vunpack.c.h.b16 %v6691
    %v7874 = vunpack.c.l.b16 %v6692
    %v7875 = vunpack.c.h.b16 %v6692
    %v7876 = vunpack.c.l.b16 %v6693
    %v7877 = vunpack.c.h.b16 %v6693
    %v7878 = vunpack.c.l.b16 %v6694
    %v7879 = vunpack.c.h.b16 %v6694
    %v7880 = vunpack.c.l.b16 %v6695
    %v7881 = vunpack.c.h.b16 %v6695
    %v7882 = vunpack.c.l.b16 %v6696
    %v7883 = vunpack.c.h.b16 %v6696
    %v7884 = vunpack.c.l.b16 %v6697
    %v7885 = vunpack.c.h.b16 %v6697
    %v7886 = vunpack.c.l.b16 %v6698
    %v7887 = vunpack.c.h.b16 %v6698
    %v7888 = vunpack.c.l.b16 %v6699
    %v7889 = vunpack.c.h.b16 %v6699
    %v7890 = vunpack.c.l.b16 %v6700
    %v7891 = vunpack.c.h.b16 %v6700
    %v7892 = vunpack.c.l.b16 %v6701
    %v7893 = vunpack.c.h.b16 %v6701
    %v7894 = vunpack.c.l.b16 %v6702
    %v7895 = vunpack.c.h.b16 %v6702
    %v7896 = vunpack.c.l.b16 %v6703
    %v7897 = vunpack.c.h.b16 %v6703
    %v7898 = vunpack.c.l.b16 %v6704
    %v7899 = vunpack.c.h.b16 %v6704
    %v7900 = vunpack.c.l.b16 %v6705
    %v7901 = vunpack.c.h.b16 %v6705
    %v7902 = vunpack.c.l.b16 %v6706
    %v7903 = vunpack.c.h.b16 %v6706
    %v7904 = vunpack.c.l.b16 %v6707
    %v7905 = vunpack.c.h.b16 %v6707
    %v7906 = vunpack.c.l.b16 %v6708
    %v7907 = vunpack.c.h.b16 %v6708
    %v7908 = vunpack.c.l.b16 %v6709
    %v7909 = vunpack.c.h.b16 %v6709
    %v7910 = vunpack.c.l.b16 %v6710
    %v7911 = vunpack.c.h.b16 %v6710
    %v7912 = vunpack.c.l.b16 %v6711
    %v7913 = vunpack.c.h.b16 %v6711
    %v7914 = vunpack.c.l.b16 %v6712
    %v7915 = vunpack.c.h.b16 %v6712
    %v7916 = vunpack.c.l.b16 %v6713
    %v7917 = vunpack.c.h.b16 %v6713
    %v7918 = vunpack.c.l.b16 %v6714
    %v7919 = vunpack.c.h.b16 %v6714
    %v7920 = vunpack.c.l.b16 %v6715
    %v7921 = vunpack.c.h.b16 %v6715
    %v7922 = vunpack.c.l.b16 %v6716
    %v7923 = vunpack.c.h.b16 %v6716
    %v7924 = vunpack.c.l.b16 %v6717
    %v7925 = vunpack.c.h.b16 %v6717
    %v7926 = vunpack.c.l.b16 %v6718
    %v7927 = vunpack.c.h.b16 %v6718
    %v7928 = vunpack.c.l.b16 %v6719
    %v7929 = vunpack.c.h.b16 %v6719
    %v7930 = vunpack.c.l.b16 %v6720
    %v7931 = vunpack.c.h.b16 %v6720
    %v7932 = vunpack.c.l.b16 %v6721
    %v7933 = vunpack.c.h.b16 %v6721
    %v7934 = vunpack.c.l.b16 %v6722
    %v7935 = vunpack.c.h.b16 %v6722
    %v7936 = vunpack.c.l.b16 %v6723
    %v7937 = vunpack.c.h.b16 %v6723
    %v7938 = vunpack.c.l.b16 %v6724
    %v7939 = vunpack.c.h.b16 %v6724
    %v7940 = vunpack.c.l.b16 %v6725
    %v7941 = vunpack.c.h.b16 %v6725
    %v7942 = vunpack.c.l.b16 %v6726
    %v7943 = vunpack.c.h.b16 %v6726
    %v7944 = vunpack.c.l.b16 %v6727
    %v7945 = vunpack.c.h.b16 %v6727
    %v7946 = vunpack.c.l.b16 %v6728
    %v7947 = vunpack.c.h.b16 %v6728
    %v7948 = vunpack.c.l.b16 %v6729
    %v7949 = vunpack.c.h.b16 %v6729
    %v7950 = vunpack.c.l.b16 %v6730
    %v7951 = vunpack.c.h.b16 %v6730
    %v7952 = vunpack.c.l.b16 %v6731
    %v7953 = vunpack.c.h.b16 %v6731
    %v7954 = vunpack.c.l.b16 %v6732
    %v7955 = vunpack.c.h.b16 %v6732
    %v7956 = vunpack.c.l.b16 %v6733
    %v7957 = vunpack.c.h.b16 %v6733
    %v7958 = vunpack.c.l.b16 %v6734
    %v7959 = vunpack.c.h.b16 %v6734
    %v7960 = vunpack.c.l.b16 %v6735
    %v7961 = vunpack.c.h.b16 %v6735
    %v7962 = vunpack.c.l.b16 %v6736
    %v7963 = vunpack.c.h.b16 %v6736
    %v7964 = vunpack.c.l.b16 %v6737
    %v7965 = vunpack.c.h.b16 %v6737
    %v7966 = vunpack.c.l.b16 %v6738
    %v7967 = vunpack.c.h.b16 %v6738
    %v7968 = vunpack.c.l.b16 %v6739
    %v7969 = vunpack.c.h.b16 %v6739
    %v7970 = vunpack.c.l.b16 %v6740
    %v7971 = vunpack.c.h.b16 %v6740
    %v7972 = vunpack.c.l.b16 %v6741
    %v7973 = vunpack.c.h.b16 %v6741
    %v7974 = vunpack.c.l.b16 %v6742
    %v7975 = vunpack.c.h.b16 %v6742
    %v7976 = vunpack.c.l.b16 %v6743
    %v7977 = vunpack.c.h.b16 %v6743
    %v7978 = vunpack.c.l.b16 %v6744
    %v7979 = vunpack.c.h.b16 %v6744
    %v7980 = vunpack.c.l.b16 %v6745
    %v7981 = vunpack.c.h.b16 %v6745
    %v7982 = vunpack.c.l.b16 %v6746
    %v7983 = vunpack.c.h.b16 %v6746
    %v7984 = vunpack.c.l.b16 %v6747
    %v7985 = vunpack.c.h.b16 %v6747
    %v7986 = vunpack.c.l.b16 %v6748
    %v7987 = vunpack.c.h.b16 %v6748
    %v7988 = vunpack.c.l.b16 %v6749
    %v7989 = vunpack.c.h.b16 %v6749
    %v7990 = vunpack.c.l.b16 %v6750
    %v7991 = vunpack.c.h.b16 %v6750
    %v7992 = vunpack.c.l.b16 %v6751
    %v7993 = vunpack.c.h.b16 %v6751
    %v7994 = vunpack.c.l.b16 %v6752
    %v7995 = vunpack.c.h.b16 %v6752
    %v7996 = vunpack.c.l.b16 %v6753
    %v7997 = vunpack.c.h.b16 %v6753
    %v7998 = vunpack.c.l.b16 %v6754
    %v7999 = vunpack.c.h.b16 %v6754
    %v8000 = vunpack.c.l.b16 %v6755
    %v8001 = vunpack.c.h.b16 %v6755
    %v8002 = vunpack.c.l.b16 %v6756
    %v8003 = vunpack.c.h.b16 %v6756
    %v8004 = vunpack.c.l.b16 %v6757
    %v8005 = vunpack.c.h.b16 %v6757
    %v8006 = vunpack.c.l.b16 %v6758
    %v8007 = vunpack.c.h.b16 %v6758
    %v8008 = vunpack.c.l.b16 %v6759
    %v8009 = vunpack.c.h.b16 %v6759
    %v8010 = vunpack.c.l.b16 %v6760
    %v8011 = vunpack.c.h.b16 %v6760
    %v8012 = vunpack.c.l.b16 %v6761
    %v8013 = vunpack.c.h.b16 %v6761
    %v8014 = vunpack.c.l.b16 %v6762
    %v8015 = vunpack.c.h.b16 %v6762
    %v8016 = vunpack.c.l.b16 %v6763
    %v8017 = vunpack.c.h.b16 %v6763
    %v8018 = vunpack.c.l.b16 %v6764
    %v8019 = vunpack.c.h.b16 %v6764
    %v8020 = vunpack.c.l.b16 %v6765
    %v8021 = vunpack.c.h.b16 %v6765
    %v8022 = vunpack.c.l.b16 %v6766
    %v8023 = vunpack.c.h.b16 %v6766
    %v8024 = vunpack.c.l.b16 %v6767
    %v8025 = vunpack.c.h.b16 %v6767
    %v8026 = vunpack.c.l.b16 %v6768
    %v8027 = vunpack.c.h.b16 %v6768
    %v8028 = vunpack.c.l.b16 %v6769
    %v8029 = vunpack.c.h.b16 %v6769
    %v8030 = vunpack.c.l.b16 %v6770
    %v8031 = vunpack.c.h.b16 %v6770
    %v8032 = vunpack.c.l.b16 %v6771
    %v8033 = vunpack.c.h.b16 %v6771
    %v8034 = vunpack.c.l.b16 %v6772
    %v8035 = vunpack.c.h.b16 %v6772
    %v8036 = vunpack.c.l.b16 %v6773
    %v8037 = vunpack.c.h.b16 %v6773
    %v8038 = vunpack.c.l.b16 %v6774
    %v8039 = vunpack.c.h.b16 %v6774
    %v8040 = vunpack.c.l.b16 %v6775
    %v8041 = vunpack.c.h.b16 %v6775
    %v8042 = vunpack.c.l.b16 %v6776
    %v8043 = vunpack.c.h.b16 %v6776
    %v8044 = vunpack.c.l.b16 %v6777
    %v8045 = vunpack.c.h.b16 %v6777
    %v8046 = vunpack.c.l.b16 %v6778
    %v8047 = vunpack.c.h.b16 %v6778
    %v8048 = vunpack.c.l.b16 %v6779
    %v8049 = vunpack.c.h.b16 %v6779
    %v8050 = vunpack.c.l.b16 %v6780
    %v8051 = vunpack.c.h.b16 %v6780
    %v8052 = vunpack.c.l.b16 %v6781
    %v8053 = vunpack.c.h.b16 %v6781
    %v8054 = vunpack.c.l.b16 %v6782
    %v8055 = vunpack.c.h.b16 %v6782
    %v8056 = vunpack.c.l.b16 %v6783
    %v8057 = vunpack.c.h.b16 %v6783
    %v8058 = vunpack.c.l.b16 %v6784
    %v8059 = vunpack.c.h.b16 %v6784
    %v8060 = vunpack.c.l.b16 %v6785
    %v8061 = vunpack.c.h.b16 %v6785
    %v8062 = vunpack.c.l.b16 %v6786
    %v8063 = vunpack.c.h.b16 %v6786
    %v8064 = vunpack.c.l.b16 %v6787
    %v8065 = vunpack.c.h.b16 %v6787
    %v8066 = vunpack.c.l.b16 %v6788
    %v8067 = vunpack.c.h.b16 %v6788
    %v8068 = vunpack.c.l.b16 %v6789
    %v8069 = vunpack.c.h.b16 %v6789
    %v8070 = vunpack.c.l.b16 %v6790
    %v8071 = vunpack.c.h.b16 %v6790
    %v8072 = vunpack.c.l.b16 %v6791
    %v8073 = vunpack.c.h.b16 %v6791
    %v8074 = vunpack.c.l.b16 %v6792
    %v8075 = vunpack.c.h.b16 %v6792
    %v8076 = vunpack.c.l.b16 %v6793
    %v8077 = vunpack.c.h.b16 %v6793
    %v8078 = vunpack.c.l.b16 %v6794
    %v8079 = vunpack.c.h.b16 %v6794
    %v8080 = vunpack.c.l.b16 %v6795
    %v8081 = vunpack.c.h.b16 %v6795
    %v8082 = vunpack.c.l.b16 %v6796
    %v8083 = vunpack.c.h.b16 %v6796
    %v8084 = vunpack.c.l.b16 %v6797
    %v8085 = vunpack.c.h.b16 %v6797
    %v8086 = vunpack.c.l.b16 %v6798
    %v8087 = vunpack.c.h.b16 %v6798
    %v8088 = vunpack.c.l.b16 %v6799
    %v8089 = vunpack.c.h.b16 %v6799
    %v8090 = vunpack.c.l.b16 %v6800
    %v8091 = vunpack.c.h.b16 %v6800
    %v8092 = vunpack.c.l.b16 %v6801
    %v8093 = vunpack.c.h.b16 %v6801
    %v8094 = vunpack.c.l.b16 %v6802
    %v8095 = vunpack.c.h.b16 %v6802
    %v8096 = vunpack.c.l.b16 %v6803
    %v8097 = vunpack.c.h.b16 %v6803
    %v8098 = vunpack.c.l.b16 %v6804
    %v8099 = vunpack.c.h.b16 %v6804
    %v8100 = vunpack.c.l.b16 %v6805
    %v8101 = vunpack.c.h.b16 %v6805
    %v8102 = vunpack.c.l.b16 %v6806
    %v8103 = vunpack.c.h.b16 %v6806
    %v8104 = vunpack.c.l.b16 %v6807
    %v8105 = vunpack.c.h.b16 %v6807
    %v8106 = vunpack.c.l.b16 %v6808
    %v8107 = vunpack.c.h.b16 %v6808
    %v8108 = vunpack.c.l.b16 %v6809
    %v8109 = vunpack.c.h.b16 %v6809
    %v8110 = vunpack.c.l.b16 %v6810
    %v8111 = vunpack.c.h.b16 %v6810
    %v8112 = vunpack.c.l.b16 %v6811
    %v8113 = vunpack.c.h.b16 %v6811
    %v8114 = vunpack.c.l.b16 %v6812
    %v8115 = vunpack.c.h.b16 %v6812
    %v8116 = vunpack.c.l.b16 %v6813
    %v8117 = vunpack.c.h.b16 %v6813
    %v8118 = vunpack.c.l.b16 %v6814
    %v8119 = vunpack.c.h.b16 %v6814
    %v8120 = vunpack.c.l.b16 %v6815
    %v8121 = vunpack.c.h.b16 %v6815
    %v8122 = vunpack.c.l.b16 %v6816
    %v8123 = vunpack.c.h.b16 %v6816
    %v8124 = vunpack.c.l.b16 %v6817
    %v8125 = vunpack.c.h.b16 %v6817
    %v8126 = vunpack.c.l.b16 %v6818
    %v8127 = vunpack.c.h.b16 %v6818
    %v8128 = vunpack.c.l.b16 %v6819
    %v8129 = vunpack.c.h.b16 %v6819
    %v8130 = vunpack.c.l.b16 %v6820
    %v8131 = vunpack.c.h.b16 %v6820
    %v8132 = vunpack.c.l.b16 %v6821
    %v8133 = vunpack.c.h.b16 %v6821
    %v8134 = vunpack.c.l.b16 %v6822
    %v8135 = vunpack.c.h.b16 %v6822
    %v8136 = vunpack.c.l.b16 %v6823
    %v8137 = vunpack.c.h.b16 %v6823
    %v8138 = vunpack.c.l.b16 %v6824
    %v8139 = vunpack.c.h.b16 %v6824
    %v8140 = vunpack.c.l.b16 %v6825
    %v8141 = vunpack.c.h.b16 %v6825
    %v8142 = vunpack.c.l.b16 %v6826
    %v8143 = vunpack.c.h.b16 %v6826
    %v8144 = vunpack.c.l.b16 %v6827
    %v8145 = vunpack.c.h.b16 %v6827
    %v8146 = vunpack.c.l.b16 %v6828
    %v8147 = vunpack.c.h.b16 %v6828
    %v8148 = vunpack.c.l.b16 %v6829
    %v8149 = vunpack.c.h.b16 %v6829
    %v8150 = vunpack.c.l.b16 %v6830
    %v8151 = vunpack.c.h.b16 %v6830
    %v8152 = vunpack.c.l.b16 %v6831
    %v8153 = vunpack.c.h.b16 %v6831
    %v8154 = vunpack.c.l.b16 %v6832
    %v8155 = vunpack.c.h.b16 %v6832
    %v8156 = vunpack.c.l.b16 %v6833
    %v8157 = vunpack.c.h.b16 %v6833
    %v8158 = vunpack.c.l.b16 %v6834
    %v8159 = vunpack.c.h.b16 %v6834
    %v8160 = vunpack.c.l.b16 %v6835
    %v8161 = vunpack.c.h.b16 %v6835
    %v8162 = vunpack.c.l.b16 %v6836
    %v8163 = vunpack.c.h.b16 %v6836
    %v8164 = vunpack.c.l.b16 %v6837
    %v8165 = vunpack.c.h.b16 %v6837
    %v8166 = vunpack.c.l.b16 %v6838
    %v8167 = vunpack.c.h.b16 %v6838
    %v8168 = vunpack.c.l.b16 %v6839
    %v8169 = vunpack.c.h.b16 %v6839
    %v8170 = vunpack.c.l.b16 %v6840
    %v8171 = vunpack.c.h.b16 %v6840
    %v8172 = vunpack.c.l.b16 %v6841
    %v8173 = vunpack.c.h.b16 %v6841
    %v8174 = vunpack.c.l.b16 %v6842
    %v8175 = vunpack.c.h.b16 %v6842
    %v8176 = vunpack.c.l.b16 %v6843
    %v8177 = vunpack.c.h.b16 %v6843
    %v8178 = vunpack.c.l.b16 %v6844
    %v8179 = vunpack.c.h.b16 %v6844
    %v8180 = vunpack.c.l.b16 %v6845
    %v8181 = vunpack.c.h.b16 %v6845
    %v8182 = vunpack.c.l.b16 %v6846
    %v8183 = vunpack.c.h.b16 %v6846
    %v8184 = vunpack.c.l.b16 %v6847
    %v8185 = vunpack.c.h.b16 %v6847
    %v8186 = vunpack.c.l.b16 %v6848
    %v8187 = vunpack.c.h.b16 %v6848
    %v8188 = vunpack.c.l.b16 %v6849
    %v8189 = vunpack.c.h.b16 %v6849
    %v8190 = vunpack.c.l.b16 %v6850
    %v8191 = vunpack.c.h.b16 %v6850
    %v8192 = vunpack.c.l.b16 %v6851
    %v8193 = vunpack.c.h.b16 %v6851
    %v8194 = vunpack.c.l.b16 %v6852
    %v8195 = vunpack.c.h.b16 %v6852
    %v8196 = vunpack.c.l.b16 %v6853
    %v8197 = vunpack.c.h.b16 %v6853
    %v8198 = vunpack.c.l.b16 %v6854
    %v8199 = vunpack.c.h.b16 %v6854
    %v8200 = vunpack.c.l.b16 %v6855
    %v8201 = vunpack.c.h.b16 %v6855
    %v8202 = vunpack.c.l.b16 %v6856
    %v8203 = vunpack.c.h.b16 %v6856
    %v8204 = vunpack.c.l.b16 %v6857
    %v8205 = vunpack.c.h.b16 %v6857
    %v8206 = vunpack.c.l.b16 %v6858
    %v8207 = vunpack.c.h.b16 %v6858
    %v8208 = vunpack.c.l.b16 %v6859
    %v8209 = vunpack.c.h.b16 %v6859
    %v8210 = vunpack.c.l.b16 %v6860
    %v8211 = vunpack.c.h.b16 %v6860
    %v8212 = vunpack.c.l.b16 %v6861
    %v8213 = vunpack.c.h.b16 %v6861
    %v8214 = vunpack.c.l.b16 %v6862
    %v8215 = vunpack.c.h.b16 %v6862
    %v8216 = vunpack.c.l.b16 %v6863
    %v8217 = vunpack.c.h.b16 %v6863
    %v8218 = vunpack.c.l.b16 %v6864
    %v8219 = vunpack.c.h.b16 %v6864
    %v8220 = vunpack.c.l.b16 %v6865
    %v8221 = vunpack.c.h.b16 %v6865
    %v8222 = vunpack.c.l.b16 %v6866
    %v8223 = vunpack.c.h.b16 %v6866
    %v8224 = vunpack.c.l.b16 %v6867
    %v8225 = vunpack.c.h.b16 %v6867
    %v8226 = vunpack.c.l.b16 %v6868
    %v8227 = vunpack.c.h.b16 %v6868
    %v8228 = vunpack.c.l.b16 %v6869
    %v8229 = vunpack.c.h.b16 %v6869
    %v8230 = vunpack.c.l.b16 %v6870
    %v8231 = vunpack.c.h.b16 %v6870
    %v8232 = vunpack.c.l.b16 %v6871
    %v8233 = vunpack.c.h.b16 %v6871
    %v8234 = vunpack.c.l.b16 %v6872
    %v8235 = vunpack.c.h.b16 %v6872
    %v8236 = vunpack.c.l.b16 %v6873
    %v8237 = vunpack.c.h.b16 %v6873
    %v8238 = vunpack.c.l.b16 %v6874
    %v8239 = vunpack.c.h.b16 %v6874
    %v8240 = vunpack.c.l.b16 %v6875
    %v8241 = vunpack.c.h.b16 %v6875
    %v8242 = vunpack.c.l.b16 %v6876
    %v8243 = vunpack.c.h.b16 %v6876
    %v8244 = vunpack.c.l.b16 %v6877
    %v8245 = vunpack.c.h.b16 %v6877
    %v8246 = vunpack.c.l.b16 %v6878
    %v8247 = vunpack.c.h.b16 %v6878
    %v8248 = vunpack.c.l.b16 %v6879
    %v8249 = vunpack.c.h.b16 %v6879
    %v8250 = vunpack.c.l.b16 %v6880
    %v8251 = vunpack.c.h.b16 %v6880
    %v8252 = vunpack.c.l.b16 %v6881
    %v8253 = vunpack.c.h.b16 %v6881
    %v8254 = vunpack.c.l.b16 %v6882
    %v8255 = vunpack.c.h.b16 %v6882
    %v8256 = vunpack.c.l.b16 %v6883
    %v8257 = vunpack.c.h.b16 %v6883
    %v8258 = vunpack.c.l.b16 %v6884
    %v8259 = vunpack.c.h.b16 %v6884
    %v8260 = vunpack.c.l.b16 %v6885
    %v8261 = vunpack.c.h.b16 %v6885
    %v8262 = vunpack.c.l.b16 %v6886
    %v8263 = vunpack.c.h.b16 %v6886
    %v8264 = vunpack.c.l.b16 %v6887
    %v8265 = vunpack.c.h.b16 %v6887
    %v8266 = vunpack.c.l.b16 %v6888
    %v8267 = vunpack.c.h.b16 %v6888
    %v8268 = vunpack.c.l.b16 %v6889
    %v8269 = vunpack.c.h.b16 %v6889
    %v8270 = vunpack.c.l.b16 %v6890
    %v8271 = vunpack.c.h.b16 %v6890
    %v8272 = vunpack.c.l.b16 %v6891
    %v8273 = vunpack.c.h.b16 %v6891
    %v8274 = vunpack.c.l.b16 %v6892
    %v8275 = vunpack.c.h.b16 %v6892
    %v8276 = vunpack.c.l.b16 %v6893
    %v8277 = vunpack.c.h.b16 %v6893
    %v8278 = vunpack.c.l.b16 %v6894
    %v8279 = vunpack.c.h.b16 %v6894
    %v8280 = vunpack.c.l.b16 %v6895
    %v8281 = vunpack.c.h.b16 %v6895
    %v8282 = vunpack.c.l.b16 %v6896
    %v8283 = vunpack.c.h.b16 %v6896
    %v8284 = vunpack.c.l.b16 %v6897
    %v8285 = vunpack.c.h.b16 %v6897
    %v8286 = vunpack.c.l.b16 %v6898
    %v8287 = vunpack.c.h.b16 %v6898
    %v8288 = vunpack.c.l.b16 %v6899
    %v8289 = vunpack.c.h.b16 %v6899
    %v8290 = vunpack.c.l.b16 %v6900
    %v8291 = vunpack.c.h.b16 %v6900
    %v8292 = vunpack.c.l.b16 %v6901
    %v8293 = vunpack.c.h.b16 %v6901
    %v8294 = vunpack.c.l.b16 %v6902
    %v8295 = vunpack.c.h.b16 %v6902
    %v8296 = vunpack.c.l.b16 %v6903
    %v8297 = vunpack.c.h.b16 %v6903
    %v8298 = vunpack.c.l.b16 %v6904
    %v8299 = vunpack.c.h.b16 %v6904
    %v8300 = vunpack.c.l.b16 %v6905
    %v8301 = vunpack.c.h.b16 %v6905
    %v8302 = vunpack.c.l.b16 %v6906
    %v8303 = vunpack.c.h.b16 %v6906
    %v8304 = vunpack.c.l.b16 %v6907
    %v8305 = vunpack.c.h.b16 %v6907
    %v8306 = vunpack.c.l.b16 %v6908
    %v8307 = vunpack.c.h.b16 %v6908
    %v8308 = vunpack.c.l.b16 %v6909
    %v8309 = vunpack.c.h.b16 %v6909
    %v8310 = vunpack.c.l.b16 %v6910
    %v8311 = vunpack.c.h.b16 %v6910
    %v8312 = vunpack.c.l.b16 %v6911
    %v8313 = vunpack.c.h.b16 %v6911
    %v8314 = vunpack.c.l.b16 %v6912
    %v8315 = vunpack.c.h.b16 %v6912
    %v8316 = vunpack.c.l.b16 %v6913
    %v8317 = vunpack.c.h.b16 %v6913
    %v8318 = vunpack.c.l.b16 %v6914
    %v8319 = vunpack.c.h.b16 %v6914
    %v8320 = vunpack.c.l.b16 %v6915
    %v8321 = vunpack.c.h.b16 %v6915
    %v8322 = vunpack.c.l.b16 %v6916
    %v8323 = vunpack.c.h.b16 %v6916
    %v8324 = vunpack.c.l.b16 %v6917
    %v8325 = vunpack.c.h.b16 %v6917
    %v8326 = vunpack.c.l.b16 %v6918
    %v8327 = vunpack.c.h.b16 %v6918
    %v8328 = vunpack.c.l.b16 %v6919
    %v8329 = vunpack.c.h.b16 %v6919
    %v8330 = vunpack.c.l.b16 %v6920
    %v8331 = vunpack.c.h.b16 %v6920
    %v8332 = vunpack.c.l.b16 %v6921
    %v8333 = vunpack.c.h.b16 %v6921
    %v8334 = vunpack.c.l.b16 %v6922
    %v8335 = vunpack.c.h.b16 %v6922
    %v8336 = vunpack.c.l.b16 %v6923
    %v8337 = vunpack.c.h.b16 %v6923
    %v8338 = vunpack.c.l.b16 %v6924
    %v8339 = vunpack.c.h.b16 %v6924
    %v8340 = vunpack.c.l.b16 %v6925
    %v8341 = vunpack.c.h.b16 %v6925
    %v8342 = vunpack.c.l.b16 %v6926
    %v8343 = vunpack.c.h.b16 %v6926
    %v8344 = vunpack.c.l.b16 %v6927
    %v8345 = vunpack.c.h.b16 %v6927
    %v8346 = vunpack.c.l.b16 %v6928
    %v8347 = vunpack.c.h.b16 %v6928
    %v8348 = vunpack.c.l.b16 %v6929
    %v8349 = vunpack.c.h.b16 %v6929
    %v8350 = vunpack.c.l.b16 %v6930
    %v8351 = vunpack.c.h.b16 %v6930
    %v8352 = vunpack.c.l.b16 %v6931
    %v8353 = vunpack.c.h.b16 %v6931
    %v8354 = vunpack.c.l.b16 %v6932
    %v8355 = vunpack.c.h.b16 %v6932
    %v8356 = vunpack.c.l.b16 %v6933
    %v8357 = vunpack.c.h.b16 %v6933
    %v8358 = vunpack.c.l.b16 %v6934
    %v8359 = vunpack.c.h.b16 %v6934
    %v8360 = vunpack.c.l.b16 %v6935
    %v8361 = vunpack.c.h.b16 %v6935
    %v8362 = vunpack.c.l.b16 %v6936
    %v8363 = vunpack.c.h.b16 %v6936
    %v8364 = vunpack.c.l.b16 %v6937
    %v8365 = vunpack.c.h.b16 %v6937
    %v8366 = vunpack.c.l.b16 %v6938
    %v8367 = vunpack.c.h.b16 %v6938
    %v8368 = vunpack.c.l.b16 %v6939
    %v8369 = vunpack.c.h.b16 %v6939
    %v8370 = vunpack.c.l.b16 %v6940
    %v8371 = vunpack.c.h.b16 %v6940
    %v8372 = vunpack.c.l.b16 %v6941
    %v8373 = vunpack.c.h.b16 %v6941
    %v8374 = vunpack.c.l.b16 %v6942
    %v8375 = vunpack.c.h.b16 %v6942
    %v8376 = vunpack.c.l.b16 %v6943
    %v8377 = vunpack.c.h.b16 %v6943
    %v8378 = vunpack.c.l.b16 %v6944
    %v8379 = vunpack.c.h.b16 %v6944
    %v8380 = vunpack.c.l.b16 %v6945
    %v8381 = vunpack.c.h.b16 %v6945
    %v8382 = vunpack.c.l.b16 %v6946
    %v8383 = vunpack.c.h.b16 %v6946
    %v8384 = vunpack.c.l.b16 %v6947
    %v8385 = vunpack.c.h.b16 %v6947
    %v8386 = vunpack.c.l.b16 %v6948
    %v8387 = vunpack.c.h.b16 %v6948
    %v8388 = vunpack.c.l.b16 %v6949
    %v8389 = vunpack.c.h.b16 %v6949
    %v8390 = vunpack.c.l.b16 %v6950
    %v8391 = vunpack.c.h.b16 %v6950
    %v8392 = vunpack.c.l.b16 %v6951
    %v8393 = vunpack.c.h.b16 %v6951
    %v8394 = vunpack.c.l.b16 %v6952
    %v8395 = vunpack.c.h.b16 %v6952
    %v8396 = vunpack.c.l.b16 %v6953
    %v8397 = vunpack.c.h.b16 %v6953
    %v8398 = vunpack.c.l.b16 %v6954
    %v8399 = vunpack.c.h.b16 %v6954
    %v8400 = vunpack.c.l.b16 %v6955
    %v8401 = vunpack.c.h.b16 %v6955
    %v8402 = vunpack.c.l.b16 %v6956
    %v8403 = vunpack.c.h.b16 %v6956
    %v8404 = vunpack.c.l.b16 %v6957
    %v8405 = vunpack.c.h.b16 %v6957
    %v8406 = vunpack.c.l.b16 %v6958
    %v8407 = vunpack.c.h.b16 %v6958
    %v8408 = vunpack.c.l.b16 %v6959
    %v8409 = vunpack.c.h.b16 %v6959
    %v8410 = vunpack.c.l.b16 %v6960
    %v8411 = vunpack.c.h.b16 %v6960
    %v8412 = vunpack.c.l.b16 %v6961
    %v8413 = vunpack.c.h.b16 %v6961
    %v8414 = vunpack.c.l.b16 %v6962
    %v8415 = vunpack.c.h.b16 %v6962
    %v8416 = vunpack.c.l.b16 %v6963
    %v8417 = vunpack.c.h.b16 %v6963
    %v8418 = vunpack.c.l.b16 %v6964
    %v8419 = vunpack.c.h.b16 %v6964
    %v8420 = vunpack.c.l.b16 %v6965
    %v8421 = vunpack.c.h.b16 %v6965
    %v8422 = vunpack.c.l.b16 %v6966
    %v8423 = vunpack.c.h.b16 %v6966
    %v8424 = vunpack.c.l.b16 %v6967
    %v8425 = vunpack.c.h.b16 %v6967
    %v8426 = vunpack.c.l.b16 %v6968
    %v8427 = vunpack.c.h.b16 %v6968
    %v8428 = vunpack.c.l.b16 %v6969
    %v8429 = vunpack.c.h.b16 %v6969
    %v8430 = vunpack.c.l.b16 %v6970
    %v8431 = vunpack.c.h.b16 %v6970
    %v8432 = vunpack.c.l.b16 %v6971
    %v8433 = vunpack.c.h.b16 %v6971
    %v8434 = vunpack.c.l.b16 %v6972
    %v8435 = vunpack.c.h.b16 %v6972
    %v8436 = vunpack.c.l.b16 %v6973
    %v8437 = vunpack.c.h.b16 %v6973
    %v8438 = vunpack.c.l.b16 %v6974
    %v8439 = vunpack.c.h.b16 %v6974
    %v8440 = vunpack.c.l.b16 %v6975
    %v8441 = vunpack.c.h.b16 %v6975
    %v8442 = vunpack.c.l.b16 %v6976
    %v8443 = vunpack.c.h.b16 %v6976
    %v8444 = vunpack.c.l.b16 %v6977
    %v8445 = vunpack.c.h.b16 %v6977
    %v8446 = vunpack.c.l.b16 %v6978
    %v8447 = vunpack.c.h.b16 %v6978
    %v8448 = vunpack.c.l.b16 %v6979
    %v8449 = vunpack.c.h.b16 %v6979
    %v8450 = vunpack.c.l.b16 %v6980
    %v8451 = vunpack.c.h.b16 %v6980
    %v8452 = vunpack.c.l.b16 %v6981
    %v8453 = vunpack.c.h.b16 %v6981
    %v8454 = vunpack.c.l.b16 %v6982
    %v8455 = vunpack.c.h.b16 %v6982
    %v8456 = vunpack.c.l.b16 %v6983
    %v8457 = vunpack.c.h.b16 %v6983
    %v8458 = vunpack.c.l.b16 %v6984
    %v8459 = vunpack.c.h.b16 %v6984
    %v8460 = vunpack.c.l.b16 %v6985
    %v8461 = vunpack.c.h.b16 %v6985
    %v8462 = vunpack.c.l.b16 %v6986
    %v8463 = vunpack.c.h.b16 %v6986
    %v8464 = vunpack.c.l.b16 %v6987
    %v8465 = vunpack.c.h.b16 %v6987
    %v8466 = vunpack.c.l.b16 %v6988
    %v8467 = vunpack.c.h.b16 %v6988
    %v8468 = vunpack.c.l.b16 %v6989
    %v8469 = vunpack.c.h.b16 %v6989
    %v8470 = vunpack.c.l.b16 %v6990
    %v8471 = vunpack.c.h.b16 %v6990
    %v8472 = vunpack.c.l.b16 %v6991
    %v8473 = vunpack.c.h.b16 %v6991
    %v8474 = vunpack.c.l.b16 %v6992
    %v8475 = vunpack.c.h.b16 %v6992
    %v8476 = vunpack.c.l.b16 %v6993
    %v8477 = vunpack.c.h.b16 %v6993
    %v8478 = vunpack.c.l.b16 %v6994
    %v8479 = vunpack.c.h.b16 %v6994
    %v8480 = vunpack.c.l.b16 %v6995
    %v8481 = vunpack.c.h.b16 %v6995
    %v8482 = vunpack.c.l.b16 %v6996
    %v8483 = vunpack.c.h.b16 %v6996
    %v8484 = vunpack.c.l.b16 %v6997
    %v8485 = vunpack.c.h.b16 %v6997
    %v8486 = vunpack.c.l.b16 %v6998
    %v8487 = vunpack.c.h.b16 %v6998
    %v8488 = vunpack.c.l.b16 %v6999
    %v8489 = vunpack.c.h.b16 %v6999
    %v8490 = vunpack.c.l.b16 %v7000
    %v8491 = vunpack.c.h.b16 %v7000
    %v8492 = vunpack.c.l.b16 %v7001
    %v8493 = vunpack.c.h.b16 %v7001
    %v8494 = vunpack.c.l.b16 %v7002
    %v8495 = vunpack.c.h.b16 %v7002
    %v8496 = vunpack.c.l.b16 %v7003
    %v8497 = vunpack.c.h.b16 %v7003
    %v8498 = vunpack.c.l.b16 %v7004
    %v8499 = vunpack.c.h.b16 %v7004
    %v8500 = vunpack.c.l.b16 %v7005
    %v8501 = vunpack.c.h.b16 %v7005
    %v8502 = vunpack.c.l.b16 %v7006
    %v8503 = vunpack.c.h.b16 %v7006
    %v8504 = vunpack.c.l.b16 %v7007
    %v8505 = vunpack.c.h.b16 %v7007
    %v8506 = vunpack.c.l.b16 %v7008
    %v8507 = vunpack.c.h.b16 %v7008
    %v8508 = vunpack.c.l.b16 %v7009
    %v8509 = vunpack.c.h.b16 %v7009
    %v8510 = vunpack.c.l.b16 %v7010
    %v8511 = vunpack.c.h.b16 %v7010
    %v8512 = vunpack.c.l.b16 %v7011
    %v8513 = vunpack.c.h.b16 %v7011
    %v8514 = vunpack.c.l.b16 %v7012
    %v8515 = vunpack.c.h.b16 %v7012
    %v8516 = vunpack.c.l.b16 %v7013
    %v8517 = vunpack.c.h.b16 %v7013
    %v8518 = vunpack.c.l.b16 %v7014
    %v8519 = vunpack.c.h.b16 %v7014
    %v8520 = vunpack.c.l.b16 %v7015
    %v8521 = vunpack.c.h.b16 %v7015
    %v8522 = vunpack.c.l.b16 %v7016
    %v8523 = vunpack.c.h.b16 %v7016
    %v8524 = vunpack.c.l.b16 %v7017
    %v8525 = vunpack.c.h.b16 %v7017
    %v8526 = vunpack.c.l.b16 %v7018
    %v8527 = vunpack.c.h.b16 %v7018
    %v8528 = vunpack.c.l.b16 %v7019
    %v8529 = vunpack.c.h.b16 %v7019
    %v8530 = vunpack.c.l.b16 %v7020
    %v8531 = vunpack.c.h.b16 %v7020
    %v8532 = vunpack.c.l.b16 %v7021
    %v8533 = vunpack.c.h.b16 %v7021
    %v8534 = vunpack.c.l.b16 %v7022
    %v8535 = vunpack.c.h.b16 %v7022
    %v8536 = vunpack.c.l.b16 %v7023
    %v8537 = vunpack.c.h.b16 %v7023
    %v8538 = vunpack.c.l.b16 %v7024
    %v8539 = vunpack.c.h.b16 %v7024
    %v8540 = vunpack.c.l.b16 %v7025
    %v8541 = vunpack.c.h.b16 %v7025
    %v8542 = vunpack.c.l.b16 %v7026
    %v8543 = vunpack.c.h.b16 %v7026
    %v8544 = vunpack.c.l.b16 %v7027
    %v8545 = vunpack.c.h.b16 %v7027
    %v8546 = vunpack.c.l.b16 %v7028
    %v8547 = vunpack.c.h.b16 %v7028
    %v8548 = vunpack.c.l.b16 %v7029
    %v8549 = vunpack.c.h.b16 %v7029
    %v8550 = vunpack.c.l.b16 %v7030
    %v8551 = vunpack.c.h.b16 %v7030
    %v8552 = vunpack.c.l.b16 %v7031
    %v8553 = vunpack.c.h.b16 %v7031
    %v8554 = vunpack.c.l.b16 %v7032
    %v8555 = vunpack.c.h.b16 %v7032
    %v8556 = vunpack.c.l.b16 %v7033
    %v8557 = vunpack.c.h.b16 %v7033
    %v8558 = vunpack.c.l.b16 %v7034
    %v8559 = vunpack.c.h.b16 %v7034
    %v8560 = vunpack.c.l.b16 %v7035
    %v8561 = vunpack.c.h.b16 %v7035
    %v8562 = vunpack.c.l.b16 %v7036
    %v8563 = vunpack.c.h.b16 %v7036
    %v8564 = vunpack.c.l.b16 %v7037
    %v8565 = vunpack.c.h.b16 %v7037
    %v8566 = vunpack.c.l.b16 %v7038
    %v8567 = vunpack.c.h.b16 %v7038
    %v8568 = vunpack.c.l.b16 %v7039
    %v8569 = vunpack.c.h.b16 %v7039
    %v8570 = vunpack.c.l.b16 %v7040
    %v8571 = vunpack.c.h.b16 %v7040
    %v8572 = vunpack.c.l.b16 %v7041
    %v8573 = vunpack.c.h.b16 %v7041
    %v8574 = vunpack.c.l.b16 %v7042
    %v8575 = vunpack.c.h.b16 %v7042
    %v8576 = vunpack.c.l.b16 %v7043
    %v8577 = vunpack.c.h.b16 %v7043
    %v8578 = vunpack.c.l.b16 %v7044
    %v8579 = vunpack.c.h.b16 %v7044
    %v8580 = vunpack.c.l.b16 %v7045
    %v8581 = vunpack.c.h.b16 %v7045
    %v8582 = vunpack.c.l.b16 %v7046
    %v8583 = vunpack.c.h.b16 %v7046
    %v8584 = vunpack.c.l.b16 %v7047
    %v8585 = vunpack.c.h.b16 %v7047
    %v8586 = vunpack.c.l.b16 %v7048
    %v8587 = vunpack.c.h.b16 %v7048
    %v8588 = vunpack.c.l.b16 %v7049
    %v8589 = vunpack.c.h.b16 %v7049
    %v8590 = vunpack.c.l.b16 %v7050
    %v8591 = vunpack.c.h.b16 %v7050
    %v8592 = vunpack.c.l.b16 %v7051
    %v8593 = vunpack.c.h.b16 %v7051
    %v8594 = vunpack.c.l.b16 %v7052
    %v8595 = vunpack.c.h.b16 %v7052
    %v8596 = vunpack.c.l.b16 %v7053
    %v8597 = vunpack.c.h.b16 %v7053
    %v8598 = vunpack.c.l.b16 %v7054
    %v8599 = vunpack.c.h.b16 %v7054
    %v8600 = vunpack.c.l.b16 %v7055
    %v8601 = vunpack.c.h.b16 %v7055
    %v8602 = vunpack.c.l.b16 %v7056
    %v8603 = vunpack.c.h.b16 %v7056
    %v8604 = vunpack.c.l.b16 %v7057
    %v8605 = vunpack.c.h.b16 %v7057
    %v8606 = vunpack.c.l.b16 %v7058
    %v8607 = vunpack.c.h.b16 %v7058
    %v8608 = vunpack.c.l.b16 %v7059
    %v8609 = vunpack.c.h.b16 %v7059
    %v8610 = vunpack.c.l.b16 %v7060
    %v8611 = vunpack.c.h.b16 %v7060
    %v8612 = vunpack.c.l.b16 %v7061
    %v8613 = vunpack.c.h.b16 %v7061
    %v8614 = vunpack.c.l.b16 %v7062
    %v8615 = vunpack.c.h.b16 %v7062
    %v8616 = vunpack.c.l.b16 %v7063
    %v8617 = vunpack.c.h.b16 %v7063
    %v8618 = vunpack.c.l.b16 %v7064
    %v8619 = vunpack.c.h.b16 %v7064
    %v8620 = vunpack.c.l.b16 %v7065
    %v8621 = vunpack.c.h.b16 %v7065
    %v8622 = vunpack.c.l.b16 %v7066
    %v8623 = vunpack.c.h.b16 %v7066
    %v8624 = vunpack.c.l.b16 %v7067
    %v8625 = vunpack.c.h.b16 %v7067
    %v8626 = vunpack.c.l.b16 %v7068
    %v8627 = vunpack.c.h.b16 %v7068
    %v8628 = vunpack.c.l.b16 %v7069
    %v8629 = vunpack.c.h.b16 %v7069
    %v8630 = vunpack.c.l.b16 %v7070
    %v8631 = vunpack.c.h.b16 %v7070
    %v8632 = vunpack.c.l.b16 %v7071
    %v8633 = vunpack.c.h.b16 %v7071
    %v8634 = vunpack.c.l.b16 %v7072
    %v8635 = vunpack.c.h.b16 %v7072
    %v8636 = vunpack.c.l.b16 %v7073
    %v8637 = vunpack.c.h.b16 %v7073
    %v8638 = vunpack.c.l.b16 %v7074
    %v8639 = vunpack.c.h.b16 %v7074
    %v8640 = vunpack.c.l.b16 %v7075
    %v8641 = vunpack.c.h.b16 %v7075
    %v8642 = vunpack.c.l.b16 %v7076
    %v8643 = vunpack.c.h.b16 %v7076
    %v8644 = vunpack.c.l.b16 %v7077
    %v8645 = vunpack.c.h.b16 %v7077
    %v8646 = vunpack.c.l.b16 %v7078
    %v8647 = vunpack.c.h.b16 %v7078
    %v8648 = vunpack.c.l.b16 %v7079
    %v8649 = vunpack.c.h.b16 %v7079
    %v8650 = vunpack.c.l.b16 %v7080
    %v8651 = vunpack.c.h.b16 %v7080
    %v8652 = vunpack.c.l.b16 %v7081
    %v8653 = vunpack.c.h.b16 %v7081
    %v8654 = vunpack.c.l.b16 %v7082
    %v8655 = vunpack.c.h.b16 %v7082
    %v8656 = vunpack.c.l.b16 %v7083
    %v8657 = vunpack.c.h.b16 %v7083
    %v8658 = vunpack.c.l.b16 %v7084
    %v8659 = vunpack.c.h.b16 %v7084
    %v8660 = vunpack.c.l.b16 %v7085
    %v8661 = vunpack.c.h.b16 %v7085
    %v8662 = vunpack.c.l.b16 %v7086
    %v8663 = vunpack.c.h.b16 %v7086
    %v8664 = vunpack.c.l.b16 %v7087
    %v8665 = vunpack.c.h.b16 %v7087
    %v8666 = vunpack.c.l.b16 %v7088
    %v8667 = vunpack.c.h.b16 %v7088
    %v8668 = vunpack.c.l.b16 %v7089
    %v8669 = vunpack.c.h.b16 %v7089
    %v8670 = vunpack.c.l.b16 %v7090
    %v8671 = vunpack.c.h.b16 %v7090
    %v8672 = vunpack.c.l.b16 %v7091
    %v8673 = vunpack.c.h.b16 %v7091
    %v8674 = vunpack.c.l.b16 %v7092
    %v8675 = vunpack.c.h.b16 %v7092
    %v8676 = vunpack.c.l.b16 %v7093
    %v8677 = vunpack.c.h.b16 %v7093
    %v8678 = vunpack.c.l.b16 %v7094
    %v8679 = vunpack.c.h.b16 %v7094
    %v8680 = vunpack.c.l.b16 %v7095
    %v8681 = vunpack.c.h.b16 %v7095
    %v8682 = vunpack.c.l.b16 %v7096
    %v8683 = vunpack.c.h.b16 %v7096
    %v8684 = vunpack.c.l.b16 %v7097
    %v8685 = vunpack.c.h.b16 %v7097
    %v8686 = vunpack.c.l.b16 %v7098
    %v8687 = vunpack.c.h.b16 %v7098
    %v8688 = vunpack.c.l.b16 %v7099
    %v8689 = vunpack.c.h.b16 %v7099
    %v8690 = vunpack.c.l.b16 %v7100
    %v8691 = vunpack.c.h.b16 %v7100
    %v8692 = vunpack.c.l.b16 %v7101
    %v8693 = vunpack.c.h.b16 %v7101
    %v8694 = vunpack.c.l.b16 %v7102
    %v8695 = vunpack.c.h.b16 %v7102
    %v8696 = vunpack.c.l.b16 %v7103
    %v8697 = vunpack.c.h.b16 %v7103
    %v8698 = vunpack.c.l.b16 %v7104
    %v8699 = vunpack.c.h.b16 %v7104
    %v8700 = vunpack.c.l.b16 %v7105
    %v8701 = vunpack.c.h.b16 %v7105
    %v8702 = vunpack.c.l.b16 %v7106
    %v8703 = vunpack.c.h.b16 %v7106
    %v8704 = vunpack.c.l.b16 %v7107
    %v8705 = vunpack.c.h.b16 %v7107
    %v8706 = vunpack.c.l.b16 %v7108
    %v8707 = vunpack.c.h.b16 %v7108
    %v8708 = vunpack.c.l.b16 %v7109
    %v8709 = vunpack.c.h.b16 %v7109
    %v8710 = vunpack.c.l.b16 %v7110
    %v8711 = vunpack.c.h.b16 %v7110
    %v8712 = vunpack.c.l.b16 %v7111
    %v8713 = vunpack.c.h.b16 %v7111
    %v8714 = vunpack.c.l.b16 %v7112
    %v8715 = vunpack.c.h.b16 %v7112
    %v8716 = vunpack.c.l.b16 %v7113
    %v8717 = vunpack.c.h.b16 %v7113
    %v8718 = vunpack.c.l.b16 %v7114
    %v8719 = vunpack.c.h.b16 %v7114
    %v8720 = vunpack.c.l.b16 %v7115
    %v8721 = vunpack.c.h.b16 %v7115
    %v8722 = vunpack.c.l.b16 %v7116
    %v8723 = vunpack.c.h.b16 %v7116
    %v8724 = vunpack.c.l.b16 %v7117
    %v8725 = vunpack.c.h.b16 %v7117
    %v8726 = vunpack.c.l.b16 %v7118
    %v8727 = vunpack.c.h.b16 %v7118
    %v8728 = vunpack.c.l.b16 %v7119
    %v8729 = vunpack.c.h.b16 %v7119
    %v8730 = vunpack.c.l.b16 %v7120
    %v8731 = vunpack.c.h.b16 %v7120
    %v8732 = vunpack.c.l.b16 %v7121
    %v8733 = vunpack.c.h.b16 %v7121
    %v8734 = vunpack.c.l.b16 %v7122
    %v8735 = vunpack.c.h.b16 %v7122
    %v8736 = vunpack.c.l.b16 %v7123
    %v8737 = vunpack.c.h.b16 %v7123
    %v8738 = vunpack.c.l.b16 %v7124
    %v8739 = vunpack.c.h.b16 %v7124
    %v8740 = vunpack.c.l.b16 %v7125
    %v8741 = vunpack.c.h.b16 %v7125
    %v8742 = vpack.c.b16 %v7726, %v7718
    %v8743 = vpack.c.b16 %v7727, %v7719
    %v8744 = vpack.c.b16 %v7728, %v7720
    %v8745 = vpack.c.b16 %v7729, %v7721
    %v8746 = vpack.c.b16 %v7730, %v7722
    %v8747 = vpack.c.b16 %v7731, %v7723
    %v8748 = vpack.c.b16 %v7732, %v7724
    %v8749 = vpack.c.b16 %v7733, %v7725
    %v8750 = vpack.c.b16 %v7742, %v7734
    %v8751 = vpack.c.b16 %v7743, %v7735
    %v8752 = vpack.c.b16 %v7744, %v7736
    %v8753 = vpack.c.b16 %v7745, %v7737
    %v8754 = vpack.c.b16 %v7746, %v7738
    %v8755 = vpack.c.b16 %v7747, %v7739
    %v8756 = vpack.c.b16 %v7748, %v7740
    %v8757 = vpack.c.b16 %v7749, %v7741
    %v8758 = vpack.c.b16 %v7758, %v7750
    %v8759 = vpack.c.b16 %v7759, %v7751
    %v8760 = vpack.c.b16 %v7760, %v7752
    %v8761 = vpack.c.b16 %v7761, %v7753
    %v8762 = vpack.c.b16 %v7762, %v7754
    %v8763 = vpack.c.b16 %v7763, %v7755
    %v8764 = vpack.c.b16 %v7764, %v7756
    %v8765 = vpack.c.b16 %v7765, %v7757
    %v8766 = vpack.c.b16 %v7774, %v7766
    %v8767 = vpack.c.b16 %v7775, %v7767
    %v8768 = vpack.c.b16 %v7776, %v7768
    %v8769 = vpack.c.b16 %v7777, %v7769
    %v8770 = vpack.c.b16 %v7778, %v7770
    %v8771 = vpack.c.b16 %v7779, %v7771
    %v8772 = vpack.c.b16 %v7780, %v7772
    %v8773 = vpack.c.b16 %v7781, %v7773
    %v8774 = vpack.c.b16 %v7790, %v7782
    %v8775 = vpack.c.b16 %v7791, %v7783
    %v8776 = vpack.c.b16 %v7792, %v7784
    %v8777 = vpack.c.b16 %v7793, %v7785
    %v8778 = vpack.c.b16 %v7794, %v7786
    %v8779 = vpack.c.b16 %v7795, %v7787
    %v8780 = vpack.c.b16 %v7796, %v7788
    %v8781 = vpack.c.b16 %v7797, %v7789
    %v8782 = vpack.c.b16 %v7806, %v7798
    %v8783 = vpack.c.b16 %v7807, %v7799
    %v8784 = vpack.c.b16 %v7808, %v7800
    %v8785 = vpack.c.b16 %v7809, %v7801
    %v8786 = vpack.c.b16 %v7810, %v7802
    %v8787 = vpack.c.b16 %v7811, %v7803
    %v8788 = vpack.c.b16 %v7812, %v7804
    %v8789 = vpack.c.b16 %v7813, %v7805
    %v8790 = vpack.c.b16 %v7822, %v7814
    %v8791 = vpack.c.b16 %v7823, %v7815
    %v8792 = vpack.c.b16 %v7824, %v7816
    %v8793 = vpack.c.b16 %v7825, %v7817
    %v8794 = vpack.c.b16 %v7826, %v7818
    %v8795 = vpack.c.b16 %v7827, %v7819
    %v8796 = vpack.c.b16 %v7828, %v7820
    %v8797 = vpack.c.b16 %v7829, %v7821
    %v8798 = vpack.c.b16 %v7838, %v7830
    %v8799 = vpack.c.b16 %v7839, %v7831
    %v8800 = vpack.c.b16 %v7840, %v7832
    %v8801 = vpack.c.b16 %v7841, %v7833
    %v8802 = vpack.c.b16 %v7842, %v7834
    %v8803 = vpack.c.b16 %v7843, %v7835
    %v8804 = vpack.c.b16 %v7844, %v7836
    %v8805 = vpack.c.b16 %v7845, %v7837
    %v8806 = vpack.c.b16 %v7854, %v7846
    %v8807 = vpack.c.b16 %v7855, %v7847
    %v8808 = vpack.c.b16 %v7856, %v7848
    %v8809 = vpack.c.b16 %v7857, %v7849
    %v8810 = vpack.c.b16 %v7858, %v7850
    %v8811 = vpack.c.b16 %v7859, %v7851
    %v8812 = vpack.c.b16 %v7860, %v7852
    %v8813 = vpack.c.b16 %v7861, %v7853
    %v8814 = vpack.c.b16 %v7870, %v7862
    %v8815 = vpack.c.b16 %v7871, %v7863
    %v8816 = vpack.c.b16 %v7872, %v7864
    %v8817 = vpack.c.b16 %v7873, %v7865
    %v8818 = vpack.c.b16 %v7874, %v7866
    %v8819 = vpack.c.b16 %v7875, %v7867
    %v8820 = vpack.c.b16 %v7876, %v7868
    %v8821 = vpack.c.b16 %v7877, %v7869
    %v8822 = vpack.c.b16 %v7886, %v7878
    %v8823 = vpack.c.b16 %v7887, %v7879
    %v8824 = vpack.c.b16 %v7888, %v7880
    %v8825 = vpack.c.b16 %v7889, %v7881
    %v8826 = vpack.c.b16 %v7890, %v7882
    %v8827 = vpack.c.b16 %v7891, %v7883
    %v8828 = vpack.c.b16 %v7892, %v7884
    %v8829 = vpack.c.b16 %v7893, %v7885
    %v8830 = vpack.c.b16 %v7902, %v7894
    %v8831 = vpack.c.b16 %v7903, %v7895
    %v8832 = vpack.c.b16 %v7904, %v7896
    %v8833 = vpack.c.b16 %v7905, %v7897
    %v8834 = vpack.c.b16 %v7906, %v7898
    %v8835 = vpack.c.b16 %v7907, %v7899
    %v8836 = vpack.c.b16 %v7908, %v7900
    %v8837 = vpack.c.b16 %v7909, %v7901
    %v8838 = vpack.c.b16 %v7918, %v7910
    %v8839 = vpack.c.b16 %v7919, %v7911
    %v8840 = vpack.c.b16 %v7920, %v7912
    %v8841 = vpack.c.b16 %v7921, %v7913
    %v8842 = vpack.c.b16 %v7922, %v7914
    %v8843 = vpack.c.b16 %v7923, %v7915
    %v8844 = vpack.c.b16 %v7924, %v7916
    %v8845 = vpack.c.b16 %v7925, %v7917
    %v8846 = vpack.c.b16 %v7934, %v7926
    %v8847 = vpack.c.b16 %v7935, %v7927
    %v8848 = vpack.c.b16 %v7936, %v7928
    %v8849 = vpack.c.b16 %v7937, %v7929
    %v8850 = vpack.c.b16 %v7938, %v7930
    %v8851 = vpack.c.b16 %v7939, %v7931
    %v8852 = vpack.c.b16 %v7940, %v7932
    %v8853 = vpack.c.b16 %v7941, %v7933
    %v8854 = vpack.c.b16 %v7950, %v7942
    %v8855 = vpack.c.b16 %v7951, %v7943
    %v8856 = vpack.c.b16 %v7952, %v7944
    %v8857 = vpack.c.b16 %v7953, %v7945
    %v8858 = vpack.c.b16 %v7954, %v7946
    %v8859 = vpack.c.b16 %v7955, %v7947
    %v8860 = vpack.c.b16 %v7956, %v7948
    %v8861 = vpack.c.b16 %v7957, %v7949
    %v8862 = vpack.c.b16 %v7966, %v7958
    %v8863 = vpack.c.b16 %v7967, %v7959
    %v8864 = vpack.c.b16 %v7968, %v7960
    %v8865 = vpack.c.b16 %v7969, %v7961
    %v8866 = vpack.c.b16 %v7970, %v7962
    %v8867 = vpack.c.b16 %v7971, %v7963
    %v8868 = vpack.c.b16 %v7972, %v7964
    %v8869 = vpack.c.b16 %v7973, %v7965
    %v8870 = vpack.c.b16 %v7982, %v7974
    %v8871 = vpack.c.b16 %v7983, %v7975
    %v8872 = vpack.c.b16 %v7984, %v7976
    %v8873 = vpack.c.b16 %v7985, %v7977
    %v8874 = vpack.c.b16 %v7986, %v7978
    %v8875 = vpack.c.b16 %v7987, %v7979
    %v8876 = vpack.c.b16 %v7988, %v7980
    %v8877 = vpack.c.b16 %v7989, %v7981
    %v8878 = vpack.c.b16 %v7998, %v7990
    %v8879 = vpack.c.b16 %v7999, %v7991
    %v8880 = vpack.c.b16 %v8000, %v7992
    %v8881 = vpack.c.b16 %v8001, %v7993
    %v8882 = vpack.c.b16 %v8002, %v7994
    %v8883 = vpack.c.b16 %v8003, %v7995
    %v8884 = vpack.c.b16 %v8004, %v7996
    %v8885 = vpack.c.b16 %v8005, %v7997
    %v8886 = vpack.c.b16 %v8014, %v8006
    %v8887 = vpack.c.b16 %v8015, %v8007
    %v8888 = vpack.c.b16 %v8016, %v8008
    %v8889 = vpack.c.b16 %v8017, %v8009
    %v8890 = vpack.c.b16 %v8018, %v8010
    %v8891 = vpack.c.b16 %v8019, %v8011
    %v8892 = vpack.c.b16 %v8020, %v8012
    %v8893 = vpack.c.b16 %v8021, %v8013
    %v8894 = vpack.c.b16 %v8030, %v8022
    %v8895 = vpack.c.b16 %v8031, %v8023
    %v8896 = vpack.c.b16 %v8032, %v8024
    %v8897 = vpack.c.b16 %v8033, %v8025
    %v8898 = vpack.c.b16 %v8034, %v8026
    %v8899 = vpack.c.b16 %v8035, %v8027
    %v8900 = vpack.c.b16 %v8036, %v8028
    %v8901 = vpack.c.b16 %v8037, %v8029
    %v8902 = vpack.c.b16 %v8046, %v8038
    %v8903 = vpack.c.b16 %v8047, %v8039
    %v8904 = vpack.c.b16 %v8048, %v8040
    %v8905 = vpack.c.b16 %v8049, %v8041
    %v8906 = vpack.c.b16 %v8050, %v8042
    %v8907 = vpack.c.b16 %v8051, %v8043
    %v8908 = vpack.c.b16 %v8052, %v8044
    %v8909 = vpack.c.b16 %v8053, %v8045
    %v8910 = vpack.c.b16 %v8062, %v8054
    %v8911 = vpack.c.b16 %v8063, %v8055
    %v8912 = vpack.c.b16 %v8064, %v8056
    %v8913 = vpack.c.b16 %v8065, %v8057
    %v8914 = vpack.c.b16 %v8066, %v8058
    %v8915 = vpack.c.b16 %v8067, %v8059
    %v8916 = vpack.c.b16 %v8068, %v8060
    %v8917 = vpack.c.b16 %v8069, %v8061
    %v8918 = vpack.c.b16 %v8078, %v8070
    %v8919 = vpack.c.b16 %v8079, %v8071
    %v8920 = vpack.c.b16 %v8080, %v8072
    %v8921 = vpack.c.b16 %v8081, %v8073
    %v8922 = vpack.c.b16 %v8082, %v8074
    %v8923 = vpack.c.b16 %v8083, %v8075
    %v8924 = vpack.c.b16 %v8084, %v8076
    %v8925 = vpack.c.b16 %v8085, %v8077
    %v8926 = vpack.c.b16 %v8094, %v8086
    %v8927 = vpack.c.b16 %v8095, %v8087
    %v8928 = vpack.c.b16 %v8096, %v8088
    %v8929 = vpack.c.b16 %v8097, %v8089
    %v8930 = vpack.c.b16 %v8098, %v8090
    %v8931 = vpack.c.b16 %v8099, %v8091
    %v8932 = vpack.c.b16 %v8100, %v8092
    %v8933 = vpack.c.b16 %v8101, %v8093
    %v8934 = vpack.c.b16 %v8110, %v8102
    %v8935 = vpack.c.b16 %v8111, %v8103
    %v8936 = vpack.c.b16 %v8112, %v8104
    %v8937 = vpack.c.b16 %v8113, %v8105
    %v8938 = vpack.c.b16 %v8114, %v8106
    %v8939 = vpack.c.b16 %v8115, %v8107
    %v8940 = vpack.c.b16 %v8116, %v8108
    %v8941 = vpack.c.b16 %v8117, %v8109
    %v8942 = vpack.c.b16 %v8126, %v8118
    %v8943 = vpack.c.b16 %v8127, %v8119
    %v8944 = vpack.c.b16 %v8128, %v8120
    %v8945 = vpack.c.b16 %v8129, %v8121
    %v8946 = vpack.c.b16 %v8130, %v8122
    %v8947 = vpack.c.b16 %v8131, %v8123
    %v8948 = vpack.c.b16 %v8132, %v8124
    %v8949 = vpack.c.b16 %v8133, %v8125
    %v8950 = vpack.c.b16 %v8142, %v8134
    %v8951 = vpack.c.b16 %v8143, %v8135
    %v8952 = vpack.c.b16 %v8144, %v8136
    %v8953 = vpack.c.b16 %v8145, %v8137
    %v8954 = vpack.c.b16 %v8146, %v8138
    %v8955 = vpack.c.b16 %v8147, %v8139
    %v8956 = vpack.c.b16 %v8148, %v8140
    %v8957 = vpack.c.b16 %v8149, %v8141
    %v8958 = vpack.c.b16 %v8158, %v8150
    %v8959 = vpack.c.b16 %v8159, %v8151
    %v8960 = vpack.c.b16 %v8160, %v8152
    %v8961 = vpack.c.b16 %v8161, %v8153
    %v8962 = vpack.c.b16 %v8162, %v8154
    %v8963 = vpack.c.b16 %v8163, %v8155
    %v8964 = vpack.c.b16 %v8164, %v8156
    %v8965 = vpack.c.b16 %v8165, %v8157
    %v8966 = vpack.c.b16 %v8174, %v8166
    %v8967 = vpack.c.b16 %v8175, %v8167
    %v8968 = vpack.c.b16 %v8176, %v8168
    %v8969 = vpack.c.b16 %v8177, %v8169
    %v8970 = vpack.c.b16 %v8178, %v8170
    %v8971 = vpack.c.b16 %v8179, %v8171
    %v8972 = vpack.c.b16 %v8180, %v8172
    %v8973 = vpack.c.b16 %v8181, %v8173
    %v8974 = vpack.c.b16 %v8190, %v8182
    %v8975 = vpack.c.b16 %v8191, %v8183
    %v8976 = vpack.c.b16 %v8192, %v8184
    %v8977 = vpack.c.b16 %v8193, %v8185
    %v8978 = vpack.c.b16 %v8194, %v8186
    %v8979 = vpack.c.b16 %v8195, %v8187
    %v8980 = vpack.c.b16 %v8196, %v8188
    %v8981 = vpack.c.b16 %v8197, %v8189
    %v8982 = vpack.c.b16 %v8206, %v8198
    %v8983 = vpack.c.b16 %v8207, %v8199
    %v8984 = vpack.c.b16 %v8208, %v8200
    %v8985 = vpack.c.b16 %v8209, %v8201
    %v8986 = vpack.c.b16 %v8210, %v8202
    %v8987 = vpack.c.b16 %v8211, %v8203
    %v8988 = vpack.c.b16 %v8212, %v8204
    %v8989 = vpack.c.b16 %v8213, %v8205
    %v8990 = vpack.c.b16 %v8222, %v8214
    %v8991 = vpack.c.b16 %v8223, %v8215
    %v8992 = vpack.c.b16 %v8224, %v8216
    %v8993 = vpack.c.b16 %v8225, %v8217
    %v8994 = vpack.c.b16 %v8226, %v8218
    %v8995 = vpack.c.b16 %v8227, %v8219
    %v8996 = vpack.c.b16 %v8228, %v8220
    %v8997 = vpack.c.b16 %v8229, %v8221
    %v8998 = vpack.c.b16 %v8238, %v8230
    %v8999 = vpack.c.b16 %v8239, %v8231
    %v9000 = vpack.c.b16 %v8240, %v8232
    %v9001 = vpack.c.b16 %v8241, %v8233
    %v9002 = vpack.c.b16 %v8242, %v8234
    %v9003 = vpack.c.b16 %v8243, %v8235
    %v9004 = vpack.c.b16 %v8244, %v8236
    %v9005 = vpack.c.b16 %v8245, %v8237
    %v9006 = vpack.c.b16 %v8254, %v8246
    %v9007 = vpack.c.b16 %v8255, %v8247
    %v9008 = vpack.c.b16 %v8256, %v8248
    %v9009 = vpack.c.b16 %v8257, %v8249
    %v9010 = vpack.c.b16 %v8258, %v8250
    %v9011 = vpack.c.b16 %v8259, %v8251
    %v9012 = vpack.c.b16 %v8260, %v8252
    %v9013 = vpack.c.b16 %v8261, %v8253
    %v9014 = vpack.c.b16 %v8270, %v8262
    %v9015 = vpack.c.b16 %v8271, %v8263
    %v9016 = vpack.c.b16 %v8272, %v8264
    %v9017 = vpack.c.b16 %v8273, %v8265
    %v9018 = vpack.c.b16 %v8274, %v8266
    %v9019 = vpack.c.b16 %v8275, %v8267
    %v9020 = vpack.c.b16 %v8276, %v8268
    %v9021 = vpack.c.b16 %v8277, %v8269
    %v9022 = vpack.c.b16 %v8286, %v8278
    %v9023 = vpack.c.b16 %v8287, %v8279
    %v9024 = vpack.c.b16 %v8288, %v8280
    %v9025 = vpack.c.b16 %v8289, %v8281
    %v9026 = vpack.c.b16 %v8290, %v8282
    %v9027 = vpack.c.b16 %v8291, %v8283
    %v9028 = vpack.c.b16 %v8292, %v8284
    %v9029 = vpack.c.b16 %v8293, %v8285
    %v9030 = vpack.c.b16 %v8302, %v8294
    %v9031 = vpack.c.b16 %v8303, %v8295
    %v9032 = vpack.c.b16 %v8304, %v8296
    %v9033 = vpack.c.b16 %v8305, %v8297
    %v9034 = vpack.c.b16 %v8306, %v8298
    %v9035 = vpack.c.b16 %v8307, %v8299
    %v9036 = vpack.c.b16 %v8308, %v8300
    %v9037 = vpack.c.b16 %v8309, %v8301
    %v9038 = vpack.c.b16 %v8318, %v8310
    %v9039 = vpack.c.b16 %v8319, %v8311
    %v9040 = vpack.c.b16 %v8320, %v8312
    %v9041 = vpack.c.b16 %v8321, %v8313
    %v9042 = vpack.c.b16 %v8322, %v8314
    %v9043 = vpack.c.b16 %v8323, %v8315
    %v9044 = vpack.c.b16 %v8324, %v8316
    %v9045 = vpack.c.b16 %v8325, %v8317
    %v9046 = vpack.c.b16 %v8334, %v8326
    %v9047 = vpack.c.b16 %v8335, %v8327
    %v9048 = vpack.c.b16 %v8336, %v8328
    %v9049 = vpack.c.b16 %v8337, %v8329
    %v9050 = vpack.c.b16 %v8338, %v8330
    %v9051 = vpack.c.b16 %v8339, %v8331
    %v9052 = vpack.c.b16 %v8340, %v8332
    %v9053 = vpack.c.b16 %v8341, %v8333
    %v9054 = vpack.c.b16 %v8350, %v8342
    %v9055 = vpack.c.b16 %v8351, %v8343
    %v9056 = vpack.c.b16 %v8352, %v8344
    %v9057 = vpack.c.b16 %v8353, %v8345
    %v9058 = vpack.c.b16 %v8354, %v8346
    %v9059 = vpack.c.b16 %v8355, %v8347
    %v9060 = vpack.c.b16 %v8356, %v8348
    %v9061 = vpack.c.b16 %v8357, %v8349
    %v9062 = vpack.c.b16 %v8366, %v8358
    %v9063 = vpack.c.b16 %v8367, %v8359
    %v9064 = vpack.c.b16 %v8368, %v8360
    %v9065 = vpack.c.b16 %v8369, %v8361
    %v9066 = vpack.c.b16 %v8370, %v8362
    %v9067 = vpack.c.b16 %v8371, %v8363
    %v9068 = vpack.c.b16 %v8372, %v8364
    %v9069 = vpack.c.b16 %v8373, %v8365
    %v9070 = vpack.c.b16 %v8382, %v8374
    %v9071 = vpack.c.b16 %v8383, %v8375
    %v9072 = vpack.c.b16 %v8384, %v8376
    %v9073 = vpack.c.b16 %v8385, %v8377
    %v9074 = vpack.c.b16 %v8386, %v8378
    %v9075 = vpack.c.b16 %v8387, %v8379
    %v9076 = vpack.c.b16 %v8388, %v8380
    %v9077 = vpack.c.b16 %v8389, %v8381
    %v9078 = vpack.c.b16 %v8398, %v8390
    %v9079 = vpack.c.b16 %v8399, %v8391
    %v9080 = vpack.c.b16 %v8400, %v8392
    %v9081 = vpack.c.b16 %v8401, %v8393
    %v9082 = vpack.c.b16 %v8402, %v8394
    %v9083 = vpack.c.b16 %v8403, %v8395
    %v9084 = vpack.c.b16 %v8404, %v8396
    %v9085 = vpack.c.b16 %v8405, %v8397
    %v9086 = vpack.c.b16 %v8414, %v8406
    %v9087 = vpack.c.b16 %v8415, %v8407
    %v9088 = vpack.c.b16 %v8416, %v8408
    %v9089 = vpack.c.b16 %v8417, %v8409
    %v9090 = vpack.c.b16 %v8418, %v8410
    %v9091 = vpack.c.b16 %v8419, %v8411
    %v9092 = vpack.c.b16 %v8420, %v8412
    %v9093 = vpack.c.b16 %v8421, %v8413
    %v9094 = vpack.c.b16 %v8430, %v8422
    %v9095 = vpack.c.b16 %v8431, %v8423
    %v9096 = vpack.c.b16 %v8432, %v8424
    %v9097 = vpack.c.b16 %v8433, %v8425
    %v9098 = vpack.c.b16 %v8434, %v8426
    %v9099 = vpack.c.b16 %v8435, %v8427
    %v9100 = vpack.c.b16 %v8436, %v8428
    %v9101 = vpack.c.b16 %v8437, %v8429
    %v9102 = vpack.c.b16 %v8446, %v8438
    %v9103 = vpack.c.b16 %v8447, %v8439
    %v9104 = vpack.c.b16 %v8448, %v8440
    %v9105 = vpack.c.b16 %v8449, %v8441
    %v9106 = vpack.c.b16 %v8450, %v8442
    %v9107 = vpack.c.b16 %v8451, %v8443
    %v9108 = vpack.c.b16 %v8452, %v8444
    %v9109 = vpack.c.b16 %v8453, %v8445
    %v9110 = vpack.c.b16 %v8462, %v8454
    %v9111 = vpack.c.b16 %v8463, %v8455
    %v9112 = vpack.c.b16 %v8464, %v8456
    %v9113 = vpack.c.b16 %v8465, %v8457
    %v9114 = vpack.c.b16 %v8466, %v8458
    %v9115 = vpack.c.b16 %v8467, %v8459
    %v9116 = vpack.c.b16 %v8468, %v8460
    %v9117 = vpack.c.b16 %v8469, %v8461
    %v9118 = vpack.c.b16 %v8478, %v8470
    %v9119 = vpack.c.b16 %v8479, %v8471
    %v9120 = vpack.c.b16 %v8480, %v8472
    %v9121 = vpack.c.b16 %v8481, %v8473
    %v9122 = vpack.c.b16 %v8482, %v8474
    %v9123 = vpack.c.b16 %v8483, %v8475
    %v9124 = vpack.c.b16 %v8484, %v8476
    %v9125 = vpack.c.b16 %v8485, %v8477
    %v9126 = vpack.c.b16 %v8494, %v8486
    %v9127 = vpack.c.b16 %v8495, %v8487
    %v9128 = vpack.c.b16 %v8496, %v8488
    %v9129 = vpack.c.b16 %v8497, %v8489
    %v9130 = vpack.c.b16 %v8498, %v8490
    %v9131 = vpack.c.b16 %v8499, %v8491
    %v9132 = vpack.c.b16 %v8500, %v8492
    %v9133 = vpack.c.b16 %v8501, %v8493
    %v9134 = vpack.c.b16 %v8510, %v8502
    %v9135 = vpack.c.b16 %v8511, %v8503
    %v9136 = vpack.c.b16 %v8512, %v8504
    %v9137 = vpack.c.b16 %v8513, %v8505
    %v9138 = vpack.c.b16 %v8514, %v8506
    %v9139 = vpack.c.b16 %v8515, %v8507
    %v9140 = vpack.c.b16 %v8516, %v8508
    %v9141 = vpack.c.b16 %v8517, %v8509
    %v9142 = vpack.c.b16 %v8526, %v8518
    %v9143 = vpack.c.b16 %v8527, %v8519
    %v9144 = vpack.c.b16 %v8528, %v8520
    %v9145 = vpack.c.b16 %v8529, %v8521
    %v9146 = vpack.c.b16 %v8530, %v8522
    %v9147 = vpack.c.b16 %v8531, %v8523
    %v9148 = vpack.c.b16 %v8532, %v8524
    %v9149 = vpack.c.b16 %v8533, %v8525
    %v9150 = vpack.c.b16 %v8542, %v8534
    %v9151 = vpack.c.b16 %v8543, %v8535
    %v9152 = vpack.c.b16 %v8544, %v8536
    %v9153 = vpack.c.b16 %v8545, %v8537
    %v9154 = vpack.c.b16 %v8546, %v8538
    %v9155 = vpack.c.b16 %v8547, %v8539
    %v9156 = vpack.c.b16 %v8548, %v8540
    %v9157 = vpack.c.b16 %v8549, %v8541
    %v9158 = vpack.c.b16 %v8558, %v8550
    %v9159 = vpack.c.b16 %v8559, %v8551
    %v9160 = vpack.c.b16 %v8560, %v8552
    %v9161 = vpack.c.b16 %v8561, %v8553
    %v9162 = vpack.c.b16 %v8562, %v8554
    %v9163 = vpack.c.b16 %v8563, %v8555
    %v9164 = vpack.c.b16 %v8564, %v8556
    %v9165 = vpack.c.b16 %v8565, %v8557
    %v9166 = vpack.c.b16 %v8574, %v8566
    %v9167 = vpack.c.b16 %v8575, %v8567
    %v9168 = vpack.c.b16 %v8576, %v8568
    %v9169 = vpack.c.b16 %v8577, %v8569
    %v9170 = vpack.c.b16 %v8578, %v8570
    %v9171 = vpack.c.b16 %v8579, %v8571
    %v9172 = vpack.c.b16 %v8580, %v8572
    %v9173 = vpack.c.b16 %v8581, %v8573
    %v9174 = vpack.c.b16 %v8590, %v8582
    %v9175 = vpack.c.b16 %v8591, %v8583
    %v9176 = vpack.c.b16 %v8592, %v8584
    %v9177 = vpack.c.b16 %v8593, %v8585
    %v9178 = vpack.c.b16 %v8594, %v8586
    %v9179 = vpack.c.b16 %v8595, %v8587
    %v9180 = vpack.c.b16 %v8596, %v8588
    %v9181 = vpack.c.b16 %v8597, %v8589
    %v9182 = vpack.c.b16 %v8606, %v8598
    %v9183 = vpack.c.b16 %v8607, %v8599
    %v9184 = vpack.c.b16 %v8608, %v8600
    %v9185 = vpack.c.b16 %v8609, %v8601
    %v9186 = vpack.c.b16 %v8610, %v8602
    %v9187 = vpack.c.b16 %v8611, %v8603
    %v9188 = vpack.c.b16 %v8612, %v8604
    %v9189 = vpack.c.b16 %v8613, %v8605
    %v9190 = vpack.c.b16 %v8622, %v8614
    %v9191 = vpack.c.b16 %v8623, %v8615
    %v9192 = vpack.c.b16 %v8624, %v8616
    %v9193 = vpack.c.b16 %v8625, %v8617
    %v9194 = vpack.c.b16 %v8626, %v8618
    %v9195 = vpack.c.b16 %v8627, %v8619
    %v9196 = vpack.c.b16 %v8628, %v8620
    %v9197 = vpack.c.b16 %v8629, %v8621
    %v9198 = vpack.c.b16 %v8638, %v8630
    %v9199 = vpack.c.b16 %v8639, %v8631
    %v9200 = vpack.c.b16 %v8640, %v8632
    %v9201 = vpack.c.b16 %v8641, %v8633
    %v9202 = vpack.c.b16 %v8642, %v8634
    %v9203 = vpack.c.b16 %v8643, %v8635
    %v9204 = vpack.c.b16 %v8644, %v8636
    %v9205 = vpack.c.b16 %v8645, %v8637
    %v9206 = vpack.c.b16 %v8654, %v8646
    %v9207 = vpack.c.b16 %v8655, %v8647
    %v9208 = vpack.c.b16 %v8656, %v8648
    %v9209 = vpack.c.b16 %v8657, %v8649
    %v9210 = vpack.c.b16 %v8658, %v8650
    %v9211 = vpack.c.b16 %v8659, %v8651
    %v9212 = vpack.c.b16 %v8660, %v8652
    %v9213 = vpack.c.b16 %v8661, %v8653
    %v9214 = vpack.c.b16 %v8670, %v8662
    %v9215 = vpack.c.b16 %v8671, %v8663
    %v9216 = vpack.c.b16 %v8672, %v8664
    %v9217 = vpack.c.b16 %v8673, %v8665
    %v9218 = vpack.c.b16 %v8674, %v8666
    %v9219 = vpack.c.b16 %v8675, %v8667
    %v9220 = vpack.c.b16 %v8676, %v8668
    %v9221 = vpack.c.b16 %v8677, %v8669
    %v9222 = vpack.c.b16 %v8686, %v8678
    %v9223 = vpack.c.b16 %v8687, %v8679
    %v9224 = vpack.c.b16 %v8688, %v8680
    %v9225 = vpack.c.b16 %v8689, %v8681
    %v9226 = vpack.c.b16 %v8690, %v8682
    %v9227 = vpack.c.b16 %v8691, %v8683
    %v9228 = vpack.c.b16 %v8692, %v8684
    %v9229 = vpack.c.b16 %v8693, %v8685
    %v9230 = vpack.c.b16 %v8702, %v8694
    %v9231 = vpack.c.b16 %v8703, %v8695
    %v9232 = vpack.c.b16 %v8704, %v8696
    %v9233 = vpack.c.b16 %v8705, %v8697
    %v9234 = vpack.c.b16 %v8706, %v8698
    %v9235 = vpack.c.b16 %v8707, %v8699
    %v9236 = vpack.c.b16 %v8708, %v8700
    %v9237 = vpack.c.b16 %v8709, %v8701
    %v9238 = vpack.c.b16 %v8718, %v8710
    %v9239 = vpack.c.b16 %v8719, %v8711
    %v9240 = vpack.c.b16 %v8720, %v8712
    %v9241 = vpack.c.b16 %v8721, %v8713
    %v9242 = vpack.c.b16 %v8722, %v8714
    %v9243 = vpack.c.b16 %v8723, %v8715
    %v9244 = vpack.c.b16 %v8724, %v8716
    %v9245 = vpack.c.b16 %v8725, %v8717
    %v9246 = vpack.c.b16 %v8734, %v8726
    %v9247 = vpack.c.b16 %v8735, %v8727
    %v9248 = vpack.c.b16 %v8736, %v8728
    %v9249 = vpack.c.b16 %v8737, %v8729
    %v9250 = vpack.c.b16 %v8738, %v8730
    %v9251 = vpack.c.b16 %v8739, %v8731
    %v9252 = vpack.c.b16 %v8740, %v8732
    %v9253 = vpack.c.b16 %v8741, %v8733
    %9766 = vmatprep.subr.bf16.mxu0 %v8799
    %9767 = vmatpush1.bf16.msra.mxu0 %v8798
    %9768 = vmatprep.subr.bf16.mxu0 %v8791
    %9769 = vmatpush1.bf16.msra.mxu0 %v8790
    %9770 = vmatprep.subr.bf16.mxu0 %v8783
    %9771 = vmatpush1.bf16.msra.mxu0 %v8782
    %9772 = vmatprep.subr.bf16.mxu0 %v8775
    %9773 = vmatpush1.bf16.msra.mxu0 %v8774
    %9774 = vmatprep.subr.bf16.mxu0 %v8767
    %9775 = vmatpush1.bf16.msra.mxu0 %v8766
    %9776 = vmatprep.subr.bf16.mxu0 %v8759
    %9777 = vmatpush1.bf16.msra.mxu0 %v8758
    %9778 = vmatprep.subr.bf16.mxu0 %v8751
    %9779 = vmatpush1.bf16.msra.mxu0 %v8750
    %9780 = vmatprep.subr.bf16.mxu0 %v8743
    %9781 = vmatpush1.bf16.msra.mxu0 %v8742
    %9782 = vmatprep.subr.bf16.mxu0 %v8863
    %9783 = vmatpush2.bf16.msra.mxu0 %v8862
    %9784 = vmatprep.subr.bf16.mxu0 %v8855
    %9785 = vmatpush2.bf16.msra.mxu0 %v8854
    %9786 = vmatprep.subr.bf16.mxu0 %v8847
    %9787 = vmatpush2.bf16.msra.mxu0 %v8846
    %9788 = vmatprep.subr.bf16.mxu0 %v8839
    %9789 = vmatpush2.bf16.msra.mxu0 %v8838
    %9790 = vmatprep.subr.bf16.mxu0 %v8831
    %9791 = vmatpush2.bf16.msra.mxu0 %v8830
    %9792 = vmatprep.subr.bf16.mxu0 %v8823
    %9793 = vmatpush2.bf16.msra.mxu0 %v8822
    %9794 = vmatprep.subr.bf16.mxu0 %v8815
    %9795 = vmatpush2.bf16.msra.mxu0 %v8814
    %9796 = vmatprep.subr.bf16.mxu0 %v8807
    %9797 = vmatpush2.bf16.msra.mxu0 %v8806
    %9798 = vmatprep.mubr.bf16.mxu0 %v7127
    %9799 = vmatmul.mubr.bf16.gmra.mxu0 %v7126
    %v9800 = vpop.f32.mrf.mxu0
    %v9801 = vadd.f32 %v7177, %v9800
    %v9802 = vpop.f32.mrf.mxu0
    %v9803 = vadd.f32 %v7181, %v9802
    %v9804 = vpop.f32.mrf.mxu0
    %v9805 = vpop.f32.mrf.mxu0
    %9806 = vdwg.mxu0
    %9807 = vmatprep.subr.bf16.mxu0 %v8927
    %9808 = vmatpush1.bf16.msra.mxu0 %v8926
    %9809 = vmatprep.subr.bf16.mxu0 %v8919
    %9810 = vmatpush1.bf16.msra.mxu0 %v8918
    %9811 = vmatprep.subr.bf16.mxu0 %v8911
    %9812 = vmatpush1.bf16.msra.mxu0 %v8910
    %9813 = vmatprep.subr.bf16.mxu0 %v8903
    %9814 = vmatpush1.bf16.msra.mxu0 %v8902
    %9815 = vmatprep.subr.bf16.mxu0 %v8895
    %9816 = vmatpush1.bf16.msra.mxu0 %v8894
    %9817 = vmatprep.subr.bf16.mxu0 %v8887
    %9818 = vmatpush1.bf16.msra.mxu0 %v8886
    %9819 = vmatprep.subr.bf16.mxu0 %v8879
    %9820 = vmatpush1.bf16.msra.mxu0 %v8878
    %9821 = vmatprep.subr.bf16.mxu0 %v8871
    %9822 = vmatpush1.bf16.msra.mxu0 %v8870
    %9823 = vmatprep.subr.bf16.mxu0 %v8991
    %9824 = vmatpush2.bf16.msra.mxu0 %v8990
    %9825 = vmatprep.subr.bf16.mxu0 %v8983
    %9826 = vmatpush2.bf16.msra.mxu0 %v8982
    %9827 = vmatprep.subr.bf16.mxu0 %v8975
    %9828 = vmatpush2.bf16.msra.mxu0 %v8974
    %9829 = vmatprep.subr.bf16.mxu0 %v8967
    %9830 = vmatpush2.bf16.msra.mxu0 %v8966
    %9831 = vmatprep.subr.bf16.mxu0 %v8959
    %9832 = vmatpush2.bf16.msra.mxu0 %v8958
    %9833 = vmatprep.subr.bf16.mxu0 %v8951
    %9834 = vmatpush2.bf16.msra.mxu0 %v8950
    %9835 = vmatprep.subr.bf16.mxu0 %v8943
    %9836 = vmatpush2.bf16.msra.mxu0 %v8942
    %9837 = vmatprep.subr.bf16.mxu0 %v8935
    %9838 = vmatpush2.bf16.msra.mxu0 %v8934
    %9839 = vmatprep.mubr.bf16.mxu0 %v7129
    %9840 = vmatmul.mubr.bf16.gmra.mxu0 %v7128
    %v9841 = vpop.f32.mrf.mxu0
    %v9842 = vadd.f32 %v9801, %v9841
    %v9843 = vpop.f32.mrf.mxu0
    %v9844 = vadd.f32 %v9803, %v9843
    %v9845 = vpop.f32.mrf.mxu0
    %v9846 = vpop.f32.mrf.mxu0
    %9847 = vdwg.mxu0
    %9848 = vmatprep.subr.bf16.mxu0 %v9055
    %9849 = vmatpush1.bf16.msra.mxu0 %v9054
    %9850 = vmatprep.subr.bf16.mxu0 %v9047
    %9851 = vmatpush1.bf16.msra.mxu0 %v9046
    %9852 = vmatprep.subr.bf16.mxu0 %v9039
    %9853 = vmatpush1.bf16.msra.mxu0 %v9038
    %9854 = vmatprep.subr.bf16.mxu0 %v9031
    %9855 = vmatpush1.bf16.msra.mxu0 %v9030
    %9856 = vmatprep.subr.bf16.mxu0 %v9023
    %9857 = vmatpush1.bf16.msra.mxu0 %v9022
    %9858 = vmatprep.subr.bf16.mxu0 %v9015
    %9859 = vmatpush1.bf16.msra.mxu0 %v9014
    %9860 = vmatprep.subr.bf16.mxu0 %v9007
    %9861 = vmatpush1.bf16.msra.mxu0 %v9006
    %9862 = vmatprep.subr.bf16.mxu0 %v8999
    %9863 = vmatpush1.bf16.msra.mxu0 %v8998
    %9864 = vmatprep.subr.bf16.mxu0 %v9119
    %9865 = vmatpush2.bf16.msra.mxu0 %v9118
    %9866 = vmatprep.subr.bf16.mxu0 %v9111
    %9867 = vmatpush2.bf16.msra.mxu0 %v9110
    %9868 = vmatprep.subr.bf16.mxu0 %v9103
    %9869 = vmatpush2.bf16.msra.mxu0 %v9102
    %9870 = vmatprep.subr.bf16.mxu0 %v9095
    %9871 = vmatpush2.bf16.msra.mxu0 %v9094
    %9872 = vmatprep.subr.bf16.mxu0 %v9087
    %9873 = vmatpush2.bf16.msra.mxu0 %v9086
    %9874 = vmatprep.subr.bf16.mxu0 %v9079
    %9875 = vmatpush2.bf16.msra.mxu0 %v9078
    %9876 = vmatprep.subr.bf16.mxu0 %v9071
    %9877 = vmatpush2.bf16.msra.mxu0 %v9070
    %9878 = vmatprep.subr.bf16.mxu0 %v9063
    %9879 = vmatpush2.bf16.msra.mxu0 %v9062
    %9880 = vmatprep.mubr.bf16.mxu0 %v7131
    %9881 = vmatmul.mubr.bf16.gmra.mxu0 %v7130
    %v9882 = vpop.f32.mrf.mxu0
    %v9883 = vadd.f32 %v9842, %v9882
    %v9884 = vpop.f32.mrf.mxu0
    %v9885 = vadd.f32 %v9844, %v9884
    %v9886 = vpop.f32.mrf.mxu0
    %v9887 = vpop.f32.mrf.mxu0
    %9888 = vdwg.mxu0
    %9889 = vmatprep.subr.bf16.mxu0 %v9183
    %9890 = vmatpush1.bf16.msra.mxu0 %v9182
    %9891 = vmatprep.subr.bf16.mxu0 %v9175
    %9892 = vmatpush1.bf16.msra.mxu0 %v9174
    %9893 = vmatprep.subr.bf16.mxu0 %v9167
    %9894 = vmatpush1.bf16.msra.mxu0 %v9166
    %9895 = vmatprep.subr.bf16.mxu0 %v9159
    %9896 = vmatpush1.bf16.msra.mxu0 %v9158
    %9897 = vmatprep.subr.bf16.mxu0 %v9151
    %9898 = vmatpush1.bf16.msra.mxu0 %v9150
    %9899 = vmatprep.subr.bf16.mxu0 %v9143
    %9900 = vmatpush1.bf16.msra.mxu0 %v9142
    %9901 = vmatprep.subr.bf16.mxu0 %v9135
    %9902 = vmatpush1.bf16.msra.mxu0 %v9134
    %9903 = vmatprep.subr.bf16.mxu0 %v9127
    %9904 = vmatpush1.bf16.msra.mxu0 %v9126
    %9905 = vmatprep.subr.bf16.mxu0 %v9247
    %9906 = vmatpush2.bf16.msra.mxu0 %v9246
    %9907 = vmatprep.subr.bf16.mxu0 %v9239
    %9908 = vmatpush2.bf16.msra.mxu0 %v9238
    %9909 = vmatprep.subr.bf16.mxu0 %v9231
    %9910 = vmatpush2.bf16.msra.mxu0 %v9230
    %9911 = vmatprep.subr.bf16.mxu0 %v9223
    %9912 = vmatpush2.bf16.msra.mxu0 %v9222
    %9913 = vmatprep.subr.bf16.mxu0 %v9215
    %9914 = vmatpush2.bf16.msra.mxu0 %v9214
    %9915 = vmatprep.subr.bf16.mxu0 %v9207
    %9916 = vmatpush2.bf16.msra.mxu0 %v9206
    %9917 = vmatprep.subr.bf16.mxu0 %v9199
    %9918 = vmatpush2.bf16.msra.mxu0 %v9198
    %9919 = vmatprep.subr.bf16.mxu0 %v9191
    %9920 = vmatpush2.bf16.msra.mxu0 %v9190
    %9921 = vmatprep.mubr.bf16.mxu0 %v7133
    %9922 = vmatmul.mubr.bf16.gmra.mxu0 %v7132
    %v9923 = vpop.f32.mrf.mxu0
    %v9924 = vadd.f32 %v9883, %v9923
    %v9925 = vpop.f32.mrf.mxu0
    %v9926 = vadd.f32 %v9885, %v9925
    %v9927 = vpop.f32.mrf.mxu0
    %v9928 = vpop.f32.mrf.mxu0
    %9929 = vdwg.mxu0
    %9930 = vmatprep.subr.bf16.mxu0 %v8801
    %9931 = vmatpush1.bf16.msra.mxu0 %v8800
    %9932 = vmatprep.subr.bf16.mxu0 %v8793
    %9933 = vmatpush1.bf16.msra.mxu0 %v8792
    %9934 = vmatprep.subr.bf16.mxu0 %v8785
    %9935 = vmatpush1.bf16.msra.mxu0 %v8784
    %9936 = vmatprep.subr.bf16.mxu0 %v8777
    %9937 = vmatpush1.bf16.msra.mxu0 %v8776
    %9938 = vmatprep.subr.bf16.mxu0 %v8769
    %9939 = vmatpush1.bf16.msra.mxu0 %v8768
    %9940 = vmatprep.subr.bf16.mxu0 %v8761
    %9941 = vmatpush1.bf16.msra.mxu0 %v8760
    %9942 = vmatprep.subr.bf16.mxu0 %v8753
    %9943 = vmatpush1.bf16.msra.mxu0 %v8752
    %9944 = vmatprep.subr.bf16.mxu0 %v8745
    %9945 = vmatpush1.bf16.msra.mxu0 %v8744
    %9946 = vmatprep.subr.bf16.mxu0 %v8865
    %9947 = vmatpush2.bf16.msra.mxu0 %v8864
    %9948 = vmatprep.subr.bf16.mxu0 %v8857
    %9949 = vmatpush2.bf16.msra.mxu0 %v8856
    %9950 = vmatprep.subr.bf16.mxu0 %v8849
    %9951 = vmatpush2.bf16.msra.mxu0 %v8848
    %9952 = vmatprep.subr.bf16.mxu0 %v8841
    %9953 = vmatpush2.bf16.msra.mxu0 %v8840
    %9954 = vmatprep.subr.bf16.mxu0 %v8833
    %9955 = vmatpush2.bf16.msra.mxu0 %v8832
    %9956 = vmatprep.subr.bf16.mxu0 %v8825
    %9957 = vmatpush2.bf16.msra.mxu0 %v8824
    %9958 = vmatprep.subr.bf16.mxu0 %v8817
    %9959 = vmatpush2.bf16.msra.mxu0 %v8816
    %9960 = vmatprep.subr.bf16.mxu0 %v8809
    %9961 = vmatpush2.bf16.msra.mxu0 %v8808
    %9962 = vmatprep.mubr.bf16.mxu0 %v7127
    %9963 = vmatmul.mubr.bf16.gmra.mxu0 %v7126
    %v9964 = vpop.f32.mrf.mxu0
    %v9965 = vadd.f32 %v7185, %v9964
    %v9966 = vpop.f32.mrf.mxu0
    %v9967 = vadd.f32 %v7189, %v9966
    %v9968 = vpop.f32.mrf.mxu0
    %v9969 = vpop.f32.mrf.mxu0
    %9970 = vdwg.mxu0
    %9971 = vmatprep.subr.bf16.mxu0 %v8929
    %9972 = vmatpush1.bf16.msra.mxu0 %v8928
    %9973 = vmatprep.subr.bf16.mxu0 %v8921
    %9974 = vmatpush1.bf16.msra.mxu0 %v8920
    %9975 = vmatprep.subr.bf16.mxu0 %v8913
    %9976 = vmatpush1.bf16.msra.mxu0 %v8912
    %9977 = vmatprep.subr.bf16.mxu0 %v8905
    %9978 = vmatpush1.bf16.msra.mxu0 %v8904
    %9979 = vmatprep.subr.bf16.mxu0 %v8897
    %9980 = vmatpush1.bf16.msra.mxu0 %v8896
    %9981 = vmatprep.subr.bf16.mxu0 %v8889
    %9982 = vmatpush1.bf16.msra.mxu0 %v8888
    %9983 = vmatprep.subr.bf16.mxu0 %v8881
    %9984 = vmatpush1.bf16.msra.mxu0 %v8880
    %9985 = vmatprep.subr.bf16.mxu0 %v8873
    %9986 = vmatpush1.bf16.msra.mxu0 %v8872
    %9987 = vmatprep.subr.bf16.mxu0 %v8993
    %9988 = vmatpush2.bf16.msra.mxu0 %v8992
    %9989 = vmatprep.subr.bf16.mxu0 %v8985
    %9990 = vmatpush2.bf16.msra.mxu0 %v8984
    %9991 = vmatprep.subr.bf16.mxu0 %v8977
    %9992 = vmatpush2.bf16.msra.mxu0 %v8976
    %9993 = vmatprep.subr.bf16.mxu0 %v8969
    %9994 = vmatpush2.bf16.msra.mxu0 %v8968
    %9995 = vmatprep.subr.bf16.mxu0 %v8961
    %9996 = vmatpush2.bf16.msra.mxu0 %v8960
    %9997 = vmatprep.subr.bf16.mxu0 %v8953
    %9998 = vmatpush2.bf16.msra.mxu0 %v8952
    %9999 = vmatprep.subr.bf16.mxu0 %v8945
    %10000 = vmatpush2.bf16.msra.mxu0 %v8944
    %10001 = vmatprep.subr.bf16.mxu0 %v8937
    %10002 = vmatpush2.bf16.msra.mxu0 %v8936
    %10003 = vmatprep.mubr.bf16.mxu0 %v7129
    %10004 = vmatmul.mubr.bf16.gmra.mxu0 %v7128
    %v10005 = vpop.f32.mrf.mxu0
    %v10006 = vadd.f32 %v9965, %v10005
    %v10007 = vpop.f32.mrf.mxu0
    %v10008 = vadd.f32 %v9967, %v10007
    %v10009 = vpop.f32.mrf.mxu0
    %v10010 = vpop.f32.mrf.mxu0
    %10011 = vdwg.mxu0
    %10012 = vmatprep.subr.bf16.mxu0 %v9057
    %10013 = vmatpush1.bf16.msra.mxu0 %v9056
    %10014 = vmatprep.subr.bf16.mxu0 %v9049
    %10015 = vmatpush1.bf16.msra.mxu0 %v9048
    %10016 = vmatprep.subr.bf16.mxu0 %v9041
    %10017 = vmatpush1.bf16.msra.mxu0 %v9040
    %10018 = vmatprep.subr.bf16.mxu0 %v9033
    %10019 = vmatpush1.bf16.msra.mxu0 %v9032
    %10020 = vmatprep.subr.bf16.mxu0 %v9025
    %10021 = vmatpush1.bf16.msra.mxu0 %v9024
    %10022 = vmatprep.subr.bf16.mxu0 %v9017
    %10023 = vmatpush1.bf16.msra.mxu0 %v9016
    %10024 = vmatprep.subr.bf16.mxu0 %v9009
    %10025 = vmatpush1.bf16.msra.mxu0 %v9008
    %10026 = vmatprep.subr.bf16.mxu0 %v9001
    %10027 = vmatpush1.bf16.msra.mxu0 %v9000
    %10028 = vmatprep.subr.bf16.mxu0 %v9121
    %10029 = vmatpush2.bf16.msra.mxu0 %v9120
    %10030 = vmatprep.subr.bf16.mxu0 %v9113
    %10031 = vmatpush2.bf16.msra.mxu0 %v9112
    %10032 = vmatprep.subr.bf16.mxu0 %v9105
    %10033 = vmatpush2.bf16.msra.mxu0 %v9104
    %10034 = vmatprep.subr.bf16.mxu0 %v9097
    %10035 = vmatpush2.bf16.msra.mxu0 %v9096
    %10036 = vmatprep.subr.bf16.mxu0 %v9089
    %10037 = vmatpush2.bf16.msra.mxu0 %v9088
    %10038 = vmatprep.subr.bf16.mxu0 %v9081
    %10039 = vmatpush2.bf16.msra.mxu0 %v9080
    %10040 = vmatprep.subr.bf16.mxu0 %v9073
    %10041 = vmatpush2.bf16.msra.mxu0 %v9072
    %10042 = vmatprep.subr.bf16.mxu0 %v9065
    %10043 = vmatpush2.bf16.msra.mxu0 %v9064
    %10044 = vmatprep.mubr.bf16.mxu0 %v7131
    %10045 = vmatmul.mubr.bf16.gmra.mxu0 %v7130
    %v10046 = vpop.f32.mrf.mxu0
    %v10047 = vadd.f32 %v10006, %v10046
    %v10048 = vpop.f32.mrf.mxu0
    %v10049 = vadd.f32 %v10008, %v10048
    %v10050 = vpop.f32.mrf.mxu0
    %v10051 = vpop.f32.mrf.mxu0
    %10052 = vdwg.mxu0
    %10053 = vmatprep.subr.bf16.mxu0 %v9185
    %10054 = vmatpush1.bf16.msra.mxu0 %v9184
    %10055 = vmatprep.subr.bf16.mxu0 %v9177
    %10056 = vmatpush1.bf16.msra.mxu0 %v9176
    %10057 = vmatprep.subr.bf16.mxu0 %v9169
    %10058 = vmatpush1.bf16.msra.mxu0 %v9168
    %10059 = vmatprep.subr.bf16.mxu0 %v9161
    %10060 = vmatpush1.bf16.msra.mxu0 %v9160
    %10061 = vmatprep.subr.bf16.mxu0 %v9153
    %10062 = vmatpush1.bf16.msra.mxu0 %v9152
    %10063 = vmatprep.subr.bf16.mxu0 %v9145
    %10064 = vmatpush1.bf16.msra.mxu0 %v9144
    %10065 = vmatprep.subr.bf16.mxu0 %v9137
    %10066 = vmatpush1.bf16.msra.mxu0 %v9136
    %10067 = vmatprep.subr.bf16.mxu0 %v9129
    %10068 = vmatpush1.bf16.msra.mxu0 %v9128
    %10069 = vmatprep.subr.bf16.mxu0 %v9249
    %10070 = vmatpush2.bf16.msra.mxu0 %v9248
    %10071 = vmatprep.subr.bf16.mxu0 %v9241
    %10072 = vmatpush2.bf16.msra.mxu0 %v9240
    %10073 = vmatprep.subr.bf16.mxu0 %v9233
    %10074 = vmatpush2.bf16.msra.mxu0 %v9232
    %10075 = vmatprep.subr.bf16.mxu0 %v9225
    %10076 = vmatpush2.bf16.msra.mxu0 %v9224
    %10077 = vmatprep.subr.bf16.mxu0 %v9217
    %10078 = vmatpush2.bf16.msra.mxu0 %v9216
    %10079 = vmatprep.subr.bf16.mxu0 %v9209
    %10080 = vmatpush2.bf16.msra.mxu0 %v9208
    %10081 = vmatprep.subr.bf16.mxu0 %v9201
    %10082 = vmatpush2.bf16.msra.mxu0 %v9200
    %10083 = vmatprep.subr.bf16.mxu0 %v9193
    %10084 = vmatpush2.bf16.msra.mxu0 %v9192
    %10085 = vmatprep.mubr.bf16.mxu0 %v7133
    %10086 = vmatmul.mubr.bf16.gmra.mxu0 %v7132
    %v10087 = vpop.f32.mrf.mxu0
    %v10088 = vadd.f32 %v10047, %v10087
    %v10089 = vpop.f32.mrf.mxu0
    %v10090 = vadd.f32 %v10049, %v10089
    %v10091 = vpop.f32.mrf.mxu0
    %v10092 = vpop.f32.mrf.mxu0
    %10093 = vdwg.mxu0
    %10094 = vmatprep.subr.bf16.mxu0 %v8803
    %10095 = vmatpush1.bf16.msra.mxu0 %v8802
    %10096 = vmatprep.subr.bf16.mxu0 %v8795
    %10097 = vmatpush1.bf16.msra.mxu0 %v8794
    %10098 = vmatprep.subr.bf16.mxu0 %v8787
    %10099 = vmatpush1.bf16.msra.mxu0 %v8786
    %10100 = vmatprep.subr.bf16.mxu0 %v8779
    %10101 = vmatpush1.bf16.msra.mxu0 %v8778
    %10102 = vmatprep.subr.bf16.mxu0 %v8771
    %10103 = vmatpush1.bf16.msra.mxu0 %v8770
    %10104 = vmatprep.subr.bf16.mxu0 %v8763
    %10105 = vmatpush1.bf16.msra.mxu0 %v8762
    %10106 = vmatprep.subr.bf16.mxu0 %v8755
    %10107 = vmatpush1.bf16.msra.mxu0 %v8754
    %10108 = vmatprep.subr.bf16.mxu0 %v8747
    %10109 = vmatpush1.bf16.msra.mxu0 %v8746
    %10110 = vmatprep.subr.bf16.mxu0 %v8867
    %10111 = vmatpush2.bf16.msra.mxu0 %v8866
    %10112 = vmatprep.subr.bf16.mxu0 %v8859
    %10113 = vmatpush2.bf16.msra.mxu0 %v8858
    %10114 = vmatprep.subr.bf16.mxu0 %v8851
    %10115 = vmatpush2.bf16.msra.mxu0 %v8850
    %10116 = vmatprep.subr.bf16.mxu0 %v8843
    %10117 = vmatpush2.bf16.msra.mxu0 %v8842
    %10118 = vmatprep.subr.bf16.mxu0 %v8835
    %10119 = vmatpush2.bf16.msra.mxu0 %v8834
    %10120 = vmatprep.subr.bf16.mxu0 %v8827
    %10121 = vmatpush2.bf16.msra.mxu0 %v8826
    %10122 = vmatprep.subr.bf16.mxu0 %v8819
    %10123 = vmatpush2.bf16.msra.mxu0 %v8818
    %10124 = vmatprep.subr.bf16.mxu0 %v8811
    %10125 = vmatpush2.bf16.msra.mxu0 %v8810
    %10126 = vmatprep.mubr.bf16.mxu0 %v7127
    %10127 = vmatmul.mubr.bf16.gmra.mxu0 %v7126
    %v10128 = vpop.f32.mrf.mxu0
    %v10129 = vadd.f32 %v7193, %v10128
    %v10130 = vpop.f32.mrf.mxu0
    %v10131 = vadd.f32 %v7197, %v10130
    %v10132 = vpop.f32.mrf.mxu0
    %v10133 = vpop.f32.mrf.mxu0
    %10134 = vdwg.mxu0
    %10135 = vmatprep.subr.bf16.mxu0 %v8931
    %10136 = vmatpush1.bf16.msra.mxu0 %v8930
    %10137 = vmatprep.subr.bf16.mxu0 %v8923
    %10138 = vmatpush1.bf16.msra.mxu0 %v8922
    %10139 = vmatprep.subr.bf16.mxu0 %v8915
    %10140 = vmatpush1.bf16.msra.mxu0 %v8914
    %10141 = vmatprep.subr.bf16.mxu0 %v8907
    %10142 = vmatpush1.bf16.msra.mxu0 %v8906
    %10143 = vmatprep.subr.bf16.mxu0 %v8899
    %10144 = vmatpush1.bf16.msra.mxu0 %v8898
    %10145 = vmatprep.subr.bf16.mxu0 %v8891
    %10146 = vmatpush1.bf16.msra.mxu0 %v8890
    %10147 = vmatprep.subr.bf16.mxu0 %v8883
    %10148 = vmatpush1.bf16.msra.mxu0 %v8882
    %10149 = vmatprep.subr.bf16.mxu0 %v8875
    %10150 = vmatpush1.bf16.msra.mxu0 %v8874
    %10151 = vmatprep.subr.bf16.mxu0 %v8995
    %10152 = vmatpush2.bf16.msra.mxu0 %v8994
    %10153 = vmatprep.subr.bf16.mxu0 %v8987
    %10154 = vmatpush2.bf16.msra.mxu0 %v8986
    %10155 = vmatprep.subr.bf16.mxu0 %v8979
    %10156 = vmatpush2.bf16.msra.mxu0 %v8978
    %10157 = vmatprep.subr.bf16.mxu0 %v8971
    %10158 = vmatpush2.bf16.msra.mxu0 %v8970
    %10159 = vmatprep.subr.bf16.mxu0 %v8963
    %10160 = vmatpush2.bf16.msra.mxu0 %v8962
    %10161 = vmatprep.subr.bf16.mxu0 %v8955
    %10162 = vmatpush2.bf16.msra.mxu0 %v8954
    %10163 = vmatprep.subr.bf16.mxu0 %v8947
    %10164 = vmatpush2.bf16.msra.mxu0 %v8946
    %10165 = vmatprep.subr.bf16.mxu0 %v8939
    %10166 = vmatpush2.bf16.msra.mxu0 %v8938
    %10167 = vmatprep.mubr.bf16.mxu0 %v7129
    %10168 = vmatmul.mubr.bf16.gmra.mxu0 %v7128
    %v10169 = vpop.f32.mrf.mxu0
    %v10170 = vadd.f32 %v10129, %v10169
    %v10171 = vpop.f32.mrf.mxu0
    %v10172 = vadd.f32 %v10131, %v10171
    %v10173 = vpop.f32.mrf.mxu0
    %v10174 = vpop.f32.mrf.mxu0
    %10175 = vdwg.mxu0
    %10176 = vmatprep.subr.bf16.mxu0 %v9059
    %10177 = vmatpush1.bf16.msra.mxu0 %v9058
    %10178 = vmatprep.subr.bf16.mxu0 %v9051
    %10179 = vmatpush1.bf16.msra.mxu0 %v9050
    %10180 = vmatprep.subr.bf16.mxu0 %v9043
    %10181 = vmatpush1.bf16.msra.mxu0 %v9042
    %10182 = vmatprep.subr.bf16.mxu0 %v9035
    %10183 = vmatpush1.bf16.msra.mxu0 %v9034
    %10184 = vmatprep.subr.bf16.mxu0 %v9027
    %10185 = vmatpush1.bf16.msra.mxu0 %v9026
    %10186 = vmatprep.subr.bf16.mxu0 %v9019
    %10187 = vmatpush1.bf16.msra.mxu0 %v9018
    %10188 = vmatprep.subr.bf16.mxu0 %v9011
    %10189 = vmatpush1.bf16.msra.mxu0 %v9010
    %10190 = vmatprep.subr.bf16.mxu0 %v9003
    %10191 = vmatpush1.bf16.msra.mxu0 %v9002
    %10192 = vmatprep.subr.bf16.mxu0 %v9123
    %10193 = vmatpush2.bf16.msra.mxu0 %v9122
    %10194 = vmatprep.subr.bf16.mxu0 %v9115
    %10195 = vmatpush2.bf16.msra.mxu0 %v9114
    %10196 = vmatprep.subr.bf16.mxu0 %v9107
    %10197 = vmatpush2.bf16.msra.mxu0 %v9106
    %10198 = vmatprep.subr.bf16.mxu0 %v9099
    %10199 = vmatpush2.bf16.msra.mxu0 %v9098
    %10200 = vmatprep.subr.bf16.mxu0 %v9091
    %10201 = vmatpush2.bf16.msra.mxu0 %v9090
    %10202 = vmatprep.subr.bf16.mxu0 %v9083
    %10203 = vmatpush2.bf16.msra.mxu0 %v9082
    %10204 = vmatprep.subr.bf16.mxu0 %v9075
    %10205 = vmatpush2.bf16.msra.mxu0 %v9074
    %10206 = vmatprep.subr.bf16.mxu0 %v9067
    %10207 = vmatpush2.bf16.msra.mxu0 %v9066
    %10208 = vmatprep.mubr.bf16.mxu0 %v7131
    %10209 = vmatmul.mubr.bf16.gmra.mxu0 %v7130
    %v10210 = vpop.f32.mrf.mxu0
    %v10211 = vadd.f32 %v10170, %v10210
    %v10212 = vpop.f32.mrf.mxu0
    %v10213 = vadd.f32 %v10172, %v10212
    %v10214 = vpop.f32.mrf.mxu0
    %v10215 = vpop.f32.mrf.mxu0
    %10216 = vdwg.mxu0
    %10217 = vmatprep.subr.bf16.mxu0 %v9187
    %10218 = vmatpush1.bf16.msra.mxu0 %v9186
    %10219 = vmatprep.subr.bf16.mxu0 %v9179
    %10220 = vmatpush1.bf16.msra.mxu0 %v9178
    %10221 = vmatprep.subr.bf16.mxu0 %v9171
    %10222 = vmatpush1.bf16.msra.mxu0 %v9170
    %10223 = vmatprep.subr.bf16.mxu0 %v9163
    %10224 = vmatpush1.bf16.msra.mxu0 %v9162
    %10225 = vmatprep.subr.bf16.mxu0 %v9155
    %10226 = vmatpush1.bf16.msra.mxu0 %v9154
    %10227 = vmatprep.subr.bf16.mxu0 %v9147
    %10228 = vmatpush1.bf16.msra.mxu0 %v9146
    %10229 = vmatprep.subr.bf16.mxu0 %v9139
    %10230 = vmatpush1.bf16.msra.mxu0 %v9138
    %10231 = vmatprep.subr.bf16.mxu0 %v9131
    %10232 = vmatpush1.bf16.msra.mxu0 %v9130
    %10233 = vmatprep.subr.bf16.mxu0 %v9251
    %10234 = vmatpush2.bf16.msra.mxu0 %v9250
    %10235 = vmatprep.subr.bf16.mxu0 %v9243
    %10236 = vmatpush2.bf16.msra.mxu0 %v9242
    %10237 = vmatprep.subr.bf16.mxu0 %v9235
    %10238 = vmatpush2.bf16.msra.mxu0 %v9234
    %10239 = vmatprep.subr.bf16.mxu0 %v9227
    %10240 = vmatpush2.bf16.msra.mxu0 %v9226
    %10241 = vmatprep.subr.bf16.mxu0 %v9219
    %10242 = vmatpush2.bf16.msra.mxu0 %v9218
    %10243 = vmatprep.subr.bf16.mxu0 %v9211
    %10244 = vmatpush2.bf16.msra.mxu0 %v9210
    %10245 = vmatprep.subr.bf16.mxu0 %v9203
    %10246 = vmatpush2.bf16.msra.mxu0 %v9202
    %10247 = vmatprep.subr.bf16.mxu0 %v9195
    %10248 = vmatpush2.bf16.msra.mxu0 %v9194
    %10249 = vmatprep.mubr.bf16.mxu0 %v7133
    %10250 = vmatmul.mubr.bf16.gmra.mxu0 %v7132
    %v10251 = vpop.f32.mrf.mxu0
    %v10252 = vadd.f32 %v10211, %v10251
    %v10253 = vpop.f32.mrf.mxu0
    %v10254 = vadd.f32 %v10213, %v10253
    %v10255 = vpop.f32.mrf.mxu0
    %v10256 = vpop.f32.mrf.mxu0
    %10257 = vdwg.mxu0
    %10258 = vmatprep.subr.bf16.mxu0 %v8805
    %10259 = vmatpush1.bf16.msra.mxu0 %v8804
    %10260 = vmatprep.subr.bf16.mxu0 %v8797
    %10261 = vmatpush1.bf16.msra.mxu0 %v8796
    %10262 = vmatprep.subr.bf16.mxu0 %v8789
    %10263 = vmatpush1.bf16.msra.mxu0 %v8788
    %10264 = vmatprep.subr.bf16.mxu0 %v8781
    %10265 = vmatpush1.bf16.msra.mxu0 %v8780
    %10266 = vmatprep.subr.bf16.mxu0 %v8773
    %10267 = vmatpush1.bf16.msra.mxu0 %v8772
    %10268 = vmatprep.subr.bf16.mxu0 %v8765
    %10269 = vmatpush1.bf16.msra.mxu0 %v8764
    %10270 = vmatprep.subr.bf16.mxu0 %v8757
    %10271 = vmatpush1.bf16.msra.mxu0 %v8756
    %10272 = vmatprep.subr.bf16.mxu0 %v8749
    %10273 = vmatpush1.bf16.msra.mxu0 %v8748
    %10274 = vmatprep.subr.bf16.mxu0 %v8869
    %10275 = vmatpush2.bf16.msra.mxu0 %v8868
    %10276 = vmatprep.subr.bf16.mxu0 %v8861
    %10277 = vmatpush2.bf16.msra.mxu0 %v8860
    %10278 = vmatprep.subr.bf16.mxu0 %v8853
    %10279 = vmatpush2.bf16.msra.mxu0 %v8852
    %10280 = vmatprep.subr.bf16.mxu0 %v8845
    %10281 = vmatpush2.bf16.msra.mxu0 %v8844
    %10282 = vmatprep.subr.bf16.mxu0 %v8837
    %10283 = vmatpush2.bf16.msra.mxu0 %v8836
    %10284 = vmatprep.subr.bf16.mxu0 %v8829
    %10285 = vmatpush2.bf16.msra.mxu0 %v8828
    %10286 = vmatprep.subr.bf16.mxu0 %v8821
    %10287 = vmatpush2.bf16.msra.mxu0 %v8820
    %10288 = vmatprep.subr.bf16.mxu0 %v8813
    %10289 = vmatpush2.bf16.msra.mxu0 %v8812
    %10290 = vmatprep.mubr.bf16.mxu0 %v7127
    %10291 = vmatmul.mubr.bf16.gmra.mxu0 %v7126
    %v10292 = vpop.f32.mrf.mxu0
    %v10293 = vadd.f32 %v7201, %v10292
    %v10294 = vpop.f32.mrf.mxu0
    %v10295 = vadd.f32 %v7205, %v10294
    %v10296 = vpop.f32.mrf.mxu0
    %v10297 = vpop.f32.mrf.mxu0
    %10298 = vdwg.mxu0
    %10299 = vmatprep.subr.bf16.mxu0 %v8933
    %10300 = vmatpush1.bf16.msra.mxu0 %v8932
    %10301 = vmatprep.subr.bf16.mxu0 %v8925
    %10302 = vmatpush1.bf16.msra.mxu0 %v8924
    %10303 = vmatprep.subr.bf16.mxu0 %v8917
    %10304 = vmatpush1.bf16.msra.mxu0 %v8916
    %10305 = vmatprep.subr.bf16.mxu0 %v8909
    %10306 = vmatpush1.bf16.msra.mxu0 %v8908
    %10307 = vmatprep.subr.bf16.mxu0 %v8901
    %10308 = vmatpush1.bf16.msra.mxu0 %v8900
    %10309 = vmatprep.subr.bf16.mxu0 %v8893
    %10310 = vmatpush1.bf16.msra.mxu0 %v8892
    %10311 = vmatprep.subr.bf16.mxu0 %v8885
    %10312 = vmatpush1.bf16.msra.mxu0 %v8884
    %10313 = vmatprep.subr.bf16.mxu0 %v8877
    %10314 = vmatpush1.bf16.msra.mxu0 %v8876
    %10315 = vmatprep.subr.bf16.mxu0 %v8997
    %10316 = vmatpush2.bf16.msra.mxu0 %v8996
    %10317 = vmatprep.subr.bf16.mxu0 %v8989
    %10318 = vmatpush2.bf16.msra.mxu0 %v8988
    %10319 = vmatprep.subr.bf16.mxu0 %v8981
    %10320 = vmatpush2.bf16.msra.mxu0 %v8980
    %10321 = vmatprep.subr.bf16.mxu0 %v8973
    %10322 = vmatpush2.bf16.msra.mxu0 %v8972
    %10323 = vmatprep.subr.bf16.mxu0 %v8965
    %10324 = vmatpush2.bf16.msra.mxu0 %v8964
    %10325 = vmatprep.subr.bf16.mxu0 %v8957
    %10326 = vmatpush2.bf16.msra.mxu0 %v8956
    %10327 = vmatprep.subr.bf16.mxu0 %v8949
    %10328 = vmatpush2.bf16.msra.mxu0 %v8948
    %10329 = vmatprep.subr.bf16.mxu0 %v8941
    %10330 = vmatpush2.bf16.msra.mxu0 %v8940
    %10331 = vmatprep.mubr.bf16.mxu0 %v7129
    %10332 = vmatmul.mubr.bf16.gmra.mxu0 %v7128
    %v10333 = vpop.f32.mrf.mxu0
    %v10334 = vadd.f32 %v10293, %v10333
    %v10335 = vpop.f32.mrf.mxu0
    %v10336 = vadd.f32 %v10295, %v10335
    %v10337 = vpop.f32.mrf.mxu0
    %v10338 = vpop.f32.mrf.mxu0
    %10339 = vdwg.mxu0
    %10340 = vmatprep.subr.bf16.mxu0 %v9061
    %10341 = vmatpush1.bf16.msra.mxu0 %v9060
    %10342 = vmatprep.subr.bf16.mxu0 %v9053
    %10343 = vmatpush1.bf16.msra.mxu0 %v9052
    %10344 = vmatprep.subr.bf16.mxu0 %v9045
    %10345 = vmatpush1.bf16.msra.mxu0 %v9044
    %10346 = vmatprep.subr.bf16.mxu0 %v9037
    %10347 = vmatpush1.bf16.msra.mxu0 %v9036
    %10348 = vmatprep.subr.bf16.mxu0 %v9029
    %10349 = vmatpush1.bf16.msra.mxu0 %v9028
    %10350 = vmatprep.subr.bf16.mxu0 %v9021
    %10351 = vmatpush1.bf16.msra.mxu0 %v9020
    %10352 = vmatprep.subr.bf16.mxu0 %v9013
    %10353 = vmatpush1.bf16.msra.mxu0 %v9012
    %10354 = vmatprep.subr.bf16.mxu0 %v9005
    %10355 = vmatpush1.bf16.msra.mxu0 %v9004
    %10356 = vmatprep.subr.bf16.mxu0 %v9125
    %10357 = vmatpush2.bf16.msra.mxu0 %v9124
    %10358 = vmatprep.subr.bf16.mxu0 %v9117
    %10359 = vmatpush2.bf16.msra.mxu0 %v9116
    %10360 = vmatprep.subr.bf16.mxu0 %v9109
    %10361 = vmatpush2.bf16.msra.mxu0 %v9108
    %10362 = vmatprep.subr.bf16.mxu0 %v9101
    %10363 = vmatpush2.bf16.msra.mxu0 %v9100
    %10364 = vmatprep.subr.bf16.mxu0 %v9093
    %10365 = vmatpush2.bf16.msra.mxu0 %v9092
    %10366 = vmatprep.subr.bf16.mxu0 %v9085
    %10367 = vmatpush2.bf16.msra.mxu0 %v9084
    %10368 = vmatprep.subr.bf16.mxu0 %v9077
    %10369 = vmatpush2.bf16.msra.mxu0 %v9076
    %10370 = vmatprep.subr.bf16.mxu0 %v9069
    %10371 = vmatpush2.bf16.msra.mxu0 %v9068
    %10372 = vmatprep.mubr.bf16.mxu0 %v7131
    %10373 = vmatmul.mubr.bf16.gmra.mxu0 %v7130
    %v10374 = vpop.f32.mrf.mxu0
    %v10375 = vadd.f32 %v10334, %v10374
    %v10376 = vpop.f32.mrf.mxu0
    %v10377 = vadd.f32 %v10336, %v10376
    %v10378 = vpop.f32.mrf.mxu0
    %v10379 = vpop.f32.mrf.mxu0
    %10380 = vdwg.mxu0
    %10381 = vmatprep.subr.bf16.mxu0 %v9189
    %10382 = vmatpush1.bf16.msra.mxu0 %v9188
    %10383 = vmatprep.subr.bf16.mxu0 %v9181
    %10384 = vmatpush1.bf16.msra.mxu0 %v9180
    %10385 = vmatprep.subr.bf16.mxu0 %v9173
    %10386 = vmatpush1.bf16.msra.mxu0 %v9172
    %10387 = vmatprep.subr.bf16.mxu0 %v9165
    %10388 = vmatpush1.bf16.msra.mxu0 %v9164
    %10389 = vmatprep.subr.bf16.mxu0 %v9157
    %10390 = vmatpush1.bf16.msra.mxu0 %v9156
    %10391 = vmatprep.subr.bf16.mxu0 %v9149
    %10392 = vmatpush1.bf16.msra.mxu0 %v9148
    %10393 = vmatprep.subr.bf16.mxu0 %v9141
    %10394 = vmatpush1.bf16.msra.mxu0 %v9140
    %10395 = vmatprep.subr.bf16.mxu0 %v9133
    %10396 = vmatpush1.bf16.msra.mxu0 %v9132
    %10397 = vmatprep.subr.bf16.mxu0 %v9253
    %10398 = vmatpush2.bf16.msra.mxu0 %v9252
    %10399 = vmatprep.subr.bf16.mxu0 %v9245
    %10400 = vmatpush2.bf16.msra.mxu0 %v9244
    %10401 = vmatprep.subr.bf16.mxu0 %v9237
    %10402 = vmatpush2.bf16.msra.mxu0 %v9236
    %10403 = vmatprep.subr.bf16.mxu0 %v9229
    %10404 = vmatpush2.bf16.msra.mxu0 %v9228
    %10405 = vmatprep.subr.bf16.mxu0 %v9221
    %10406 = vmatpush2.bf16.msra.mxu0 %v9220
    %10407 = vmatprep.subr.bf16.mxu0 %v9213
    %10408 = vmatpush2.bf16.msra.mxu0 %v9212
    %10409 = vmatprep.subr.bf16.mxu0 %v9205
    %10410 = vmatpush2.bf16.msra.mxu0 %v9204
    %10411 = vmatprep.subr.bf16.mxu0 %v9197
    %10412 = vmatpush2.bf16.msra.mxu0 %v9196
    %10413 = vmatprep.mubr.bf16.mxu0 %v7133
    %10414 = vmatmul.mubr.bf16.gmra.mxu0 %v7132
    %v10415 = vpop.f32.mrf.mxu0
    %v10416 = vadd.f32 %v10375, %v10415
    %v10417 = vpop.f32.mrf.mxu0
    %v10418 = vadd.f32 %v10377, %v10417
    %v10419 = vpop.f32.mrf.mxu0
    %v10420 = vpop.f32.mrf.mxu0
    %10421 = vdwg.mxu0
    %v10422 = vmax.f32 %v9924, 0.0
    %v10423 = vmax.f32 %v9926, 0.0
    %v10424 = vmax.f32 %v10088, 0.0
    %v10425 = vmax.f32 %v10090, 0.0
    %v10426 = vmax.f32 %v10252, 0.0
    %v10427 = vmax.f32 %v10254, 0.0
    %v10428 = vmax.f32 %v10416, 0.0
    %v10429 = vmax.f32 %v10418, 0.0
    %v10430 = vld [vmem:[#allocation6 + $0x200] sm:$0xff]
    %v10431 = vld [vmem:[#allocation6 + $0x208] sm:$0xff]
    %v10432 = vld [vmem:[#allocation6 + $0x210] sm:$0xff]
    %v10433 = vld [vmem:[#allocation6 + $0x218] sm:$0xff]
    %v10434 = vld [vmem:[#allocation6 + $0x220] sm:$0xff]
    %v10435 = vld [vmem:[#allocation6 + $0x228] sm:$0xff]
    %v10436 = vld [vmem:[#allocation6 + $0x230] sm:$0xff]
    %v10437 = vld [vmem:[#allocation6 + $0x238] sm:$0xff]
    %v10438 = vld [vmem:[#allocation6 + $0x240] sm:$0xff]
    %v10439 = vld [vmem:[#allocation6 + $0x248] sm:$0xff]
    %v10440 = vld [vmem:[#allocation6 + $0x250] sm:$0xff]
    %v10441 = vld [vmem:[#allocation6 + $0x258] sm:$0xff]
    %v10442 = vld [vmem:[#allocation6 + $0x260] sm:$0xff]
    %v10443 = vld [vmem:[#allocation6 + $0x268] sm:$0xff]
    %v10444 = vld [vmem:[#allocation6 + $0x270] sm:$0xff]
    %v10445 = vld [vmem:[#allocation6 + $0x278] sm:$0xff]
    %v10446 = vld [vmem:[#allocation6 + $0x280] sm:$0xff]
    %v10447 = vld [vmem:[#allocation6 + $0x288] sm:$0xff]
    %v10448 = vld [vmem:[#allocation6 + $0x290] sm:$0xff]
    %v10449 = vld [vmem:[#allocation6 + $0x298] sm:$0xff]
    %v10450 = vld [vmem:[#allocation6 + $0x2a0] sm:$0xff]
    %v10451 = vld [vmem:[#allocation6 + $0x2a8] sm:$0xff]
    %v10452 = vld [vmem:[#allocation6 + $0x2b0] sm:$0xff]
    %v10453 = vld [vmem:[#allocation6 + $0x2b8] sm:$0xff]
    %v10454 = vld [vmem:[#allocation6 + $0x2c0] sm:$0xff]
    %v10455 = vld [vmem:[#allocation6 + $0x2c8] sm:$0xff]
    %v10456 = vld [vmem:[#allocation6 + $0x2d0] sm:$0xff]
    %v10457 = vld [vmem:[#allocation6 + $0x2d8] sm:$0xff]
    %v10458 = vld [vmem:[#allocation6 + $0x2e0] sm:$0xff]
    %v10459 = vld [vmem:[#allocation6 + $0x2e8] sm:$0xff]
    %v10460 = vld [vmem:[#allocation6 + $0x2f0] sm:$0xff]
    %v10461 = vld [vmem:[#allocation6 + $0x2f8] sm:$0xff]
    %v10462 = vld [vmem:[#allocation6 + $0x300] sm:$0xff]
    %v10463 = vld [vmem:[#allocation6 + $0x308] sm:$0xff]
    %v10464 = vld [vmem:[#allocation6 + $0x310] sm:$0xff]
    %v10465 = vld [vmem:[#allocation6 + $0x318] sm:$0xff]
    %v10466 = vld [vmem:[#allocation6 + $0x320] sm:$0xff]
    %v10467 = vld [vmem:[#allocation6 + $0x328] sm:$0xff]
    %v10468 = vld [vmem:[#allocation6 + $0x330] sm:$0xff]
    %v10469 = vld [vmem:[#allocation6 + $0x338] sm:$0xff]
    %v10470 = vld [vmem:[#allocation6 + $0x340] sm:$0xff]
    %v10471 = vld [vmem:[#allocation6 + $0x348] sm:$0xff]
    %v10472 = vld [vmem:[#allocation6 + $0x350] sm:$0xff]
    %v10473 = vld [vmem:[#allocation6 + $0x358] sm:$0xff]
    %v10474 = vld [vmem:[#allocation6 + $0x360] sm:$0xff]
    %v10475 = vld [vmem:[#allocation6 + $0x368] sm:$0xff]
    %v10476 = vld [vmem:[#allocation6 + $0x370] sm:$0xff]
    %v10477 = vld [vmem:[#allocation6 + $0x378] sm:$0xff]
    %v10478 = vld [vmem:[#allocation6 + $0x380] sm:$0xff]
    %v10479 = vld [vmem:[#allocation6 + $0x388] sm:$0xff]
    %v10480 = vld [vmem:[#allocation6 + $0x390] sm:$0xff]
    %v10481 = vld [vmem:[#allocation6 + $0x398] sm:$0xff]
    %v10482 = vld [vmem:[#allocation6 + $0x3a0] sm:$0xff]
    %v10483 = vld [vmem:[#allocation6 + $0x3a8] sm:$0xff]
    %v10484 = vld [vmem:[#allocation6 + $0x3b0] sm:$0xff]
    %v10485 = vld [vmem:[#allocation6 + $0x3b8] sm:$0xff]
    %v10486 = vld [vmem:[#allocation6 + $0x3c0] sm:$0xff]
    %v10487 = vld [vmem:[#allocation6 + $0x3c8] sm:$0xff]
    %v10488 = vld [vmem:[#allocation6 + $0x3d0] sm:$0xff]
    %v10489 = vld [vmem:[#allocation6 + $0x3d8] sm:$0xff]
    %v10490 = vld [vmem:[#allocation6 + $0x3e0] sm:$0xff]
    %v10491 = vld [vmem:[#allocation6 + $0x3e8] sm:$0xff]
    %v10492 = vld [vmem:[#allocation6 + $0x3f0] sm:$0xff]
    %v10493 = vld [vmem:[#allocation6 + $0x3f8] sm:$0xff]
    %v10494 = vld [vmem:[#allocation6 + $0x400] sm:$0xff]
    %v10495 = vld [vmem:[#allocation6 + $0x408] sm:$0xff]
    %v10496 = vld [vmem:[#allocation6 + $0x410] sm:$0xff]
    %v10497 = vld [vmem:[#allocation6 + $0x418] sm:$0xff]
    %v10498 = vld [vmem:[#allocation6 + $0x420] sm:$0xff]
    %v10499 = vld [vmem:[#allocation6 + $0x428] sm:$0xff]
    %v10500 = vld [vmem:[#allocation6 + $0x430] sm:$0xff]
    %v10501 = vld [vmem:[#allocation6 + $0x438] sm:$0xff]
    %v10502 = vld [vmem:[#allocation6 + $0x440] sm:$0xff]
    %v10503 = vld [vmem:[#allocation6 + $0x448] sm:$0xff]
    %v10504 = vld [vmem:[#allocation6 + $0x450] sm:$0xff]
    %v10505 = vld [vmem:[#allocation6 + $0x458] sm:$0xff]
    %v10506 = vld [vmem:[#allocation6 + $0x460] sm:$0xff]
    %v10507 = vld [vmem:[#allocation6 + $0x468] sm:$0xff]
    %v10508 = vld [vmem:[#allocation6 + $0x470] sm:$0xff]
    %v10509 = vld [vmem:[#allocation6 + $0x478] sm:$0xff]
    %v10510 = vld [vmem:[#allocation6 + $0x480] sm:$0xff]
    %v10511 = vld [vmem:[#allocation6 + $0x488] sm:$0xff]
    %v10512 = vld [vmem:[#allocation6 + $0x490] sm:$0xff]
    %v10513 = vld [vmem:[#allocation6 + $0x498] sm:$0xff]
    %v10514 = vld [vmem:[#allocation6 + $0x4a0] sm:$0xff]
    %v10515 = vld [vmem:[#allocation6 + $0x4a8] sm:$0xff]
    %v10516 = vld [vmem:[#allocation6 + $0x4b0] sm:$0xff]
    %v10517 = vld [vmem:[#allocation6 + $0x4b8] sm:$0xff]
    %v10518 = vld [vmem:[#allocation6 + $0x4c0] sm:$0xff]
    %v10519 = vld [vmem:[#allocation6 + $0x4c8] sm:$0xff]
    %v10520 = vld [vmem:[#allocation6 + $0x4d0] sm:$0xff]
    %v10521 = vld [vmem:[#allocation6 + $0x4d8] sm:$0xff]
    %v10522 = vld [vmem:[#allocation6 + $0x4e0] sm:$0xff]
    %v10523 = vld [vmem:[#allocation6 + $0x4e8] sm:$0xff]
    %v10524 = vld [vmem:[#allocation6 + $0x4f0] sm:$0xff]
    %v10525 = vld [vmem:[#allocation6 + $0x4f8] sm:$0xff]
    %v10526 = vld [vmem:[#allocation6 + $0x500] sm:$0xff]
    %v10527 = vld [vmem:[#allocation6 + $0x508] sm:$0xff]
    %v10528 = vld [vmem:[#allocation6 + $0x510] sm:$0xff]
    %v10529 = vld [vmem:[#allocation6 + $0x518] sm:$0xff]
    %v10530 = vld [vmem:[#allocation6 + $0x520] sm:$0xff]
    %v10531 = vld [vmem:[#allocation6 + $0x528] sm:$0xff]
    %v10532 = vld [vmem:[#allocation6 + $0x530] sm:$0xff]
    %v10533 = vld [vmem:[#allocation6 + $0x538] sm:$0xff]
    %v10534 = vld [vmem:[#allocation6 + $0x540] sm:$0xff]
    %v10535 = vld [vmem:[#allocation6 + $0x548] sm:$0xff]
    %v10536 = vld [vmem:[#allocation6 + $0x550] sm:$0xff]
    %v10537 = vld [vmem:[#allocation6 + $0x558] sm:$0xff]
    %v10538 = vld [vmem:[#allocation6 + $0x560] sm:$0xff]
    %v10539 = vld [vmem:[#allocation6 + $0x568] sm:$0xff]
    %v10540 = vld [vmem:[#allocation6 + $0x570] sm:$0xff]
    %v10541 = vld [vmem:[#allocation6 + $0x578] sm:$0xff]
    %v10542 = vld [vmem:[#allocation6 + $0x580] sm:$0xff]
    %v10543 = vld [vmem:[#allocation6 + $0x588] sm:$0xff]
    %v10544 = vld [vmem:[#allocation6 + $0x590] sm:$0xff]
    %v10545 = vld [vmem:[#allocation6 + $0x598] sm:$0xff]
    %v10546 = vld [vmem:[#allocation6 + $0x5a0] sm:$0xff]
    %v10547 = vld [vmem:[#allocation6 + $0x5a8] sm:$0xff]
    %v10548 = vld [vmem:[#allocation6 + $0x5b0] sm:$0xff]
    %v10549 = vld [vmem:[#allocation6 + $0x5b8] sm:$0xff]
    %v10550 = vld [vmem:[#allocation6 + $0x5c0] sm:$0xff]
    %v10551 = vld [vmem:[#allocation6 + $0x5c8] sm:$0xff]
    %v10552 = vld [vmem:[#allocation6 + $0x5d0] sm:$0xff]
    %v10553 = vld [vmem:[#allocation6 + $0x5d8] sm:$0xff]
    %v10554 = vld [vmem:[#allocation6 + $0x5e0] sm:$0xff]
    %v10555 = vld [vmem:[#allocation6 + $0x5e8] sm:$0xff]
    %v10556 = vld [vmem:[#allocation6 + $0x5f0] sm:$0xff]
    %v10557 = vld [vmem:[#allocation6 + $0x5f8] sm:$0xff]
    %v10558 = vld [vmem:[#allocation6 + $0x600] sm:$0xff]
    %v10559 = vld [vmem:[#allocation6 + $0x608] sm:$0xff]
    %v10560 = vld [vmem:[#allocation6 + $0x610] sm:$0xff]
    %v10561 = vld [vmem:[#allocation6 + $0x618] sm:$0xff]
    %v10562 = vld [vmem:[#allocation6 + $0x620] sm:$0xff]
    %v10563 = vld [vmem:[#allocation6 + $0x628] sm:$0xff]
    %v10564 = vld [vmem:[#allocation6 + $0x630] sm:$0xff]
    %v10565 = vld [vmem:[#allocation6 + $0x638] sm:$0xff]
    %v10566 = vld [vmem:[#allocation6 + $0x640] sm:$0xff]
    %v10567 = vld [vmem:[#allocation6 + $0x648] sm:$0xff]
    %v10568 = vld [vmem:[#allocation6 + $0x650] sm:$0xff]
    %v10569 = vld [vmem:[#allocation6 + $0x658] sm:$0xff]
    %v10570 = vld [vmem:[#allocation6 + $0x660] sm:$0xff]
    %v10571 = vld [vmem:[#allocation6 + $0x668] sm:$0xff]
    %v10572 = vld [vmem:[#allocation6 + $0x670] sm:$0xff]
    %v10573 = vld [vmem:[#allocation6 + $0x678] sm:$0xff]
    %v10574 = vld [vmem:[#allocation6 + $0x680] sm:$0xff]
    %v10575 = vld [vmem:[#allocation6 + $0x688] sm:$0xff]
    %v10576 = vld [vmem:[#allocation6 + $0x690] sm:$0xff]
    %v10577 = vld [vmem:[#allocation6 + $0x698] sm:$0xff]
    %v10578 = vld [vmem:[#allocation6 + $0x6a0] sm:$0xff]
    %v10579 = vld [vmem:[#allocation6 + $0x6a8] sm:$0xff]
    %v10580 = vld [vmem:[#allocation6 + $0x6b0] sm:$0xff]
    %v10581 = vld [vmem:[#allocation6 + $0x6b8] sm:$0xff]
    %v10582 = vld [vmem:[#allocation6 + $0x6c0] sm:$0xff]
    %v10583 = vld [vmem:[#allocation6 + $0x6c8] sm:$0xff]
    %v10584 = vld [vmem:[#allocation6 + $0x6d0] sm:$0xff]
    %v10585 = vld [vmem:[#allocation6 + $0x6d8] sm:$0xff]
    %v10586 = vld [vmem:[#allocation6 + $0x6e0] sm:$0xff]
    %v10587 = vld [vmem:[#allocation6 + $0x6e8] sm:$0xff]
    %v10588 = vld [vmem:[#allocation6 + $0x6f0] sm:$0xff]
    %v10589 = vld [vmem:[#allocation6 + $0x6f8] sm:$0xff]
    %v10590 = vld [vmem:[#allocation6 + $0x700] sm:$0xff]
    %v10591 = vld [vmem:[#allocation6 + $0x708] sm:$0xff]
    %v10592 = vld [vmem:[#allocation6 + $0x710] sm:$0xff]
    %v10593 = vld [vmem:[#allocation6 + $0x718] sm:$0xff]
    %v10594 = vld [vmem:[#allocation6 + $0x720] sm:$0xff]
    %v10595 = vld [vmem:[#allocation6 + $0x728] sm:$0xff]
    %v10596 = vld [vmem:[#allocation6 + $0x730] sm:$0xff]
    %v10597 = vld [vmem:[#allocation6 + $0x738] sm:$0xff]
    %v10598 = vld [vmem:[#allocation6 + $0x740] sm:$0xff]
    %v10599 = vld [vmem:[#allocation6 + $0x748] sm:$0xff]
    %v10600 = vld [vmem:[#allocation6 + $0x750] sm:$0xff]
    %v10601 = vld [vmem:[#allocation6 + $0x758] sm:$0xff]
    %v10602 = vld [vmem:[#allocation6 + $0x760] sm:$0xff]
    %v10603 = vld [vmem:[#allocation6 + $0x768] sm:$0xff]
    %v10604 = vld [vmem:[#allocation6 + $0x770] sm:$0xff]
    %v10605 = vld [vmem:[#allocation6 + $0x778] sm:$0xff]
    %v10606 = vld [vmem:[#allocation6 + $0x780] sm:$0xff]
    %v10607 = vld [vmem:[#allocation6 + $0x788] sm:$0xff]
    %v10608 = vld [vmem:[#allocation6 + $0x790] sm:$0xff]
    %v10609 = vld [vmem:[#allocation6 + $0x798] sm:$0xff]
    %v10610 = vld [vmem:[#allocation6 + $0x7a0] sm:$0xff]
    %v10611 = vld [vmem:[#allocation6 + $0x7a8] sm:$0xff]
    %v10612 = vld [vmem:[#allocation6 + $0x7b0] sm:$0xff]
    %v10613 = vld [vmem:[#allocation6 + $0x7b8] sm:$0xff]
    %v10614 = vld [vmem:[#allocation6 + $0x7c0] sm:$0xff]
    %v10615 = vld [vmem:[#allocation6 + $0x7c8] sm:$0xff]
    %v10616 = vld [vmem:[#allocation6 + $0x7d0] sm:$0xff]
    %v10617 = vld [vmem:[#allocation6 + $0x7d8] sm:$0xff]
    %v10618 = vld [vmem:[#allocation6 + $0x7e0] sm:$0xff]
    %v10619 = vld [vmem:[#allocation6 + $0x7e8] sm:$0xff]
    %v10620 = vld [vmem:[#allocation6 + $0x7f0] sm:$0xff]
    %v10621 = vld [vmem:[#allocation6 + $0x7f8] sm:$0xff]
    %v10622 = vld [vmem:[#allocation6 + $0x800] sm:$0xff]
    %v10623 = vld [vmem:[#allocation6 + $0x808] sm:$0xff]
    %v10624 = vld [vmem:[#allocation6 + $0x810] sm:$0xff]
    %v10625 = vld [vmem:[#allocation6 + $0x818] sm:$0xff]
    %v10626 = vld [vmem:[#allocation6 + $0x820] sm:$0xff]
    %v10627 = vld [vmem:[#allocation6 + $0x828] sm:$0xff]
    %v10628 = vld [vmem:[#allocation6 + $0x830] sm:$0xff]
    %v10629 = vld [vmem:[#allocation6 + $0x838] sm:$0xff]
    %v10630 = vld [vmem:[#allocation6 + $0x840] sm:$0xff]
    %v10631 = vld [vmem:[#allocation6 + $0x848] sm:$0xff]
    %v10632 = vld [vmem:[#allocation6 + $0x850] sm:$0xff]
    %v10633 = vld [vmem:[#allocation6 + $0x858] sm:$0xff]
    %v10634 = vld [vmem:[#allocation6 + $0x860] sm:$0xff]
    %v10635 = vld [vmem:[#allocation6 + $0x868] sm:$0xff]
    %v10636 = vld [vmem:[#allocation6 + $0x870] sm:$0xff]
    %v10637 = vld [vmem:[#allocation6 + $0x878] sm:$0xff]
    %v10638 = vld [vmem:[#allocation6 + $0x880] sm:$0xff]
    %v10639 = vld [vmem:[#allocation6 + $0x888] sm:$0xff]
    %v10640 = vld [vmem:[#allocation6 + $0x890] sm:$0xff]
    %v10641 = vld [vmem:[#allocation6 + $0x898] sm:$0xff]
    %v10642 = vld [vmem:[#allocation6 + $0x8a0] sm:$0xff]
    %v10643 = vld [vmem:[#allocation6 + $0x8a8] sm:$0xff]
    %v10644 = vld [vmem:[#allocation6 + $0x8b0] sm:$0xff]
    %v10645 = vld [vmem:[#allocation6 + $0x8b8] sm:$0xff]
    %v10646 = vld [vmem:[#allocation6 + $0x8c0] sm:$0xff]
    %v10647 = vld [vmem:[#allocation6 + $0x8c8] sm:$0xff]
    %v10648 = vld [vmem:[#allocation6 + $0x8d0] sm:$0xff]
    %v10649 = vld [vmem:[#allocation6 + $0x8d8] sm:$0xff]
    %v10650 = vld [vmem:[#allocation6 + $0x8e0] sm:$0xff]
    %v10651 = vld [vmem:[#allocation6 + $0x8e8] sm:$0xff]
    %v10652 = vld [vmem:[#allocation6 + $0x8f0] sm:$0xff]
    %v10653 = vld [vmem:[#allocation6 + $0x8f8] sm:$0xff]
    %v10654 = vld [vmem:[#allocation6 + $0x900] sm:$0xff]
    %v10655 = vld [vmem:[#allocation6 + $0x908] sm:$0xff]
    %v10656 = vld [vmem:[#allocation6 + $0x910] sm:$0xff]
    %v10657 = vld [vmem:[#allocation6 + $0x918] sm:$0xff]
    %v10658 = vld [vmem:[#allocation6 + $0x920] sm:$0xff]
    %v10659 = vld [vmem:[#allocation6 + $0x928] sm:$0xff]
    %v10660 = vld [vmem:[#allocation6 + $0x930] sm:$0xff]
    %v10661 = vld [vmem:[#allocation6 + $0x938] sm:$0xff]
    %v10662 = vld [vmem:[#allocation6 + $0x940] sm:$0xff]
    %v10663 = vld [vmem:[#allocation6 + $0x948] sm:$0xff]
    %v10664 = vld [vmem:[#allocation6 + $0x950] sm:$0xff]
    %v10665 = vld [vmem:[#allocation6 + $0x958] sm:$0xff]
    %v10666 = vld [vmem:[#allocation6 + $0x960] sm:$0xff]
    %v10667 = vld [vmem:[#allocation6 + $0x968] sm:$0xff]
    %v10668 = vld [vmem:[#allocation6 + $0x970] sm:$0xff]
    %v10669 = vld [vmem:[#allocation6 + $0x978] sm:$0xff]
    %v10670 = vld [vmem:[#allocation6 + $0x980] sm:$0xff]
    %v10671 = vld [vmem:[#allocation6 + $0x988] sm:$0xff]
    %v10672 = vld [vmem:[#allocation6 + $0x990] sm:$0xff]
    %v10673 = vld [vmem:[#allocation6 + $0x998] sm:$0xff]
    %v10674 = vld [vmem:[#allocation6 + $0x9a0] sm:$0xff]
    %v10675 = vld [vmem:[#allocation6 + $0x9a8] sm:$0xff]
    %v10676 = vld [vmem:[#allocation6 + $0x9b0] sm:$0xff]
    %v10677 = vld [vmem:[#allocation6 + $0x9b8] sm:$0xff]
    %v10678 = vld [vmem:[#allocation6 + $0x9c0] sm:$0xff]
    %v10679 = vld [vmem:[#allocation6 + $0x9c8] sm:$0xff]
    %v10680 = vld [vmem:[#allocation6 + $0x9d0] sm:$0xff]
    %v10681 = vld [vmem:[#allocation6 + $0x9d8] sm:$0xff]
    %v10682 = vld [vmem:[#allocation6 + $0x9e0] sm:$0xff]
    %v10683 = vld [vmem:[#allocation6 + $0x9e8] sm:$0xff]
    %v10684 = vld [vmem:[#allocation6 + $0x9f0] sm:$0xff]
    %v10685 = vld [vmem:[#allocation6 + $0x9f8] sm:$0xff]
    %v10686 = vpack.c.bf16 %v10422, %v10422
    %v10687 = vpack.c.bf16 %v10423, %v10423
    %v10688 = vpack.c.bf16 %v10424, %v10424
    %v10689 = vpack.c.bf16 %v10425, %v10425
    %v10690 = vpack.c.bf16 %v10426, %v10426
    %v10691 = vpack.c.bf16 %v10427, %v10427
    %v10692 = vpack.c.bf16 %v10428, %v10428
    %v10693 = vpack.c.bf16 %v10429, %v10429
    %v10694 = vlaneseq
    %v10695 = vshrl.u32 %v10694, 7
    %v10696 = vsub.s32 1, %v10695
    %v10697 = vrot.slane %v151, %v10696
    %v10698 = vlaneseq
    %v10699 = vshrl.u32 %v10698, 7
    %v10700 = vsub.s32 3, %v10699
    %v10701 = vrot.slane %v151, %v10700
    %v10702 = vlaneseq
    %v10703 = vshrl.u32 %v10702, 7
    %v10704 = vsub.s32 5, %v10703
    %v10705 = vrot.slane %v151, %v10704
    %v10706 = vlaneseq
    %v10707 = vshrl.u32 %v10706, 7
    %v10708 = vsub.s32 7, %v10707
    %v10709 = vrot.slane %v151, %v10708
    %v10714 = vlaneseq
    %v10715 = vshrl.u32 %v10714, 7
    %v10716 = vsub.s32 1, %v10715
    %v10717 = vrot.slane %v10697, %v10716
    %v10718 = vlaneseq
    %v10719 = vshrl.u32 %v10718, 7
    %v10720 = vsub.s32 1, %v10719
    %v10721 = vrot.slane %v10701, %v10720
    %v10722 = vlaneseq
    %v10723 = vshrl.u32 %v10722, 7
    %v10724 = vsub.s32 1, %v10723
    %v10725 = vrot.slane %v10705, %v10724
    %v10726 = vlaneseq
    %v10727 = vshrl.u32 %v10726, 7
    %v10728 = vsub.s32 1, %v10727
    %v10729 = vrot.slane %v10709, %v10728
    %v10986 = vunpack.c.l.b16 %v10430
    %v10987 = vunpack.c.h.b16 %v10430
    %v10988 = vunpack.c.l.b16 %v10431
    %v10989 = vunpack.c.h.b16 %v10431
    %v10990 = vunpack.c.l.b16 %v10432
    %v10991 = vunpack.c.h.b16 %v10432
    %v10992 = vunpack.c.l.b16 %v10433
    %v10993 = vunpack.c.h.b16 %v10433
    %v10994 = vunpack.c.l.b16 %v10434
    %v10995 = vunpack.c.h.b16 %v10434
    %v10996 = vunpack.c.l.b16 %v10435
    %v10997 = vunpack.c.h.b16 %v10435
    %v10998 = vunpack.c.l.b16 %v10436
    %v10999 = vunpack.c.h.b16 %v10436
    %v11000 = vunpack.c.l.b16 %v10437
    %v11001 = vunpack.c.h.b16 %v10437
    %v11002 = vunpack.c.l.b16 %v10438
    %v11003 = vunpack.c.h.b16 %v10438
    %v11004 = vunpack.c.l.b16 %v10439
    %v11005 = vunpack.c.h.b16 %v10439
    %v11006 = vunpack.c.l.b16 %v10440
    %v11007 = vunpack.c.h.b16 %v10440
    %v11008 = vunpack.c.l.b16 %v10441
    %v11009 = vunpack.c.h.b16 %v10441
    %v11010 = vunpack.c.l.b16 %v10442
    %v11011 = vunpack.c.h.b16 %v10442
    %v11012 = vunpack.c.l.b16 %v10443
    %v11013 = vunpack.c.h.b16 %v10443
    %v11014 = vunpack.c.l.b16 %v10444
    %v11015 = vunpack.c.h.b16 %v10444
    %v11016 = vunpack.c.l.b16 %v10445
    %v11017 = vunpack.c.h.b16 %v10445
    %v11018 = vunpack.c.l.b16 %v10446
    %v11019 = vunpack.c.h.b16 %v10446
    %v11020 = vunpack.c.l.b16 %v10447
    %v11021 = vunpack.c.h.b16 %v10447
    %v11022 = vunpack.c.l.b16 %v10448
    %v11023 = vunpack.c.h.b16 %v10448
    %v11024 = vunpack.c.l.b16 %v10449
    %v11025 = vunpack.c.h.b16 %v10449
    %v11026 = vunpack.c.l.b16 %v10450
    %v11027 = vunpack.c.h.b16 %v10450
    %v11028 = vunpack.c.l.b16 %v10451
    %v11029 = vunpack.c.h.b16 %v10451
    %v11030 = vunpack.c.l.b16 %v10452
    %v11031 = vunpack.c.h.b16 %v10452
    %v11032 = vunpack.c.l.b16 %v10453
    %v11033 = vunpack.c.h.b16 %v10453
    %v11034 = vunpack.c.l.b16 %v10454
    %v11035 = vunpack.c.h.b16 %v10454
    %v11036 = vunpack.c.l.b16 %v10455
    %v11037 = vunpack.c.h.b16 %v10455
    %v11038 = vunpack.c.l.b16 %v10456
    %v11039 = vunpack.c.h.b16 %v10456
    %v11040 = vunpack.c.l.b16 %v10457
    %v11041 = vunpack.c.h.b16 %v10457
    %v11042 = vunpack.c.l.b16 %v10458
    %v11043 = vunpack.c.h.b16 %v10458
    %v11044 = vunpack.c.l.b16 %v10459
    %v11045 = vunpack.c.h.b16 %v10459
    %v11046 = vunpack.c.l.b16 %v10460
    %v11047 = vunpack.c.h.b16 %v10460
    %v11048 = vunpack.c.l.b16 %v10461
    %v11049 = vunpack.c.h.b16 %v10461
    %v11050 = vunpack.c.l.b16 %v10462
    %v11051 = vunpack.c.h.b16 %v10462
    %v11052 = vunpack.c.l.b16 %v10463
    %v11053 = vunpack.c.h.b16 %v10463
    %v11054 = vunpack.c.l.b16 %v10464
    %v11055 = vunpack.c.h.b16 %v10464
    %v11056 = vunpack.c.l.b16 %v10465
    %v11057 = vunpack.c.h.b16 %v10465
    %v11058 = vunpack.c.l.b16 %v10466
    %v11059 = vunpack.c.h.b16 %v10466
    %v11060 = vunpack.c.l.b16 %v10467
    %v11061 = vunpack.c.h.b16 %v10467
    %v11062 = vunpack.c.l.b16 %v10468
    %v11063 = vunpack.c.h.b16 %v10468
    %v11064 = vunpack.c.l.b16 %v10469
    %v11065 = vunpack.c.h.b16 %v10469
    %v11066 = vunpack.c.l.b16 %v10470
    %v11067 = vunpack.c.h.b16 %v10470
    %v11068 = vunpack.c.l.b16 %v10471
    %v11069 = vunpack.c.h.b16 %v10471
    %v11070 = vunpack.c.l.b16 %v10472
    %v11071 = vunpack.c.h.b16 %v10472
    %v11072 = vunpack.c.l.b16 %v10473
    %v11073 = vunpack.c.h.b16 %v10473
    %v11074 = vunpack.c.l.b16 %v10474
    %v11075 = vunpack.c.h.b16 %v10474
    %v11076 = vunpack.c.l.b16 %v10475
    %v11077 = vunpack.c.h.b16 %v10475
    %v11078 = vunpack.c.l.b16 %v10476
    %v11079 = vunpack.c.h.b16 %v10476
    %v11080 = vunpack.c.l.b16 %v10477
    %v11081 = vunpack.c.h.b16 %v10477
    %v11082 = vunpack.c.l.b16 %v10478
    %v11083 = vunpack.c.h.b16 %v10478
    %v11084 = vunpack.c.l.b16 %v10479
    %v11085 = vunpack.c.h.b16 %v10479
    %v11086 = vunpack.c.l.b16 %v10480
    %v11087 = vunpack.c.h.b16 %v10480
    %v11088 = vunpack.c.l.b16 %v10481
    %v11089 = vunpack.c.h.b16 %v10481
    %v11090 = vunpack.c.l.b16 %v10482
    %v11091 = vunpack.c.h.b16 %v10482
    %v11092 = vunpack.c.l.b16 %v10483
    %v11093 = vunpack.c.h.b16 %v10483
    %v11094 = vunpack.c.l.b16 %v10484
    %v11095 = vunpack.c.h.b16 %v10484
    %v11096 = vunpack.c.l.b16 %v10485
    %v11097 = vunpack.c.h.b16 %v10485
    %v11098 = vunpack.c.l.b16 %v10486
    %v11099 = vunpack.c.h.b16 %v10486
    %v11100 = vunpack.c.l.b16 %v10487
    %v11101 = vunpack.c.h.b16 %v10487
    %v11102 = vunpack.c.l.b16 %v10488
    %v11103 = vunpack.c.h.b16 %v10488
    %v11104 = vunpack.c.l.b16 %v10489
    %v11105 = vunpack.c.h.b16 %v10489
    %v11106 = vunpack.c.l.b16 %v10490
    %v11107 = vunpack.c.h.b16 %v10490
    %v11108 = vunpack.c.l.b16 %v10491
    %v11109 = vunpack.c.h.b16 %v10491
    %v11110 = vunpack.c.l.b16 %v10492
    %v11111 = vunpack.c.h.b16 %v10492
    %v11112 = vunpack.c.l.b16 %v10493
    %v11113 = vunpack.c.h.b16 %v10493
    %v11114 = vunpack.c.l.b16 %v10494
    %v11115 = vunpack.c.h.b16 %v10494
    %v11116 = vunpack.c.l.b16 %v10495
    %v11117 = vunpack.c.h.b16 %v10495
    %v11118 = vunpack.c.l.b16 %v10496
    %v11119 = vunpack.c.h.b16 %v10496
    %v11120 = vunpack.c.l.b16 %v10497
    %v11121 = vunpack.c.h.b16 %v10497
    %v11122 = vunpack.c.l.b16 %v10498
    %v11123 = vunpack.c.h.b16 %v10498
    %v11124 = vunpack.c.l.b16 %v10499
    %v11125 = vunpack.c.h.b16 %v10499
    %v11126 = vunpack.c.l.b16 %v10500
    %v11127 = vunpack.c.h.b16 %v10500
    %v11128 = vunpack.c.l.b16 %v10501
    %v11129 = vunpack.c.h.b16 %v10501
    %v11130 = vunpack.c.l.b16 %v10502
    %v11131 = vunpack.c.h.b16 %v10502
    %v11132 = vunpack.c.l.b16 %v10503
    %v11133 = vunpack.c.h.b16 %v10503
    %v11134 = vunpack.c.l.b16 %v10504
    %v11135 = vunpack.c.h.b16 %v10504
    %v11136 = vunpack.c.l.b16 %v10505
    %v11137 = vunpack.c.h.b16 %v10505
    %v11138 = vunpack.c.l.b16 %v10506
    %v11139 = vunpack.c.h.b16 %v10506
    %v11140 = vunpack.c.l.b16 %v10507
    %v11141 = vunpack.c.h.b16 %v10507
    %v11142 = vunpack.c.l.b16 %v10508
    %v11143 = vunpack.c.h.b16 %v10508
    %v11144 = vunpack.c.l.b16 %v10509
    %v11145 = vunpack.c.h.b16 %v10509
    %v11146 = vunpack.c.l.b16 %v10510
    %v11147 = vunpack.c.h.b16 %v10510
    %v11148 = vunpack.c.l.b16 %v10511
    %v11149 = vunpack.c.h.b16 %v10511
    %v11150 = vunpack.c.l.b16 %v10512
    %v11151 = vunpack.c.h.b16 %v10512
    %v11152 = vunpack.c.l.b16 %v10513
    %v11153 = vunpack.c.h.b16 %v10513
    %v11154 = vunpack.c.l.b16 %v10514
    %v11155 = vunpack.c.h.b16 %v10514
    %v11156 = vunpack.c.l.b16 %v10515
    %v11157 = vunpack.c.h.b16 %v10515
    %v11158 = vunpack.c.l.b16 %v10516
    %v11159 = vunpack.c.h.b16 %v10516
    %v11160 = vunpack.c.l.b16 %v10517
    %v11161 = vunpack.c.h.b16 %v10517
    %v11162 = vunpack.c.l.b16 %v10518
    %v11163 = vunpack.c.h.b16 %v10518
    %v11164 = vunpack.c.l.b16 %v10519
    %v11165 = vunpack.c.h.b16 %v10519
    %v11166 = vunpack.c.l.b16 %v10520
    %v11167 = vunpack.c.h.b16 %v10520
    %v11168 = vunpack.c.l.b16 %v10521
    %v11169 = vunpack.c.h.b16 %v10521
    %v11170 = vunpack.c.l.b16 %v10522
    %v11171 = vunpack.c.h.b16 %v10522
    %v11172 = vunpack.c.l.b16 %v10523
    %v11173 = vunpack.c.h.b16 %v10523
    %v11174 = vunpack.c.l.b16 %v10524
    %v11175 = vunpack.c.h.b16 %v10524
    %v11176 = vunpack.c.l.b16 %v10525
    %v11177 = vunpack.c.h.b16 %v10525
    %v11178 = vunpack.c.l.b16 %v10526
    %v11179 = vunpack.c.h.b16 %v10526
    %v11180 = vunpack.c.l.b16 %v10527
    %v11181 = vunpack.c.h.b16 %v10527
    %v11182 = vunpack.c.l.b16 %v10528
    %v11183 = vunpack.c.h.b16 %v10528
    %v11184 = vunpack.c.l.b16 %v10529
    %v11185 = vunpack.c.h.b16 %v10529
    %v11186 = vunpack.c.l.b16 %v10530
    %v11187 = vunpack.c.h.b16 %v10530
    %v11188 = vunpack.c.l.b16 %v10531
    %v11189 = vunpack.c.h.b16 %v10531
    %v11190 = vunpack.c.l.b16 %v10532
    %v11191 = vunpack.c.h.b16 %v10532
    %v11192 = vunpack.c.l.b16 %v10533
    %v11193 = vunpack.c.h.b16 %v10533
    %v11194 = vunpack.c.l.b16 %v10534
    %v11195 = vunpack.c.h.b16 %v10534
    %v11196 = vunpack.c.l.b16 %v10535
    %v11197 = vunpack.c.h.b16 %v10535
    %v11198 = vunpack.c.l.b16 %v10536
    %v11199 = vunpack.c.h.b16 %v10536
    %v11200 = vunpack.c.l.b16 %v10537
    %v11201 = vunpack.c.h.b16 %v10537
    %v11202 = vunpack.c.l.b16 %v10538
    %v11203 = vunpack.c.h.b16 %v10538
    %v11204 = vunpack.c.l.b16 %v10539
    %v11205 = vunpack.c.h.b16 %v10539
    %v11206 = vunpack.c.l.b16 %v10540
    %v11207 = vunpack.c.h.b16 %v10540
    %v11208 = vunpack.c.l.b16 %v10541
    %v11209 = vunpack.c.h.b16 %v10541
    %v11210 = vunpack.c.l.b16 %v10542
    %v11211 = vunpack.c.h.b16 %v10542
    %v11212 = vunpack.c.l.b16 %v10543
    %v11213 = vunpack.c.h.b16 %v10543
    %v11214 = vunpack.c.l.b16 %v10544
    %v11215 = vunpack.c.h.b16 %v10544
    %v11216 = vunpack.c.l.b16 %v10545
    %v11217 = vunpack.c.h.b16 %v10545
    %v11218 = vunpack.c.l.b16 %v10546
    %v11219 = vunpack.c.h.b16 %v10546
    %v11220 = vunpack.c.l.b16 %v10547
    %v11221 = vunpack.c.h.b16 %v10547
    %v11222 = vunpack.c.l.b16 %v10548
    %v11223 = vunpack.c.h.b16 %v10548
    %v11224 = vunpack.c.l.b16 %v10549
    %v11225 = vunpack.c.h.b16 %v10549
    %v11226 = vunpack.c.l.b16 %v10550
    %v11227 = vunpack.c.h.b16 %v10550
    %v11228 = vunpack.c.l.b16 %v10551
    %v11229 = vunpack.c.h.b16 %v10551
    %v11230 = vunpack.c.l.b16 %v10552
    %v11231 = vunpack.c.h.b16 %v10552
    %v11232 = vunpack.c.l.b16 %v10553
    %v11233 = vunpack.c.h.b16 %v10553
    %v11234 = vunpack.c.l.b16 %v10554
    %v11235 = vunpack.c.h.b16 %v10554
    %v11236 = vunpack.c.l.b16 %v10555
    %v11237 = vunpack.c.h.b16 %v10555
    %v11238 = vunpack.c.l.b16 %v10556
    %v11239 = vunpack.c.h.b16 %v10556
    %v11240 = vunpack.c.l.b16 %v10557
    %v11241 = vunpack.c.h.b16 %v10557
    %v11242 = vunpack.c.l.b16 %v10558
    %v11243 = vunpack.c.h.b16 %v10558
    %v11244 = vunpack.c.l.b16 %v10559
    %v11245 = vunpack.c.h.b16 %v10559
    %v11246 = vunpack.c.l.b16 %v10560
    %v11247 = vunpack.c.h.b16 %v10560
    %v11248 = vunpack.c.l.b16 %v10561
    %v11249 = vunpack.c.h.b16 %v10561
    %v11250 = vunpack.c.l.b16 %v10562
    %v11251 = vunpack.c.h.b16 %v10562
    %v11252 = vunpack.c.l.b16 %v10563
    %v11253 = vunpack.c.h.b16 %v10563
    %v11254 = vunpack.c.l.b16 %v10564
    %v11255 = vunpack.c.h.b16 %v10564
    %v11256 = vunpack.c.l.b16 %v10565
    %v11257 = vunpack.c.h.b16 %v10565
    %v11258 = vunpack.c.l.b16 %v10566
    %v11259 = vunpack.c.h.b16 %v10566
    %v11260 = vunpack.c.l.b16 %v10567
    %v11261 = vunpack.c.h.b16 %v10567
    %v11262 = vunpack.c.l.b16 %v10568
    %v11263 = vunpack.c.h.b16 %v10568
    %v11264 = vunpack.c.l.b16 %v10569
    %v11265 = vunpack.c.h.b16 %v10569
    %v11266 = vunpack.c.l.b16 %v10570
    %v11267 = vunpack.c.h.b16 %v10570
    %v11268 = vunpack.c.l.b16 %v10571
    %v11269 = vunpack.c.h.b16 %v10571
    %v11270 = vunpack.c.l.b16 %v10572
    %v11271 = vunpack.c.h.b16 %v10572
    %v11272 = vunpack.c.l.b16 %v10573
    %v11273 = vunpack.c.h.b16 %v10573
    %v11274 = vunpack.c.l.b16 %v10574
    %v11275 = vunpack.c.h.b16 %v10574
    %v11276 = vunpack.c.l.b16 %v10575
    %v11277 = vunpack.c.h.b16 %v10575
    %v11278 = vunpack.c.l.b16 %v10576
    %v11279 = vunpack.c.h.b16 %v10576
    %v11280 = vunpack.c.l.b16 %v10577
    %v11281 = vunpack.c.h.b16 %v10577
    %v11282 = vunpack.c.l.b16 %v10578
    %v11283 = vunpack.c.h.b16 %v10578
    %v11284 = vunpack.c.l.b16 %v10579
    %v11285 = vunpack.c.h.b16 %v10579
    %v11286 = vunpack.c.l.b16 %v10580
    %v11287 = vunpack.c.h.b16 %v10580
    %v11288 = vunpack.c.l.b16 %v10581
    %v11289 = vunpack.c.h.b16 %v10581
    %v11290 = vunpack.c.l.b16 %v10582
    %v11291 = vunpack.c.h.b16 %v10582
    %v11292 = vunpack.c.l.b16 %v10583
    %v11293 = vunpack.c.h.b16 %v10583
    %v11294 = vunpack.c.l.b16 %v10584
    %v11295 = vunpack.c.h.b16 %v10584
    %v11296 = vunpack.c.l.b16 %v10585
    %v11297 = vunpack.c.h.b16 %v10585
    %v11298 = vunpack.c.l.b16 %v10586
    %v11299 = vunpack.c.h.b16 %v10586
    %v11300 = vunpack.c.l.b16 %v10587
    %v11301 = vunpack.c.h.b16 %v10587
    %v11302 = vunpack.c.l.b16 %v10588
    %v11303 = vunpack.c.h.b16 %v10588
    %v11304 = vunpack.c.l.b16 %v10589
    %v11305 = vunpack.c.h.b16 %v10589
    %v11306 = vunpack.c.l.b16 %v10590
    %v11307 = vunpack.c.h.b16 %v10590
    %v11308 = vunpack.c.l.b16 %v10591
    %v11309 = vunpack.c.h.b16 %v10591
    %v11310 = vunpack.c.l.b16 %v10592
    %v11311 = vunpack.c.h.b16 %v10592
    %v11312 = vunpack.c.l.b16 %v10593
    %v11313 = vunpack.c.h.b16 %v10593
    %v11314 = vunpack.c.l.b16 %v10594
    %v11315 = vunpack.c.h.b16 %v10594
    %v11316 = vunpack.c.l.b16 %v10595
    %v11317 = vunpack.c.h.b16 %v10595
    %v11318 = vunpack.c.l.b16 %v10596
    %v11319 = vunpack.c.h.b16 %v10596
    %v11320 = vunpack.c.l.b16 %v10597
    %v11321 = vunpack.c.h.b16 %v10597
    %v11322 = vunpack.c.l.b16 %v10598
    %v11323 = vunpack.c.h.b16 %v10598
    %v11324 = vunpack.c.l.b16 %v10599
    %v11325 = vunpack.c.h.b16 %v10599
    %v11326 = vunpack.c.l.b16 %v10600
    %v11327 = vunpack.c.h.b16 %v10600
    %v11328 = vunpack.c.l.b16 %v10601
    %v11329 = vunpack.c.h.b16 %v10601
    %v11330 = vunpack.c.l.b16 %v10602
    %v11331 = vunpack.c.h.b16 %v10602
    %v11332 = vunpack.c.l.b16 %v10603
    %v11333 = vunpack.c.h.b16 %v10603
    %v11334 = vunpack.c.l.b16 %v10604
    %v11335 = vunpack.c.h.b16 %v10604
    %v11336 = vunpack.c.l.b16 %v10605
    %v11337 = vunpack.c.h.b16 %v10605
    %v11338 = vunpack.c.l.b16 %v10606
    %v11339 = vunpack.c.h.b16 %v10606
    %v11340 = vunpack.c.l.b16 %v10607
    %v11341 = vunpack.c.h.b16 %v10607
    %v11342 = vunpack.c.l.b16 %v10608
    %v11343 = vunpack.c.h.b16 %v10608
    %v11344 = vunpack.c.l.b16 %v10609
    %v11345 = vunpack.c.h.b16 %v10609
    %v11346 = vunpack.c.l.b16 %v10610
    %v11347 = vunpack.c.h.b16 %v10610
    %v11348 = vunpack.c.l.b16 %v10611
    %v11349 = vunpack.c.h.b16 %v10611
    %v11350 = vunpack.c.l.b16 %v10612
    %v11351 = vunpack.c.h.b16 %v10612
    %v11352 = vunpack.c.l.b16 %v10613
    %v11353 = vunpack.c.h.b16 %v10613
    %v11354 = vunpack.c.l.b16 %v10614
    %v11355 = vunpack.c.h.b16 %v10614
    %v11356 = vunpack.c.l.b16 %v10615
    %v11357 = vunpack.c.h.b16 %v10615
    %v11358 = vunpack.c.l.b16 %v10616
    %v11359 = vunpack.c.h.b16 %v10616
    %v11360 = vunpack.c.l.b16 %v10617
    %v11361 = vunpack.c.h.b16 %v10617
    %v11362 = vunpack.c.l.b16 %v10618
    %v11363 = vunpack.c.h.b16 %v10618
    %v11364 = vunpack.c.l.b16 %v10619
    %v11365 = vunpack.c.h.b16 %v10619
    %v11366 = vunpack.c.l.b16 %v10620
    %v11367 = vunpack.c.h.b16 %v10620
    %v11368 = vunpack.c.l.b16 %v10621
    %v11369 = vunpack.c.h.b16 %v10621
    %v11370 = vunpack.c.l.b16 %v10622
    %v11371 = vunpack.c.h.b16 %v10622
    %v11372 = vunpack.c.l.b16 %v10623
    %v11373 = vunpack.c.h.b16 %v10623
    %v11374 = vunpack.c.l.b16 %v10624
    %v11375 = vunpack.c.h.b16 %v10624
    %v11376 = vunpack.c.l.b16 %v10625
    %v11377 = vunpack.c.h.b16 %v10625
    %v11378 = vunpack.c.l.b16 %v10626
    %v11379 = vunpack.c.h.b16 %v10626
    %v11380 = vunpack.c.l.b16 %v10627
    %v11381 = vunpack.c.h.b16 %v10627
    %v11382 = vunpack.c.l.b16 %v10628
    %v11383 = vunpack.c.h.b16 %v10628
    %v11384 = vunpack.c.l.b16 %v10629
    %v11385 = vunpack.c.h.b16 %v10629
    %v11386 = vunpack.c.l.b16 %v10630
    %v11387 = vunpack.c.h.b16 %v10630
    %v11388 = vunpack.c.l.b16 %v10631
    %v11389 = vunpack.c.h.b16 %v10631
    %v11390 = vunpack.c.l.b16 %v10632
    %v11391 = vunpack.c.h.b16 %v10632
    %v11392 = vunpack.c.l.b16 %v10633
    %v11393 = vunpack.c.h.b16 %v10633
    %v11394 = vunpack.c.l.b16 %v10634
    %v11395 = vunpack.c.h.b16 %v10634
    %v11396 = vunpack.c.l.b16 %v10635
    %v11397 = vunpack.c.h.b16 %v10635
    %v11398 = vunpack.c.l.b16 %v10636
    %v11399 = vunpack.c.h.b16 %v10636
    %v11400 = vunpack.c.l.b16 %v10637
    %v11401 = vunpack.c.h.b16 %v10637
    %v11402 = vunpack.c.l.b16 %v10638
    %v11403 = vunpack.c.h.b16 %v10638
    %v11404 = vunpack.c.l.b16 %v10639
    %v11405 = vunpack.c.h.b16 %v10639
    %v11406 = vunpack.c.l.b16 %v10640
    %v11407 = vunpack.c.h.b16 %v10640
    %v11408 = vunpack.c.l.b16 %v10641
    %v11409 = vunpack.c.h.b16 %v10641
    %v11410 = vunpack.c.l.b16 %v10642
    %v11411 = vunpack.c.h.b16 %v10642
    %v11412 = vunpack.c.l.b16 %v10643
    %v11413 = vunpack.c.h.b16 %v10643
    %v11414 = vunpack.c.l.b16 %v10644
    %v11415 = vunpack.c.h.b16 %v10644
    %v11416 = vunpack.c.l.b16 %v10645
    %v11417 = vunpack.c.h.b16 %v10645
    %v11418 = vunpack.c.l.b16 %v10646
    %v11419 = vunpack.c.h.b16 %v10646
    %v11420 = vunpack.c.l.b16 %v10647
    %v11421 = vunpack.c.h.b16 %v10647
    %v11422 = vunpack.c.l.b16 %v10648
    %v11423 = vunpack.c.h.b16 %v10648
    %v11424 = vunpack.c.l.b16 %v10649
    %v11425 = vunpack.c.h.b16 %v10649
    %v11426 = vunpack.c.l.b16 %v10650
    %v11427 = vunpack.c.h.b16 %v10650
    %v11428 = vunpack.c.l.b16 %v10651
    %v11429 = vunpack.c.h.b16 %v10651
    %v11430 = vunpack.c.l.b16 %v10652
    %v11431 = vunpack.c.h.b16 %v10652
    %v11432 = vunpack.c.l.b16 %v10653
    %v11433 = vunpack.c.h.b16 %v10653
    %v11434 = vunpack.c.l.b16 %v10654
    %v11435 = vunpack.c.h.b16 %v10654
    %v11436 = vunpack.c.l.b16 %v10655
    %v11437 = vunpack.c.h.b16 %v10655
    %v11438 = vunpack.c.l.b16 %v10656
    %v11439 = vunpack.c.h.b16 %v10656
    %v11440 = vunpack.c.l.b16 %v10657
    %v11441 = vunpack.c.h.b16 %v10657
    %v11442 = vunpack.c.l.b16 %v10658
    %v11443 = vunpack.c.h.b16 %v10658
    %v11444 = vunpack.c.l.b16 %v10659
    %v11445 = vunpack.c.h.b16 %v10659
    %v11446 = vunpack.c.l.b16 %v10660
    %v11447 = vunpack.c.h.b16 %v10660
    %v11448 = vunpack.c.l.b16 %v10661
    %v11449 = vunpack.c.h.b16 %v10661
    %v11450 = vunpack.c.l.b16 %v10662
    %v11451 = vunpack.c.h.b16 %v10662
    %v11452 = vunpack.c.l.b16 %v10663
    %v11453 = vunpack.c.h.b16 %v10663
    %v11454 = vunpack.c.l.b16 %v10664
    %v11455 = vunpack.c.h.b16 %v10664
    %v11456 = vunpack.c.l.b16 %v10665
    %v11457 = vunpack.c.h.b16 %v10665
    %v11458 = vunpack.c.l.b16 %v10666
    %v11459 = vunpack.c.h.b16 %v10666
    %v11460 = vunpack.c.l.b16 %v10667
    %v11461 = vunpack.c.h.b16 %v10667
    %v11462 = vunpack.c.l.b16 %v10668
    %v11463 = vunpack.c.h.b16 %v10668
    %v11464 = vunpack.c.l.b16 %v10669
    %v11465 = vunpack.c.h.b16 %v10669
    %v11466 = vunpack.c.l.b16 %v10670
    %v11467 = vunpack.c.h.b16 %v10670
    %v11468 = vunpack.c.l.b16 %v10671
    %v11469 = vunpack.c.h.b16 %v10671
    %v11470 = vunpack.c.l.b16 %v10672
    %v11471 = vunpack.c.h.b16 %v10672
    %v11472 = vunpack.c.l.b16 %v10673
    %v11473 = vunpack.c.h.b16 %v10673
    %v11474 = vunpack.c.l.b16 %v10674
    %v11475 = vunpack.c.h.b16 %v10674
    %v11476 = vunpack.c.l.b16 %v10675
    %v11477 = vunpack.c.h.b16 %v10675
    %v11478 = vunpack.c.l.b16 %v10676
    %v11479 = vunpack.c.h.b16 %v10676
    %v11480 = vunpack.c.l.b16 %v10677
    %v11481 = vunpack.c.h.b16 %v10677
    %v11482 = vunpack.c.l.b16 %v10678
    %v11483 = vunpack.c.h.b16 %v10678
    %v11484 = vunpack.c.l.b16 %v10679
    %v11485 = vunpack.c.h.b16 %v10679
    %v11486 = vunpack.c.l.b16 %v10680
    %v11487 = vunpack.c.h.b16 %v10680
    %v11488 = vunpack.c.l.b16 %v10681
    %v11489 = vunpack.c.h.b16 %v10681
    %v11490 = vunpack.c.l.b16 %v10682
    %v11491 = vunpack.c.h.b16 %v10682
    %v11492 = vunpack.c.l.b16 %v10683
    %v11493 = vunpack.c.h.b16 %v10683
    %v11494 = vunpack.c.l.b16 %v10684
    %v11495 = vunpack.c.h.b16 %v10684
    %v11496 = vunpack.c.l.b16 %v10685
    %v11497 = vunpack.c.h.b16 %v10685
    %v11498 = vpack.c.b16 %v10990, %v10986
    %v11499 = vpack.c.b16 %v10991, %v10987
    %v11500 = vpack.c.b16 %v10992, %v10988
    %v11501 = vpack.c.b16 %v10993, %v10989
    %v11502 = vpack.c.b16 %v10998, %v10994
    %v11503 = vpack.c.b16 %v10999, %v10995
    %v11504 = vpack.c.b16 %v11000, %v10996
    %v11505 = vpack.c.b16 %v11001, %v10997
    %v11506 = vpack.c.b16 %v11006, %v11002
    %v11507 = vpack.c.b16 %v11007, %v11003
    %v11508 = vpack.c.b16 %v11008, %v11004
    %v11509 = vpack.c.b16 %v11009, %v11005
    %v11510 = vpack.c.b16 %v11014, %v11010
    %v11511 = vpack.c.b16 %v11015, %v11011
    %v11512 = vpack.c.b16 %v11016, %v11012
    %v11513 = vpack.c.b16 %v11017, %v11013
    %v11514 = vpack.c.b16 %v11022, %v11018
    %v11515 = vpack.c.b16 %v11023, %v11019
    %v11516 = vpack.c.b16 %v11024, %v11020
    %v11517 = vpack.c.b16 %v11025, %v11021
    %v11518 = vpack.c.b16 %v11030, %v11026
    %v11519 = vpack.c.b16 %v11031, %v11027
    %v11520 = vpack.c.b16 %v11032, %v11028
    %v11521 = vpack.c.b16 %v11033, %v11029
    %v11522 = vpack.c.b16 %v11038, %v11034
    %v11523 = vpack.c.b16 %v11039, %v11035
    %v11524 = vpack.c.b16 %v11040, %v11036
    %v11525 = vpack.c.b16 %v11041, %v11037
    %v11526 = vpack.c.b16 %v11046, %v11042
    %v11527 = vpack.c.b16 %v11047, %v11043
    %v11528 = vpack.c.b16 %v11048, %v11044
    %v11529 = vpack.c.b16 %v11049, %v11045
    %v11530 = vpack.c.b16 %v11054, %v11050
    %v11531 = vpack.c.b16 %v11055, %v11051
    %v11532 = vpack.c.b16 %v11056, %v11052
    %v11533 = vpack.c.b16 %v11057, %v11053
    %v11534 = vpack.c.b16 %v11062, %v11058
    %v11535 = vpack.c.b16 %v11063, %v11059
    %v11536 = vpack.c.b16 %v11064, %v11060
    %v11537 = vpack.c.b16 %v11065, %v11061
    %v11538 = vpack.c.b16 %v11070, %v11066
    %v11539 = vpack.c.b16 %v11071, %v11067
    %v11540 = vpack.c.b16 %v11072, %v11068
    %v11541 = vpack.c.b16 %v11073, %v11069
    %v11542 = vpack.c.b16 %v11078, %v11074
    %v11543 = vpack.c.b16 %v11079, %v11075
    %v11544 = vpack.c.b16 %v11080, %v11076
    %v11545 = vpack.c.b16 %v11081, %v11077
    %v11546 = vpack.c.b16 %v11086, %v11082
    %v11547 = vpack.c.b16 %v11087, %v11083
    %v11548 = vpack.c.b16 %v11088, %v11084
    %v11549 = vpack.c.b16 %v11089, %v11085
    %v11550 = vpack.c.b16 %v11094, %v11090
    %v11551 = vpack.c.b16 %v11095, %v11091
    %v11552 = vpack.c.b16 %v11096, %v11092
    %v11553 = vpack.c.b16 %v11097, %v11093
    %v11554 = vpack.c.b16 %v11102, %v11098
    %v11555 = vpack.c.b16 %v11103, %v11099
    %v11556 = vpack.c.b16 %v11104, %v11100
    %v11557 = vpack.c.b16 %v11105, %v11101
    %v11558 = vpack.c.b16 %v11110, %v11106
    %v11559 = vpack.c.b16 %v11111, %v11107
    %v11560 = vpack.c.b16 %v11112, %v11108
    %v11561 = vpack.c.b16 %v11113, %v11109
    %v11562 = vpack.c.b16 %v11118, %v11114
    %v11563 = vpack.c.b16 %v11119, %v11115
    %v11564 = vpack.c.b16 %v11120, %v11116
    %v11565 = vpack.c.b16 %v11121, %v11117
    %v11566 = vpack.c.b16 %v11126, %v11122
    %v11567 = vpack.c.b16 %v11127, %v11123
    %v11568 = vpack.c.b16 %v11128, %v11124
    %v11569 = vpack.c.b16 %v11129, %v11125
    %v11570 = vpack.c.b16 %v11134, %v11130
    %v11571 = vpack.c.b16 %v11135, %v11131
    %v11572 = vpack.c.b16 %v11136, %v11132
    %v11573 = vpack.c.b16 %v11137, %v11133
    %v11574 = vpack.c.b16 %v11142, %v11138
    %v11575 = vpack.c.b16 %v11143, %v11139
    %v11576 = vpack.c.b16 %v11144, %v11140
    %v11577 = vpack.c.b16 %v11145, %v11141
    %v11578 = vpack.c.b16 %v11150, %v11146
    %v11579 = vpack.c.b16 %v11151, %v11147
    %v11580 = vpack.c.b16 %v11152, %v11148
    %v11581 = vpack.c.b16 %v11153, %v11149
    %v11582 = vpack.c.b16 %v11158, %v11154
    %v11583 = vpack.c.b16 %v11159, %v11155
    %v11584 = vpack.c.b16 %v11160, %v11156
    %v11585 = vpack.c.b16 %v11161, %v11157
    %v11586 = vpack.c.b16 %v11166, %v11162
    %v11587 = vpack.c.b16 %v11167, %v11163
    %v11588 = vpack.c.b16 %v11168, %v11164
    %v11589 = vpack.c.b16 %v11169, %v11165
    %v11590 = vpack.c.b16 %v11174, %v11170
    %v11591 = vpack.c.b16 %v11175, %v11171
    %v11592 = vpack.c.b16 %v11176, %v11172
    %v11593 = vpack.c.b16 %v11177, %v11173
    %v11594 = vpack.c.b16 %v11182, %v11178
    %v11595 = vpack.c.b16 %v11183, %v11179
    %v11596 = vpack.c.b16 %v11184, %v11180
    %v11597 = vpack.c.b16 %v11185, %v11181
    %v11598 = vpack.c.b16 %v11190, %v11186
    %v11599 = vpack.c.b16 %v11191, %v11187
    %v11600 = vpack.c.b16 %v11192, %v11188
    %v11601 = vpack.c.b16 %v11193, %v11189
    %v11602 = vpack.c.b16 %v11198, %v11194
    %v11603 = vpack.c.b16 %v11199, %v11195
    %v11604 = vpack.c.b16 %v11200, %v11196
    %v11605 = vpack.c.b16 %v11201, %v11197
    %v11606 = vpack.c.b16 %v11206, %v11202
    %v11607 = vpack.c.b16 %v11207, %v11203
    %v11608 = vpack.c.b16 %v11208, %v11204
    %v11609 = vpack.c.b16 %v11209, %v11205
    %v11610 = vpack.c.b16 %v11214, %v11210
    %v11611 = vpack.c.b16 %v11215, %v11211
    %v11612 = vpack.c.b16 %v11216, %v11212
    %v11613 = vpack.c.b16 %v11217, %v11213
    %v11614 = vpack.c.b16 %v11222, %v11218
    %v11615 = vpack.c.b16 %v11223, %v11219
    %v11616 = vpack.c.b16 %v11224, %v11220
    %v11617 = vpack.c.b16 %v11225, %v11221
    %v11618 = vpack.c.b16 %v11230, %v11226
    %v11619 = vpack.c.b16 %v11231, %v11227
    %v11620 = vpack.c.b16 %v11232, %v11228
    %v11621 = vpack.c.b16 %v11233, %v11229
    %v11622 = vpack.c.b16 %v11238, %v11234
    %v11623 = vpack.c.b16 %v11239, %v11235
    %v11624 = vpack.c.b16 %v11240, %v11236
    %v11625 = vpack.c.b16 %v11241, %v11237
    %v11626 = vpack.c.b16 %v11246, %v11242
    %v11627 = vpack.c.b16 %v11247, %v11243
    %v11628 = vpack.c.b16 %v11248, %v11244
    %v11629 = vpack.c.b16 %v11249, %v11245
    %v11630 = vpack.c.b16 %v11254, %v11250
    %v11631 = vpack.c.b16 %v11255, %v11251
    %v11632 = vpack.c.b16 %v11256, %v11252
    %v11633 = vpack.c.b16 %v11257, %v11253
    %v11634 = vpack.c.b16 %v11262, %v11258
    %v11635 = vpack.c.b16 %v11263, %v11259
    %v11636 = vpack.c.b16 %v11264, %v11260
    %v11637 = vpack.c.b16 %v11265, %v11261
    %v11638 = vpack.c.b16 %v11270, %v11266
    %v11639 = vpack.c.b16 %v11271, %v11267
    %v11640 = vpack.c.b16 %v11272, %v11268
    %v11641 = vpack.c.b16 %v11273, %v11269
    %v11642 = vpack.c.b16 %v11278, %v11274
    %v11643 = vpack.c.b16 %v11279, %v11275
    %v11644 = vpack.c.b16 %v11280, %v11276
    %v11645 = vpack.c.b16 %v11281, %v11277
    %v11646 = vpack.c.b16 %v11286, %v11282
    %v11647 = vpack.c.b16 %v11287, %v11283
    %v11648 = vpack.c.b16 %v11288, %v11284
    %v11649 = vpack.c.b16 %v11289, %v11285
    %v11650 = vpack.c.b16 %v11294, %v11290
    %v11651 = vpack.c.b16 %v11295, %v11291
    %v11652 = vpack.c.b16 %v11296, %v11292
    %v11653 = vpack.c.b16 %v11297, %v11293
    %v11654 = vpack.c.b16 %v11302, %v11298
    %v11655 = vpack.c.b16 %v11303, %v11299
    %v11656 = vpack.c.b16 %v11304, %v11300
    %v11657 = vpack.c.b16 %v11305, %v11301
    %v11658 = vpack.c.b16 %v11310, %v11306
    %v11659 = vpack.c.b16 %v11311, %v11307
    %v11660 = vpack.c.b16 %v11312, %v11308
    %v11661 = vpack.c.b16 %v11313, %v11309
    %v11662 = vpack.c.b16 %v11318, %v11314
    %v11663 = vpack.c.b16 %v11319, %v11315
    %v11664 = vpack.c.b16 %v11320, %v11316
    %v11665 = vpack.c.b16 %v11321, %v11317
    %v11666 = vpack.c.b16 %v11326, %v11322
    %v11667 = vpack.c.b16 %v11327, %v11323
    %v11668 = vpack.c.b16 %v11328, %v11324
    %v11669 = vpack.c.b16 %v11329, %v11325
    %v11670 = vpack.c.b16 %v11334, %v11330
    %v11671 = vpack.c.b16 %v11335, %v11331
    %v11672 = vpack.c.b16 %v11336, %v11332
    %v11673 = vpack.c.b16 %v11337, %v11333
    %v11674 = vpack.c.b16 %v11342, %v11338
    %v11675 = vpack.c.b16 %v11343, %v11339
    %v11676 = vpack.c.b16 %v11344, %v11340
    %v11677 = vpack.c.b16 %v11345, %v11341
    %v11678 = vpack.c.b16 %v11350, %v11346
    %v11679 = vpack.c.b16 %v11351, %v11347
    %v11680 = vpack.c.b16 %v11352, %v11348
    %v11681 = vpack.c.b16 %v11353, %v11349
    %v11682 = vpack.c.b16 %v11358, %v11354
    %v11683 = vpack.c.b16 %v11359, %v11355
    %v11684 = vpack.c.b16 %v11360, %v11356
    %v11685 = vpack.c.b16 %v11361, %v11357
    %v11686 = vpack.c.b16 %v11366, %v11362
    %v11687 = vpack.c.b16 %v11367, %v11363
    %v11688 = vpack.c.b16 %v11368, %v11364
    %v11689 = vpack.c.b16 %v11369, %v11365
    %v11690 = vpack.c.b16 %v11374, %v11370
    %v11691 = vpack.c.b16 %v11375, %v11371
    %v11692 = vpack.c.b16 %v11376, %v11372
    %v11693 = vpack.c.b16 %v11377, %v11373
    %v11694 = vpack.c.b16 %v11382, %v11378
    %v11695 = vpack.c.b16 %v11383, %v11379
    %v11696 = vpack.c.b16 %v11384, %v11380
    %v11697 = vpack.c.b16 %v11385, %v11381
    %v11698 = vpack.c.b16 %v11390, %v11386
    %v11699 = vpack.c.b16 %v11391, %v11387
    %v11700 = vpack.c.b16 %v11392, %v11388
    %v11701 = vpack.c.b16 %v11393, %v11389
    %v11702 = vpack.c.b16 %v11398, %v11394
    %v11703 = vpack.c.b16 %v11399, %v11395
    %v11704 = vpack.c.b16 %v11400, %v11396
    %v11705 = vpack.c.b16 %v11401, %v11397
    %v11706 = vpack.c.b16 %v11406, %v11402
    %v11707 = vpack.c.b16 %v11407, %v11403
    %v11708 = vpack.c.b16 %v11408, %v11404
    %v11709 = vpack.c.b16 %v11409, %v11405
    %v11710 = vpack.c.b16 %v11414, %v11410
    %v11711 = vpack.c.b16 %v11415, %v11411
    %v11712 = vpack.c.b16 %v11416, %v11412
    %v11713 = vpack.c.b16 %v11417, %v11413
    %v11714 = vpack.c.b16 %v11422, %v11418
    %v11715 = vpack.c.b16 %v11423, %v11419
    %v11716 = vpack.c.b16 %v11424, %v11420
    %v11717 = vpack.c.b16 %v11425, %v11421
    %v11718 = vpack.c.b16 %v11430, %v11426
    %v11719 = vpack.c.b16 %v11431, %v11427
    %v11720 = vpack.c.b16 %v11432, %v11428
    %v11721 = vpack.c.b16 %v11433, %v11429
    %v11722 = vpack.c.b16 %v11438, %v11434
    %v11723 = vpack.c.b16 %v11439, %v11435
    %v11724 = vpack.c.b16 %v11440, %v11436
    %v11725 = vpack.c.b16 %v11441, %v11437
    %v11726 = vpack.c.b16 %v11446, %v11442
    %v11727 = vpack.c.b16 %v11447, %v11443
    %v11728 = vpack.c.b16 %v11448, %v11444
    %v11729 = vpack.c.b16 %v11449, %v11445
    %v11730 = vpack.c.b16 %v11454, %v11450
    %v11731 = vpack.c.b16 %v11455, %v11451
    %v11732 = vpack.c.b16 %v11456, %v11452
    %v11733 = vpack.c.b16 %v11457, %v11453
    %v11734 = vpack.c.b16 %v11462, %v11458
    %v11735 = vpack.c.b16 %v11463, %v11459
    %v11736 = vpack.c.b16 %v11464, %v11460
    %v11737 = vpack.c.b16 %v11465, %v11461
    %v11738 = vpack.c.b16 %v11470, %v11466
    %v11739 = vpack.c.b16 %v11471, %v11467
    %v11740 = vpack.c.b16 %v11472, %v11468
    %v11741 = vpack.c.b16 %v11473, %v11469
    %v11742 = vpack.c.b16 %v11478, %v11474
    %v11743 = vpack.c.b16 %v11479, %v11475
    %v11744 = vpack.c.b16 %v11480, %v11476
    %v11745 = vpack.c.b16 %v11481, %v11477
    %v11746 = vpack.c.b16 %v11486, %v11482
    %v11747 = vpack.c.b16 %v11487, %v11483
    %v11748 = vpack.c.b16 %v11488, %v11484
    %v11749 = vpack.c.b16 %v11489, %v11485
    %v11750 = vpack.c.b16 %v11494, %v11490
    %v11751 = vpack.c.b16 %v11495, %v11491
    %v11752 = vpack.c.b16 %v11496, %v11492
    %v11753 = vpack.c.b16 %v11497, %v11493
    %12010 = vmatprep.subr.bf16.mxu0 %v11527
    %12011 = vmatpush1.bf16.msra.mxu0 %v11526
    %12012 = vmatprep.subr.bf16.mxu0 %v11523
    %12013 = vmatpush1.bf16.msra.mxu0 %v11522
    %12014 = vmatprep.subr.bf16.mxu0 %v11519
    %12015 = vmatpush1.bf16.msra.mxu0 %v11518
    %12016 = vmatprep.subr.bf16.mxu0 %v11515
    %12017 = vmatpush1.bf16.msra.mxu0 %v11514
    %12018 = vmatprep.subr.bf16.mxu0 %v11511
    %12019 = vmatpush1.bf16.msra.mxu0 %v11510
    %12020 = vmatprep.subr.bf16.mxu0 %v11507
    %12021 = vmatpush1.bf16.msra.mxu0 %v11506
    %12022 = vmatprep.subr.bf16.mxu0 %v11503
    %12023 = vmatpush1.bf16.msra.mxu0 %v11502
    %12024 = vmatprep.subr.bf16.mxu0 %v11499
    %12025 = vmatpush1.bf16.msra.mxu0 %v11498
    %12026 = vmatprep.subr.bf16.mxu0 %v11559
    %12027 = vmatpush2.bf16.msra.mxu0 %v11558
    %12028 = vmatprep.subr.bf16.mxu0 %v11555
    %12029 = vmatpush2.bf16.msra.mxu0 %v11554
    %12030 = vmatprep.subr.bf16.mxu0 %v11551
    %12031 = vmatpush2.bf16.msra.mxu0 %v11550
    %12032 = vmatprep.subr.bf16.mxu0 %v11547
    %12033 = vmatpush2.bf16.msra.mxu0 %v11546
    %12034 = vmatprep.subr.bf16.mxu0 %v11543
    %12035 = vmatpush2.bf16.msra.mxu0 %v11542
    %12036 = vmatprep.subr.bf16.mxu0 %v11539
    %12037 = vmatpush2.bf16.msra.mxu0 %v11538
    %12038 = vmatprep.subr.bf16.mxu0 %v11535
    %12039 = vmatpush2.bf16.msra.mxu0 %v11534
    %12040 = vmatprep.subr.bf16.mxu0 %v11531
    %12041 = vmatpush2.bf16.msra.mxu0 %v11530
    %12042 = vmatprep.mubr.bf16.mxu0 %v10687
    %12043 = vmatmul.mubr.bf16.gmra.mxu0 %v10686
    %v12044 = vpop.f32.mrf.mxu0
    %v12045 = vadd.f32 %v10717, %v12044
    %v12046 = vpop.f32.mrf.mxu0
    %v12047 = vadd.f32 %v10721, %v12046
    %v12048 = vpop.f32.mrf.mxu0
    %v12049 = vpop.f32.mrf.mxu0
    %12050 = vdwg.mxu0
    %12051 = vmatprep.subr.bf16.mxu0 %v11591
    %12052 = vmatpush1.bf16.msra.mxu0 %v11590
    %12053 = vmatprep.subr.bf16.mxu0 %v11587
    %12054 = vmatpush1.bf16.msra.mxu0 %v11586
    %12055 = vmatprep.subr.bf16.mxu0 %v11583
    %12056 = vmatpush1.bf16.msra.mxu0 %v11582
    %12057 = vmatprep.subr.bf16.mxu0 %v11579
    %12058 = vmatpush1.bf16.msra.mxu0 %v11578
    %12059 = vmatprep.subr.bf16.mxu0 %v11575
    %12060 = vmatpush1.bf16.msra.mxu0 %v11574
    %12061 = vmatprep.subr.bf16.mxu0 %v11571
    %12062 = vmatpush1.bf16.msra.mxu0 %v11570
    %12063 = vmatprep.subr.bf16.mxu0 %v11567
    %12064 = vmatpush1.bf16.msra.mxu0 %v11566
    %12065 = vmatprep.subr.bf16.mxu0 %v11563
    %12066 = vmatpush1.bf16.msra.mxu0 %v11562
    %12067 = vmatprep.subr.bf16.mxu0 %v11623
    %12068 = vmatpush2.bf16.msra.mxu0 %v11622
    %12069 = vmatprep.subr.bf16.mxu0 %v11619
    %12070 = vmatpush2.bf16.msra.mxu0 %v11618
    %12071 = vmatprep.subr.bf16.mxu0 %v11615
    %12072 = vmatpush2.bf16.msra.mxu0 %v11614
    %12073 = vmatprep.subr.bf16.mxu0 %v11611
    %12074 = vmatpush2.bf16.msra.mxu0 %v11610
    %12075 = vmatprep.subr.bf16.mxu0 %v11607
    %12076 = vmatpush2.bf16.msra.mxu0 %v11606
    %12077 = vmatprep.subr.bf16.mxu0 %v11603
    %12078 = vmatpush2.bf16.msra.mxu0 %v11602
    %12079 = vmatprep.subr.bf16.mxu0 %v11599
    %12080 = vmatpush2.bf16.msra.mxu0 %v11598
    %12081 = vmatprep.subr.bf16.mxu0 %v11595
    %12082 = vmatpush2.bf16.msra.mxu0 %v11594
    %12083 = vmatprep.mubr.bf16.mxu0 %v10689
    %12084 = vmatmul.mubr.bf16.gmra.mxu0 %v10688
    %v12085 = vpop.f32.mrf.mxu0
    %v12086 = vadd.f32 %v12045, %v12085
    %v12087 = vpop.f32.mrf.mxu0
    %v12088 = vadd.f32 %v12047, %v12087
    %v12089 = vpop.f32.mrf.mxu0
    %v12090 = vpop.f32.mrf.mxu0
    %12091 = vdwg.mxu0
    %12092 = vmatprep.subr.bf16.mxu0 %v11655
    %12093 = vmatpush1.bf16.msra.mxu0 %v11654
    %12094 = vmatprep.subr.bf16.mxu0 %v11651
    %12095 = vmatpush1.bf16.msra.mxu0 %v11650
    %12096 = vmatprep.subr.bf16.mxu0 %v11647
    %12097 = vmatpush1.bf16.msra.mxu0 %v11646
    %12098 = vmatprep.subr.bf16.mxu0 %v11643
    %12099 = vmatpush1.bf16.msra.mxu0 %v11642
    %12100 = vmatprep.subr.bf16.mxu0 %v11639
    %12101 = vmatpush1.bf16.msra.mxu0 %v11638
    %12102 = vmatprep.subr.bf16.mxu0 %v11635
    %12103 = vmatpush1.bf16.msra.mxu0 %v11634
    %12104 = vmatprep.subr.bf16.mxu0 %v11631
    %12105 = vmatpush1.bf16.msra.mxu0 %v11630
    %12106 = vmatprep.subr.bf16.mxu0 %v11627
    %12107 = vmatpush1.bf16.msra.mxu0 %v11626
    %12108 = vmatprep.subr.bf16.mxu0 %v11687
    %12109 = vmatpush2.bf16.msra.mxu0 %v11686
    %12110 = vmatprep.subr.bf16.mxu0 %v11683
    %12111 = vmatpush2.bf16.msra.mxu0 %v11682
    %12112 = vmatprep.subr.bf16.mxu0 %v11679
    %12113 = vmatpush2.bf16.msra.mxu0 %v11678
    %12114 = vmatprep.subr.bf16.mxu0 %v11675
    %12115 = vmatpush2.bf16.msra.mxu0 %v11674
    %12116 = vmatprep.subr.bf16.mxu0 %v11671
    %12117 = vmatpush2.bf16.msra.mxu0 %v11670
    %12118 = vmatprep.subr.bf16.mxu0 %v11667
    %12119 = vmatpush2.bf16.msra.mxu0 %v11666
    %12120 = vmatprep.subr.bf16.mxu0 %v11663
    %12121 = vmatpush2.bf16.msra.mxu0 %v11662
    %12122 = vmatprep.subr.bf16.mxu0 %v11659
    %12123 = vmatpush2.bf16.msra.mxu0 %v11658
    %12124 = vmatprep.mubr.bf16.mxu0 %v10691
    %12125 = vmatmul.mubr.bf16.gmra.mxu0 %v10690
    %v12126 = vpop.f32.mrf.mxu0
    %v12127 = vadd.f32 %v12086, %v12126
    %v12128 = vpop.f32.mrf.mxu0
    %v12129 = vadd.f32 %v12088, %v12128
    %v12130 = vpop.f32.mrf.mxu0
    %v12131 = vpop.f32.mrf.mxu0
    %12132 = vdwg.mxu0
    %12133 = vmatprep.subr.bf16.mxu0 %v11719
    %12134 = vmatpush1.bf16.msra.mxu0 %v11718
    %12135 = vmatprep.subr.bf16.mxu0 %v11715
    %12136 = vmatpush1.bf16.msra.mxu0 %v11714
    %12137 = vmatprep.subr.bf16.mxu0 %v11711
    %12138 = vmatpush1.bf16.msra.mxu0 %v11710
    %12139 = vmatprep.subr.bf16.mxu0 %v11707
    %12140 = vmatpush1.bf16.msra.mxu0 %v11706
    %12141 = vmatprep.subr.bf16.mxu0 %v11703
    %12142 = vmatpush1.bf16.msra.mxu0 %v11702
    %12143 = vmatprep.subr.bf16.mxu0 %v11699
    %12144 = vmatpush1.bf16.msra.mxu0 %v11698
    %12145 = vmatprep.subr.bf16.mxu0 %v11695
    %12146 = vmatpush1.bf16.msra.mxu0 %v11694
    %12147 = vmatprep.subr.bf16.mxu0 %v11691
    %12148 = vmatpush1.bf16.msra.mxu0 %v11690
    %12149 = vmatprep.subr.bf16.mxu0 %v11751
    %12150 = vmatpush2.bf16.msra.mxu0 %v11750
    %12151 = vmatprep.subr.bf16.mxu0 %v11747
    %12152 = vmatpush2.bf16.msra.mxu0 %v11746
    %12153 = vmatprep.subr.bf16.mxu0 %v11743
    %12154 = vmatpush2.bf16.msra.mxu0 %v11742
    %12155 = vmatprep.subr.bf16.mxu0 %v11739
    %12156 = vmatpush2.bf16.msra.mxu0 %v11738
    %12157 = vmatprep.subr.bf16.mxu0 %v11735
    %12158 = vmatpush2.bf16.msra.mxu0 %v11734
    %12159 = vmatprep.subr.bf16.mxu0 %v11731
    %12160 = vmatpush2.bf16.msra.mxu0 %v11730
    %12161 = vmatprep.subr.bf16.mxu0 %v11727
    %12162 = vmatpush2.bf16.msra.mxu0 %v11726
    %12163 = vmatprep.subr.bf16.mxu0 %v11723
    %12164 = vmatpush2.bf16.msra.mxu0 %v11722
    %12165 = vmatprep.mubr.bf16.mxu0 %v10693
    %12166 = vmatmul.mubr.bf16.gmra.mxu0 %v10692
    %v12167 = vpop.f32.mrf.mxu0
    %v12168 = vadd.f32 %v12127, %v12167
    %v12169 = vpop.f32.mrf.mxu0
    %v12170 = vadd.f32 %v12129, %v12169
    %v12171 = vpop.f32.mrf.mxu0
    %v12172 = vpop.f32.mrf.mxu0
    %12173 = vdwg.mxu0
    %12174 = vmatprep.subr.bf16.mxu0 %v11529
    %12175 = vmatpush1.bf16.msra.mxu0 %v11528
    %12176 = vmatprep.subr.bf16.mxu0 %v11525
    %12177 = vmatpush1.bf16.msra.mxu0 %v11524
    %12178 = vmatprep.subr.bf16.mxu0 %v11521
    %12179 = vmatpush1.bf16.msra.mxu0 %v11520
    %12180 = vmatprep.subr.bf16.mxu0 %v11517
    %12181 = vmatpush1.bf16.msra.mxu0 %v11516
    %12182 = vmatprep.subr.bf16.mxu0 %v11513
    %12183 = vmatpush1.bf16.msra.mxu0 %v11512
    %12184 = vmatprep.subr.bf16.mxu0 %v11509
    %12185 = vmatpush1.bf16.msra.mxu0 %v11508
    %12186 = vmatprep.subr.bf16.mxu0 %v11505
    %12187 = vmatpush1.bf16.msra.mxu0 %v11504
    %12188 = vmatprep.subr.bf16.mxu0 %v11501
    %12189 = vmatpush1.bf16.msra.mxu0 %v11500
    %12190 = vmatprep.subr.bf16.mxu0 %v11561
    %12191 = vmatpush2.bf16.msra.mxu0 %v11560
    %12192 = vmatprep.subr.bf16.mxu0 %v11557
    %12193 = vmatpush2.bf16.msra.mxu0 %v11556
    %12194 = vmatprep.subr.bf16.mxu0 %v11553
    %12195 = vmatpush2.bf16.msra.mxu0 %v11552
    %12196 = vmatprep.subr.bf16.mxu0 %v11549
    %12197 = vmatpush2.bf16.msra.mxu0 %v11548
    %12198 = vmatprep.subr.bf16.mxu0 %v11545
    %12199 = vmatpush2.bf16.msra.mxu0 %v11544
    %12200 = vmatprep.subr.bf16.mxu0 %v11541
    %12201 = vmatpush2.bf16.msra.mxu0 %v11540
    %12202 = vmatprep.subr.bf16.mxu0 %v11537
    %12203 = vmatpush2.bf16.msra.mxu0 %v11536
    %12204 = vmatprep.subr.bf16.mxu0 %v11533
    %12205 = vmatpush2.bf16.msra.mxu0 %v11532
    %12206 = vmatprep.mubr.bf16.mxu0 %v10687
    %12207 = vmatmul.mubr.bf16.gmra.mxu0 %v10686
    %v12208 = vpop.f32.mrf.mxu0
    %v12209 = vadd.f32 %v10725, %v12208
    %v12210 = vpop.f32.mrf.mxu0
    %v12211 = vadd.f32 %v10729, %v12210
    %v12212 = vpop.f32.mrf.mxu0
    %v12213 = vpop.f32.mrf.mxu0
    %12214 = vdwg.mxu0
    %12215 = vmatprep.subr.bf16.mxu0 %v11593
    %12216 = vmatpush1.bf16.msra.mxu0 %v11592
    %12217 = vmatprep.subr.bf16.mxu0 %v11589
    %12218 = vmatpush1.bf16.msra.mxu0 %v11588
    %12219 = vmatprep.subr.bf16.mxu0 %v11585
    %12220 = vmatpush1.bf16.msra.mxu0 %v11584
    %12221 = vmatprep.subr.bf16.mxu0 %v11581
    %12222 = vmatpush1.bf16.msra.mxu0 %v11580
    %12223 = vmatprep.subr.bf16.mxu0 %v11577
    %12224 = vmatpush1.bf16.msra.mxu0 %v11576
    %12225 = vmatprep.subr.bf16.mxu0 %v11573
    %12226 = vmatpush1.bf16.msra.mxu0 %v11572
    %12227 = vmatprep.subr.bf16.mxu0 %v11569
    %12228 = vmatpush1.bf16.msra.mxu0 %v11568
    %12229 = vmatprep.subr.bf16.mxu0 %v11565
    %12230 = vmatpush1.bf16.msra.mxu0 %v11564
    %12231 = vmatprep.subr.bf16.mxu0 %v11625
    %12232 = vmatpush2.bf16.msra.mxu0 %v11624
    %12233 = vmatprep.subr.bf16.mxu0 %v11621
    %12234 = vmatpush2.bf16.msra.mxu0 %v11620
    %12235 = vmatprep.subr.bf16.mxu0 %v11617
    %12236 = vmatpush2.bf16.msra.mxu0 %v11616
    %12237 = vmatprep.subr.bf16.mxu0 %v11613
    %12238 = vmatpush2.bf16.msra.mxu0 %v11612
    %12239 = vmatprep.subr.bf16.mxu0 %v11609
    %12240 = vmatpush2.bf16.msra.mxu0 %v11608
    %12241 = vmatprep.subr.bf16.mxu0 %v11605
    %12242 = vmatpush2.bf16.msra.mxu0 %v11604
    %12243 = vmatprep.subr.bf16.mxu0 %v11601
    %12244 = vmatpush2.bf16.msra.mxu0 %v11600
    %12245 = vmatprep.subr.bf16.mxu0 %v11597
    %12246 = vmatpush2.bf16.msra.mxu0 %v11596
    %12247 = vmatprep.mubr.bf16.mxu0 %v10689
    %12248 = vmatmul.mubr.bf16.gmra.mxu0 %v10688
    %v12249 = vpop.f32.mrf.mxu0
    %v12250 = vadd.f32 %v12209, %v12249
    %v12251 = vpop.f32.mrf.mxu0
    %v12252 = vadd.f32 %v12211, %v12251
    %v12253 = vpop.f32.mrf.mxu0
    %v12254 = vpop.f32.mrf.mxu0
    %12255 = vdwg.mxu0
    %12256 = vmatprep.subr.bf16.mxu0 %v11657
    %12257 = vmatpush1.bf16.msra.mxu0 %v11656
    %12258 = vmatprep.subr.bf16.mxu0 %v11653
    %12259 = vmatpush1.bf16.msra.mxu0 %v11652
    %12260 = vmatprep.subr.bf16.mxu0 %v11649
    %12261 = vmatpush1.bf16.msra.mxu0 %v11648
    %12262 = vmatprep.subr.bf16.mxu0 %v11645
    %12263 = vmatpush1.bf16.msra.mxu0 %v11644
    %12264 = vmatprep.subr.bf16.mxu0 %v11641
    %12265 = vmatpush1.bf16.msra.mxu0 %v11640
    %12266 = vmatprep.subr.bf16.mxu0 %v11637
    %12267 = vmatpush1.bf16.msra.mxu0 %v11636
    %12268 = vmatprep.subr.bf16.mxu0 %v11633
    %12269 = vmatpush1.bf16.msra.mxu0 %v11632
    %12270 = vmatprep.subr.bf16.mxu0 %v11629
    %12271 = vmatpush1.bf16.msra.mxu0 %v11628
    %12272 = vmatprep.subr.bf16.mxu0 %v11689
    %12273 = vmatpush2.bf16.msra.mxu0 %v11688
    %12274 = vmatprep.subr.bf16.mxu0 %v11685
    %12275 = vmatpush2.bf16.msra.mxu0 %v11684
    %12276 = vmatprep.subr.bf16.mxu0 %v11681
    %12277 = vmatpush2.bf16.msra.mxu0 %v11680
    %12278 = vmatprep.subr.bf16.mxu0 %v11677
    %12279 = vmatpush2.bf16.msra.mxu0 %v11676
    %12280 = vmatprep.subr.bf16.mxu0 %v11673
    %12281 = vmatpush2.bf16.msra.mxu0 %v11672
    %12282 = vmatprep.subr.bf16.mxu0 %v11669
    %12283 = vmatpush2.bf16.msra.mxu0 %v11668
    %12284 = vmatprep.subr.bf16.mxu0 %v11665
    %12285 = vmatpush2.bf16.msra.mxu0 %v11664
    %12286 = vmatprep.subr.bf16.mxu0 %v11661
    %12287 = vmatpush2.bf16.msra.mxu0 %v11660
    %12288 = vmatprep.mubr.bf16.mxu0 %v10691
    %12289 = vmatmul.mubr.bf16.gmra.mxu0 %v10690
    %v12290 = vpop.f32.mrf.mxu0
    %v12291 = vadd.f32 %v12250, %v12290
    %v12292 = vpop.f32.mrf.mxu0
    %v12293 = vadd.f32 %v12252, %v12292
    %v12294 = vpop.f32.mrf.mxu0
    %v12295 = vpop.f32.mrf.mxu0
    %12296 = vdwg.mxu0
    %12297 = vmatprep.subr.bf16.mxu0 %v11721
    %12298 = vmatpush1.bf16.msra.mxu0 %v11720
    %12299 = vmatprep.subr.bf16.mxu0 %v11717
    %12300 = vmatpush1.bf16.msra.mxu0 %v11716
    %12301 = vmatprep.subr.bf16.mxu0 %v11713
    %12302 = vmatpush1.bf16.msra.mxu0 %v11712
    %12303 = vmatprep.subr.bf16.mxu0 %v11709
    %12304 = vmatpush1.bf16.msra.mxu0 %v11708
    %12305 = vmatprep.subr.bf16.mxu0 %v11705
    %12306 = vmatpush1.bf16.msra.mxu0 %v11704
    %12307 = vmatprep.subr.bf16.mxu0 %v11701
    %12308 = vmatpush1.bf16.msra.mxu0 %v11700
    %12309 = vmatprep.subr.bf16.mxu0 %v11697
    %12310 = vmatpush1.bf16.msra.mxu0 %v11696
    %12311 = vmatprep.subr.bf16.mxu0 %v11693
    %12312 = vmatpush1.bf16.msra.mxu0 %v11692
    %12313 = vmatprep.subr.bf16.mxu0 %v11753
    %12314 = vmatpush2.bf16.msra.mxu0 %v11752
    %12315 = vmatprep.subr.bf16.mxu0 %v11749
    %12316 = vmatpush2.bf16.msra.mxu0 %v11748
    %12317 = vmatprep.subr.bf16.mxu0 %v11745
    %12318 = vmatpush2.bf16.msra.mxu0 %v11744
    %12319 = vmatprep.subr.bf16.mxu0 %v11741
    %12320 = vmatpush2.bf16.msra.mxu0 %v11740
    %12321 = vmatprep.subr.bf16.mxu0 %v11737
    %12322 = vmatpush2.bf16.msra.mxu0 %v11736
    %12323 = vmatprep.subr.bf16.mxu0 %v11733
    %12324 = vmatpush2.bf16.msra.mxu0 %v11732
    %12325 = vmatprep.subr.bf16.mxu0 %v11729
    %12326 = vmatpush2.bf16.msra.mxu0 %v11728
    %12327 = vmatprep.subr.bf16.mxu0 %v11725
    %12328 = vmatpush2.bf16.msra.mxu0 %v11724
    %12329 = vmatprep.mubr.bf16.mxu0 %v10693
    %12330 = vmatmul.mubr.bf16.gmra.mxu0 %v10692
    %v12331 = vpop.f32.mrf.mxu0
    %v12332 = vadd.f32 %v12291, %v12331
    %v12333 = vpop.f32.mrf.mxu0
    %v12334 = vadd.f32 %v12293, %v12333
    %v12335 = vpop.f32.mrf.mxu0
    %v12336 = vpop.f32.mrf.mxu0
    %12337 = vdwg.mxu0
    %v12338 = vmax.f32 %v12168, 0.0
    %v12339 = vmax.f32 %v12170, 0.0
    %v12340 = vmax.f32 %v12332, 0.0
    %v12341 = vmax.f32 %v12334, 0.0
    %v12342 = vld [vmem:[#allocation7 + $0x20] sm:$0xff]
    %v12343 = vld [vmem:[#allocation7 + $0x28] sm:$0xff]
    %v12344 = vld [vmem:[#allocation7 + $0x30] sm:$0xff]
    %v12345 = vld [vmem:[#allocation7 + $0x38] sm:$0xff]
    %v12346 = vld [vmem:[#allocation7 + $0x40] sm:$0xff]
    %v12347 = vld [vmem:[#allocation7 + $0x48] sm:$0xff]
    %v12348 = vld [vmem:[#allocation7 + $0x50] sm:$0xff]
    %v12349 = vld [vmem:[#allocation7 + $0x58] sm:$0xff]
    %v12350 = vld [vmem:[#allocation7 + $0x60] sm:$0xff]
    %v12351 = vld [vmem:[#allocation7 + $0x68] sm:$0xff]
    %v12352 = vld [vmem:[#allocation7 + $0x70] sm:$0xff]
    %v12353 = vld [vmem:[#allocation7 + $0x78] sm:$0xff]
    %v12354 = vld [vmem:[#allocation7 + $0x80] sm:$0xff]
    %v12355 = vld [vmem:[#allocation7 + $0x88] sm:$0xff]
    %v12356 = vld [vmem:[#allocation7 + $0x90] sm:$0xff]
    %v12357 = vld [vmem:[#allocation7 + $0x98] sm:$0xff]
    %v12358 = vld [vmem:[#allocation7 + $0xa0] sm:$0xff]
    %v12359 = vld [vmem:[#allocation7 + $0xa8] sm:$0xff]
    %v12360 = vld [vmem:[#allocation7 + $0xb0] sm:$0xff]
    %v12361 = vld [vmem:[#allocation7 + $0xb8] sm:$0xff]
    %v12362 = vld [vmem:[#allocation7 + $0xc0] sm:$0xff]
    %v12363 = vld [vmem:[#allocation7 + $0xc8] sm:$0xff]
    %v12364 = vld [vmem:[#allocation7 + $0xd0] sm:$0xff]
    %v12365 = vld [vmem:[#allocation7 + $0xd8] sm:$0xff]
    %v12366 = vld [vmem:[#allocation7 + $0xe0] sm:$0xff]
    %v12367 = vld [vmem:[#allocation7 + $0xe8] sm:$0xff]
    %v12368 = vld [vmem:[#allocation7 + $0xf0] sm:$0xff]
    %v12369 = vld [vmem:[#allocation7 + $0xf8] sm:$0xff]
    %v12370 = vld [vmem:[#allocation7 + $0x100] sm:$0xff]
    %v12371 = vld [vmem:[#allocation7 + $0x108] sm:$0xff]
    %v12372 = vld [vmem:[#allocation7 + $0x110] sm:$0xff]
    %v12373 = vld [vmem:[#allocation7 + $0x118] sm:$0xff]
    %v12374 = vld [vmem:[#allocation7 + $0x120] sm:$0xff]
    %v12375 = vld [vmem:[#allocation7 + $0x128] sm:$0xff]
    %v12376 = vld [vmem:[#allocation7 + $0x130] sm:$0xff]
    %v12377 = vld [vmem:[#allocation7 + $0x138] sm:$0xff]
    %v12378 = vld [vmem:[#allocation7 + $0x140] sm:$0xff]
    %v12379 = vld [vmem:[#allocation7 + $0x148] sm:$0xff]
    %v12380 = vld [vmem:[#allocation7 + $0x150] sm:$0xff]
    %v12381 = vld [vmem:[#allocation7 + $0x158] sm:$0xff]
    %v12382 = vld [vmem:[#allocation7 + $0x160] sm:$0xff]
    %v12383 = vld [vmem:[#allocation7 + $0x168] sm:$0xff]
    %v12384 = vld [vmem:[#allocation7 + $0x170] sm:$0xff]
    %v12385 = vld [vmem:[#allocation7 + $0x178] sm:$0xff]
    %v12386 = vld [vmem:[#allocation7 + $0x180] sm:$0xff]
    %v12387 = vld [vmem:[#allocation7 + $0x188] sm:$0xff]
    %v12388 = vld [vmem:[#allocation7 + $0x190] sm:$0xff]
    %v12389 = vld [vmem:[#allocation7 + $0x198] sm:$0xff]
    %v12390 = vld [vmem:[#allocation7 + $0x1a0] sm:$0xff]
    %v12391 = vld [vmem:[#allocation7 + $0x1a8] sm:$0xff]
    %v12392 = vld [vmem:[#allocation7 + $0x1b0] sm:$0xff]
    %v12393 = vld [vmem:[#allocation7 + $0x1b8] sm:$0xff]
    %v12394 = vld [vmem:[#allocation7 + $0x1c0] sm:$0xff]
    %v12395 = vld [vmem:[#allocation7 + $0x1c8] sm:$0xff]
    %v12396 = vld [vmem:[#allocation7 + $0x1d0] sm:$0xff]
    %v12397 = vld [vmem:[#allocation7 + $0x1d8] sm:$0xff]
    %v12398 = vld [vmem:[#allocation7 + $0x1e0] sm:$0xff]
    %v12399 = vld [vmem:[#allocation7 + $0x1e8] sm:$0xff]
    %v12400 = vld [vmem:[#allocation7 + $0x1f0] sm:$0xff]
    %v12401 = vld [vmem:[#allocation7 + $0x1f8] sm:$0xff]
    %v12402 = vld [vmem:[#allocation7 + $0x200] sm:$0xff]
    %v12403 = vld [vmem:[#allocation7 + $0x208] sm:$0xff]
    %v12404 = vld [vmem:[#allocation7 + $0x210] sm:$0xff]
    %v12405 = vld [vmem:[#allocation7 + $0x218] sm:$0xff]
    %v12406 = vpack.c.bf16 %v12338, %v12338
    %v12407 = vpack.c.bf16 %v12339, %v12339
    %v12408 = vpack.c.bf16 %v12340, %v12340
    %v12409 = vpack.c.bf16 %v12341, %v12341
    %v12410 = vlaneseq
    %v12411 = vshrl.u32 %v12410, 7
    %v12412 = vsub.s32 1, %v12411
    %v12413 = vrot.slane %v152, %v12412
    %v12414 = vlaneseq
    %v12415 = vshrl.u32 %v12414, 7
    %v12416 = vsub.s32 1, %v12415
    %v12417 = vrot.slane %v153, %v12416
    %v12482 = vunpack.c.l.b16 %v12342
    %v12483 = vunpack.c.h.b16 %v12342
    %v12484 = vunpack.c.l.b16 %v12343
    %v12485 = vunpack.c.h.b16 %v12343
    %v12486 = vunpack.c.l.b16 %v12344
    %v12487 = vunpack.c.h.b16 %v12344
    %v12488 = vunpack.c.l.b16 %v12345
    %v12489 = vunpack.c.h.b16 %v12345
    %v12490 = vunpack.c.l.b16 %v12346
    %v12491 = vunpack.c.h.b16 %v12346
    %v12492 = vunpack.c.l.b16 %v12347
    %v12493 = vunpack.c.h.b16 %v12347
    %v12494 = vunpack.c.l.b16 %v12348
    %v12495 = vunpack.c.h.b16 %v12348
    %v12496 = vunpack.c.l.b16 %v12349
    %v12497 = vunpack.c.h.b16 %v12349
    %v12498 = vunpack.c.l.b16 %v12350
    %v12499 = vunpack.c.h.b16 %v12350
    %v12500 = vunpack.c.l.b16 %v12351
    %v12501 = vunpack.c.h.b16 %v12351
    %v12502 = vunpack.c.l.b16 %v12352
    %v12503 = vunpack.c.h.b16 %v12352
    %v12504 = vunpack.c.l.b16 %v12353
    %v12505 = vunpack.c.h.b16 %v12353
    %v12506 = vunpack.c.l.b16 %v12354
    %v12507 = vunpack.c.h.b16 %v12354
    %v12508 = vunpack.c.l.b16 %v12355
    %v12509 = vunpack.c.h.b16 %v12355
    %v12510 = vunpack.c.l.b16 %v12356
    %v12511 = vunpack.c.h.b16 %v12356
    %v12512 = vunpack.c.l.b16 %v12357
    %v12513 = vunpack.c.h.b16 %v12357
    %v12514 = vunpack.c.l.b16 %v12358
    %v12515 = vunpack.c.h.b16 %v12358
    %v12516 = vunpack.c.l.b16 %v12359
    %v12517 = vunpack.c.h.b16 %v12359
    %v12518 = vunpack.c.l.b16 %v12360
    %v12519 = vunpack.c.h.b16 %v12360
    %v12520 = vunpack.c.l.b16 %v12361
    %v12521 = vunpack.c.h.b16 %v12361
    %v12522 = vunpack.c.l.b16 %v12362
    %v12523 = vunpack.c.h.b16 %v12362
    %v12524 = vunpack.c.l.b16 %v12363
    %v12525 = vunpack.c.h.b16 %v12363
    %v12526 = vunpack.c.l.b16 %v12364
    %v12527 = vunpack.c.h.b16 %v12364
    %v12528 = vunpack.c.l.b16 %v12365
    %v12529 = vunpack.c.h.b16 %v12365
    %v12530 = vunpack.c.l.b16 %v12366
    %v12531 = vunpack.c.h.b16 %v12366
    %v12532 = vunpack.c.l.b16 %v12367
    %v12533 = vunpack.c.h.b16 %v12367
    %v12534 = vunpack.c.l.b16 %v12368
    %v12535 = vunpack.c.h.b16 %v12368
    %v12536 = vunpack.c.l.b16 %v12369
    %v12537 = vunpack.c.h.b16 %v12369
    %v12538 = vunpack.c.l.b16 %v12370
    %v12539 = vunpack.c.h.b16 %v12370
    %v12540 = vunpack.c.l.b16 %v12371
    %v12541 = vunpack.c.h.b16 %v12371
    %v12542 = vunpack.c.l.b16 %v12372
    %v12543 = vunpack.c.h.b16 %v12372
    %v12544 = vunpack.c.l.b16 %v12373
    %v12545 = vunpack.c.h.b16 %v12373
    %v12546 = vunpack.c.l.b16 %v12374
    %v12547 = vunpack.c.h.b16 %v12374
    %v12548 = vunpack.c.l.b16 %v12375
    %v12549 = vunpack.c.h.b16 %v12375
    %v12550 = vunpack.c.l.b16 %v12376
    %v12551 = vunpack.c.h.b16 %v12376
    %v12552 = vunpack.c.l.b16 %v12377
    %v12553 = vunpack.c.h.b16 %v12377
    %v12554 = vunpack.c.l.b16 %v12378
    %v12555 = vunpack.c.h.b16 %v12378
    %v12556 = vunpack.c.l.b16 %v12379
    %v12557 = vunpack.c.h.b16 %v12379
    %v12558 = vunpack.c.l.b16 %v12380
    %v12559 = vunpack.c.h.b16 %v12380
    %v12560 = vunpack.c.l.b16 %v12381
    %v12561 = vunpack.c.h.b16 %v12381
    %v12562 = vunpack.c.l.b16 %v12382
    %v12563 = vunpack.c.h.b16 %v12382
    %v12564 = vunpack.c.l.b16 %v12383
    %v12565 = vunpack.c.h.b16 %v12383
    %v12566 = vunpack.c.l.b16 %v12384
    %v12567 = vunpack.c.h.b16 %v12384
    %v12568 = vunpack.c.l.b16 %v12385
    %v12569 = vunpack.c.h.b16 %v12385
    %v12570 = vunpack.c.l.b16 %v12386
    %v12571 = vunpack.c.h.b16 %v12386
    %v12572 = vunpack.c.l.b16 %v12387
    %v12573 = vunpack.c.h.b16 %v12387
    %v12574 = vunpack.c.l.b16 %v12388
    %v12575 = vunpack.c.h.b16 %v12388
    %v12576 = vunpack.c.l.b16 %v12389
    %v12577 = vunpack.c.h.b16 %v12389
    %v12578 = vunpack.c.l.b16 %v12390
    %v12579 = vunpack.c.h.b16 %v12390
    %v12580 = vunpack.c.l.b16 %v12391
    %v12581 = vunpack.c.h.b16 %v12391
    %v12582 = vunpack.c.l.b16 %v12392
    %v12583 = vunpack.c.h.b16 %v12392
    %v12584 = vunpack.c.l.b16 %v12393
    %v12585 = vunpack.c.h.b16 %v12393
    %v12586 = vunpack.c.l.b16 %v12394
    %v12587 = vunpack.c.h.b16 %v12394
    %v12588 = vunpack.c.l.b16 %v12395
    %v12589 = vunpack.c.h.b16 %v12395
    %v12590 = vunpack.c.l.b16 %v12396
    %v12591 = vunpack.c.h.b16 %v12396
    %v12592 = vunpack.c.l.b16 %v12397
    %v12593 = vunpack.c.h.b16 %v12397
    %v12594 = vunpack.c.l.b16 %v12398
    %v12595 = vunpack.c.h.b16 %v12398
    %v12596 = vunpack.c.l.b16 %v12399
    %v12597 = vunpack.c.h.b16 %v12399
    %v12598 = vunpack.c.l.b16 %v12400
    %v12599 = vunpack.c.h.b16 %v12400
    %v12600 = vunpack.c.l.b16 %v12401
    %v12601 = vunpack.c.h.b16 %v12401
    %v12602 = vunpack.c.l.b16 %v12402
    %v12603 = vunpack.c.h.b16 %v12402
    %v12604 = vunpack.c.l.b16 %v12403
    %v12605 = vunpack.c.h.b16 %v12403
    %v12606 = vunpack.c.l.b16 %v12404
    %v12607 = vunpack.c.h.b16 %v12404
    %v12608 = vunpack.c.l.b16 %v12405
    %v12609 = vunpack.c.h.b16 %v12405
    %v12610 = vpack.c.b16 %v12484, %v12482
    %v12611 = vpack.c.b16 %v12485, %v12483
    %v12612 = vpack.c.b16 %v12488, %v12486
    %v12613 = vpack.c.b16 %v12489, %v12487
    %v12614 = vpack.c.b16 %v12492, %v12490
    %v12615 = vpack.c.b16 %v12493, %v12491
    %v12616 = vpack.c.b16 %v12496, %v12494
    %v12617 = vpack.c.b16 %v12497, %v12495
    %v12618 = vpack.c.b16 %v12500, %v12498
    %v12619 = vpack.c.b16 %v12501, %v12499
    %v12620 = vpack.c.b16 %v12504, %v12502
    %v12621 = vpack.c.b16 %v12505, %v12503
    %v12622 = vpack.c.b16 %v12508, %v12506
    %v12623 = vpack.c.b16 %v12509, %v12507
    %v12624 = vpack.c.b16 %v12512, %v12510
    %v12625 = vpack.c.b16 %v12513, %v12511
    %v12626 = vpack.c.b16 %v12516, %v12514
    %v12627 = vpack.c.b16 %v12517, %v12515
    %v12628 = vpack.c.b16 %v12520, %v12518
    %v12629 = vpack.c.b16 %v12521, %v12519
    %v12630 = vpack.c.b16 %v12524, %v12522
    %v12631 = vpack.c.b16 %v12525, %v12523
    %v12632 = vpack.c.b16 %v12528, %v12526
    %v12633 = vpack.c.b16 %v12529, %v12527
    %v12634 = vpack.c.b16 %v12532, %v12530
    %v12635 = vpack.c.b16 %v12533, %v12531
    %v12636 = vpack.c.b16 %v12536, %v12534
    %v12637 = vpack.c.b16 %v12537, %v12535
    %v12638 = vpack.c.b16 %v12540, %v12538
    %v12639 = vpack.c.b16 %v12541, %v12539
    %v12640 = vpack.c.b16 %v12544, %v12542
    %v12641 = vpack.c.b16 %v12545, %v12543
    %v12642 = vpack.c.b16 %v12548, %v12546
    %v12643 = vpack.c.b16 %v12549, %v12547
    %v12644 = vpack.c.b16 %v12552, %v12550
    %v12645 = vpack.c.b16 %v12553, %v12551
    %v12646 = vpack.c.b16 %v12556, %v12554
    %v12647 = vpack.c.b16 %v12557, %v12555
    %v12648 = vpack.c.b16 %v12560, %v12558
    %v12649 = vpack.c.b16 %v12561, %v12559
    %v12650 = vpack.c.b16 %v12564, %v12562
    %v12651 = vpack.c.b16 %v12565, %v12563
    %v12652 = vpack.c.b16 %v12568, %v12566
    %v12653 = vpack.c.b16 %v12569, %v12567
    %v12654 = vpack.c.b16 %v12572, %v12570
    %v12655 = vpack.c.b16 %v12573, %v12571
    %v12656 = vpack.c.b16 %v12576, %v12574
    %v12657 = vpack.c.b16 %v12577, %v12575
    %v12658 = vpack.c.b16 %v12580, %v12578
    %v12659 = vpack.c.b16 %v12581, %v12579
    %v12660 = vpack.c.b16 %v12584, %v12582
    %v12661 = vpack.c.b16 %v12585, %v12583
    %v12662 = vpack.c.b16 %v12588, %v12586
    %v12663 = vpack.c.b16 %v12589, %v12587
    %v12664 = vpack.c.b16 %v12592, %v12590
    %v12665 = vpack.c.b16 %v12593, %v12591
    %v12666 = vpack.c.b16 %v12596, %v12594
    %v12667 = vpack.c.b16 %v12597, %v12595
    %v12668 = vpack.c.b16 %v12600, %v12598
    %v12669 = vpack.c.b16 %v12601, %v12599
    %v12670 = vpack.c.b16 %v12604, %v12602
    %v12671 = vpack.c.b16 %v12605, %v12603
    %v12672 = vpack.c.b16 %v12608, %v12606
    %v12673 = vpack.c.b16 %v12609, %v12607
    %12738 = vmatprep.subr.bf16.mxu0 %v12625
    %12739 = vmatpush1.bf16.msra.mxu0 %v12624
    %12740 = vmatprep.subr.bf16.mxu0 %v12623
    %12741 = vmatpush1.bf16.msra.mxu0 %v12622
    %12742 = vmatprep.subr.bf16.mxu0 %v12621
    %12743 = vmatpush1.bf16.msra.mxu0 %v12620
    %12744 = vmatprep.subr.bf16.mxu0 %v12619
    %12745 = vmatpush1.bf16.msra.mxu0 %v12618
    %12746 = vmatprep.subr.bf16.mxu0 %v12617
    %12747 = vmatpush1.bf16.msra.mxu0 %v12616
    %12748 = vmatprep.subr.bf16.mxu0 %v12615
    %12749 = vmatpush1.bf16.msra.mxu0 %v12614
    %12750 = vmatprep.subr.bf16.mxu0 %v12613
    %12751 = vmatpush1.bf16.msra.mxu0 %v12612
    %12752 = vmatprep.subr.bf16.mxu0 %v12611
    %12753 = vmatpush1.bf16.msra.mxu0 %v12610
    %12754 = vmatprep.subr.bf16.mxu0 %v12641
    %12755 = vmatpush2.bf16.msra.mxu0 %v12640
    %12756 = vmatprep.subr.bf16.mxu0 %v12639
    %12757 = vmatpush2.bf16.msra.mxu0 %v12638
    %12758 = vmatprep.subr.bf16.mxu0 %v12637
    %12759 = vmatpush2.bf16.msra.mxu0 %v12636
    %12760 = vmatprep.subr.bf16.mxu0 %v12635
    %12761 = vmatpush2.bf16.msra.mxu0 %v12634
    %12762 = vmatprep.subr.bf16.mxu0 %v12633
    %12763 = vmatpush2.bf16.msra.mxu0 %v12632
    %12764 = vmatprep.subr.bf16.mxu0 %v12631
    %12765 = vmatpush2.bf16.msra.mxu0 %v12630
    %12766 = vmatprep.subr.bf16.mxu0 %v12629
    %12767 = vmatpush2.bf16.msra.mxu0 %v12628
    %12768 = vmatprep.subr.bf16.mxu0 %v12627
    %12769 = vmatpush2.bf16.msra.mxu0 %v12626
    %12770 = vmatprep.mubr.bf16.mxu0 %v12407
    %12771 = vmatmul.mubr.bf16.gmra.mxu0 %v12406
    %v12772 = vpop.f32.mrf.mxu0
    %v12773 = vadd.f32 %v12413, %v12772
    %v12774 = vpop.f32.mrf.mxu0
    %v12775 = vadd.f32 %v12417, %v12774
    %v12776 = vpop.f32.mrf.mxu0
    %v12777 = vpop.f32.mrf.mxu0
    %12778 = vdwg.mxu0
    %12779 = vmatprep.subr.bf16.mxu0 %v12657
    %12780 = vmatpush1.bf16.msra.mxu0 %v12656
    %12781 = vmatprep.subr.bf16.mxu0 %v12655
    %12782 = vmatpush1.bf16.msra.mxu0 %v12654
    %12783 = vmatprep.subr.bf16.mxu0 %v12653
    %12784 = vmatpush1.bf16.msra.mxu0 %v12652
    %12785 = vmatprep.subr.bf16.mxu0 %v12651
    %12786 = vmatpush1.bf16.msra.mxu0 %v12650
    %12787 = vmatprep.subr.bf16.mxu0 %v12649
    %12788 = vmatpush1.bf16.msra.mxu0 %v12648
    %12789 = vmatprep.subr.bf16.mxu0 %v12647
    %12790 = vmatpush1.bf16.msra.mxu0 %v12646
    %12791 = vmatprep.subr.bf16.mxu0 %v12645
    %12792 = vmatpush1.bf16.msra.mxu0 %v12644
    %12793 = vmatprep.subr.bf16.mxu0 %v12643
    %12794 = vmatpush1.bf16.msra.mxu0 %v12642
    %12795 = vmatprep.subr.bf16.mxu0 %v12673
    %12796 = vmatpush2.bf16.msra.mxu0 %v12672
    %12797 = vmatprep.subr.bf16.mxu0 %v12671
    %12798 = vmatpush2.bf16.msra.mxu0 %v12670
    %12799 = vmatprep.subr.bf16.mxu0 %v12669
    %12800 = vmatpush2.bf16.msra.mxu0 %v12668
    %12801 = vmatprep.subr.bf16.mxu0 %v12667
    %12802 = vmatpush2.bf16.msra.mxu0 %v12666
    %12803 = vmatprep.subr.bf16.mxu0 %v12665
    %12804 = vmatpush2.bf16.msra.mxu0 %v12664
    %12805 = vmatprep.subr.bf16.mxu0 %v12663
    %12806 = vmatpush2.bf16.msra.mxu0 %v12662
    %12807 = vmatprep.subr.bf16.mxu0 %v12661
    %12808 = vmatpush2.bf16.msra.mxu0 %v12660
    %12809 = vmatprep.subr.bf16.mxu0 %v12659
    %12810 = vmatpush2.bf16.msra.mxu0 %v12658
    %12811 = vmatprep.mubr.bf16.mxu0 %v12409
    %12812 = vmatmul.mubr.bf16.gmra.mxu0 %v12408
    %v12813 = vpop.f32.mrf.mxu0
    %v12814 = vadd.f32 %v12773, %v12813
    %v12815 = vpop.f32.mrf.mxu0
    %v12816 = vadd.f32 %v12775, %v12815
    %v12817 = vpop.f32.mrf.mxu0
    %v12818 = vpop.f32.mrf.mxu0
    %12819 = vdwg.mxu0
    %v12820 = vmax.f32 %v12814, 0.0
    %v12821 = vmax.f32 %v12816, 0.0
    %v12822 = vld [vmem:[#allocation7 + $0x220] sm:$0xff]
    %v12823 = vld [vmem:[#allocation7 + $0x228] sm:$0xff]
    %v12824 = vld [vmem:[#allocation7 + $0x230] sm:$0xff]
    %v12825 = vld [vmem:[#allocation7 + $0x238] sm:$0xff]
    %v12826 = vld [vmem:[#allocation7 + $0x240] sm:$0xff]
    %v12827 = vld [vmem:[#allocation7 + $0x248] sm:$0xff]
    %v12828 = vld [vmem:[#allocation7 + $0x250] sm:$0xff]
    %v12829 = vld [vmem:[#allocation7 + $0x258] sm:$0xff]
    %v12830 = vld [vmem:[#allocation7 + $0x260] sm:$0xff]
    %v12831 = vld [vmem:[#allocation7 + $0x268] sm:$0xff]
    %v12832 = vld [vmem:[#allocation7 + $0x270] sm:$0xff]
    %v12833 = vld [vmem:[#allocation7 + $0x278] sm:$0xff]
    %v12834 = vld [vmem:[#allocation7 + $0x280] sm:$0xff]
    %v12835 = vld [vmem:[#allocation7 + $0x288] sm:$0xff]
    %v12836 = vld [vmem:[#allocation7 + $0x290] sm:$0xff]
    %v12837 = vld [vmem:[#allocation7 + $0x298] sm:$0xff]
    %v12838 = vld [vmem:[#allocation7 + $0x2a0] sm:$0xff]
    %v12839 = vld [vmem:[#allocation7 + $0x2a8] sm:$0xff]
    %v12840 = vld [vmem:[#allocation7 + $0x2b0] sm:$0xff]
    %v12841 = vld [vmem:[#allocation7 + $0x2b8] sm:$0xff]
    %v12842 = vld [vmem:[#allocation7 + $0x2c0] sm:$0xff]
    %v12843 = vld [vmem:[#allocation7 + $0x2c8] sm:$0xff]
    %v12844 = vld [vmem:[#allocation7 + $0x2d0] sm:$0xff]
    %v12845 = vld [vmem:[#allocation7 + $0x2d8] sm:$0xff]
    %v12846 = vld [vmem:[#allocation7 + $0x2e0] sm:$0xff]
    %v12847 = vld [vmem:[#allocation7 + $0x2e8] sm:$0xff]
    %v12848 = vld [vmem:[#allocation7 + $0x2f0] sm:$0xff]
    %v12849 = vld [vmem:[#allocation7 + $0x2f8] sm:$0xff]
    %v12850 = vld [vmem:[#allocation7 + $0x300] sm:$0xff]
    %v12851 = vld [vmem:[#allocation7 + $0x308] sm:$0xff]
    %v12852 = vld [vmem:[#allocation7 + $0x310] sm:$0xff]
    %v12853 = vld [vmem:[#allocation7 + $0x318] sm:$0xff]
    %v12854 = vpack.c.bf16 %v12820, %v12820
    %v12855 = vpack.c.bf16 %v12821, %v12821
    %v12856 = vlaneseq
    %v12857 = vshrl.u32 %v12856, 7
    %v12858 = vsub.s32 2, %v12857
    %v12859 = vrot.slane %v152, %v12858
    %v12860 = vlaneseq
    %v12861 = vshrl.u32 %v12860, 7
    %v12862 = vsub.s32 2, %v12861
    %v12863 = vrot.slane %v153, %v12862
    %v12896 = vunpack.c.l.b16 %v12822
    %v12897 = vunpack.c.h.b16 %v12822
    %v12898 = vunpack.c.l.b16 %v12823
    %v12899 = vunpack.c.h.b16 %v12823
    %v12900 = vunpack.c.l.b16 %v12824
    %v12901 = vunpack.c.h.b16 %v12824
    %v12902 = vunpack.c.l.b16 %v12825
    %v12903 = vunpack.c.h.b16 %v12825
    %v12904 = vunpack.c.l.b16 %v12826
    %v12905 = vunpack.c.h.b16 %v12826
    %v12906 = vunpack.c.l.b16 %v12827
    %v12907 = vunpack.c.h.b16 %v12827
    %v12908 = vunpack.c.l.b16 %v12828
    %v12909 = vunpack.c.h.b16 %v12828
    %v12910 = vunpack.c.l.b16 %v12829
    %v12911 = vunpack.c.h.b16 %v12829
    %v12912 = vunpack.c.l.b16 %v12830
    %v12913 = vunpack.c.h.b16 %v12830
    %v12914 = vunpack.c.l.b16 %v12831
    %v12915 = vunpack.c.h.b16 %v12831
    %v12916 = vunpack.c.l.b16 %v12832
    %v12917 = vunpack.c.h.b16 %v12832
    %v12918 = vunpack.c.l.b16 %v12833
    %v12919 = vunpack.c.h.b16 %v12833
    %v12920 = vunpack.c.l.b16 %v12834
    %v12921 = vunpack.c.h.b16 %v12834
    %v12922 = vunpack.c.l.b16 %v12835
    %v12923 = vunpack.c.h.b16 %v12835
    %v12924 = vunpack.c.l.b16 %v12836
    %v12925 = vunpack.c.h.b16 %v12836
    %v12926 = vunpack.c.l.b16 %v12837
    %v12927 = vunpack.c.h.b16 %v12837
    %v12928 = vunpack.c.l.b16 %v12838
    %v12929 = vunpack.c.h.b16 %v12838
    %v12930 = vunpack.c.l.b16 %v12839
    %v12931 = vunpack.c.h.b16 %v12839
    %v12932 = vunpack.c.l.b16 %v12840
    %v12933 = vunpack.c.h.b16 %v12840
    %v12934 = vunpack.c.l.b16 %v12841
    %v12935 = vunpack.c.h.b16 %v12841
    %v12936 = vunpack.c.l.b16 %v12842
    %v12937 = vunpack.c.h.b16 %v12842
    %v12938 = vunpack.c.l.b16 %v12843
    %v12939 = vunpack.c.h.b16 %v12843
    %v12940 = vunpack.c.l.b16 %v12844
    %v12941 = vunpack.c.h.b16 %v12844
    %v12942 = vunpack.c.l.b16 %v12845
    %v12943 = vunpack.c.h.b16 %v12845
    %v12944 = vunpack.c.l.b16 %v12846
    %v12945 = vunpack.c.h.b16 %v12846
    %v12946 = vunpack.c.l.b16 %v12847
    %v12947 = vunpack.c.h.b16 %v12847
    %v12948 = vunpack.c.l.b16 %v12848
    %v12949 = vunpack.c.h.b16 %v12848
    %v12950 = vunpack.c.l.b16 %v12849
    %v12951 = vunpack.c.h.b16 %v12849
    %v12952 = vunpack.c.l.b16 %v12850
    %v12953 = vunpack.c.h.b16 %v12850
    %v12954 = vunpack.c.l.b16 %v12851
    %v12955 = vunpack.c.h.b16 %v12851
    %v12956 = vunpack.c.l.b16 %v12852
    %v12957 = vunpack.c.h.b16 %v12852
    %v12958 = vunpack.c.l.b16 %v12853
    %v12959 = vunpack.c.h.b16 %v12853
    %v12960 = vpack.c.b16 %v12898, %v12896
    %v12961 = vpack.c.b16 %v12899, %v12897
    %v12962 = vpack.c.b16 %v12902, %v12900
    %v12963 = vpack.c.b16 %v12903, %v12901
    %v12964 = vpack.c.b16 %v12906, %v12904
    %v12965 = vpack.c.b16 %v12907, %v12905
    %v12966 = vpack.c.b16 %v12910, %v12908
    %v12967 = vpack.c.b16 %v12911, %v12909
    %v12968 = vpack.c.b16 %v12914, %v12912
    %v12969 = vpack.c.b16 %v12915, %v12913
    %v12970 = vpack.c.b16 %v12918, %v12916
    %v12971 = vpack.c.b16 %v12919, %v12917
    %v12972 = vpack.c.b16 %v12922, %v12920
    %v12973 = vpack.c.b16 %v12923, %v12921
    %v12974 = vpack.c.b16 %v12926, %v12924
    %v12975 = vpack.c.b16 %v12927, %v12925
    %v12976 = vpack.c.b16 %v12930, %v12928
    %v12977 = vpack.c.b16 %v12931, %v12929
    %v12978 = vpack.c.b16 %v12934, %v12932
    %v12979 = vpack.c.b16 %v12935, %v12933
    %v12980 = vpack.c.b16 %v12938, %v12936
    %v12981 = vpack.c.b16 %v12939, %v12937
    %v12982 = vpack.c.b16 %v12942, %v12940
    %v12983 = vpack.c.b16 %v12943, %v12941
    %v12984 = vpack.c.b16 %v12946, %v12944
    %v12985 = vpack.c.b16 %v12947, %v12945
    %v12986 = vpack.c.b16 %v12950, %v12948
    %v12987 = vpack.c.b16 %v12951, %v12949
    %v12988 = vpack.c.b16 %v12954, %v12952
    %v12989 = vpack.c.b16 %v12955, %v12953
    %v12990 = vpack.c.b16 %v12958, %v12956
    %v12991 = vpack.c.b16 %v12959, %v12957
    %13024 = vmatprep.subr.bf16.mxu0 %v12975
    %13025 = vmatpush1.bf16.msra.mxu0 %v12974
    %13026 = vmatprep.subr.bf16.mxu0 %v12973
    %13027 = vmatpush1.bf16.msra.mxu0 %v12972
    %13028 = vmatprep.subr.bf16.mxu0 %v12971
    %13029 = vmatpush1.bf16.msra.mxu0 %v12970
    %13030 = vmatprep.subr.bf16.mxu0 %v12969
    %13031 = vmatpush1.bf16.msra.mxu0 %v12968
    %13032 = vmatprep.subr.bf16.mxu0 %v12967
    %13033 = vmatpush1.bf16.msra.mxu0 %v12966
    %13034 = vmatprep.subr.bf16.mxu0 %v12965
    %13035 = vmatpush1.bf16.msra.mxu0 %v12964
    %13036 = vmatprep.subr.bf16.mxu0 %v12963
    %13037 = vmatpush1.bf16.msra.mxu0 %v12962
    %13038 = vmatprep.subr.bf16.mxu0 %v12961
    %13039 = vmatpush1.bf16.msra.mxu0 %v12960
    %13040 = vmatprep.subr.bf16.mxu0 %v12991
    %13041 = vmatpush2.bf16.msra.mxu0 %v12990
    %13042 = vmatprep.subr.bf16.mxu0 %v12989
    %13043 = vmatpush2.bf16.msra.mxu0 %v12988
    %13044 = vmatprep.subr.bf16.mxu0 %v12987
    %13045 = vmatpush2.bf16.msra.mxu0 %v12986
    %13046 = vmatprep.subr.bf16.mxu0 %v12985
    %13047 = vmatpush2.bf16.msra.mxu0 %v12984
    %13048 = vmatprep.subr.bf16.mxu0 %v12983
    %13049 = vmatpush2.bf16.msra.mxu0 %v12982
    %13050 = vmatprep.subr.bf16.mxu0 %v12981
    %13051 = vmatpush2.bf16.msra.mxu0 %v12980
    %13052 = vmatprep.subr.bf16.mxu0 %v12979
    %13053 = vmatpush2.bf16.msra.mxu0 %v12978
    %13054 = vmatprep.subr.bf16.mxu0 %v12977
    %13055 = vmatpush2.bf16.msra.mxu0 %v12976
    %13056 = vmatprep.mubr.bf16.mxu0 %v12855
    %13057 = vmatmul.mubr.bf16.gmra.mxu0 %v12854
    %v13058 = vpop.f32.mrf.mxu0
    %v13059 = vadd.f32 %v12859, %v13058
    %v13060 = vpop.f32.mrf.mxu0
    %v13061 = vadd.f32 %v12863, %v13060
    %v13062 = vpop.f32.mrf.mxu0
    %v13063 = vpop.f32.mrf.mxu0
    %13064 = vdwg.mxu0
    %v13065 = vmax.f32 %v13059, 0.0
    %v13066 = vmax.f32 %v13061, 0.0
    %v13067 = vld [vmem:[#allocation7 + $0x320] sm:$0xff]
    %v13068 = vld [vmem:[#allocation7 + $0x328] sm:$0xff]
    %v13069 = vld [vmem:[#allocation7 + $0x330] sm:$0xff]
    %v13070 = vld [vmem:[#allocation7 + $0x338] sm:$0xff]
    %v13071 = vld [vmem:[#allocation7 + $0x340] sm:$0xff]
    %v13072 = vld [vmem:[#allocation7 + $0x348] sm:$0xff]
    %v13073 = vld [vmem:[#allocation7 + $0x350] sm:$0xff]
    %v13074 = vld [vmem:[#allocation7 + $0x358] sm:$0xff]
    %v13075 = vld [vmem:[#allocation7 + $0x360] sm:$0xff]
    %v13076 = vld [vmem:[#allocation7 + $0x368] sm:$0xff]
    %v13077 = vld [vmem:[#allocation7 + $0x370] sm:$0xff]
    %v13078 = vld [vmem:[#allocation7 + $0x378] sm:$0xff]
    %v13079 = vld [vmem:[#allocation7 + $0x380] sm:$0xff]
    %v13080 = vld [vmem:[#allocation7 + $0x388] sm:$0xff]
    %v13081 = vld [vmem:[#allocation7 + $0x390] sm:$0xff]
    %v13082 = vld [vmem:[#allocation7 + $0x398] sm:$0xff]
    %v13083 = vld [vmem:[#allocation7 + $0x3a0] sm:$0xff]
    %v13084 = vld [vmem:[#allocation7 + $0x3a8] sm:$0xff]
    %v13085 = vld [vmem:[#allocation7 + $0x3b0] sm:$0xff]
    %v13086 = vld [vmem:[#allocation7 + $0x3b8] sm:$0xff]
    %v13087 = vld [vmem:[#allocation7 + $0x3c0] sm:$0xff]
    %v13088 = vld [vmem:[#allocation7 + $0x3c8] sm:$0xff]
    %v13089 = vld [vmem:[#allocation7 + $0x3d0] sm:$0xff]
    %v13090 = vld [vmem:[#allocation7 + $0x3d8] sm:$0xff]
    %v13091 = vld [vmem:[#allocation7 + $0x3e0] sm:$0xff]
    %v13092 = vld [vmem:[#allocation7 + $0x3e8] sm:$0xff]
    %v13093 = vld [vmem:[#allocation7 + $0x3f0] sm:$0xff]
    %v13094 = vld [vmem:[#allocation7 + $0x3f8] sm:$0xff]
    %v13095 = vld [vmem:[#allocation7 + $0x400] sm:$0xff]
    %v13096 = vld [vmem:[#allocation7 + $0x408] sm:$0xff]
    %v13097 = vld [vmem:[#allocation7 + $0x410] sm:$0xff]
    %v13098 = vld [vmem:[#allocation7 + $0x418] sm:$0xff]
    %v13099 = vpack.c.bf16 %v13065, %v13065
    %v13100 = vpack.c.bf16 %v13066, %v13066
    %v13101 = vlaneseq
    %v13102 = vshrl.u32 %v13101, 7
    %v13103 = vsub.s32 3, %v13102
    %v13104 = vrot.slane %v152, %v13103
    %v13105 = vlaneseq
    %v13106 = vshrl.u32 %v13105, 7
    %v13107 = vsub.s32 3, %v13106
    %v13108 = vrot.slane %v153, %v13107
    %v13141 = vunpack.c.l.b16 %v13067
    %v13142 = vunpack.c.h.b16 %v13067
    %v13143 = vunpack.c.l.b16 %v13068
    %v13144 = vunpack.c.h.b16 %v13068
    %v13145 = vunpack.c.l.b16 %v13069
    %v13146 = vunpack.c.h.b16 %v13069
    %v13147 = vunpack.c.l.b16 %v13070
    %v13148 = vunpack.c.h.b16 %v13070
    %v13149 = vunpack.c.l.b16 %v13071
    %v13150 = vunpack.c.h.b16 %v13071
    %v13151 = vunpack.c.l.b16 %v13072
    %v13152 = vunpack.c.h.b16 %v13072
    %v13153 = vunpack.c.l.b16 %v13073
    %v13154 = vunpack.c.h.b16 %v13073
    %v13155 = vunpack.c.l.b16 %v13074
    %v13156 = vunpack.c.h.b16 %v13074
    %v13157 = vunpack.c.l.b16 %v13075
    %v13158 = vunpack.c.h.b16 %v13075
    %v13159 = vunpack.c.l.b16 %v13076
    %v13160 = vunpack.c.h.b16 %v13076
    %v13161 = vunpack.c.l.b16 %v13077
    %v13162 = vunpack.c.h.b16 %v13077
    %v13163 = vunpack.c.l.b16 %v13078
    %v13164 = vunpack.c.h.b16 %v13078
    %v13165 = vunpack.c.l.b16 %v13079
    %v13166 = vunpack.c.h.b16 %v13079
    %v13167 = vunpack.c.l.b16 %v13080
    %v13168 = vunpack.c.h.b16 %v13080
    %v13169 = vunpack.c.l.b16 %v13081
    %v13170 = vunpack.c.h.b16 %v13081
    %v13171 = vunpack.c.l.b16 %v13082
    %v13172 = vunpack.c.h.b16 %v13082
    %v13173 = vunpack.c.l.b16 %v13083
    %v13174 = vunpack.c.h.b16 %v13083
    %v13175 = vunpack.c.l.b16 %v13084
    %v13176 = vunpack.c.h.b16 %v13084
    %v13177 = vunpack.c.l.b16 %v13085
    %v13178 = vunpack.c.h.b16 %v13085
    %v13179 = vunpack.c.l.b16 %v13086
    %v13180 = vunpack.c.h.b16 %v13086
    %v13181 = vunpack.c.l.b16 %v13087
    %v13182 = vunpack.c.h.b16 %v13087
    %v13183 = vunpack.c.l.b16 %v13088
    %v13184 = vunpack.c.h.b16 %v13088
    %v13185 = vunpack.c.l.b16 %v13089
    %v13186 = vunpack.c.h.b16 %v13089
    %v13187 = vunpack.c.l.b16 %v13090
    %v13188 = vunpack.c.h.b16 %v13090
    %v13189 = vunpack.c.l.b16 %v13091
    %v13190 = vunpack.c.h.b16 %v13091
    %v13191 = vunpack.c.l.b16 %v13092
    %v13192 = vunpack.c.h.b16 %v13092
    %v13193 = vunpack.c.l.b16 %v13093
    %v13194 = vunpack.c.h.b16 %v13093
    %v13195 = vunpack.c.l.b16 %v13094
    %v13196 = vunpack.c.h.b16 %v13094
    %v13197 = vunpack.c.l.b16 %v13095
    %v13198 = vunpack.c.h.b16 %v13095
    %v13199 = vunpack.c.l.b16 %v13096
    %v13200 = vunpack.c.h.b16 %v13096
    %v13201 = vunpack.c.l.b16 %v13097
    %v13202 = vunpack.c.h.b16 %v13097
    %v13203 = vunpack.c.l.b16 %v13098
    %v13204 = vunpack.c.h.b16 %v13098
    %v13205 = vpack.c.b16 %v13143, %v13141
    %v13206 = vpack.c.b16 %v13144, %v13142
    %v13207 = vpack.c.b16 %v13147, %v13145
    %v13208 = vpack.c.b16 %v13148, %v13146
    %v13209 = vpack.c.b16 %v13151, %v13149
    %v13210 = vpack.c.b16 %v13152, %v13150
    %v13211 = vpack.c.b16 %v13155, %v13153
    %v13212 = vpack.c.b16 %v13156, %v13154
    %v13213 = vpack.c.b16 %v13159, %v13157
    %v13214 = vpack.c.b16 %v13160, %v13158
    %v13215 = vpack.c.b16 %v13163, %v13161
    %v13216 = vpack.c.b16 %v13164, %v13162
    %v13217 = vpack.c.b16 %v13167, %v13165
    %v13218 = vpack.c.b16 %v13168, %v13166
    %v13219 = vpack.c.b16 %v13171, %v13169
    %v13220 = vpack.c.b16 %v13172, %v13170
    %v13221 = vpack.c.b16 %v13175, %v13173
    %v13222 = vpack.c.b16 %v13176, %v13174
    %v13223 = vpack.c.b16 %v13179, %v13177
    %v13224 = vpack.c.b16 %v13180, %v13178
    %v13225 = vpack.c.b16 %v13183, %v13181
    %v13226 = vpack.c.b16 %v13184, %v13182
    %v13227 = vpack.c.b16 %v13187, %v13185
    %v13228 = vpack.c.b16 %v13188, %v13186
    %v13229 = vpack.c.b16 %v13191, %v13189
    %v13230 = vpack.c.b16 %v13192, %v13190
    %v13231 = vpack.c.b16 %v13195, %v13193
    %v13232 = vpack.c.b16 %v13196, %v13194
    %v13233 = vpack.c.b16 %v13199, %v13197
    %v13234 = vpack.c.b16 %v13200, %v13198
    %v13235 = vpack.c.b16 %v13203, %v13201
    %v13236 = vpack.c.b16 %v13204, %v13202
    %13269 = vmatprep.subr.bf16.mxu0 %v13220
    %13270 = vmatpush1.bf16.msra.mxu0 %v13219
    %13271 = vmatprep.subr.bf16.mxu0 %v13218
    %13272 = vmatpush1.bf16.msra.mxu0 %v13217
    %13273 = vmatprep.subr.bf16.mxu0 %v13216
    %13274 = vmatpush1.bf16.msra.mxu0 %v13215
    %13275 = vmatprep.subr.bf16.mxu0 %v13214
    %13276 = vmatpush1.bf16.msra.mxu0 %v13213
    %13277 = vmatprep.subr.bf16.mxu0 %v13212
    %13278 = vmatpush1.bf16.msra.mxu0 %v13211
    %13279 = vmatprep.subr.bf16.mxu0 %v13210
    %13280 = vmatpush1.bf16.msra.mxu0 %v13209
    %13281 = vmatprep.subr.bf16.mxu0 %v13208
    %13282 = vmatpush1.bf16.msra.mxu0 %v13207
    %13283 = vmatprep.subr.bf16.mxu0 %v13206
    %13284 = vmatpush1.bf16.msra.mxu0 %v13205
    %13285 = vmatprep.subr.bf16.mxu0 %v13236
    %13286 = vmatpush2.bf16.msra.mxu0 %v13235
    %13287 = vmatprep.subr.bf16.mxu0 %v13234
    %13288 = vmatpush2.bf16.msra.mxu0 %v13233
    %13289 = vmatprep.subr.bf16.mxu0 %v13232
    %13290 = vmatpush2.bf16.msra.mxu0 %v13231
    %13291 = vmatprep.subr.bf16.mxu0 %v13230
    %13292 = vmatpush2.bf16.msra.mxu0 %v13229
    %13293 = vmatprep.subr.bf16.mxu0 %v13228
    %13294 = vmatpush2.bf16.msra.mxu0 %v13227
    %13295 = vmatprep.subr.bf16.mxu0 %v13226
    %13296 = vmatpush2.bf16.msra.mxu0 %v13225
    %13297 = vmatprep.subr.bf16.mxu0 %v13224
    %13298 = vmatpush2.bf16.msra.mxu0 %v13223
    %13299 = vmatprep.subr.bf16.mxu0 %v13222
    %13300 = vmatpush2.bf16.msra.mxu0 %v13221
    %13301 = vmatprep.mubr.bf16.mxu0 %v13100
    %13302 = vmatmul.mubr.bf16.gmra.mxu0 %v13099
    %v13303 = vpop.f32.mrf.mxu0
    %v13304 = vadd.f32 %v13104, %v13303
    %v13305 = vpop.f32.mrf.mxu0
    %v13306 = vadd.f32 %v13108, %v13305
    %v13307 = vpop.f32.mrf.mxu0
    %v13308 = vpop.f32.mrf.mxu0
    %13309 = vdwg.mxu0
    %v13310 = vmax.f32 %v13304, 0.0
    %v13311 = vmax.f32 %v13306, 0.0
    %v13312 = vld [vmem:[#allocation7 + $0x420] sm:$0xff]
    %v13313 = vld [vmem:[#allocation7 + $0x428] sm:$0xff]
    %v13314 = vld [vmem:[#allocation7 + $0x430] sm:$0xff]
    %v13315 = vld [vmem:[#allocation7 + $0x438] sm:$0xff]
    %v13316 = vld [vmem:[#allocation7 + $0x440] sm:$0xff]
    %v13317 = vld [vmem:[#allocation7 + $0x448] sm:$0xff]
    %v13318 = vld [vmem:[#allocation7 + $0x450] sm:$0xff]
    %v13319 = vld [vmem:[#allocation7 + $0x458] sm:$0xff]
    %v13320 = vld [vmem:[#allocation7 + $0x460] sm:$0xff]
    %v13321 = vld [vmem:[#allocation7 + $0x468] sm:$0xff]
    %v13322 = vld [vmem:[#allocation7 + $0x470] sm:$0xff]
    %v13323 = vld [vmem:[#allocation7 + $0x478] sm:$0xff]
    %v13324 = vld [vmem:[#allocation7 + $0x480] sm:$0xff]
    %v13325 = vld [vmem:[#allocation7 + $0x488] sm:$0xff]
    %v13326 = vld [vmem:[#allocation7 + $0x490] sm:$0xff]
    %v13327 = vld [vmem:[#allocation7 + $0x498] sm:$0xff]
    %v13328 = vld [vmem:[#allocation7 + $0x4a0] sm:$0xff]
    %v13329 = vld [vmem:[#allocation7 + $0x4a8] sm:$0xff]
    %v13330 = vld [vmem:[#allocation7 + $0x4b0] sm:$0xff]
    %v13331 = vld [vmem:[#allocation7 + $0x4b8] sm:$0xff]
    %v13332 = vld [vmem:[#allocation7 + $0x4c0] sm:$0xff]
    %v13333 = vld [vmem:[#allocation7 + $0x4c8] sm:$0xff]
    %v13334 = vld [vmem:[#allocation7 + $0x4d0] sm:$0xff]
    %v13335 = vld [vmem:[#allocation7 + $0x4d8] sm:$0xff]
    %v13336 = vld [vmem:[#allocation7 + $0x4e0] sm:$0xff]
    %v13337 = vld [vmem:[#allocation7 + $0x4e8] sm:$0xff]
    %v13338 = vld [vmem:[#allocation7 + $0x4f0] sm:$0xff]
    %v13339 = vld [vmem:[#allocation7 + $0x4f8] sm:$0xff]
    %v13340 = vld [vmem:[#allocation7 + $0x500] sm:$0xff]
    %v13341 = vld [vmem:[#allocation7 + $0x508] sm:$0xff]
    %v13342 = vld [vmem:[#allocation7 + $0x510] sm:$0xff]
    %v13343 = vld [vmem:[#allocation7 + $0x518] sm:$0xff]
    %v13344 = vpack.c.bf16 %v13310, %v13310
    %v13345 = vpack.c.bf16 %v13311, %v13311
    %v13346 = vlaneseq
    %v13347 = vshrl.u32 %v13346, 7
    %v13348 = vsub.s32 4, %v13347
    %v13349 = vrot.slane %v152, %v13348
    %v13350 = vlaneseq
    %v13351 = vshrl.u32 %v13350, 7
    %v13352 = vsub.s32 4, %v13351
    %v13353 = vrot.slane %v153, %v13352
    %v13386 = vunpack.c.l.b16 %v13312
    %v13387 = vunpack.c.h.b16 %v13312
    %v13388 = vunpack.c.l.b16 %v13313
    %v13389 = vunpack.c.h.b16 %v13313
    %v13390 = vunpack.c.l.b16 %v13314
    %v13391 = vunpack.c.h.b16 %v13314
    %v13392 = vunpack.c.l.b16 %v13315
    %v13393 = vunpack.c.h.b16 %v13315
    %v13394 = vunpack.c.l.b16 %v13316
    %v13395 = vunpack.c.h.b16 %v13316
    %v13396 = vunpack.c.l.b16 %v13317
    %v13397 = vunpack.c.h.b16 %v13317
    %v13398 = vunpack.c.l.b16 %v13318
    %v13399 = vunpack.c.h.b16 %v13318
    %v13400 = vunpack.c.l.b16 %v13319
    %v13401 = vunpack.c.h.b16 %v13319
    %v13402 = vunpack.c.l.b16 %v13320
    %v13403 = vunpack.c.h.b16 %v13320
    %v13404 = vunpack.c.l.b16 %v13321
    %v13405 = vunpack.c.h.b16 %v13321
    %v13406 = vunpack.c.l.b16 %v13322
    %v13407 = vunpack.c.h.b16 %v13322
    %v13408 = vunpack.c.l.b16 %v13323
    %v13409 = vunpack.c.h.b16 %v13323
    %v13410 = vunpack.c.l.b16 %v13324
    %v13411 = vunpack.c.h.b16 %v13324
    %v13412 = vunpack.c.l.b16 %v13325
    %v13413 = vunpack.c.h.b16 %v13325
    %v13414 = vunpack.c.l.b16 %v13326
    %v13415 = vunpack.c.h.b16 %v13326
    %v13416 = vunpack.c.l.b16 %v13327
    %v13417 = vunpack.c.h.b16 %v13327
    %v13418 = vunpack.c.l.b16 %v13328
    %v13419 = vunpack.c.h.b16 %v13328
    %v13420 = vunpack.c.l.b16 %v13329
    %v13421 = vunpack.c.h.b16 %v13329
    %v13422 = vunpack.c.l.b16 %v13330
    %v13423 = vunpack.c.h.b16 %v13330
    %v13424 = vunpack.c.l.b16 %v13331
    %v13425 = vunpack.c.h.b16 %v13331
    %v13426 = vunpack.c.l.b16 %v13332
    %v13427 = vunpack.c.h.b16 %v13332
    %v13428 = vunpack.c.l.b16 %v13333
    %v13429 = vunpack.c.h.b16 %v13333
    %v13430 = vunpack.c.l.b16 %v13334
    %v13431 = vunpack.c.h.b16 %v13334
    %v13432 = vunpack.c.l.b16 %v13335
    %v13433 = vunpack.c.h.b16 %v13335
    %v13434 = vunpack.c.l.b16 %v13336
    %v13435 = vunpack.c.h.b16 %v13336
    %v13436 = vunpack.c.l.b16 %v13337
    %v13437 = vunpack.c.h.b16 %v13337
    %v13438 = vunpack.c.l.b16 %v13338
    %v13439 = vunpack.c.h.b16 %v13338
    %v13440 = vunpack.c.l.b16 %v13339
    %v13441 = vunpack.c.h.b16 %v13339
    %v13442 = vunpack.c.l.b16 %v13340
    %v13443 = vunpack.c.h.b16 %v13340
    %v13444 = vunpack.c.l.b16 %v13341
    %v13445 = vunpack.c.h.b16 %v13341
    %v13446 = vunpack.c.l.b16 %v13342
    %v13447 = vunpack.c.h.b16 %v13342
    %v13448 = vunpack.c.l.b16 %v13343
    %v13449 = vunpack.c.h.b16 %v13343
    %v13450 = vpack.c.b16 %v13388, %v13386
    %v13451 = vpack.c.b16 %v13389, %v13387
    %v13452 = vpack.c.b16 %v13392, %v13390
    %v13453 = vpack.c.b16 %v13393, %v13391
    %v13454 = vpack.c.b16 %v13396, %v13394
    %v13455 = vpack.c.b16 %v13397, %v13395
    %v13456 = vpack.c.b16 %v13400, %v13398
    %v13457 = vpack.c.b16 %v13401, %v13399
    %v13458 = vpack.c.b16 %v13404, %v13402
    %v13459 = vpack.c.b16 %v13405, %v13403
    %v13460 = vpack.c.b16 %v13408, %v13406
    %v13461 = vpack.c.b16 %v13409, %v13407
    %v13462 = vpack.c.b16 %v13412, %v13410
    %v13463 = vpack.c.b16 %v13413, %v13411
    %v13464 = vpack.c.b16 %v13416, %v13414
    %v13465 = vpack.c.b16 %v13417, %v13415
    %v13466 = vpack.c.b16 %v13420, %v13418
    %v13467 = vpack.c.b16 %v13421, %v13419
    %v13468 = vpack.c.b16 %v13424, %v13422
    %v13469 = vpack.c.b16 %v13425, %v13423
    %v13470 = vpack.c.b16 %v13428, %v13426
    %v13471 = vpack.c.b16 %v13429, %v13427
    %v13472 = vpack.c.b16 %v13432, %v13430
    %v13473 = vpack.c.b16 %v13433, %v13431
    %v13474 = vpack.c.b16 %v13436, %v13434
    %v13475 = vpack.c.b16 %v13437, %v13435
    %v13476 = vpack.c.b16 %v13440, %v13438
    %v13477 = vpack.c.b16 %v13441, %v13439
    %v13478 = vpack.c.b16 %v13444, %v13442
    %v13479 = vpack.c.b16 %v13445, %v13443
    %v13480 = vpack.c.b16 %v13448, %v13446
    %v13481 = vpack.c.b16 %v13449, %v13447
    %13514 = vmatprep.subr.bf16.mxu0 %v13465
    %13515 = vmatpush1.bf16.msra.mxu0 %v13464
    %13516 = vmatprep.subr.bf16.mxu0 %v13463
    %13517 = vmatpush1.bf16.msra.mxu0 %v13462
    %13518 = vmatprep.subr.bf16.mxu0 %v13461
    %13519 = vmatpush1.bf16.msra.mxu0 %v13460
    %13520 = vmatprep.subr.bf16.mxu0 %v13459
    %13521 = vmatpush1.bf16.msra.mxu0 %v13458
    %13522 = vmatprep.subr.bf16.mxu0 %v13457
    %13523 = vmatpush1.bf16.msra.mxu0 %v13456
    %13524 = vmatprep.subr.bf16.mxu0 %v13455
    %13525 = vmatpush1.bf16.msra.mxu0 %v13454
    %13526 = vmatprep.subr.bf16.mxu0 %v13453
    %13527 = vmatpush1.bf16.msra.mxu0 %v13452
    %13528 = vmatprep.subr.bf16.mxu0 %v13451
    %13529 = vmatpush1.bf16.msra.mxu0 %v13450
    %13530 = vmatprep.subr.bf16.mxu0 %v13481
    %13531 = vmatpush2.bf16.msra.mxu0 %v13480
    %13532 = vmatprep.subr.bf16.mxu0 %v13479
    %13533 = vmatpush2.bf16.msra.mxu0 %v13478
    %13534 = vmatprep.subr.bf16.mxu0 %v13477
    %13535 = vmatpush2.bf16.msra.mxu0 %v13476
    %13536 = vmatprep.subr.bf16.mxu0 %v13475
    %13537 = vmatpush2.bf16.msra.mxu0 %v13474
    %13538 = vmatprep.subr.bf16.mxu0 %v13473
    %13539 = vmatpush2.bf16.msra.mxu0 %v13472
    %13540 = vmatprep.subr.bf16.mxu0 %v13471
    %13541 = vmatpush2.bf16.msra.mxu0 %v13470
    %13542 = vmatprep.subr.bf16.mxu0 %v13469
    %13543 = vmatpush2.bf16.msra.mxu0 %v13468
    %13544 = vmatprep.subr.bf16.mxu0 %v13467
    %13545 = vmatpush2.bf16.msra.mxu0 %v13466
    %13546 = vmatprep.mubr.bf16.mxu0 %v13345
    %13547 = vmatmul.mubr.bf16.gmra.mxu0 %v13344
    %v13548 = vpop.f32.mrf.mxu0
    %v13549 = vadd.f32 %v13349, %v13548
    %v13550 = vpop.f32.mrf.mxu0
    %v13551 = vadd.f32 %v13353, %v13550
    %v13552 = vpop.f32.mrf.mxu0
    %v13553 = vpop.f32.mrf.mxu0
    %13554 = vdwg.mxu0
    %v13555 = vmax.f32 %v13549, 0.0
    %v13556 = vmax.f32 %v13551, 0.0
    %v13557 = vld [vmem:[#allocation9] sm:$0xf]
    %v13558 = vld [vmem:[#allocation9 + $0x4] sm:$0xf]
    %v13559 = vld [vmem:[#allocation9 + $0x8] sm:$0xf]
    %v13560 = vld [vmem:[#allocation9 + $0xc] sm:$0xf]
    %v13561 = vld [vmem:[#allocation9 + $0x10] sm:$0xf]
    %v13562 = vld [vmem:[#allocation9 + $0x14] sm:$0xf]
    %v13563 = vld [vmem:[#allocation9 + $0x18] sm:$0xf]
    %v13564 = vld [vmem:[#allocation9 + $0x1c] sm:$0xf]
    %v13565 = vld [vmem:[#allocation9 + $0x20] sm:$0xf]
    %v13566 = vld [vmem:[#allocation9 + $0x24] sm:$0xf]
    %v13567 = vld [vmem:[#allocation9 + $0x28] sm:$0xf]
    %v13568 = vld [vmem:[#allocation9 + $0x2c] sm:$0xf]
    %v13569 = vld [vmem:[#allocation9 + $0x30] sm:$0xf]
    %v13570 = vld [vmem:[#allocation9 + $0x34] sm:$0xf]
    %v13571 = vld [vmem:[#allocation9 + $0x38] sm:$0xf]
    %v13572 = vld [vmem:[#allocation9 + $0x3c] sm:$0xf]
    %v13573 = vld [vmem:[#allocation9 + $0x40] sm:$0xf]
    %v13574 = vld [vmem:[#allocation9 + $0x44] sm:$0xf]
    %v13575 = vld [vmem:[#allocation9 + $0x48] sm:$0xf]
    %v13576 = vld [vmem:[#allocation9 + $0x4c] sm:$0xf]
    %v13577 = vld [vmem:[#allocation9 + $0x50] sm:$0xf]
    %v13578 = vld [vmem:[#allocation9 + $0x54] sm:$0xf]
    %v13579 = vld [vmem:[#allocation9 + $0x58] sm:$0xf]
    %v13580 = vld [vmem:[#allocation9 + $0x5c] sm:$0xf]
    %v13581 = vld [vmem:[#allocation9 + $0x60] sm:$0xf]
    %v13582 = vld [vmem:[#allocation9 + $0x64] sm:$0xf]
    %v13583 = vld [vmem:[#allocation9 + $0x68] sm:$0xf]
    %v13584 = vld [vmem:[#allocation9 + $0x6c] sm:$0xf]
    %v13585 = vld [vmem:[#allocation9 + $0x70] sm:$0xf]
    %v13586 = vld [vmem:[#allocation9 + $0x74] sm:$0xf]
    %v13587 = vld [vmem:[#allocation9 + $0x78] sm:$0xf]
    %v13588 = vld [vmem:[#allocation9 + $0x7c] sm:$0xf]
    %v13589 = vpack.c.bf16 %v13555, %v13555
    %v13590 = vpack.c.bf16 %v13556, %v13556
    %v13591 = vlaneseq
    %v13592 = vshrl.u32 %v13591, 7
    %v13593 = vsub.s32 0, %v13592
    %v13594 = vrot.slane %v154, %v13593
    %v13627 = vunpack.c.l.b16 %v13557
    %v13628 = vunpack.c.l.b16 %v13558
    %v13629 = vunpack.c.l.b16 %v13559
    %v13630 = vunpack.c.l.b16 %v13560
    %v13631 = vunpack.c.l.b16 %v13561
    %v13632 = vunpack.c.l.b16 %v13562
    %v13633 = vunpack.c.l.b16 %v13563
    %v13634 = vunpack.c.l.b16 %v13564
    %v13635 = vunpack.c.l.b16 %v13565
    %v13636 = vunpack.c.l.b16 %v13566
    %v13637 = vunpack.c.l.b16 %v13567
    %v13638 = vunpack.c.l.b16 %v13568
    %v13639 = vunpack.c.l.b16 %v13569
    %v13640 = vunpack.c.l.b16 %v13570
    %v13641 = vunpack.c.l.b16 %v13571
    %v13642 = vunpack.c.l.b16 %v13572
    %v13643 = vunpack.c.l.b16 %v13573
    %v13644 = vunpack.c.l.b16 %v13574
    %v13645 = vunpack.c.l.b16 %v13575
    %v13646 = vunpack.c.l.b16 %v13576
    %v13647 = vunpack.c.l.b16 %v13577
    %v13648 = vunpack.c.l.b16 %v13578
    %v13649 = vunpack.c.l.b16 %v13579
    %v13650 = vunpack.c.l.b16 %v13580
    %v13651 = vunpack.c.l.b16 %v13581
    %v13652 = vunpack.c.l.b16 %v13582
    %v13653 = vunpack.c.l.b16 %v13583
    %v13654 = vunpack.c.l.b16 %v13584
    %v13655 = vunpack.c.l.b16 %v13585
    %v13656 = vunpack.c.l.b16 %v13586
    %v13657 = vunpack.c.l.b16 %v13587
    %v13658 = vunpack.c.l.b16 %v13588
    %v13659 = vpack.c.b16 %v13628, %v13627
    %v13660 = vpack.c.b16 %v13630, %v13629
    %v13661 = vpack.c.b16 %v13632, %v13631
    %v13662 = vpack.c.b16 %v13634, %v13633
    %v13663 = vpack.c.b16 %v13636, %v13635
    %v13664 = vpack.c.b16 %v13638, %v13637
    %v13665 = vpack.c.b16 %v13640, %v13639
    %v13666 = vpack.c.b16 %v13642, %v13641
    %v13667 = vpack.c.b16 %v13644, %v13643
    %v13668 = vpack.c.b16 %v13646, %v13645
    %v13669 = vpack.c.b16 %v13648, %v13647
    %v13670 = vpack.c.b16 %v13650, %v13649
    %v13671 = vpack.c.b16 %v13652, %v13651
    %v13672 = vpack.c.b16 %v13654, %v13653
    %v13673 = vpack.c.b16 %v13656, %v13655
    %v13674 = vpack.c.b16 %v13658, %v13657
    %13691 = vmatprep.subr.bf16.mxu0 0
    %13692 = vmatpush1.bf16.msra.mxu0 %v13666
    %13693 = vmatprep.subr.bf16.mxu0 0
    %13694 = vmatpush1.bf16.msra.mxu0 %v13665
    %13695 = vmatprep.subr.bf16.mxu0 0
    %13696 = vmatpush1.bf16.msra.mxu0 %v13664
    %13697 = vmatprep.subr.bf16.mxu0 0
    %13698 = vmatpush1.bf16.msra.mxu0 %v13663
    %13699 = vmatprep.subr.bf16.mxu0 0
    %13700 = vmatpush1.bf16.msra.mxu0 %v13662
    %13701 = vmatprep.subr.bf16.mxu0 0
    %13702 = vmatpush1.bf16.msra.mxu0 %v13661
    %13703 = vmatprep.subr.bf16.mxu0 0
    %13704 = vmatpush1.bf16.msra.mxu0 %v13660
    %13705 = vmatprep.subr.bf16.mxu0 0
    %13706 = vmatpush1.bf16.msra.mxu0 %v13659
    %13707 = vmatprep.subr.bf16.mxu0 0
    %13708 = vmatpush2.bf16.msra.mxu0 %v13674
    %13709 = vmatprep.subr.bf16.mxu0 0
    %13710 = vmatpush2.bf16.msra.mxu0 %v13673
    %13711 = vmatprep.subr.bf16.mxu0 0
    %13712 = vmatpush2.bf16.msra.mxu0 %v13672
    %13713 = vmatprep.subr.bf16.mxu0 0
    %13714 = vmatpush2.bf16.msra.mxu0 %v13671
    %13715 = vmatprep.subr.bf16.mxu0 0
    %13716 = vmatpush2.bf16.msra.mxu0 %v13670
    %13717 = vmatprep.subr.bf16.mxu0 0
    %13718 = vmatpush2.bf16.msra.mxu0 %v13669
    %13719 = vmatprep.subr.bf16.mxu0 0
    %13720 = vmatpush2.bf16.msra.mxu0 %v13668
    %13721 = vmatprep.subr.bf16.mxu0 0
    %13722 = vmatpush2.bf16.msra.mxu0 %v13667
    %13723 = vmatprep.mubr.bf16.mxu0 %v13590
    %13724 = vmatmul.mubr.bf16.gmra.mxu0 %v13589
    %v13725 = vpop.f32.mrf.mxu0
    %v13726 = vadd.f32 %v13594, %v13725
    %v13727 = vpop.f32.mrf.mxu0
    %v13728 = vpop.f32.mrf.mxu0
    %v13729 = vpop.f32.mrf.mxu0
    %13730 = vdwg.mxu0
    %v13731 = vmax.f32 %v13726, 0.0
    %v13732 = vld [vmem:[#allocation9 + $0x80] sm:$0xf]
    %v13733 = vld [vmem:[#allocation9 + $0x84] sm:$0xf]
    %v13734 = vld [vmem:[#allocation9 + $0x88] sm:$0xf]
    %v13735 = vld [vmem:[#allocation9 + $0x8c] sm:$0xf]
    %v13736 = vld [vmem:[#allocation9 + $0x90] sm:$0xf]
    %v13737 = vld [vmem:[#allocation9 + $0x94] sm:$0xf]
    %v13738 = vld [vmem:[#allocation9 + $0x98] sm:$0xf]
    %v13739 = vld [vmem:[#allocation9 + $0x9c] sm:$0xf]
    %v13740 = vld [vmem:[#allocation9 + $0xa0] sm:$0xf]
    %v13741 = vld [vmem:[#allocation9 + $0xa4] sm:$0xf]
    %v13742 = vld [vmem:[#allocation9 + $0xa8] sm:$0xf]
    %v13743 = vld [vmem:[#allocation9 + $0xac] sm:$0xf]
    %v13744 = vld [vmem:[#allocation9 + $0xb0] sm:$0xf]
    %v13745 = vld [vmem:[#allocation9 + $0xb4] sm:$0xf]
    %v13746 = vld [vmem:[#allocation9 + $0xb8] sm:$0xf]
    %v13747 = vld [vmem:[#allocation9 + $0xbc] sm:$0xf]
    %v13748 = vpack.c.bf16 %v13731, %v13731
    %v13749 = vlaneseq
    %v13750 = vshrl.u32 %v13749, 7
    %v13751 = vsub.s32 1, %v13750
    %v13752 = vrot.slane %v154, %v13751
    %v13769 = vunpack.c.l.b16 %v13732
    %v13770 = vunpack.c.l.b16 %v13733
    %v13771 = vunpack.c.l.b16 %v13734
    %v13772 = vunpack.c.l.b16 %v13735
    %v13773 = vunpack.c.l.b16 %v13736
    %v13774 = vunpack.c.l.b16 %v13737
    %v13775 = vunpack.c.l.b16 %v13738
    %v13776 = vunpack.c.l.b16 %v13739
    %v13777 = vunpack.c.l.b16 %v13740
    %v13778 = vunpack.c.l.b16 %v13741
    %v13779 = vunpack.c.l.b16 %v13742
    %v13780 = vunpack.c.l.b16 %v13743
    %v13781 = vunpack.c.l.b16 %v13744
    %v13782 = vunpack.c.l.b16 %v13745
    %v13783 = vunpack.c.l.b16 %v13746
    %v13784 = vunpack.c.l.b16 %v13747
    %v13785 = vpack.c.b16 %v13770, %v13769
    %v13786 = vpack.c.b16 %v13772, %v13771
    %v13787 = vpack.c.b16 %v13774, %v13773
    %v13788 = vpack.c.b16 %v13776, %v13775
    %v13789 = vpack.c.b16 %v13778, %v13777
    %v13790 = vpack.c.b16 %v13780, %v13779
    %v13791 = vpack.c.b16 %v13782, %v13781
    %v13792 = vpack.c.b16 %v13784, %v13783
    %13801 = vmatprep.subr.bf16.mxu0 0
    %13802 = vmatpush1.bf16.msra.mxu0 %v13792
    %13803 = vmatprep.subr.bf16.mxu0 0
    %13804 = vmatpush1.bf16.msra.mxu0 %v13791
    %13805 = vmatprep.subr.bf16.mxu0 0
    %13806 = vmatpush1.bf16.msra.mxu0 %v13790
    %13807 = vmatprep.subr.bf16.mxu0 0
    %13808 = vmatpush1.bf16.msra.mxu0 %v13789
    %13809 = vmatprep.subr.bf16.mxu0 0
    %13810 = vmatpush1.bf16.msra.mxu0 %v13788
    %13811 = vmatprep.subr.bf16.mxu0 0
    %13812 = vmatpush1.bf16.msra.mxu0 %v13787
    %13813 = vmatprep.subr.bf16.mxu0 0
    %13814 = vmatpush1.bf16.msra.mxu0 %v13786
    %13815 = vmatprep.subr.bf16.mxu0 0
    %13816 = vmatpush1.bf16.msra.mxu0 %v13785
    %13817 = vmatprep.subr.bf16.mxu0 0
    %13818 = vmatpush2.bf16.msra.mxu0 0
    %13819 = vmatprep.subr.bf16.mxu0 0
    %13820 = vmatpush2.bf16.msra.mxu0 0
    %13821 = vmatprep.subr.bf16.mxu0 0
    %13822 = vmatpush2.bf16.msra.mxu0 0
    %13823 = vmatprep.subr.bf16.mxu0 0
    %13824 = vmatpush2.bf16.msra.mxu0 0
    %13825 = vmatprep.subr.bf16.mxu0 0
    %13826 = vmatpush2.bf16.msra.mxu0 0
    %13827 = vmatprep.subr.bf16.mxu0 0
    %13828 = vmatpush2.bf16.msra.mxu0 0
    %13829 = vmatprep.subr.bf16.mxu0 0
    %13830 = vmatpush2.bf16.msra.mxu0 0
    %13831 = vmatprep.subr.bf16.mxu0 0
    %13832 = vmatpush2.bf16.msra.mxu0 0
    %13833 = vmatprep.mubr.bf16.mxu0 0
    %13834 = vmatmul.mubr.bf16.gmra.mxu0 %v13748
    %v13835 = vpop.f32.mrf.mxu0
    %v13836 = vadd.f32 %v13752, %v13835
    %v13837 = vpop.f32.mrf.mxu0
    %v13838 = vpop.f32.mrf.mxu0
    %v13839 = vpop.f32.mrf.mxu0
    %13840 = vdwg.mxu0
    %v13841 = vmax.f32 %v13836, 0.0
    %v13842 = vld [vmem:[#allocation9 + $0xc0] sm:$0xf]
    %v13843 = vld [vmem:[#allocation9 + $0xc4] sm:$0xf]
    %v13844 = vld [vmem:[#allocation9 + $0xc8] sm:$0xf]
    %v13845 = vld [vmem:[#allocation9 + $0xcc] sm:$0xf]
    %v13846 = vld [vmem:[#allocation9 + $0xd0] sm:$0xf]
    %v13847 = vld [vmem:[#allocation9 + $0xd4] sm:$0xf]
    %v13848 = vld [vmem:[#allocation9 + $0xd8] sm:$0xf]
    %v13849 = vld [vmem:[#allocation9 + $0xdc] sm:$0xf]
    %v13850 = vld [vmem:[#allocation9 + $0xe0] sm:$0xf]
    %v13851 = vld [vmem:[#allocation9 + $0xe4] sm:$0xf]
    %v13852 = vld [vmem:[#allocation9 + $0xe8] sm:$0xf]
    %v13853 = vld [vmem:[#allocation9 + $0xec] sm:$0xf]
    %v13854 = vld [vmem:[#allocation9 + $0xf0] sm:$0xf]
    %v13855 = vld [vmem:[#allocation9 + $0xf4] sm:$0xf]
    %v13856 = vld [vmem:[#allocation9 + $0xf8] sm:$0xf]
    %v13857 = vld [vmem:[#allocation9 + $0xfc] sm:$0xf]
    %v13858 = vpack.c.bf16 %v13841, %v13841
    %v13859 = vlaneseq
    %v13860 = vshrl.u32 %v13859, 7
    %v13861 = vsub.s32 2, %v13860
    %v13862 = vrot.slane %v154, %v13861
    %v13879 = vunpack.c.l.b16 %v13842
    %v13880 = vunpack.c.l.b16 %v13843
    %v13881 = vunpack.c.l.b16 %v13844
    %v13882 = vunpack.c.l.b16 %v13845
    %v13883 = vunpack.c.l.b16 %v13846
    %v13884 = vunpack.c.l.b16 %v13847
    %v13885 = vunpack.c.l.b16 %v13848
    %v13886 = vunpack.c.l.b16 %v13849
    %v13887 = vunpack.c.l.b16 %v13850
    %v13888 = vunpack.c.l.b16 %v13851
    %v13889 = vunpack.c.l.b16 %v13852
    %v13890 = vunpack.c.l.b16 %v13853
    %v13891 = vunpack.c.l.b16 %v13854
    %v13892 = vunpack.c.l.b16 %v13855
    %v13893 = vunpack.c.l.b16 %v13856
    %v13894 = vunpack.c.l.b16 %v13857
    %v13895 = vpack.c.b16 %v13880, %v13879
    %v13896 = vpack.c.b16 %v13882, %v13881
    %v13897 = vpack.c.b16 %v13884, %v13883
    %v13898 = vpack.c.b16 %v13886, %v13885
    %v13899 = vpack.c.b16 %v13888, %v13887
    %v13900 = vpack.c.b16 %v13890, %v13889
    %v13901 = vpack.c.b16 %v13892, %v13891
    %v13902 = vpack.c.b16 %v13894, %v13893
    %13911 = vmatprep.subr.bf16.mxu0 0
    %13912 = vmatpush1.bf16.msra.mxu0 %v13902
    %13913 = vmatprep.subr.bf16.mxu0 0
    %13914 = vmatpush1.bf16.msra.mxu0 %v13901
    %13915 = vmatprep.subr.bf16.mxu0 0
    %13916 = vmatpush1.bf16.msra.mxu0 %v13900
    %13917 = vmatprep.subr.bf16.mxu0 0
    %13918 = vmatpush1.bf16.msra.mxu0 %v13899
    %13919 = vmatprep.subr.bf16.mxu0 0
    %13920 = vmatpush1.bf16.msra.mxu0 %v13898
    %13921 = vmatprep.subr.bf16.mxu0 0
    %13922 = vmatpush1.bf16.msra.mxu0 %v13897
    %13923 = vmatprep.subr.bf16.mxu0 0
    %13924 = vmatpush1.bf16.msra.mxu0 %v13896
    %13925 = vmatprep.subr.bf16.mxu0 0
    %13926 = vmatpush1.bf16.msra.mxu0 %v13895
    %13927 = vmatprep.subr.bf16.mxu0 0
    %13928 = vmatpush2.bf16.msra.mxu0 0
    %13929 = vmatprep.subr.bf16.mxu0 0
    %13930 = vmatpush2.bf16.msra.mxu0 0
    %13931 = vmatprep.subr.bf16.mxu0 0
    %13932 = vmatpush2.bf16.msra.mxu0 0
    %13933 = vmatprep.subr.bf16.mxu0 0
    %13934 = vmatpush2.bf16.msra.mxu0 0
    %13935 = vmatprep.subr.bf16.mxu0 0
    %13936 = vmatpush2.bf16.msra.mxu0 0
    %13937 = vmatprep.subr.bf16.mxu0 0
    %13938 = vmatpush2.bf16.msra.mxu0 0
    %13939 = vmatprep.subr.bf16.mxu0 0
    %13940 = vmatpush2.bf16.msra.mxu0 0
    %13941 = vmatprep.subr.bf16.mxu0 0
    %13942 = vmatpush2.bf16.msra.mxu0 0
    %13943 = vmatprep.mubr.bf16.mxu0 0
    %13944 = vmatmul.mubr.bf16.gmra.mxu0 %v13858
    %v13945 = vpop.f32.mrf.mxu0
    %v13946 = vadd.f32 %v13862, %v13945
    %v13947 = vpop.f32.mrf.mxu0
    %v13948 = vpop.f32.mrf.mxu0
    %v13949 = vpop.f32.mrf.mxu0
    %13950 = vdwg.mxu0
    %v13951 = vmax.f32 %v13946, 0.0
    %v13952 = vld [vmem:[#allocation9 + $0x100] sm:$0xf]
    %v13953 = vld [vmem:[#allocation9 + $0x104] sm:$0xf]
    %v13954 = vld [vmem:[#allocation9 + $0x108] sm:$0xf]
    %v13955 = vld [vmem:[#allocation9 + $0x10c] sm:$0xf]
    %v13956 = vld [vmem:[#allocation9 + $0x110] sm:$0xf]
    %v13957 = vld [vmem:[#allocation9 + $0x114] sm:$0xf]
    %v13958 = vld [vmem:[#allocation9 + $0x118] sm:$0xf]
    %v13959 = vld [vmem:[#allocation9 + $0x11c] sm:$0xf]
    %v13960 = vld [vmem:[#allocation9 + $0x120] sm:$0xf]
    %v13961 = vld [vmem:[#allocation9 + $0x124] sm:$0xf]
    %v13962 = vld [vmem:[#allocation9 + $0x128] sm:$0xf]
    %v13963 = vld [vmem:[#allocation9 + $0x12c] sm:$0xf]
    %v13964 = vld [vmem:[#allocation9 + $0x130] sm:$0xf]
    %v13965 = vld [vmem:[#allocation9 + $0x134] sm:$0xf]
    %v13966 = vld [vmem:[#allocation9 + $0x138] sm:$0xf]
    %v13967 = vld [vmem:[#allocation9 + $0x13c] sm:$0xf]
    %v13968 = vpack.c.bf16 %v13951, %v13951
    %v13969 = vlaneseq
    %v13970 = vshrl.u32 %v13969, 7
    %v13971 = vsub.s32 3, %v13970
    %v13972 = vrot.slane %v154, %v13971
    %v13989 = vunpack.c.l.b16 %v13952
    %v13990 = vunpack.c.l.b16 %v13953
    %v13991 = vunpack.c.l.b16 %v13954
    %v13992 = vunpack.c.l.b16 %v13955
    %v13993 = vunpack.c.l.b16 %v13956
    %v13994 = vunpack.c.l.b16 %v13957
    %v13995 = vunpack.c.l.b16 %v13958
    %v13996 = vunpack.c.l.b16 %v13959
    %v13997 = vunpack.c.l.b16 %v13960
    %v13998 = vunpack.c.l.b16 %v13961
    %v13999 = vunpack.c.l.b16 %v13962
    %v14000 = vunpack.c.l.b16 %v13963
    %v14001 = vunpack.c.l.b16 %v13964
    %v14002 = vunpack.c.l.b16 %v13965
    %v14003 = vunpack.c.l.b16 %v13966
    %v14004 = vunpack.c.l.b16 %v13967
    %v14005 = vpack.c.b16 %v13990, %v13989
    %v14006 = vpack.c.b16 %v13992, %v13991
    %v14007 = vpack.c.b16 %v13994, %v13993
    %v14008 = vpack.c.b16 %v13996, %v13995
    %v14009 = vpack.c.b16 %v13998, %v13997
    %v14010 = vpack.c.b16 %v14000, %v13999
    %v14011 = vpack.c.b16 %v14002, %v14001
    %v14012 = vpack.c.b16 %v14004, %v14003
    %14021 = vmatprep.subr.bf16.mxu0 0
    %14022 = vmatpush1.bf16.msra.mxu0 %v14012
    %14023 = vmatprep.subr.bf16.mxu0 0
    %14024 = vmatpush1.bf16.msra.mxu0 %v14011
    %14025 = vmatprep.subr.bf16.mxu0 0
    %14026 = vmatpush1.bf16.msra.mxu0 %v14010
    %14027 = vmatprep.subr.bf16.mxu0 0
    %14028 = vmatpush1.bf16.msra.mxu0 %v14009
    %14029 = vmatprep.subr.bf16.mxu0 0
    %14030 = vmatpush1.bf16.msra.mxu0 %v14008
    %14031 = vmatprep.subr.bf16.mxu0 0
    %14032 = vmatpush1.bf16.msra.mxu0 %v14007
    %14033 = vmatprep.subr.bf16.mxu0 0
    %14034 = vmatpush1.bf16.msra.mxu0 %v14006
    %14035 = vmatprep.subr.bf16.mxu0 0
    %14036 = vmatpush1.bf16.msra.mxu0 %v14005
    %14037 = vmatprep.subr.bf16.mxu0 0
    %14038 = vmatpush2.bf16.msra.mxu0 0
    %14039 = vmatprep.subr.bf16.mxu0 0
    %14040 = vmatpush2.bf16.msra.mxu0 0
    %14041 = vmatprep.subr.bf16.mxu0 0
    %14042 = vmatpush2.bf16.msra.mxu0 0
    %14043 = vmatprep.subr.bf16.mxu0 0
    %14044 = vmatpush2.bf16.msra.mxu0 0
    %14045 = vmatprep.subr.bf16.mxu0 0
    %14046 = vmatpush2.bf16.msra.mxu0 0
    %14047 = vmatprep.subr.bf16.mxu0 0
    %14048 = vmatpush2.bf16.msra.mxu0 0
    %14049 = vmatprep.subr.bf16.mxu0 0
    %14050 = vmatpush2.bf16.msra.mxu0 0
    %14051 = vmatprep.subr.bf16.mxu0 0
    %14052 = vmatpush2.bf16.msra.mxu0 0
    %14053 = vmatprep.mubr.bf16.mxu0 0
    %14054 = vmatmul.mubr.bf16.gmra.mxu0 %v13968
    %v14055 = vpop.f32.mrf.mxu0
    %v14056 = vadd.f32 %v13972, %v14055
    %v14057 = vpop.f32.mrf.mxu0
    %v14058 = vpop.f32.mrf.mxu0
    %v14059 = vpop.f32.mrf.mxu0
    %14060 = vdwg.mxu0
    %v14061 = vsub.f32 0.0, %v14056
    %v14062 = vmul.f32 %v14061, 1.442695
    %v14063 = vpow.pop %v14062
    %v14064 = vadd.f32 %v14063, 1.0
    %v14065 = vrcp.pop %v14064
    %v14066 = vmul.f32 1.0, %v14065
    %vm14067 = vcmask 7168
    %14068 = vst.msk [vmem:[%s9] sm:$0xff] %vm14067, %v14066
    // Predicated region
    $region74: #{tpu_custom_call.1} parent=1 // pred_check
      _
    $region75: #{tpu_custom_call.1} parent=1 // pred_check_branch
      %14070 = sbr.rel (0) target = $region77
    $region76: #{tpu_custom_call.1} parent=1 // pred_region
      _
    $region77: #{tpu_custom_call.1} parent=1 // pred_fallthru
      _
    // Predicated region
    $region78: #{tpu_custom_call.1} parent=1 // pred_check
      _
    $region79: #{tpu_custom_call.1} parent=1 // pred_check_branch
      %14072 = sbr.rel (0) target = $region81
    $region80: #{tpu_custom_call.1} parent=1 // pred_region
      _
    $region81: #{tpu_custom_call.1} parent=1 // pred_fallthru
      _
    %14073 = vsyncpa [#allocation3], 1
    %14074 = vsyncpa [#allocation5], 1
    %14075 = vsyncpa [#allocation8], 1
    %14076 = vsyncpa [#allocation11], 1
    %14077 = vsyncpa [#allocation14], 1

</llo_original>
